<compile_context>
chip_gen: v6e
topology: v6e:2x2x1
jax: 0.10.0
libtpu: 0.0.40
codegen_flags: <defaults>
</compile_context>

<pallas_src>
import functools
import math

import jax
import jax.numpy as jnp
from jax.experimental import pallas as pl
from jax.experimental.pallas import tpu as pltpu

EPS = 1e-5          # nn.InstanceNorm2d default eps
NEG_SLOPE = 0.2     # LeakyReLU(0.2)
LANE = 128


# ------------------------------ small helpers -------------------------------

def _round_up(v, m):
    return (v + m - 1) // m * m


def _pad_last(a, n):
    pad = n - a.shape[-1]
    if pad == 0:
        return a
    widths = [(0, 0)] * (a.ndim - 1) + [(0, pad)]
    return jnp.pad(a, widths)


def _conv_w_to_taps(w, cin_p, cout_p):
    # torch (Cout, Cin, 3, 3) -> (9, Cin_p, Cout_p) bf16, tap k = kh*3 + kw
    cout, cin = w.shape[0], w.shape[1]
    taps = jnp.transpose(w, (2, 3, 1, 0)).reshape(9, cin, cout)
    taps = jnp.pad(taps, ((0, 0), (0, cin_p - cin), (0, cout_p - cout)))
    return taps.astype(jnp.bfloat16)


def _conv_masks(h, w):
    # (H*W, 9) float32 validity masks for the 9 taps (kills column wrap).
    rows = jnp.arange(h).reshape(h, 1)
    cols = jnp.arange(w).reshape(1, w)
    ms = []
    for dh in (-1, 0, 1):
        for dw in (-1, 0, 1):
            m = ((rows + dh >= 0) & (rows + dh < h) &
                 (cols + dw >= 0) & (cols + dw < w))
            ms.append(m.reshape(h * w))
    return jnp.stack(ms, axis=1).astype(jnp.float32)


# ------------------------------ Pallas kernel --------------------------------

def _conv3x3_taps(scr, w_ref, m_ref, hw2, wdim, cin_p, cout_p, padrows):
    """3x3 conv as 9 shifted (HW, Cin)@(Cin, Cout) bf16 matmuls, f32 acc."""
    acc = jnp.zeros((hw2, cout_p), jnp.float32)
    k = 0
    for dh in (-1, 0, 1):
        for dw in (-1, 0, 1):
            off = dh * wdim + dw
            s = scr[padrows + off: padrows + off + hw2, 0:cin_p]
            if dw != 0:                      # row overflow handled by zero halo
                s = s * m_ref[:, k:k + 1]    # column wrap handled by mask
            acc = acc + jnp.dot(s.astype(jnp.bfloat16), w_ref[k],
                                preferred_element_type=jnp.float32)
            k += 1
    return acc


def _resblk_kernel(learned_sc, hw2, wdim, cin_p, cout_p, padrows, *refs):
    if learned_sc:
        (x_ref, g1_ref, g2_ref, w1_ref, b1_ref, w2_ref, b2_ref, m_ref,
         wsc_ref, o_ref, scr) = refs
    else:
        (x_ref, g1_ref, g2_ref, w1_ref, b1_ref, w2_ref, b2_ref, m_ref,
         o_ref, scr) = refs
        wsc_ref = None

    inv_sqrt2 = 1.0 / math.sqrt(2.0)
    rows_total, cmax = scr.shape

    # Halo rows must read as zero for every shifted conv load.  The middle
    # region is fully overwritten each grid step, so only the halos are
    # cleared (cheap, and megacore-safe unlike a program_id==0 one-shot init).
    scr[0:padrows, :] = jnp.zeros((padrows, cmax), scr.dtype)
    scr[padrows + hw2:rows_total, :] = jnp.zeros(
        (rows_total - padrows - hw2, cmax), scr.dtype)

    x = x_ref[0]                                        # (hw2, cin_p) f32

    # ---- AdaIN1 + LeakyReLU (one-pass instance-norm stats, f32) ----
    mean1 = jnp.mean(x, axis=0, keepdims=True)
    var1 = jnp.mean(x * x, axis=0, keepdims=True) - mean1 * mean1
    gb1 = g1_ref[0]                                     # (2, cin_p)
    t = (x - mean1) * jax.lax.rsqrt(var1 + EPS)
    t = (1.0 + gb1[0:1, :]) * t + gb1[1:2, :]
    t = jnp.maximum(t, NEG_SLOPE * t)
    scr[padrows:padrows + hw2, 0:cin_p] = t

    # ---- conv1 ----
    y = _conv3x3_taps(scr, w1_ref, m_ref, hw2, wdim, cin_p, cout_p, padrows)
    y = y + b1_ref[...]

    # ---- AdaIN2 + LeakyReLU ----
    mean2 = jnp.mean(y, axis=0, keepdims=True)
    var2 = jnp.mean(y * y, axis=0, keepdims=True) - mean2 * mean2
    gb2 = g2_ref[0]                                     # (2, cout_p)
    z = (y - mean2) * jax.lax.rsqrt(var2 + EPS)
    z = (1.0 + gb2[0:1, :]) * z + gb2[1:2, :]
    z = jnp.maximum(z, NEG_SLOPE * z)
    scr[padrows:padrows + hw2, 0:cout_p] = z

    # ---- conv2 ----
    r = _conv3x3_taps(scr, w2_ref, m_ref, hw2, wdim, cout_p, cout_p, padrows)
    r = r + b2_ref[...]

    # ---- shortcut (1x1 conv or identity) + merge + /sqrt(2) ----
    # Computed last so the whole result leaves in ONE lane-dense output store.
    if learned_sc:
        sc = jnp.dot(x_ref[0].astype(jnp.bfloat16), wsc_ref[...],
                     preferred_element_type=jnp.float32)
    else:
        sc = x_ref[0]
    o_ref[0] = (r + sc) * inv_sqrt2


# ------------------------------ forward wrapper ------------------------------

def adain_res_blk_forward(params, x_nchw, c, upsample=False):
    """AdainResBlk.forward; x_nchw (N, Cin, H, W), c (N, code_dim) -> NCHW."""
    x = jnp.transpose(x_nchw, (0, 2, 3, 1)).astype(jnp.float32)   # NHWC
    n, h, w, cin = x.shape
    cout = params["conv1_w"].shape[0]
    learned_sc = cin != cout
    cin_p = _round_up(cin, LANE)
    cout_p = _round_up(cout, LANE)

    # ---- style codes (tiny GEMMs: leave to XLA) ----
    h1 = c @ params["fc1_w"].T + params["fc1_b"]
    h2 = c @ params["fc2_w"].T + params["fc2_b"]
    g1b1 = _pad_last(jnp.stack([h1[:, :cin], h1[:, cin:]], axis=1), cin_p)
    g2b2 = _pad_last(jnp.stack([h2[:, :cout], h2[:, cout:]], axis=1), cout_p)

    # ---- nearest 2x upsample hoisted before AdaIN1 (mathematically equal) ----
    if upsample:
        x = jnp.repeat(jnp.repeat(x, 2, axis=1), 2, axis=2)
    h2s, w2s = int(x.shape[1]), int(x.shape[2])
    hw2 = h2s * w2s
    x_flat = _pad_last(x.reshape(n, hw2, cin), cin_p)             # f32

    # ---- weights / masks ----
    w1 = _conv_w_to_taps(params["conv1_w"], cin_p, cout_p)
    w2t = _conv_w_to_taps(params["conv2_w"], cout_p, cout_p)
    b1c = _pad_last(params["conv1_b"].reshape(1, -1), cout_p).astype(jnp.float32)
    b2c = _pad_last(params["conv2_b"].reshape(1, -1), cout_p).astype(jnp.float32)
    masks = _conv_masks(h2s, w2s)                                  # (hw2, 9)

    in_arrays = [x_flat, g1b1, g2b2, w1, b1c, w2t, b2c, masks]
    in_specs = [
        pl.BlockSpec((1, hw2, cin_p), lambda i: (i, 0, 0)),
        pl.BlockSpec((1, 2, cin_p), lambda i: (i, 0, 0)),
        pl.BlockSpec((1, 2, cout_p), lambda i: (i, 0, 0)),
        pl.BlockSpec((9, cin_p, cout_p), lambda i: (0, 0, 0)),
        pl.BlockSpec((1, cout_p), lambda i: (0, 0)),
        pl.BlockSpec((9, cout_p, cout_p), lambda i: (0, 0, 0)),
        pl.BlockSpec((1, cout_p), lambda i: (0, 0)),
        pl.BlockSpec((hw2, 9), lambda i: (0, 0)),
    ]
    if learned_sc:
        wsc = _pad_last(
            jnp.pad(params["conv1x1_w"][:, :, 0, 0].T,
                    ((0, cin_p - cin), (0, 0))), cout_p).astype(jnp.bfloat16)
        in_arrays.append(wsc)
        in_specs.append(pl.BlockSpec((cin_p, cout_p), lambda i: (0, 0)))

    padrows = _round_up(w2s + 1, 8)
    cmax = max(cin_p, cout_p)
    kernel = functools.partial(_resblk_kernel, learned_sc, hw2, w2s,
                               cin_p, cout_p, padrows)

    out = pl.pallas_call(
        kernel,
        out_shape=jax.ShapeDtypeStruct((n, hw2, cout_p), jnp.float32),
        grid=(n,),
        in_specs=in_specs,
        out_specs=pl.BlockSpec((1, hw2, cout_p), lambda i: (i, 0, 0)),
        scratch_shapes=[pltpu.VMEM((hw2 + 2 * padrows, cmax), jnp.float32)],
        compiler_params=pltpu.CompilerParams(
            dimension_semantics=("parallel",),
            vmem_limit_bytes=64 * 1024 * 1024),
    )(*in_arrays)

    out = out[:, :, :cout].reshape(n, h2s, w2s, cout)
    return jnp.transpose(out, (0, 3, 1, 2))                        # NCHW


# -------------- matched-precision JAX reference (for checking) --------------

def forward_ref(params, x_nchw, c, upsample):
    x = jnp.transpose(x_nchw, (0, 2, 3, 1)).astype(jnp.float32)
    cin = x.shape[-1]
    cout = params["conv1_w"].shape[0]
    h1 = c @ params["fc1_w"].T + params["fc1_b"]
    h2 = c @ params["fc2_w"].T + params["fc2_b"]

    def lrelu(t):
        return jnp.maximum(t, NEG_SLOPE * t)

    def adain(t, gam, bet):
        m = jnp.mean(t, axis=(1, 2), keepdims=True)
        v = jnp.mean(t * t, axis=(1, 2), keepdims=True) - m * m
        tn = (t - m) * jax.lax.rsqrt(v + EPS)
        return (1.0 + gam[:, None, None, :]) * tn + bet[:, None, None, :]

    def conv(t, wt, b, pad):
        y = jax.lax.conv_general_dilated(
            t.astype(jnp.bfloat16),
            jnp.transpose(wt, (2, 3, 1, 0)).astype(jnp.bfloat16),
            (1, 1), [(pad, pad), (pad, pad)],
            dimension_numbers=("NHWC", "HWIO", "NHWC"),
            preferred_element_type=jnp.float32)
        return y if b is None else y + b

    t = lrelu(adain(x, h1[:, :cin], h1[:, cin:]))
    if upsample:
        t = jnp.repeat(jnp.repeat(t, 2, axis=1), 2, axis=2)
    t = conv(t, params["conv1_w"], params["conv1_b"], 1)
    t = lrelu(adain(t, h2[:, :cout], h2[:, cout:]))
    t = conv(t, params["conv2_w"], params["conv2_b"], 1)

    s = jnp.repeat(jnp.repeat(x, 2, axis=1), 2, axis=2) if upsample else x
    if "conv1x1_w" in params:
        s = conv(s, params["conv1x1_w"], None, 0)
    out = (t + s) / math.sqrt(2.0)
    return jnp.transpose(out, (0, 3, 1, 2))


# --------------------------------- params ------------------------------------

def init_params(key, dim_in, dim_out, code_dim):
    keys = jax.random.split(key, 9)

    def nrm(k, shape, scale=0.1):
        return scale * jax.random.normal(k, shape, dtype=jnp.float32)

    p = {
        "conv1_w": nrm(keys[0], (dim_out, dim_in, 3, 3)),
        "conv1_b": nrm(keys[1], (dim_out,)),
        "conv2_w": nrm(keys[2], (dim_out, dim_out, 3, 3)),
        "conv2_b": nrm(keys[3], (dim_out,)),
        "fc1_w": nrm(keys[4], (2 * dim_in, code_dim)),
        "fc1_b": nrm(keys[5], (2 * dim_in,)),
        "fc2_w": nrm(keys[6], (2 * dim_out, code_dim)),
        "fc2_b": nrm(keys[7], (2 * dim_out,)),
    }
    if dim_in != dim_out:
        p["conv1x1_w"] = nrm(keys[8], (dim_out, dim_in, 1, 1))
    return p


# ----------------------------------- main -------------------------------------

if __name__ == "__main__":
    key = jax.random.PRNGKey(0)

    # Config 1: learned shortcut + nearest-2x upsample (Cin != Cout).
    k_x, k_c, k_p, key = (*jax.random.split(key, 3), key)
    N, Cin, H, W = 2, 4, 8, 8
    Cout, code_dim = 8, 16
    x = jax.random.normal(k_x, (N, Cin, H, W), dtype=jnp.float32)
    c = jax.random.normal(k_c, (N, code_dim), dtype=jnp.float32)
    params = init_params(k_p, Cin, Cout, code_dim)

    out = adain_res_blk_forward(params, x, c, upsample=True)
    out = jax.block_until_ready(out)
    ref = forward_ref(params, x, c, True)
    assert out.shape == (N, Cout, 2 * H, 2 * W), out.shape
    err1 = float(jnp.max(jnp.abs(out - ref)))
    assert jnp.allclose(out, ref, atol=1e-2, rtol=1e-2), err1

    # Config 2: identity shortcut, no upsample (Cin == Cout).
    k_x2, k_c2, k_p2 = jax.random.split(jax.random.PRNGKey(1), 3)
    N2, C2, H2, W2, cd2 = 2, 8, 16, 16, 16
    x2 = jax.random.normal(k_x2, (N2, C2, H2, W2), dtype=jnp.float32)
    c2 = jax.random.normal(k_c2, (N2, cd2), dtype=jnp.float32)
    params2 = init_params(k_p2, C2, C2, cd2)

    out2 = adain_res_blk_forward(params2, x2, c2, upsample=False)
    out2 = jax.block_until_ready(out2)
    ref2 = forward_ref(params2, x2, c2, False)
    assert out2.shape == (N2, C2, H2, W2), out2.shape
    err2 = float(jnp.max(jnp.abs(out2 - ref2)))
    assert jnp.allclose(out2, ref2, atol=1e-2, rtol=1e-2), err2

    print("KERNEL_OK")
</pallas_src>

<mosaic_0001>
module attributes {stable_mosaic.version = 11 : i64} {
  func.func @_resblk_kernel(%arg0: i32, %arg1: memref<1x256x128xf32, #tpu.memory_space<vmem>>, %arg2: memref<1x2x128xf32, #tpu.memory_space<vmem>>, %arg3: memref<1x2x128xf32, #tpu.memory_space<vmem>>, %arg4: memref<9x128x128xbf16, #tpu.memory_space<vmem>>, %arg5: memref<1x128xf32, #tpu.memory_space<vmem>>, %arg6: memref<9x128x128xbf16, #tpu.memory_space<vmem>>, %arg7: memref<1x128xf32, #tpu.memory_space<vmem>>, %arg8: memref<256x9xf32, #tpu.memory_space<vmem>>, %arg9: memref<128x128xbf16, #tpu.memory_space<vmem>>, %arg10: memref<1x256x128xf32, #tpu.memory_space<vmem>>, %arg11: memref<304x128xf32, #tpu.memory_space<vmem>>) attributes {dimension_semantics = [#tpu.dimension_semantics<parallel>], iteration_bounds = array<i64: 2>, scalar_prefetch = 0 : i64, scratch_operands = 1 : i64, tpu.core_type = #tpu.core_type<tc>, window_params = [{transform_indices = @transform_0, window_bounds = array<i64: 1, 256, 128>}, {transform_indices = @transform_1, window_bounds = array<i64: 1, 2, 128>}, {transform_indices = @transform_2, window_bounds = array<i64: 1, 2, 128>}, {pipeline_mode = #tpu.pipeline_mode<synchronous>, transform_indices = @transform_3, window_bounds = array<i64: 9, 128, 128>}, {pipeline_mode = #tpu.pipeline_mode<synchronous>, transform_indices = @transform_4, window_bounds = array<i64: 1, 128>}, {pipeline_mode = #tpu.pipeline_mode<synchronous>, transform_indices = @transform_5, window_bounds = array<i64: 9, 128, 128>}, {pipeline_mode = #tpu.pipeline_mode<synchronous>, transform_indices = @transform_6, window_bounds = array<i64: 1, 128>}, {pipeline_mode = #tpu.pipeline_mode<synchronous>, transform_indices = @transform_7, window_bounds = array<i64: 256, 9>}, {pipeline_mode = #tpu.pipeline_mode<synchronous>, transform_indices = @transform_8, window_bounds = array<i64: 128, 128>}, {transform_indices = @transform_9, window_bounds = array<i64: 1, 256, 128>}]} {
    %cst = arith.constant 0.000000e+00 : f32
    %0 = vector.broadcast %cst : f32 to vector<24x128xf32>
    %c0 = arith.constant 0 : index
    %c0_0 = arith.constant 0 : index
    %1 = vector.load %arg11[%c0, %c0_0] : memref<304x128xf32, #tpu.memory_space<vmem>>, vector<24x128xf32>
    tpu.vector_store %arg11[%c0, %c0_0], %0 {strides = array<i32>} : memref<304x128xf32, #tpu.memory_space<vmem>>, vector<24x128xf32>,
    %cst_1 = arith.constant 0.000000e+00 : f32
    %2 = vector.broadcast %cst_1 : f32 to vector<24x128xf32>
    %c280 = arith.constant 280 : index
    %c0_2 = arith.constant 0 : index
    %3 = vector.load %arg11[%c280, %c0_2] : memref<304x128xf32, #tpu.memory_space<vmem>>, vector<24x128xf32>
    tpu.vector_store %arg11[%c280, %c0_2], %2 {strides = array<i32>} : memref<304x128xf32, #tpu.memory_space<vmem>>, vector<24x128xf32>,
    %c0_3 = arith.constant 0 : index
    %c0_4 = arith.constant 0 : index
    %c0_5 = arith.constant 0 : index
    %4 = vector.load %arg1[%c0_3, %c0_4, %c0_5] : memref<1x256x128xf32, #tpu.memory_space<vmem>>, vector<1x256x128xf32>
    %5 = vector.shape_cast %4 : vector<1x256x128xf32> to vector<256x128xf32>
    %cst_6 = arith.constant dense<0.000000e+00> : vector<128xf32>
    %6 = vector.multi_reduction <add>, %5, %cst_6 [0] : vector<256x128xf32> to vector<128xf32>
    %7 = vector.shape_cast %6 : vector<128xf32> to vector<1x128xf32>
    %cst_7 = arith.constant 2.560000e+02 : f32
    %8 = vector.broadcast %cst_7 : f32 to vector<1x128xf32>
    %9 = arith.divf %7, %8 : vector<1x128xf32>
    %10 = arith.mulf %5, %5 : vector<256x128xf32>
    %cst_8 = arith.constant dense<0.000000e+00> : vector<128xf32>
    %11 = vector.multi_reduction <add>, %10, %cst_8 [0] : vector<256x128xf32> to vector<128xf32>
    %12 = vector.shape_cast %11 : vector<128xf32> to vector<1x128xf32>
    %cst_9 = arith.constant 2.560000e+02 : f32
    %13 = vector.broadcast %cst_9 : f32 to vector<1x128xf32>
    %14 = arith.divf %12, %13 : vector<1x128xf32>
    %15 = arith.mulf %9, %9 : vector<1x128xf32>
    %16 = arith.subf %14, %15 : vector<1x128xf32>
    %c0_10 = arith.constant 0 : index
    %c0_11 = arith.constant 0 : index
    %c0_12 = arith.constant 0 : index
    %17 = vector.load %arg2[%c0_10, %c0_11, %c0_12] : memref<1x2x128xf32, #tpu.memory_space<vmem>>, vector<1x2x128xf32>
    %18 = vector.shape_cast %17 : vector<1x2x128xf32> to vector<2x128xf32>
    %19 = vector.broadcast %9 : vector<1x128xf32> to vector<256x128xf32>
    %20 = arith.subf %5, %19 : vector<256x128xf32>
    %cst_13 = arith.constant 9.99999974E-6 : f32
    %21 = vector.broadcast %cst_13 : f32 to vector<1x128xf32>
    %22 = arith.addf %16, %21 : vector<1x128xf32>
    %23 = math.rsqrt %22 : vector<1x128xf32>
    %24 = vector.broadcast %23 : vector<1x128xf32> to vector<256x128xf32>
    %25 = arith.mulf %20, %24 : vector<256x128xf32>
    %26 = vector.extract_strided_slice %18 {offsets = [0, 0], sizes = [1, 128], strides = [1, 1]} : vector<2x128xf32> to vector<1x128xf32>
    %cst_14 = arith.constant 1.000000e+00 : f32
    %27 = vector.broadcast %cst_14 : f32 to vector<1x128xf32>
    %28 = arith.addf %27, %26 : vector<1x128xf32>
    %29 = vector.broadcast %28 : vector<1x128xf32> to vector<256x128xf32>
    %30 = arith.mulf %29, %25 : vector<256x128xf32>
    %31 = vector.extract_strided_slice %18 {offsets = [1, 0], sizes = [1, 128], strides = [1, 1]} : vector<2x128xf32> to vector<1x128xf32>
    %32 = vector.broadcast %31 : vector<1x128xf32> to vector<256x128xf32>
    %33 = arith.addf %30, %32 : vector<256x128xf32>
    %cst_15 = arith.constant 2.000000e-01 : f32
    %34 = vector.broadcast %cst_15 : f32 to vector<256x128xf32>
    %35 = arith.mulf %34, %33 : vector<256x128xf32>
    %36 = arith.maximumf %33, %35 : vector<256x128xf32>
    %c24 = arith.constant 24 : index
    %c0_16 = arith.constant 0 : index
    %37 = vector.load %arg11[%c24, %c0_16] : memref<304x128xf32, #tpu.memory_space<vmem>>, vector<256x128xf32>
    tpu.vector_store %arg11[%c24, %c0_16], %36 {strides = array<i32>} : memref<304x128xf32, #tpu.memory_space<vmem>>, vector<256x128xf32>,
    %cst_17 = arith.constant 0.000000e+00 : f32
    %38 = vector.broadcast %cst_17 : f32 to vector<256x128xf32>
    %c7 = arith.constant 7 : index
    %c0_18 = arith.constant 0 : index
    %39 = vector.load %arg11[%c7, %c0_18] : memref<304x128xf32, #tpu.memory_space<vmem>>, vector<256x128xf32>
    %c0_19 = arith.constant 0 : index
    %c0_20 = arith.constant 0 : index
    %40 = vector.load %arg8[%c0_19, %c0_20] : memref<256x9xf32, #tpu.memory_space<vmem>>, vector<256x1xf32>
    %41 = vector.broadcast %40 : vector<256x1xf32> to vector<256x128xf32>
    %42 = arith.mulf %39, %41 : vector<256x128xf32>
    %43 = arith.truncf %42 : vector<256x128xf32> to vector<256x128xbf16>
    %c0_21 = arith.constant 0 : index
    %c0_22 = arith.constant 0 : index
    %c0_23 = arith.constant 0 : index
    %44 = vector.load %arg4[%c0_21, %c0_22, %c0_23] : memref<9x128x128xbf16, #tpu.memory_space<vmem>>, vector<1x128x128xbf16>
    %45 = vector.shape_cast %44 : vector<1x128x128xbf16> to vector<128x128xbf16>
    %cst_24 = arith.constant dense<0.000000e+00> : vector<256x128xf32>
    %46 = tpu.matmul %43, %45, %cst_24 {dimension_numbers = #tpu.dot_dimension_numbers<[1], [0], [0], [1], [0, 0, 1, 1], [], []>} : vector<256x128xbf16>, vector<128x128xbf16>, vector<256x128xf32> -> vector<256x128xf32>
    %47 = arith.addf %38, %46 : vector<256x128xf32>
    %c8 = arith.constant 8 : index
    %c0_25 = arith.constant 0 : index
    %48 = vector.load %arg11[%c8, %c0_25] : memref<304x128xf32, #tpu.memory_space<vmem>>, vector<256x128xf32>
    %49 = arith.truncf %48 : vector<256x128xf32> to vector<256x128xbf16>
    %c1 = arith.constant 1 : index
    %c0_26 = arith.constant 0 : index
    %c0_27 = arith.constant 0 : index
    %50 = vector.load %arg4[%c1, %c0_26, %c0_27] : memref<9x128x128xbf16, #tpu.memory_space<vmem>>, vector<1x128x128xbf16>
    %51 = vector.shape_cast %50 : vector<1x128x128xbf16> to vector<128x128xbf16>
    %cst_28 = arith.constant dense<0.000000e+00> : vector<256x128xf32>
    %52 = tpu.matmul %49, %51, %cst_28 {dimension_numbers = #tpu.dot_dimension_numbers<[1], [0], [0], [1], [0, 0, 1, 1], [], []>} : vector<256x128xbf16>, vector<128x128xbf16>, vector<256x128xf32> -> vector<256x128xf32>
    %53 = arith.addf %47, %52 : vector<256x128xf32>
    %c9 = arith.constant 9 : index
    %c0_29 = arith.constant 0 : index
    %54 = vector.load %arg11[%c9, %c0_29] : memref<304x128xf32, #tpu.memory_space<vmem>>, vector<256x128xf32>
    %c0_30 = arith.constant 0 : index
    %c2 = arith.constant 2 : index
    %55 = vector.load %arg8[%c0_30, %c2] : memref<256x9xf32, #tpu.memory_space<vmem>>, vector<256x1xf32>
    %56 = vector.broadcast %55 : vector<256x1xf32> to vector<256x128xf32>
    %57 = arith.mulf %54, %56 : vector<256x128xf32>
    %58 = arith.truncf %57 : vector<256x128xf32> to vector<256x128xbf16>
    %c2_31 = arith.constant 2 : index
    %c0_32 = arith.constant 0 : index
    %c0_33 = arith.constant 0 : index
    %59 = vector.load %arg4[%c2_31, %c0_32, %c0_33] : memref<9x128x128xbf16, #tpu.memory_space<vmem>>, vector<1x128x128xbf16>
    %60 = vector.shape_cast %59 : vector<1x128x128xbf16> to vector<128x128xbf16>
    %cst_34 = arith.constant dense<0.000000e+00> : vector<256x128xf32>
    %61 = tpu.matmul %58, %60, %cst_34 {dimension_numbers = #tpu.dot_dimension_numbers<[1], [0], [0], [1], [0, 0, 1, 1], [], []>} : vector<256x128xbf16>, vector<128x128xbf16>, vector<256x128xf32> -> vector<256x128xf32>
    %62 = arith.addf %53, %61 : vector<256x128xf32>
    %c23 = arith.constant 23 : index
    %c0_35 = arith.constant 0 : index
    %63 = vector.load %arg11[%c23, %c0_35] : memref<304x128xf32, #tpu.memory_space<vmem>>, vector<256x128xf32>
    %c0_36 = arith.constant 0 : index
    %c3 = arith.constant 3 : index
    %64 = vector.load %arg8[%c0_36, %c3] : memref<256x9xf32, #tpu.memory_space<vmem>>, vector<256x1xf32>
    %65 = vector.broadcast %64 : vector<256x1xf32> to vector<256x128xf32>
    %66 = arith.mulf %63, %65 : vector<256x128xf32>
    %67 = arith.truncf %66 : vector<256x128xf32> to vector<256x128xbf16>
    %c3_37 = arith.constant 3 : index
    %c0_38 = arith.constant 0 : index
    %c0_39 = arith.constant 0 : index
    %68 = vector.load %arg4[%c3_37, %c0_38, %c0_39] : memref<9x128x128xbf16, #tpu.memory_space<vmem>>, vector<1x128x128xbf16>
    %69 = vector.shape_cast %68 : vector<1x128x128xbf16> to vector<128x128xbf16>
    %cst_40 = arith.constant dense<0.000000e+00> : vector<256x128xf32>
    %70 = tpu.matmul %67, %69, %cst_40 {dimension_numbers = #tpu.dot_dimension_numbers<[1], [0], [0], [1], [0, 0, 1, 1], [], []>} : vector<256x128xbf16>, vector<128x128xbf16>, vector<256x128xf32> -> vector<256x128xf32>
    %71 = arith.addf %62, %70 : vector<256x128xf32>
    %c24_41 = arith.constant 24 : index
    %c0_42 = arith.constant 0 : index
    %72 = vector.load %arg11[%c24_41, %c0_42] : memref<304x128xf32, #tpu.memory_space<vmem>>, vector<256x128xf32>
    %73 = arith.truncf %72 : vector<256x128xf32> to vector<256x128xbf16>
    %c4 = arith.constant 4 : index
    %c0_43 = arith.constant 0 : index
    %c0_44 = arith.constant 0 : index
    %74 = vector.load %arg4[%c4, %c0_43, %c0_44] : memref<9x128x128xbf16, #tpu.memory_space<vmem>>, vector<1x128x128xbf16>
    %75 = vector.shape_cast %74 : vector<1x128x128xbf16> to vector<128x128xbf16>
    %cst_45 = arith.constant dense<0.000000e+00> : vector<256x128xf32>
    %76 = tpu.matmul %73, %75, %cst_45 {dimension_numbers = #tpu.dot_dimension_numbers<[1], [0], [0], [1], [0, 0, 1, 1], [], []>} : vector<256x128xbf16>, vector<128x128xbf16>, vector<256x128xf32> -> vector<256x128xf32>
    %77 = arith.addf %71, %76 : vector<256x128xf32>
    %c25 = arith.constant 25 : index
    %c0_46 = arith.constant 0 : index
    %78 = vector.load %arg11[%c25, %c0_46] : memref<304x128xf32, #tpu.memory_space<vmem>>, vector<256x128xf32>
    %c0_47 = arith.constant 0 : index
    %c5 = arith.constant 5 : index
    %79 = vector.load %arg8[%c0_47, %c5] : memref<256x9xf32, #tpu.memory_space<vmem>>, vector<256x1xf32>
    %80 = vector.broadcast %79 : vector<256x1xf32> to vector<256x128xf32>
    %81 = arith.mulf %78, %80 : vector<256x128xf32>
    %82 = arith.truncf %81 : vector<256x128xf32> to vector<256x128xbf16>
    %c5_48 = arith.constant 5 : index
    %c0_49 = arith.constant 0 : index
    %c0_50 = arith.constant 0 : index
    %83 = vector.load %arg4[%c5_48, %c0_49, %c0_50] : memref<9x128x128xbf16, #tpu.memory_space<vmem>>, vector<1x128x128xbf16>
    %84 = vector.shape_cast %83 : vector<1x128x128xbf16> to vector<128x128xbf16>
    %cst_51 = arith.constant dense<0.000000e+00> : vector<256x128xf32>
    %85 = tpu.matmul %82, %84, %cst_51 {dimension_numbers = #tpu.dot_dimension_numbers<[1], [0], [0], [1], [0, 0, 1, 1], [], []>} : vector<256x128xbf16>, vector<128x128xbf16>, vector<256x128xf32> -> vector<256x128xf32>
    %86 = arith.addf %77, %85 : vector<256x128xf32>
    %c39 = arith.constant 39 : index
    %c0_52 = arith.constant 0 : index
    %87 = vector.load %arg11[%c39, %c0_52] : memref<304x128xf32, #tpu.memory_space<vmem>>, vector<256x128xf32>
    %c0_53 = arith.constant 0 : index
    %c6 = arith.constant 6 : index
    %88 = vector.load %arg8[%c0_53, %c6] : memref<256x9xf32, #tpu.memory_space<vmem>>, vector<256x1xf32>
    %89 = vector.broadcast %88 : vector<256x1xf32> to vector<256x128xf32>
    %90 = arith.mulf %87, %89 : vector<256x128xf32>
    %91 = arith.truncf %90 : vector<256x128xf32> to vector<256x128xbf16>
    %c6_54 = arith.constant 6 : index
    %c0_55 = arith.constant 0 : index
    %c0_56 = arith.constant 0 : index
    %92 = vector.load %arg4[%c6_54, %c0_55, %c0_56] : memref<9x128x128xbf16, #tpu.memory_space<vmem>>, vector<1x128x128xbf16>
    %93 = vector.shape_cast %92 : vector<1x128x128xbf16> to vector<128x128xbf16>
    %cst_57 = arith.constant dense<0.000000e+00> : vector<256x128xf32>
    %94 = tpu.matmul %91, %93, %cst_57 {dimension_numbers = #tpu.dot_dimension_numbers<[1], [0], [0], [1], [0, 0, 1, 1], [], []>} : vector<256x128xbf16>, vector<128x128xbf16>, vector<256x128xf32> -> vector<256x128xf32>
    %95 = arith.addf %86, %94 : vector<256x128xf32>
    %c40 = arith.constant 40 : index
    %c0_58 = arith.constant 0 : index
    %96 = vector.load %arg11[%c40, %c0_58] : memref<304x128xf32, #tpu.memory_space<vmem>>, vector<256x128xf32>
    %97 = arith.truncf %96 : vector<256x128xf32> to vector<256x128xbf16>
    %c7_59 = arith.constant 7 : index
    %c0_60 = arith.constant 0 : index
    %c0_61 = arith.constant 0 : index
    %98 = vector.load %arg4[%c7_59, %c0_60, %c0_61] : memref<9x128x128xbf16, #tpu.memory_space<vmem>>, vector<1x128x128xbf16>
    %99 = vector.shape_cast %98 : vector<1x128x128xbf16> to vector<128x128xbf16>
    %cst_62 = arith.constant dense<0.000000e+00> : vector<256x128xf32>
    %100 = tpu.matmul %97, %99, %cst_62 {dimension_numbers = #tpu.dot_dimension_numbers<[1], [0], [0], [1], [0, 0, 1, 1], [], []>} : vector<256x128xbf16>, vector<128x128xbf16>, vector<256x128xf32> -> vector<256x128xf32>
    %101 = arith.addf %95, %100 : vector<256x128xf32>
    %c41 = arith.constant 41 : index
    %c0_63 = arith.constant 0 : index
    %102 = vector.load %arg11[%c41, %c0_63] : memref<304x128xf32, #tpu.memory_space<vmem>>, vector<256x128xf32>
    %c0_64 = arith.constant 0 : index
    %c8_65 = arith.constant 8 : index
    %103 = vector.load %arg8[%c0_64, %c8_65] : memref<256x9xf32, #tpu.memory_space<vmem>>, vector<256x1xf32>
    %104 = vector.broadcast %103 : vector<256x1xf32> to vector<256x128xf32>
    %105 = arith.mulf %102, %104 : vector<256x128xf32>
    %106 = arith.truncf %105 : vector<256x128xf32> to vector<256x128xbf16>
    %c8_66 = arith.constant 8 : index
    %c0_67 = arith.constant 0 : index
    %c0_68 = arith.constant 0 : index
    %107 = vector.load %arg4[%c8_66, %c0_67, %c0_68] : memref<9x128x128xbf16, #tpu.memory_space<vmem>>, vector<1x128x128xbf16>
    %108 = vector.shape_cast %107 : vector<1x128x128xbf16> to vector<128x128xbf16>
    %cst_69 = arith.constant dense<0.000000e+00> : vector<256x128xf32>
    %109 = tpu.matmul %106, %108, %cst_69 {dimension_numbers = #tpu.dot_dimension_numbers<[1], [0], [0], [1], [0, 0, 1, 1], [], []>} : vector<256x128xbf16>, vector<128x128xbf16>, vector<256x128xf32> -> vector<256x128xf32>
    %110 = arith.addf %101, %109 : vector<256x128xf32>
    %c0_70 = arith.constant 0 : index
    %c0_71 = arith.constant 0 : index
    %111 = vector.load %arg5[%c0_70, %c0_71] : memref<1x128xf32, #tpu.memory_space<vmem>>, vector<1x128xf32>
    %112 = vector.broadcast %111 : vector<1x128xf32> to vector<256x128xf32>
    %113 = arith.addf %110, %112 : vector<256x128xf32>
    %cst_72 = arith.constant dense<0.000000e+00> : vector<128xf32>
    %114 = vector.multi_reduction <add>, %113, %cst_72 [0] : vector<256x128xf32> to vector<128xf32>
    %115 = vector.shape_cast %114 : vector<128xf32> to vector<1x128xf32>
    %cst_73 = arith.constant 2.560000e+02 : f32
    %116 = vector.broadcast %cst_73 : f32 to vector<1x128xf32>
    %117 = arith.divf %115, %116 : vector<1x128xf32>
    %118 = arith.mulf %113, %113 : vector<256x128xf32>
    %cst_74 = arith.constant dense<0.000000e+00> : vector<128xf32>
    %119 = vector.multi_reduction <add>, %118, %cst_74 [0] : vector<256x128xf32> to vector<128xf32>
    %120 = vector.shape_cast %119 : vector<128xf32> to vector<1x128xf32>
    %cst_75 = arith.constant 2.560000e+02 : f32
    %121 = vector.broadcast %cst_75 : f32 to vector<1x128xf32>
    %122 = arith.divf %120, %121 : vector<1x128xf32>
    %123 = arith.mulf %117, %117 : vector<1x128xf32>
    %124 = arith.subf %122, %123 : vector<1x128xf32>
    %c0_76 = arith.constant 0 : index
    %c0_77 = arith.constant 0 : index
    %c0_78 = arith.constant 0 : index
    %125 = vector.load %arg3[%c0_76, %c0_77, %c0_78] : memref<1x2x128xf32, #tpu.memory_space<vmem>>, vector<1x2x128xf32>
    %126 = vector.shape_cast %125 : vector<1x2x128xf32> to vector<2x128xf32>
    %127 = vector.broadcast %117 : vector<1x128xf32> to vector<256x128xf32>
    %128 = arith.subf %113, %127 : vector<256x128xf32>
    %cst_79 = arith.constant 9.99999974E-6 : f32
    %129 = vector.broadcast %cst_79 : f32 to vector<1x128xf32>
    %130 = arith.addf %124, %129 : vector<1x128xf32>
    %131 = math.rsqrt %130 : vector<1x128xf32>
    %132 = vector.broadcast %131 : vector<1x128xf32> to vector<256x128xf32>
    %133 = arith.mulf %128, %132 : vector<256x128xf32>
    %134 = vector.extract_strided_slice %126 {offsets = [0, 0], sizes = [1, 128], strides = [1, 1]} : vector<2x128xf32> to vector<1x128xf32>
    %cst_80 = arith.constant 1.000000e+00 : f32
    %135 = vector.broadcast %cst_80 : f32 to vector<1x128xf32>
    %136 = arith.addf %135, %134 : vector<1x128xf32>
    %137 = vector.broadcast %136 : vector<1x128xf32> to vector<256x128xf32>
    %138 = arith.mulf %137, %133 : vector<256x128xf32>
    %139 = vector.extract_strided_slice %126 {offsets = [1, 0], sizes = [1, 128], strides = [1, 1]} : vector<2x128xf32> to vector<1x128xf32>
    %140 = vector.broadcast %139 : vector<1x128xf32> to vector<256x128xf32>
    %141 = arith.addf %138, %140 : vector<256x128xf32>
    %cst_81 = arith.constant 2.000000e-01 : f32
    %142 = vector.broadcast %cst_81 : f32 to vector<256x128xf32>
    %143 = arith.mulf %142, %141 : vector<256x128xf32>
    %144 = arith.maximumf %141, %143 : vector<256x128xf32>
    %c24_82 = arith.constant 24 : index
    %c0_83 = arith.constant 0 : index
    %145 = vector.load %arg11[%c24_82, %c0_83] : memref<304x128xf32, #tpu.memory_space<vmem>>, vector<256x128xf32>
    tpu.vector_store %arg11[%c24_82, %c0_83], %144 {strides = array<i32>} : memref<304x128xf32, #tpu.memory_space<vmem>>, vector<256x128xf32>,
    %cst_84 = arith.constant 0.000000e+00 : f32
    %146 = vector.broadcast %cst_84 : f32 to vector<256x128xf32>
    %c7_85 = arith.constant 7 : index
    %c0_86 = arith.constant 0 : index
    %147 = vector.load %arg11[%c7_85, %c0_86] : memref<304x128xf32, #tpu.memory_space<vmem>>, vector<256x128xf32>
    %c0_87 = arith.constant 0 : index
    %c0_88 = arith.constant 0 : index
    %148 = vector.load %arg8[%c0_87, %c0_88] : memref<256x9xf32, #tpu.memory_space<vmem>>, vector<256x1xf32>
    %149 = vector.broadcast %148 : vector<256x1xf32> to vector<256x128xf32>
    %150 = arith.mulf %147, %149 : vector<256x128xf32>
    %151 = arith.truncf %150 : vector<256x128xf32> to vector<256x128xbf16>
    %c0_89 = arith.constant 0 : index
    %c0_90 = arith.constant 0 : index
    %c0_91 = arith.constant 0 : index
    %152 = vector.load %arg6[%c0_89, %c0_90, %c0_91] : memref<9x128x128xbf16, #tpu.memory_space<vmem>>, vector<1x128x128xbf16>
    %153 = vector.shape_cast %152 : vector<1x128x128xbf16> to vector<128x128xbf16>
    %cst_92 = arith.constant dense<0.000000e+00> : vector<256x128xf32>
    %154 = tpu.matmul %151, %153, %cst_92 {dimension_numbers = #tpu.dot_dimension_numbers<[1], [0], [0], [1], [0, 0, 1, 1], [], []>} : vector<256x128xbf16>, vector<128x128xbf16>, vector<256x128xf32> -> vector<256x128xf32>
    %155 = arith.addf %146, %154 : vector<256x128xf32>
    %c8_93 = arith.constant 8 : index
    %c0_94 = arith.constant 0 : index
    %156 = vector.load %arg11[%c8_93, %c0_94] : memref<304x128xf32, #tpu.memory_space<vmem>>, vector<256x128xf32>
    %157 = arith.truncf %156 : vector<256x128xf32> to vector<256x128xbf16>
    %c1_95 = arith.constant 1 : index
    %c0_96 = arith.constant 0 : index
    %c0_97 = arith.constant 0 : index
    %158 = vector.load %arg6[%c1_95, %c0_96, %c0_97] : memref<9x128x128xbf16, #tpu.memory_space<vmem>>, vector<1x128x128xbf16>
    %159 = vector.shape_cast %158 : vector<1x128x128xbf16> to vector<128x128xbf16>
    %cst_98 = arith.constant dense<0.000000e+00> : vector<256x128xf32>
    %160 = tpu.matmul %157, %159, %cst_98 {dimension_numbers = #tpu.dot_dimension_numbers<[1], [0], [0], [1], [0, 0, 1, 1], [], []>} : vector<256x128xbf16>, vector<128x128xbf16>, vector<256x128xf32> -> vector<256x128xf32>
    %161 = arith.addf %155, %160 : vector<256x128xf32>
    %c9_99 = arith.constant 9 : index
    %c0_100 = arith.constant 0 : index
    %162 = vector.load %arg11[%c9_99, %c0_100] : memref<304x128xf32, #tpu.memory_space<vmem>>, vector<256x128xf32>
    %c0_101 = arith.constant 0 : index
    %c2_102 = arith.constant 2 : index
    %163 = vector.load %arg8[%c0_101, %c2_102] : memref<256x9xf32, #tpu.memory_space<vmem>>, vector<256x1xf32>
    %164 = vector.broadcast %163 : vector<256x1xf32> to vector<256x128xf32>
    %165 = arith.mulf %162, %164 : vector<256x128xf32>
    %166 = arith.truncf %165 : vector<256x128xf32> to vector<256x128xbf16>
    %c2_103 = arith.constant 2 : index
    %c0_104 = arith.constant 0 : index
    %c0_105 = arith.constant 0 : index
    %167 = vector.load %arg6[%c2_103, %c0_104, %c0_105] : memref<9x128x128xbf16, #tpu.memory_space<vmem>>, vector<1x128x128xbf16>
    %168 = vector.shape_cast %167 : vector<1x128x128xbf16> to vector<128x128xbf16>
    %cst_106 = arith.constant dense<0.000000e+00> : vector<256x128xf32>
    %169 = tpu.matmul %166, %168, %cst_106 {dimension_numbers = #tpu.dot_dimension_numbers<[1], [0], [0], [1], [0, 0, 1, 1], [], []>} : vector<256x128xbf16>, vector<128x128xbf16>, vector<256x128xf32> -> vector<256x128xf32>
    %170 = arith.addf %161, %169 : vector<256x128xf32>
    %c23_107 = arith.constant 23 : index
    %c0_108 = arith.constant 0 : index
    %171 = vector.load %arg11[%c23_107, %c0_108] : memref<304x128xf32, #tpu.memory_space<vmem>>, vector<256x128xf32>
    %c0_109 = arith.constant 0 : index
    %c3_110 = arith.constant 3 : index
    %172 = vector.load %arg8[%c0_109, %c3_110] : memref<256x9xf32, #tpu.memory_space<vmem>>, vector<256x1xf32>
    %173 = vector.broadcast %172 : vector<256x1xf32> to vector<256x128xf32>
    %174 = arith.mulf %171, %173 : vector<256x128xf32>
    %175 = arith.truncf %174 : vector<256x128xf32> to vector<256x128xbf16>
    %c3_111 = arith.constant 3 : index
    %c0_112 = arith.constant 0 : index
    %c0_113 = arith.constant 0 : index
    %176 = vector.load %arg6[%c3_111, %c0_112, %c0_113] : memref<9x128x128xbf16, #tpu.memory_space<vmem>>, vector<1x128x128xbf16>
    %177 = vector.shape_cast %176 : vector<1x128x128xbf16> to vector<128x128xbf16>
    %cst_114 = arith.constant dense<0.000000e+00> : vector<256x128xf32>
    %178 = tpu.matmul %175, %177, %cst_114 {dimension_numbers = #tpu.dot_dimension_numbers<[1], [0], [0], [1], [0, 0, 1, 1], [], []>} : vector<256x128xbf16>, vector<128x128xbf16>, vector<256x128xf32> -> vector<256x128xf32>
    %179 = arith.addf %170, %178 : vector<256x128xf32>
    %c24_115 = arith.constant 24 : index
    %c0_116 = arith.constant 0 : index
    %180 = vector.load %arg11[%c24_115, %c0_116] : memref<304x128xf32, #tpu.memory_space<vmem>>, vector<256x128xf32>
    %181 = arith.truncf %180 : vector<256x128xf32> to vector<256x128xbf16>
    %c4_117 = arith.constant 4 : index
    %c0_118 = arith.constant 0 : index
    %c0_119 = arith.constant 0 : index
    %182 = vector.load %arg6[%c4_117, %c0_118, %c0_119] : memref<9x128x128xbf16, #tpu.memory_space<vmem>>, vector<1x128x128xbf16>
    %183 = vector.shape_cast %182 : vector<1x128x128xbf16> to vector<128x128xbf16>
    %cst_120 = arith.constant dense<0.000000e+00> : vector<256x128xf32>
    %184 = tpu.matmul %181, %183, %cst_120 {dimension_numbers = #tpu.dot_dimension_numbers<[1], [0], [0], [1], [0, 0, 1, 1], [], []>} : vector<256x128xbf16>, vector<128x128xbf16>, vector<256x128xf32> -> vector<256x128xf32>
    %185 = arith.addf %179, %184 : vector<256x128xf32>
    %c25_121 = arith.constant 25 : index
    %c0_122 = arith.constant 0 : index
    %186 = vector.load %arg11[%c25_121, %c0_122] : memref<304x128xf32, #tpu.memory_space<vmem>>, vector<256x128xf32>
    %c0_123 = arith.constant 0 : index
    %c5_124 = arith.constant 5 : index
    %187 = vector.load %arg8[%c0_123, %c5_124] : memref<256x9xf32, #tpu.memory_space<vmem>>, vector<256x1xf32>
    %188 = vector.broadcast %187 : vector<256x1xf32> to vector<256x128xf32>
    %189 = arith.mulf %186, %188 : vector<256x128xf32>
    %190 = arith.truncf %189 : vector<256x128xf32> to vector<256x128xbf16>
    %c5_125 = arith.constant 5 : index
    %c0_126 = arith.constant 0 : index
    %c0_127 = arith.constant 0 : index
    %191 = vector.load %arg6[%c5_125, %c0_126, %c0_127] : memref<9x128x128xbf16, #tpu.memory_space<vmem>>, vector<1x128x128xbf16>
    %192 = vector.shape_cast %191 : vector<1x128x128xbf16> to vector<128x128xbf16>
    %cst_128 = arith.constant dense<0.000000e+00> : vector<256x128xf32>
    %193 = tpu.matmul %190, %192, %cst_128 {dimension_numbers = #tpu.dot_dimension_numbers<[1], [0], [0], [1], [0, 0, 1, 1], [], []>} : vector<256x128xbf16>, vector<128x128xbf16>, vector<256x128xf32> -> vector<256x128xf32>
    %194 = arith.addf %185, %193 : vector<256x128xf32>
    %c39_129 = arith.constant 39 : index
    %c0_130 = arith.constant 0 : index
    %195 = vector.load %arg11[%c39_129, %c0_130] : memref<304x128xf32, #tpu.memory_space<vmem>>, vector<256x128xf32>
    %c0_131 = arith.constant 0 : index
    %c6_132 = arith.constant 6 : index
    %196 = vector.load %arg8[%c0_131, %c6_132] : memref<256x9xf32, #tpu.memory_space<vmem>>, vector<256x1xf32>
    %197 = vector.broadcast %196 : vector<256x1xf32> to vector<256x128xf32>
    %198 = arith.mulf %195, %197 : vector<256x128xf32>
    %199 = arith.truncf %198 : vector<256x128xf32> to vector<256x128xbf16>
    %c6_133 = arith.constant 6 : index
    %c0_134 = arith.constant 0 : index
    %c0_135 = arith.constant 0 : index
    %200 = vector.load %arg6[%c6_133, %c0_134, %c0_135] : memref<9x128x128xbf16, #tpu.memory_space<vmem>>, vector<1x128x128xbf16>
    %201 = vector.shape_cast %200 : vector<1x128x128xbf16> to vector<128x128xbf16>
    %cst_136 = arith.constant dense<0.000000e+00> : vector<256x128xf32>
    %202 = tpu.matmul %199, %201, %cst_136 {dimension_numbers = #tpu.dot_dimension_numbers<[1], [0], [0], [1], [0, 0, 1, 1], [], []>} : vector<256x128xbf16>, vector<128x128xbf16>, vector<256x128xf32> -> vector<256x128xf32>
    %203 = arith.addf %194, %202 : vector<256x128xf32>
    %c40_137 = arith.constant 40 : index
    %c0_138 = arith.constant 0 : index
    %204 = vector.load %arg11[%c40_137, %c0_138] : memref<304x128xf32, #tpu.memory_space<vmem>>, vector<256x128xf32>
    %205 = arith.truncf %204 : vector<256x128xf32> to vector<256x128xbf16>
    %c7_139 = arith.constant 7 : index
    %c0_140 = arith.constant 0 : index
    %c0_141 = arith.constant 0 : index
    %206 = vector.load %arg6[%c7_139, %c0_140, %c0_141] : memref<9x128x128xbf16, #tpu.memory_space<vmem>>, vector<1x128x128xbf16>
    %207 = vector.shape_cast %206 : vector<1x128x128xbf16> to vector<128x128xbf16>
    %cst_142 = arith.constant dense<0.000000e+00> : vector<256x128xf32>
    %208 = tpu.matmul %205, %207, %cst_142 {dimension_numbers = #tpu.dot_dimension_numbers<[1], [0], [0], [1], [0, 0, 1, 1], [], []>} : vector<256x128xbf16>, vector<128x128xbf16>, vector<256x128xf32> -> vector<256x128xf32>
    %209 = arith.addf %203, %208 : vector<256x128xf32>
    %c41_143 = arith.constant 41 : index
    %c0_144 = arith.constant 0 : index
    %210 = vector.load %arg11[%c41_143, %c0_144] : memref<304x128xf32, #tpu.memory_space<vmem>>, vector<256x128xf32>
    %c0_145 = arith.constant 0 : index
    %c8_146 = arith.constant 8 : index
    %211 = vector.load %arg8[%c0_145, %c8_146] : memref<256x9xf32, #tpu.memory_space<vmem>>, vector<256x1xf32>
    %212 = vector.broadcast %211 : vector<256x1xf32> to vector<256x128xf32>
    %213 = arith.mulf %210, %212 : vector<256x128xf32>
    %214 = arith.truncf %213 : vector<256x128xf32> to vector<256x128xbf16>
    %c8_147 = arith.constant 8 : index
    %c0_148 = arith.constant 0 : index
    %c0_149 = arith.constant 0 : index
    %215 = vector.load %arg6[%c8_147, %c0_148, %c0_149] : memref<9x128x128xbf16, #tpu.memory_space<vmem>>, vector<1x128x128xbf16>
    %216 = vector.shape_cast %215 : vector<1x128x128xbf16> to vector<128x128xbf16>
    %cst_150 = arith.constant dense<0.000000e+00> : vector<256x128xf32>
    %217 = tpu.matmul %214, %216, %cst_150 {dimension_numbers = #tpu.dot_dimension_numbers<[1], [0], [0], [1], [0, 0, 1, 1], [], []>} : vector<256x128xbf16>, vector<128x128xbf16>, vector<256x128xf32> -> vector<256x128xf32>
    %218 = arith.addf %209, %217 : vector<256x128xf32>
    %c0_151 = arith.constant 0 : index
    %c0_152 = arith.constant 0 : index
    %219 = vector.load %arg7[%c0_151, %c0_152] : memref<1x128xf32, #tpu.memory_space<vmem>>, vector<1x128xf32>
    %220 = vector.broadcast %219 : vector<1x128xf32> to vector<256x128xf32>
    %221 = arith.addf %218, %220 : vector<256x128xf32>
    %c0_153 = arith.constant 0 : index
    %c0_154 = arith.constant 0 : index
    %c0_155 = arith.constant 0 : index
    %222 = vector.load %arg1[%c0_153, %c0_154, %c0_155] : memref<1x256x128xf32, #tpu.memory_space<vmem>>, vector<1x256x128xf32>
    %223 = vector.shape_cast %222 : vector<1x256x128xf32> to vector<256x128xf32>
    %224 = arith.truncf %223 : vector<256x128xf32> to vector<256x128xbf16>
    %c0_156 = arith.constant 0 : index
    %c0_157 = arith.constant 0 : index
    %225 = vector.load %arg9[%c0_156, %c0_157] : memref<128x128xbf16, #tpu.memory_space<vmem>>, vector<128x128xbf16>
    %cst_158 = arith.constant dense<0.000000e+00> : vector<256x128xf32>
    %226 = tpu.matmul %224, %225, %cst_158 {dimension_numbers = #tpu.dot_dimension_numbers<[1], [0], [0], [1], [0, 0, 1, 1], [], []>} : vector<256x128xbf16>, vector<128x128xbf16>, vector<256x128xf32> -> vector<256x128xf32>
    %227 = arith.addf %221, %226 : vector<256x128xf32>
    %cst_159 = arith.constant 0.707106769 : f32
    %228 = vector.broadcast %cst_159 : f32 to vector<256x128xf32>
    %229 = arith.mulf %227, %228 : vector<256x128xf32>
    %c0_160 = arith.constant 0 : index
    %c0_161 = arith.constant 0 : index
    %c0_162 = arith.constant 0 : index
    %230 = vector.load %arg10[%c0_160, %c0_161, %c0_162] : memref<1x256x128xf32, #tpu.memory_space<vmem>>, vector<1x256x128xf32>
    %231 = vector.shape_cast %230 : vector<1x256x128xf32> to vector<256x128xf32>
    %232 = vector.shape_cast %229 : vector<256x128xf32> to vector<1x256x128xf32>
    tpu.vector_store %arg10[%c0_160, %c0_161, %c0_162], %232 {strides = array<i32>} : memref<1x256x128xf32, #tpu.memory_space<vmem>>, vector<1x256x128xf32>,
    return
  }
  func.func @transform_0(%arg0: i32) -> (i32, i32, i32) {
    %c0_i32 = arith.constant 0 : i32
    %c0_i32_0 = arith.constant 0 : i32
    %c0_i32_1 = arith.constant 0 : i32
    return %arg0, %c0_i32, %c0_i32_0 : i32, i32, i32
  }
  func.func @transform_1(%arg0: i32) -> (i32, i32, i32) {
    %c0_i32 = arith.constant 0 : i32
    %c0_i32_0 = arith.constant 0 : i32
    %c0_i32_1 = arith.constant 0 : i32
    return %arg0, %c0_i32, %c0_i32_0 : i32, i32, i32
  }
  func.func @transform_2(%arg0: i32) -> (i32, i32, i32) {
    %c0_i32 = arith.constant 0 : i32
    %c0_i32_0 = arith.constant 0 : i32
    %c0_i32_1 = arith.constant 0 : i32
    return %arg0, %c0_i32, %c0_i32_0 : i32, i32, i32
  }
  func.func @transform_3(%arg0: i32) -> (i32, i32, i32) {
    %c0_i32 = arith.constant 0 : i32
    %c0_i32_0 = arith.constant 0 : i32
    %c0_i32_1 = arith.constant 0 : i32
    %c0_i32_2 = arith.constant 0 : i32
    return %c0_i32, %c0_i32_0, %c0_i32_1 : i32, i32, i32
  }
  func.func @transform_4(%arg0: i32) -> (i32, i32) {
    %c0_i32 = arith.constant 0 : i32
    %c0_i32_0 = arith.constant 0 : i32
    %c0_i32_1 = arith.constant 0 : i32
    return %c0_i32, %c0_i32_0 : i32, i32
  }
  func.func @transform_5(%arg0: i32) -> (i32, i32, i32) {
    %c0_i32 = arith.constant 0 : i32
    %c0_i32_0 = arith.constant 0 : i32
    %c0_i32_1 = arith.constant 0 : i32
    %c0_i32_2 = arith.constant 0 : i32
    return %c0_i32, %c0_i32_0, %c0_i32_1 : i32, i32, i32
  }
  func.func @transform_6(%arg0: i32) -> (i32, i32) {
    %c0_i32 = arith.constant 0 : i32
    %c0_i32_0 = arith.constant 0 : i32
    %c0_i32_1 = arith.constant 0 : i32
    return %c0_i32, %c0_i32_0 : i32, i32
  }
  func.func @transform_7(%arg0: i32) -> (i32, i32) {
    %c0_i32 = arith.constant 0 : i32
    %c0_i32_0 = arith.constant 0 : i32
    %c0_i32_1 = arith.constant 0 : i32
    return %c0_i32, %c0_i32_0 : i32, i32
  }
  func.func @transform_8(%arg0: i32) -> (i32, i32) {
    %c0_i32 = arith.constant 0 : i32
    %c0_i32_0 = arith.constant 0 : i32
    %c0_i32_1 = arith.constant 0 : i32
    return %c0_i32, %c0_i32_0 : i32, i32
  }
  func.func @transform_9(%arg0: i32) -> (i32, i32, i32) {
    %c0_i32 = arith.constant 0 : i32
    %c0_i32_0 = arith.constant 0 : i32
    %c0_i32_1 = arith.constant 0 : i32
    return %arg0, %c0_i32, %c0_i32_0 : i32, i32, i32
  }
}

</mosaic_0001>

<llo_original>
// kernel: tpu_custom_call.1
$region0: #{tpu_custom_call.1}
  #allocation0 [shape = 'u32[]', space=smem, size = 0x4, offset = 0x4, fixed_abs, tag = 'smem constant byte address 0x4 - core index']
  #allocation1 [shape = 'u32[144,128]{1,0:T(1,128)}', space=vmem, size = 0x12000, scoped, tag = 'internal scratch']
  #allocation2 [shape = 'f32[304,128]{1,0:T(8,128)}', space=vmem, size = 0x26000, scoped, tag = 'scratch operand']
  %s0 = inlined_call_operand.hbm [shape: f32[2,256,128], index: 0, kind: input, shape index: {}]
  %s1 = inlined_call_operand.vmem [shape: f32[2,2,128], index: 1, kind: input, shape index: {}]
  %s2 = inlined_call_operand.vmem [shape: f32[2,2,128], index: 2, kind: input, shape index: {}]
  %s3 = inlined_call_operand.hbm [shape: bf16[9,128,128], index: 3, kind: input, shape index: {}]
  %s4 = inlined_call_operand.vmem [shape: f32[1,128], index: 4, kind: input, shape index: {}]
  %s5 = inlined_call_operand.hbm [shape: bf16[9,128,128], index: 5, kind: input, shape index: {}]
  %s6 = inlined_call_operand.vmem [shape: f32[1,128], index: 6, kind: input, shape index: {}]
  %s7 = inlined_call_operand.vmem [shape: f32[256,9], index: 7, kind: input, shape index: {}]
  %s8 = inlined_call_operand.vmem [shape: bf16[128,128], index: 8, kind: input, shape index: {}]
  %s9 = inlined_call_operand.hbm [shape: f32[2,256,128], index: 9, kind: output, shape index: {}]
  %s10 = sld [smem:[#allocation0]]
  $region81: #{tpu_custom_call.1} parent=0
    _
  %s12 = ssub.s32 1, %s10
  %s13 = scalar_select 0, %s12, %s10
  $region1: #{tpu_custom_call.1} parent=0
    #allocation3 [shape = 'u8[262144]{0}', space=vmem, size = 0x40000, scoped, tag = 'input window, operand 0']
    #allocation4 [shape = 's32[2]{0}', space=sflag, size = 0x8, scoped, tag = 'scoped memory for tpu_custom_call.1']
    #allocation5 [shape = 's32[2]{0}', space=sflag, size = 0x8, scoped, tag = 'scoped memory for tpu_custom_call.1']
    #allocation6 [shape = 'u8[294912]{0}', space=vmem, size = 0x48000, scoped, tag = 'input window, operand 3, single buffered']
    #allocation7 [shape = 's32[1]{0}', space=sflag, size = 0x4, scoped, tag = 'scoped memory for tpu_custom_call.1']
    #allocation8 [shape = 'u8[294912]{0}', space=vmem, size = 0x48000, scoped, tag = 'input window, operand 5, single buffered']
    #allocation9 [shape = 'u8[262144]{0}', space=vmem, size = 0x40000, scoped, tag = 'output window, operand 0']
    %14 = vsyncpa [#allocation4], 0
    %s15 = scalar_lea.sflag [#allocation4], 1
    %16 = vsyncpa %s15, 0
    %17 = vsyncpa [#allocation7], 0
    %18 = vsyncpa [#allocation5], 0
    %s19 = scalar_lea.sflag [#allocation5], 1
    %20 = vsyncpa %s19, 0
    loop: start=0, step=1, limit=4
    $region2: #{tpu_custom_call.1} parent=1 // loop_pre_header
      _
    $region3: #{tpu_custom_call.1} parent=1 // loop_header
      %s22 = sphi 0, %s26
      %p23 = scmp.ge.s32.totalorder %s22, 4
      %s32 = sphi 0, %s34
      %s35 = sphi 0, %s32
      %s36 = sphi 0, %s35
      %s52 = sphi 0, %s36
      %s58 = sphi 0, %s60
      %s61 = sphi 0, %s58
      %s62 = sphi 0, %s61
      %s78 = sphi 0, %s62
      %s84 = sphi 0, %s86
      %s87 = sphi 0, %s84
      %s88 = sphi 0, %s87
      %s104 = sphi 0, %s88
      %s108 = sphi 0, %s108
      %s110 = sphi 0, %s108
      %s111 = sphi 0, %s110
      %s125 = sphi 0, %s111
      %s129 = sphi 0, %s129
      %s131 = sphi 0, %s129
      %s132 = sphi 0, %s131
      %s146 = sphi 0, %s132
      %s150 = sphi 0, %s150
      %s152 = sphi 0, %s150
      %s153 = sphi 0, %s152
      %s167 = sphi 0, %s153
      %s171 = sphi 0, %s171
      %s173 = sphi 0, %s171
      %s174 = sphi 0, %s173
      %s188 = sphi 0, %s174
      %s192 = sphi 0, %s192
      %s194 = sphi 0, %s192
      %s195 = sphi 0, %s194
      %s209 = sphi 0, %s195
      %s213 = sphi 0, %s213
      %s215 = sphi 0, %s213
      %s216 = sphi 0, %s215
      %s230 = sphi 0, %s216
      %s236 = sphi 0, %s238
      %s239 = sphi 0, %s236
      %s240 = sphi 0, %s239
      %s256 = sphi 0, %s240
    $region4: #{tpu_custom_call.1} parent=1 // loop_header_branch
      %25 = sbr.rel (%p23) target = $region8
    $region5: #{tpu_custom_call.1} parent=1 // loop_body
      %s27 = ssub.s32 %s22, 1
      %s28 = ssub.s32 %s22, 2
      %s29 = sadd.s32 %s22, 1
      %s30 = ssub.s32 %s22, %s29
      %p31 = scmp.eq.s32.totalorder %s30, 0
      %s33 = sadd.s32 %s32, 1
      %s34 = scalar_select %p31, %s32, %s33
      %p37 = pneg %p31
      %p38 = scmp.eq.s32.totalorder %s22, 1
      %p39 = por %p37, %p38
      %p40 = scmp.ne.s32.totalorder %s32, %s35
      %p41 = scmp.eq.s32.totalorder %s22, 0
      %p42 = por %p40, %p41
      %p43 = scmp.ne.s32.totalorder %s32, %s35
      %p44 = scmp.eq.s32.totalorder %s27, 1
      %p45 = por %p43, %p44
      %p46 = scmp.ne.s32.totalorder %s35, %s36
      %p47 = scmp.eq.s32.totalorder %s27, 0
      %p48 = por %p46, %p47
      %p49 = scmp.ne.s32.totalorder %s35, %s36
      %p50 = scmp.eq.s32.totalorder %s28, 1
      %p51 = por %p49, %p50
      %p53 = scmp.ne.s32.totalorder %s36, %s52
      %p54 = scmp.eq.s32.totalorder %s28, 0
      %p55 = por %p53, %p54
      %s56 = ssub.s32 %s22, %s29
      %p57 = scmp.eq.s32.totalorder %s56, 0
      %s59 = sadd.s32 %s58, 1
      %s60 = scalar_select %p57, %s58, %s59
      %p63 = pneg %p57
      %p64 = scmp.eq.s32.totalorder %s22, 1
      %p65 = por %p63, %p64
      %p66 = scmp.ne.s32.totalorder %s58, %s61
      %p67 = scmp.eq.s32.totalorder %s22, 0
      %p68 = por %p66, %p67
      %p69 = scmp.ne.s32.totalorder %s58, %s61
      %p70 = scmp.eq.s32.totalorder %s27, 1
      %p71 = por %p69, %p70
      %p72 = scmp.ne.s32.totalorder %s61, %s62
      %p73 = scmp.eq.s32.totalorder %s27, 0
      %p74 = por %p72, %p73
      %p75 = scmp.ne.s32.totalorder %s61, %s62
      %p76 = scmp.eq.s32.totalorder %s28, 1
      %p77 = por %p75, %p76
      %p79 = scmp.ne.s32.totalorder %s62, %s78
      %p80 = scmp.eq.s32.totalorder %s28, 0
      %p81 = por %p79, %p80
      %s82 = ssub.s32 %s22, %s29
      %p83 = scmp.eq.s32.totalorder %s82, 0
      %s85 = sadd.s32 %s84, 1
      %s86 = scalar_select %p83, %s84, %s85
      %p89 = pneg %p83
      %p90 = scmp.eq.s32.totalorder %s22, 1
      %p91 = por %p89, %p90
      %p92 = scmp.ne.s32.totalorder %s84, %s87
      %p93 = scmp.eq.s32.totalorder %s22, 0
      %p94 = por %p92, %p93
      %p95 = scmp.ne.s32.totalorder %s84, %s87
      %p96 = scmp.eq.s32.totalorder %s27, 1
      %p97 = por %p95, %p96
      %p98 = scmp.ne.s32.totalorder %s87, %s88
      %p99 = scmp.eq.s32.totalorder %s27, 0
      %p100 = por %p98, %p99
      %p101 = scmp.ne.s32.totalorder %s87, %s88
      %p102 = scmp.eq.s32.totalorder %s28, 1
      %p103 = por %p101, %p102
      %p105 = scmp.ne.s32.totalorder %s88, %s104
      %p106 = scmp.eq.s32.totalorder %s28, 0
      %p107 = por %p105, %p106
      %s109 = sadd.s32 %s108, 1
      %p112 = scmp.eq.s32.totalorder %s22, 1
      %p113 = scmp.ne.s32.totalorder %s108, %s110
      %p114 = scmp.eq.s32.totalorder %s22, 0
      %p115 = por %p113, %p114
      %p116 = scmp.ne.s32.totalorder %s108, %s110
      %p117 = scmp.eq.s32.totalorder %s27, 1
      %p118 = por %p116, %p117
      %p119 = scmp.ne.s32.totalorder %s110, %s111
      %p120 = scmp.eq.s32.totalorder %s27, 0
      %p121 = por %p119, %p120
      %p122 = scmp.ne.s32.totalorder %s110, %s111
      %p123 = scmp.eq.s32.totalorder %s28, 1
      %p124 = por %p122, %p123
      %p126 = scmp.ne.s32.totalorder %s111, %s125
      %p127 = scmp.eq.s32.totalorder %s28, 0
      %p128 = por %p126, %p127
      %s130 = sadd.s32 %s129, 1
      %p133 = scmp.eq.s32.totalorder %s22, 1
      %p134 = scmp.ne.s32.totalorder %s129, %s131
      %p135 = scmp.eq.s32.totalorder %s22, 0
      %p136 = por %p134, %p135
      %p137 = scmp.ne.s32.totalorder %s129, %s131
      %p138 = scmp.eq.s32.totalorder %s27, 1
      %p139 = por %p137, %p138
      %p140 = scmp.ne.s32.totalorder %s131, %s132
      %p141 = scmp.eq.s32.totalorder %s27, 0
      %p142 = por %p140, %p141
      %p143 = scmp.ne.s32.totalorder %s131, %s132
      %p144 = scmp.eq.s32.totalorder %s28, 1
      %p145 = por %p143, %p144
      %p147 = scmp.ne.s32.totalorder %s132, %s146
      %p148 = scmp.eq.s32.totalorder %s28, 0
      %p149 = por %p147, %p148
      %s151 = sadd.s32 %s150, 1
      %p154 = scmp.eq.s32.totalorder %s22, 1
      %p155 = scmp.ne.s32.totalorder %s150, %s152
      %p156 = scmp.eq.s32.totalorder %s22, 0
      %p157 = por %p155, %p156
      %p158 = scmp.ne.s32.totalorder %s150, %s152
      %p159 = scmp.eq.s32.totalorder %s27, 1
      %p160 = por %p158, %p159
      %p161 = scmp.ne.s32.totalorder %s152, %s153
      %p162 = scmp.eq.s32.totalorder %s27, 0
      %p163 = por %p161, %p162
      %p164 = scmp.ne.s32.totalorder %s152, %s153
      %p165 = scmp.eq.s32.totalorder %s28, 1
      %p166 = por %p164, %p165
      %p168 = scmp.ne.s32.totalorder %s153, %s167
      %p169 = scmp.eq.s32.totalorder %s28, 0
      %p170 = por %p168, %p169
      %s172 = sadd.s32 %s171, 1
      %p175 = scmp.eq.s32.totalorder %s22, 1
      %p176 = scmp.ne.s32.totalorder %s171, %s173
      %p177 = scmp.eq.s32.totalorder %s22, 0
      %p178 = por %p176, %p177
      %p179 = scmp.ne.s32.totalorder %s171, %s173
      %p180 = scmp.eq.s32.totalorder %s27, 1
      %p181 = por %p179, %p180
      %p182 = scmp.ne.s32.totalorder %s173, %s174
      %p183 = scmp.eq.s32.totalorder %s27, 0
      %p184 = por %p182, %p183
      %p185 = scmp.ne.s32.totalorder %s173, %s174
      %p186 = scmp.eq.s32.totalorder %s28, 1
      %p187 = por %p185, %p186
      %p189 = scmp.ne.s32.totalorder %s174, %s188
      %p190 = scmp.eq.s32.totalorder %s28, 0
      %p191 = por %p189, %p190
      %s193 = sadd.s32 %s192, 1
      %p196 = scmp.eq.s32.totalorder %s22, 1
      %p197 = scmp.ne.s32.totalorder %s192, %s194
      %p198 = scmp.eq.s32.totalorder %s22, 0
      %p199 = por %p197, %p198
      %p200 = scmp.ne.s32.totalorder %s192, %s194
      %p201 = scmp.eq.s32.totalorder %s27, 1
      %p202 = por %p200, %p201
      %p203 = scmp.ne.s32.totalorder %s194, %s195
      %p204 = scmp.eq.s32.totalorder %s27, 0
      %p205 = por %p203, %p204
      %p206 = scmp.ne.s32.totalorder %s194, %s195
      %p207 = scmp.eq.s32.totalorder %s28, 1
      %p208 = por %p206, %p207
      %p210 = scmp.ne.s32.totalorder %s195, %s209
      %p211 = scmp.eq.s32.totalorder %s28, 0
      %p212 = por %p210, %p211
      %s214 = sadd.s32 %s213, 1
      %p217 = scmp.eq.s32.totalorder %s22, 1
      %p218 = scmp.ne.s32.totalorder %s213, %s215
      %p219 = scmp.eq.s32.totalorder %s22, 0
      %p220 = por %p218, %p219
      %p221 = scmp.ne.s32.totalorder %s213, %s215
      %p222 = scmp.eq.s32.totalorder %s27, 1
      %p223 = por %p221, %p222
      %p224 = scmp.ne.s32.totalorder %s215, %s216
      %p225 = scmp.eq.s32.totalorder %s27, 0
      %p226 = por %p224, %p225
      %p227 = scmp.ne.s32.totalorder %s215, %s216
      %p228 = scmp.eq.s32.totalorder %s28, 1
      %p229 = por %p227, %p228
      %p231 = scmp.ne.s32.totalorder %s216, %s230
      %p232 = scmp.eq.s32.totalorder %s28, 0
      %p233 = por %p231, %p232
      %s234 = ssub.s32 %s22, %s29
      %p235 = scmp.eq.s32.totalorder %s234, 0
      %s237 = sadd.s32 %s236, 1
      %s238 = scalar_select %p235, %s236, %s237
      %p241 = pneg %p235
      %p242 = scmp.eq.s32.totalorder %s22, 1
      %p243 = por %p241, %p242
      %p244 = scmp.ne.s32.totalorder %s236, %s239
      %p245 = scmp.eq.s32.totalorder %s22, 0
      %p246 = por %p244, %p245
      %p247 = scmp.ne.s32.totalorder %s236, %s239
      %p248 = scmp.eq.s32.totalorder %s27, 1
      %p249 = por %p247, %p248
      %p250 = scmp.ne.s32.totalorder %s239, %s240
      %p251 = scmp.eq.s32.totalorder %s27, 0
      %p252 = por %p250, %p251
      %p253 = scmp.ne.s32.totalorder %s239, %s240
      %p254 = scmp.eq.s32.totalorder %s28, 1
      %p255 = por %p253, %p254
      %p257 = scmp.ne.s32.totalorder %s240, %s256
      %p258 = scmp.eq.s32.totalorder %s28, 0
      %p259 = por %p257, %p258
      %p260 = scmp.le.s32.totalorder 1, %s22
      %p261 = scmp.lt.s32.totalorder %s22, 3
      %p262 = pnand %p260, %p261
      %p263 = pneg %p262
      // Predicated region
      $region9: #{tpu_custom_call.1} parent=5 // pred_check
        _
      $region10: #{tpu_custom_call.1} parent=5 // pred_check_branch
        %265 = sbr.rel (%p262) target = $region12
      $region11: #{tpu_custom_call.1} parent=5 // pred_region
        %s266 = ssub.s32 %s22, 1
        // Predicated region
        $region13: #{tpu_custom_call.1} parent=11 // pred_check
          %p267 = pneg %p121
        $region14: #{tpu_custom_call.1} parent=11 // pred_check_branch
          %269 = sbr.rel (%p267) target = $region16
        $region15: #{tpu_custom_call.1} parent=11 // pred_region
          %s271 = ssub.s32 9216, 9216
          %272 = vsyncadd [#allocation7], %s271
          %s273 = sshll.u32 [#allocation6], 4
          %s274 = int_to_ptr.vmem [resolvable:$true] %s273
          %279 = dma.hbm_to_vmem [thread:$0]  %s3, 9216, %s274, [#allocation7], 64, 64, 4
        $region16: #{tpu_custom_call.1} parent=11 // pred_fallthru
          _
        // Predicated region
        $region17: #{tpu_custom_call.1} parent=11 // pred_check
          %p280 = pneg %p142
        $region18: #{tpu_custom_call.1} parent=11 // pred_check_branch
          %282 = sbr.rel (%p280) target = $region20
        $region19: #{tpu_custom_call.1} parent=11 // pred_region
          _
        $region20: #{tpu_custom_call.1} parent=11 // pred_fallthru
          _
        // Predicated region
        $region21: #{tpu_custom_call.1} parent=11 // pred_check
          %p283 = pneg %p163
        $region22: #{tpu_custom_call.1} parent=11 // pred_check_branch
          %285 = sbr.rel (%p283) target = $region24
        $region23: #{tpu_custom_call.1} parent=11 // pred_region
          %s287 = ssub.s32 9216, 9216
          %288 = vsyncadd [#allocation7], %s287
          %s289 = sshll.u32 [#allocation8], 4
          %s290 = int_to_ptr.vmem [resolvable:$true] %s289
          %295 = dma.hbm_to_vmem [thread:$0]  %s5, 9216, %s290, [#allocation7], 64, 64, 4
        $region24: #{tpu_custom_call.1} parent=11 // pred_fallthru
          _
        // Predicated region
        $region25: #{tpu_custom_call.1} parent=11 // pred_check
          %p296 = pneg %p184
        $region26: #{tpu_custom_call.1} parent=11 // pred_check_branch
          %298 = sbr.rel (%p296) target = $region28
        $region27: #{tpu_custom_call.1} parent=11 // pred_region
          _
        $region28: #{tpu_custom_call.1} parent=11 // pred_fallthru
          _
        // Predicated region
        $region29: #{tpu_custom_call.1} parent=11 // pred_check
          %p299 = pneg %p205
        $region30: #{tpu_custom_call.1} parent=11 // pred_check_branch
          %301 = sbr.rel (%p299) target = $region32
        $region31: #{tpu_custom_call.1} parent=11 // pred_region
          _
        $region32: #{tpu_custom_call.1} parent=11 // pred_fallthru
          _
        // Predicated region
        $region33: #{tpu_custom_call.1} parent=11 // pred_check
          %p302 = pneg %p226
        $region34: #{tpu_custom_call.1} parent=11 // pred_check_branch
          %304 = sbr.rel (%p302) target = $region36
        $region35: #{tpu_custom_call.1} parent=11 // pred_region
          _
        $region36: #{tpu_custom_call.1} parent=11 // pred_fallthru
          _
      $region12: #{tpu_custom_call.1} parent=5 // pred_fallthru
        _
      %p305 = scmp.lt.s32.totalorder %s22, 2
      // Predicated region
      $region37: #{tpu_custom_call.1} parent=5 // pred_check
        %p306 = pneg %p305
      $region38: #{tpu_custom_call.1} parent=5 // pred_check_branch
        %308 = sbr.rel (%p306) target = $region40
      $region39: #{tpu_custom_call.1} parent=5 // pred_region
        // Predicated region
        $region41: #{tpu_custom_call.1} parent=39 // pred_check
          %p309 = pneg %p42
        $region42: #{tpu_custom_call.1} parent=39 // pred_check_branch
          %311 = sbr.rel (%p309) target = $region44
        $region43: #{tpu_custom_call.1} parent=39 // pred_region
          %s312 = sand.u32 %s32, 1
          %s313 = scalar_lea.sflag [#allocation4], %s312
          %s314 = sand.u32 %s32, 1
          %s315 = smul.addr %s314, 256
          %s316 = scalar_lea.vmem [#allocation3], %s315
          %s318 = ssub.s32 4096, 4096
          %319 = vsyncadd %s313, %s318
          %s320 = smul.addr %s22, 32
          %s321 = smul.addr %s320, 128
          %s322 = scalar_lea.hbm %s0, %s321
          %s323 = sshll.u32 %s316, 4
          %s324 = int_to_ptr.vmem [resolvable:$true] %s323
          %329 = dma.hbm_to_vmem [thread:$0]  %s322, 4096, %s324, %s313, 128, 128, 8
        $region44: #{tpu_custom_call.1} parent=39 // pred_fallthru
          _
        // Predicated region
        $region45: #{tpu_custom_call.1} parent=39 // pred_check
          %p330 = pneg %p68
        $region46: #{tpu_custom_call.1} parent=39 // pred_check_branch
          %332 = sbr.rel (%p330) target = $region48
        $region47: #{tpu_custom_call.1} parent=39 // pred_region
          %p333 = scmp.lt.s32.totalorder %s22, 1
          %s334 = scalar_select %p333, %s22, 1
          %s335 = smul.addr %s334, 2
          %s336 = scalar_lea.vmem %s1, %s335
        $region48: #{tpu_custom_call.1} parent=39 // pred_fallthru
          _
        // Predicated region
        $region49: #{tpu_custom_call.1} parent=39 // pred_check
          %p337 = pneg %p94
        $region50: #{tpu_custom_call.1} parent=39 // pred_check_branch
          %339 = sbr.rel (%p337) target = $region52
        $region51: #{tpu_custom_call.1} parent=39 // pred_region
          %p340 = scmp.lt.s32.totalorder %s22, 1
          %s341 = scalar_select %p340, %s22, 1
          %s342 = smul.addr %s341, 2
          %s343 = scalar_lea.vmem %s2, %s342
        $region52: #{tpu_custom_call.1} parent=39 // pred_fallthru
          _
      $region40: #{tpu_custom_call.1} parent=5 // pred_fallthru
        _
      %p344 = scmp.le.s32.totalorder 1, %s22
      %p345 = scmp.lt.s32.totalorder %s22, 3
      %p346 = pnand %p344, %p345
      %p347 = pneg %p346
      // Predicated region
      $region53: #{tpu_custom_call.1} parent=5 // pred_check
        _
      $region54: #{tpu_custom_call.1} parent=5 // pred_check_branch
        %349 = sbr.rel (%p346) target = $region56
      $region55: #{tpu_custom_call.1} parent=5 // pred_region
        %s350 = ssub.s32 %s22, 1
        %s351 = sand.u32 %s35, 1
        %s352 = scalar_lea.sflag [#allocation4], %s351
        %s353 = sand.u32 %s35, 1
        %s354 = smul.addr %s353, 256
        %s355 = scalar_lea.vmem [#allocation3], %s354
        // Predicated region
        $region57: #{tpu_custom_call.1} parent=55 // pred_check
          %p356 = pneg %p48
        $region58: #{tpu_custom_call.1} parent=55 // pred_check_branch
          %358 = sbr.rel (%p356) target = $region60
        $region59: #{tpu_custom_call.1} parent=55 // pred_region
          %359 = dma.done %s352, 4096
        $region60: #{tpu_custom_call.1} parent=55 // pred_fallthru
          _
        // Predicated region
        $region61: #{tpu_custom_call.1} parent=55 // pred_check
          %p360 = pneg %p121
        $region62: #{tpu_custom_call.1} parent=55 // pred_check_branch
          %362 = sbr.rel (%p360) target = $region64
        $region63: #{tpu_custom_call.1} parent=55 // pred_region
          %363 = dma.done [#allocation7], 9216
        $region64: #{tpu_custom_call.1} parent=55 // pred_fallthru
          _
        // Predicated region
        $region65: #{tpu_custom_call.1} parent=55 // pred_check
          %p364 = pneg %p163
        $region66: #{tpu_custom_call.1} parent=55 // pred_check_branch
          %366 = sbr.rel (%p364) target = $region68
        $region67: #{tpu_custom_call.1} parent=55 // pred_region
          %367 = dma.done [#allocation7], 9216
        $region68: #{tpu_custom_call.1} parent=55 // pred_fallthru
          _
        %s368 = sand.u32 %s35, 1
        %s369 = scalar_lea.sflag [#allocation4], %s368
        %s370 = sand.u32 %s35, 1
        %s371 = smul.addr %s370, 256
        %s372 = scalar_lea.vmem [#allocation3], %s371
        %p373 = pneg %p48
        %p374 = pneg %p45
        %p375 = scmp.lt.s32.totalorder %s27, 1
        %s376 = scalar_select %p375, %s27, 1
        %s377 = smul.addr %s376, 2
        %s378 = scalar_lea.vmem %s1, %s377
        %p379 = pneg %p74
        %p380 = pneg %p71
        %p381 = scmp.lt.s32.totalorder %s27, 1
        %s382 = scalar_select %p381, %s27, 1
        %s383 = smul.addr %s382, 2
        %s384 = scalar_lea.vmem %s2, %s383
        %p385 = pneg %p100
        %p386 = pneg %p97
        %p387 = pneg %p121
        %p388 = pneg %p118
        %p389 = pneg %p142
        %p390 = pneg %p139
        %p391 = pneg %p163
        %p392 = pneg %p160
        %p393 = pneg %p184
        %p394 = pneg %p181
        %p395 = pneg %p205
        %p396 = pneg %p202
        %p397 = pneg %p226
        %p398 = pneg %p223
        %p399 = pneg %p252
        %p400 = pneg %p249
        %s401 = sand.u32 %s239, 1
        %s402 = scalar_lea.sflag [#allocation5], %s401
        %s403 = sand.u32 %s239, 1
        %s404 = smul.addr %s403, 256
        %s405 = scalar_lea.vmem [#allocation9], %s404
        %p406 = scmp.lt.s32.totalorder %s27, 1
        %s407 = scalar_select %p406, %s27, 1
        %s408 = smul.addr %s407, 2
        %s409 = scalar_lea.vmem %s1, %s408
        %p410 = scmp.lt.s32.totalorder %s27, 1
        %s411 = scalar_select %p410, %s27, 1
        %s412 = smul.addr %s411, 2
        %s413 = scalar_lea.vmem %s2, %s412
        %415 = vst [vmem:[#allocation2] sm:$0xff] 0.0
        %416 = vst [vmem:[#allocation2 + $0x8] sm:$0xff] 0.0
        %417 = vst [vmem:[#allocation2 + $0x10] sm:$0xff] 0.0
        %418 = vst [vmem:[#allocation2 + $0x118] sm:$0xff] 0.0
        %419 = vst [vmem:[#allocation2 + $0x120] sm:$0xff] 0.0
        %420 = vst [vmem:[#allocation2 + $0x128] sm:$0xff] 0.0
        %v421 = vld [vmem:[%s355] sm:$0xff]
        %v422 = vld [vmem:[%s355 + $0x8] sm:$0xff]
        %v423 = vld [vmem:[%s355 + $0x10] sm:$0xff]
        %v424 = vld [vmem:[%s355 + $0x18] sm:$0xff]
        %v425 = vld [vmem:[%s355 + $0x20] sm:$0xff]
        %v426 = vld [vmem:[%s355 + $0x28] sm:$0xff]
        %v427 = vld [vmem:[%s355 + $0x30] sm:$0xff]
        %v428 = vld [vmem:[%s355 + $0x38] sm:$0xff]
        %v429 = vld [vmem:[%s355 + $0x40] sm:$0xff]
        %v430 = vld [vmem:[%s355 + $0x48] sm:$0xff]
        %v431 = vld [vmem:[%s355 + $0x50] sm:$0xff]
        %v432 = vld [vmem:[%s355 + $0x58] sm:$0xff]
        %v433 = vld [vmem:[%s355 + $0x60] sm:$0xff]
        %v434 = vld [vmem:[%s355 + $0x68] sm:$0xff]
        %v435 = vld [vmem:[%s355 + $0x70] sm:$0xff]
        %v436 = vld [vmem:[%s355 + $0x78] sm:$0xff]
        %v437 = vld [vmem:[%s355 + $0x80] sm:$0xff]
        %v438 = vld [vmem:[%s355 + $0x88] sm:$0xff]
        %v439 = vld [vmem:[%s355 + $0x90] sm:$0xff]
        %v440 = vld [vmem:[%s355 + $0x98] sm:$0xff]
        %v441 = vld [vmem:[%s355 + $0xa0] sm:$0xff]
        %v442 = vld [vmem:[%s355 + $0xa8] sm:$0xff]
        %v443 = vld [vmem:[%s355 + $0xb0] sm:$0xff]
        %v444 = vld [vmem:[%s355 + $0xb8] sm:$0xff]
        %v445 = vld [vmem:[%s355 + $0xc0] sm:$0xff]
        %v446 = vld [vmem:[%s355 + $0xc8] sm:$0xff]
        %v447 = vld [vmem:[%s355 + $0xd0] sm:$0xff]
        %v448 = vld [vmem:[%s355 + $0xd8] sm:$0xff]
        %v449 = vld [vmem:[%s355 + $0xe0] sm:$0xff]
        %v450 = vld [vmem:[%s355 + $0xe8] sm:$0xff]
        %v451 = vld [vmem:[%s355 + $0xf0] sm:$0xff]
        %v452 = vld [vmem:[%s355 + $0xf8] sm:$0xff]
        %v453 = vadd.f32 %v421, %v422
        %v454 = vadd.f32 %v453, %v423
        %v455 = vadd.f32 %v454, %v424
        %v456 = vadd.f32 %v455, %v425
        %v457 = vadd.f32 %v456, %v426
        %v458 = vadd.f32 %v457, %v427
        %v459 = vadd.f32 %v458, %v428
        %v460 = vadd.f32 %v459, %v429
        %v461 = vadd.f32 %v460, %v430
        %v462 = vadd.f32 %v461, %v431
        %v463 = vadd.f32 %v462, %v432
        %v464 = vadd.f32 %v463, %v433
        %v465 = vadd.f32 %v464, %v434
        %v466 = vadd.f32 %v465, %v435
        %v467 = vadd.f32 %v466, %v436
        %v468 = vadd.f32 %v467, %v437
        %v469 = vadd.f32 %v468, %v438
        %v470 = vadd.f32 %v469, %v439
        %v471 = vadd.f32 %v470, %v440
        %v472 = vadd.f32 %v471, %v441
        %v473 = vadd.f32 %v472, %v442
        %v474 = vadd.f32 %v473, %v443
        %v475 = vadd.f32 %v474, %v444
        %v476 = vadd.f32 %v475, %v445
        %v477 = vadd.f32 %v476, %v446
        %v478 = vadd.f32 %v477, %v447
        %v479 = vadd.f32 %v478, %v448
        %v480 = vadd.f32 %v479, %v449
        %v481 = vadd.f32 %v480, %v450
        %v482 = vadd.f32 %v481, %v451
        %v483 = vadd.f32 %v482, %v452
        %v484 = vrot.slane %v483, 4
        %v485 = vadd.f32 %v483, %v484
        %v486 = vrot.slane %v485, 2
        %v487 = vadd.f32 %v485, %v486
        %v488 = vrot.slane %v487, 1
        %v489 = vadd.f32 %v487, %v488
        %v490 = vrcp.pop 256.0
        %v491 = vmul.f32 %v489, %v490
        %v492 = vmul.f32 %v421, %v421
        %v493 = vmul.f32 %v422, %v422
        %v494 = vmul.f32 %v423, %v423
        %v495 = vmul.f32 %v424, %v424
        %v496 = vmul.f32 %v425, %v425
        %v497 = vmul.f32 %v426, %v426
        %v498 = vmul.f32 %v427, %v427
        %v499 = vmul.f32 %v428, %v428
        %v500 = vmul.f32 %v429, %v429
        %v501 = vmul.f32 %v430, %v430
        %v502 = vmul.f32 %v431, %v431
        %v503 = vmul.f32 %v432, %v432
        %v504 = vmul.f32 %v433, %v433
        %v505 = vmul.f32 %v434, %v434
        %v506 = vmul.f32 %v435, %v435
        %v507 = vmul.f32 %v436, %v436
        %v508 = vmul.f32 %v437, %v437
        %v509 = vmul.f32 %v438, %v438
        %v510 = vmul.f32 %v439, %v439
        %v511 = vmul.f32 %v440, %v440
        %v512 = vmul.f32 %v441, %v441
        %v513 = vmul.f32 %v442, %v442
        %v514 = vmul.f32 %v443, %v443
        %v515 = vmul.f32 %v444, %v444
        %v516 = vmul.f32 %v445, %v445
        %v517 = vmul.f32 %v446, %v446
        %v518 = vmul.f32 %v447, %v447
        %v519 = vmul.f32 %v448, %v448
        %v520 = vmul.f32 %v449, %v449
        %v521 = vmul.f32 %v450, %v450
        %v522 = vmul.f32 %v451, %v451
        %v523 = vmul.f32 %v452, %v452
        %v524 = vadd.f32 %v492, %v493
        %v525 = vadd.f32 %v524, %v494
        %v526 = vadd.f32 %v525, %v495
        %v527 = vadd.f32 %v526, %v496
        %v528 = vadd.f32 %v527, %v497
        %v529 = vadd.f32 %v528, %v498
        %v530 = vadd.f32 %v529, %v499
        %v531 = vadd.f32 %v530, %v500
        %v532 = vadd.f32 %v531, %v501
        %v533 = vadd.f32 %v532, %v502
        %v534 = vadd.f32 %v533, %v503
        %v535 = vadd.f32 %v534, %v504
        %v536 = vadd.f32 %v535, %v505
        %v537 = vadd.f32 %v536, %v506
        %v538 = vadd.f32 %v537, %v507
        %v539 = vadd.f32 %v538, %v508
        %v540 = vadd.f32 %v539, %v509
        %v541 = vadd.f32 %v540, %v510
        %v542 = vadd.f32 %v541, %v511
        %v543 = vadd.f32 %v542, %v512
        %v544 = vadd.f32 %v543, %v513
        %v545 = vadd.f32 %v544, %v514
        %v546 = vadd.f32 %v545, %v515
        %v547 = vadd.f32 %v546, %v516
        %v548 = vadd.f32 %v547, %v517
        %v549 = vadd.f32 %v548, %v518
        %v550 = vadd.f32 %v549, %v519
        %v551 = vadd.f32 %v550, %v520
        %v552 = vadd.f32 %v551, %v521
        %v553 = vadd.f32 %v552, %v522
        %v554 = vadd.f32 %v553, %v523
        %v555 = vrot.slane %v554, 4
        %v556 = vadd.f32 %v554, %v555
        %v557 = vrot.slane %v556, 2
        %v558 = vadd.f32 %v556, %v557
        %v559 = vrot.slane %v558, 1
        %v560 = vadd.f32 %v558, %v559
        %v561 = vmul.f32 %v560, %v490
        %v562 = vmul.f32 %v491, %v491
        %v563 = vsub.f32 %v561, %v562
        %v564 = vld [vmem:[%s409] sm:$0x3]
        %v565 = vsub.f32 %v421, %v491
        %v566 = vsub.f32 %v422, %v491
        %v567 = vsub.f32 %v423, %v491
        %v568 = vsub.f32 %v424, %v491
        %v569 = vsub.f32 %v425, %v491
        %v570 = vsub.f32 %v426, %v491
        %v571 = vsub.f32 %v427, %v491
        %v572 = vsub.f32 %v428, %v491
        %v573 = vsub.f32 %v429, %v491
        %v574 = vsub.f32 %v430, %v491
        %v575 = vsub.f32 %v431, %v491
        %v576 = vsub.f32 %v432, %v491
        %v577 = vsub.f32 %v433, %v491
        %v578 = vsub.f32 %v434, %v491
        %v579 = vsub.f32 %v435, %v491
        %v580 = vsub.f32 %v436, %v491
        %v581 = vsub.f32 %v437, %v491
        %v582 = vsub.f32 %v438, %v491
        %v583 = vsub.f32 %v439, %v491
        %v584 = vsub.f32 %v440, %v491
        %v585 = vsub.f32 %v441, %v491
        %v586 = vsub.f32 %v442, %v491
        %v587 = vsub.f32 %v443, %v491
        %v588 = vsub.f32 %v444, %v491
        %v589 = vsub.f32 %v445, %v491
        %v590 = vsub.f32 %v446, %v491
        %v591 = vsub.f32 %v447, %v491
        %v592 = vsub.f32 %v448, %v491
        %v593 = vsub.f32 %v449, %v491
        %v594 = vsub.f32 %v450, %v491
        %v595 = vsub.f32 %v451, %v491
        %v596 = vsub.f32 %v452, %v491
        %v597 = vadd.f32 %v563, 1e-05
        %v598 = vrsqrt.pop %v597
        %v599 = vmul.f32 %v565, %v598
        %v600 = vmul.f32 %v566, %v598
        %v601 = vmul.f32 %v567, %v598
        %v602 = vmul.f32 %v568, %v598
        %v603 = vmul.f32 %v569, %v598
        %v604 = vmul.f32 %v570, %v598
        %v605 = vmul.f32 %v571, %v598
        %v606 = vmul.f32 %v572, %v598
        %v607 = vmul.f32 %v573, %v598
        %v608 = vmul.f32 %v574, %v598
        %v609 = vmul.f32 %v575, %v598
        %v610 = vmul.f32 %v576, %v598
        %v611 = vmul.f32 %v577, %v598
        %v612 = vmul.f32 %v578, %v598
        %v613 = vmul.f32 %v579, %v598
        %v614 = vmul.f32 %v580, %v598
        %v615 = vmul.f32 %v581, %v598
        %v616 = vmul.f32 %v582, %v598
        %v617 = vmul.f32 %v583, %v598
        %v618 = vmul.f32 %v584, %v598
        %v619 = vmul.f32 %v585, %v598
        %v620 = vmul.f32 %v586, %v598
        %v621 = vmul.f32 %v587, %v598
        %v622 = vmul.f32 %v588, %v598
        %v623 = vmul.f32 %v589, %v598
        %v624 = vmul.f32 %v590, %v598
        %v625 = vmul.f32 %v591, %v598
        %v626 = vmul.f32 %v592, %v598
        %v627 = vmul.f32 %v593, %v598
        %v628 = vmul.f32 %v594, %v598
        %v629 = vmul.f32 %v595, %v598
        %v630 = vmul.f32 %v596, %v598
        %v631 = vadd.f32 %v564, 1.0
        %v632 = vlaneseq
        %v633 = vshrl.u32 %v632, 7
        %v634 = vsub.s32 0, %v633
        %v635 = vrot.slane %v631, %v634
        %v636 = vmul.f32 %v635, %v599
        %v637 = vmul.f32 %v635, %v600
        %v638 = vmul.f32 %v635, %v601
        %v639 = vmul.f32 %v635, %v602
        %v640 = vmul.f32 %v635, %v603
        %v641 = vmul.f32 %v635, %v604
        %v642 = vmul.f32 %v635, %v605
        %v643 = vmul.f32 %v635, %v606
        %v644 = vmul.f32 %v635, %v607
        %v645 = vmul.f32 %v635, %v608
        %v646 = vmul.f32 %v635, %v609
        %v647 = vmul.f32 %v635, %v610
        %v648 = vmul.f32 %v635, %v611
        %v649 = vmul.f32 %v635, %v612
        %v650 = vmul.f32 %v635, %v613
        %v651 = vmul.f32 %v635, %v614
        %v652 = vmul.f32 %v635, %v615
        %v653 = vmul.f32 %v635, %v616
        %v654 = vmul.f32 %v635, %v617
        %v655 = vmul.f32 %v635, %v618
        %v656 = vmul.f32 %v635, %v619
        %v657 = vmul.f32 %v635, %v620
        %v658 = vmul.f32 %v635, %v621
        %v659 = vmul.f32 %v635, %v622
        %v660 = vmul.f32 %v635, %v623
        %v661 = vmul.f32 %v635, %v624
        %v662 = vmul.f32 %v635, %v625
        %v663 = vmul.f32 %v635, %v626
        %v664 = vmul.f32 %v635, %v627
        %v665 = vmul.f32 %v635, %v628
        %v666 = vmul.f32 %v635, %v629
        %v667 = vmul.f32 %v635, %v630
        %v668 = vlaneseq
        %v669 = vshrl.u32 %v668, 7
        %v670 = vsub.s32 1, %v669
        %v671 = vrot.slane %v564, %v670
        %v672 = vadd.f32 %v636, %v671
        %v673 = vadd.f32 %v637, %v671
        %v674 = vadd.f32 %v638, %v671
        %v675 = vadd.f32 %v639, %v671
        %v676 = vadd.f32 %v640, %v671
        %v677 = vadd.f32 %v641, %v671
        %v678 = vadd.f32 %v642, %v671
        %v679 = vadd.f32 %v643, %v671
        %v680 = vadd.f32 %v644, %v671
        %v681 = vadd.f32 %v645, %v671
        %v682 = vadd.f32 %v646, %v671
        %v683 = vadd.f32 %v647, %v671
        %v684 = vadd.f32 %v648, %v671
        %v685 = vadd.f32 %v649, %v671
        %v686 = vadd.f32 %v650, %v671
        %v687 = vadd.f32 %v651, %v671
        %v688 = vadd.f32 %v652, %v671
        %v689 = vadd.f32 %v653, %v671
        %v690 = vadd.f32 %v654, %v671
        %v691 = vadd.f32 %v655, %v671
        %v692 = vadd.f32 %v656, %v671
        %v693 = vadd.f32 %v657, %v671
        %v694 = vadd.f32 %v658, %v671
        %v695 = vadd.f32 %v659, %v671
        %v696 = vadd.f32 %v660, %v671
        %v697 = vadd.f32 %v661, %v671
        %v698 = vadd.f32 %v662, %v671
        %v699 = vadd.f32 %v663, %v671
        %v700 = vadd.f32 %v664, %v671
        %v701 = vadd.f32 %v665, %v671
        %v702 = vadd.f32 %v666, %v671
        %v703 = vadd.f32 %v667, %v671
        %v704 = vmul.f32 %v672, 0.2
        %v705 = vmul.f32 %v673, 0.2
        %v706 = vmul.f32 %v674, 0.2
        %v707 = vmul.f32 %v675, 0.2
        %v708 = vmul.f32 %v676, 0.2
        %v709 = vmul.f32 %v677, 0.2
        %v710 = vmul.f32 %v678, 0.2
        %v711 = vmul.f32 %v679, 0.2
        %v712 = vmul.f32 %v680, 0.2
        %v713 = vmul.f32 %v681, 0.2
        %v714 = vmul.f32 %v682, 0.2
        %v715 = vmul.f32 %v683, 0.2
        %v716 = vmul.f32 %v684, 0.2
        %v717 = vmul.f32 %v685, 0.2
        %v718 = vmul.f32 %v686, 0.2
        %v719 = vmul.f32 %v687, 0.2
        %v720 = vmul.f32 %v688, 0.2
        %v721 = vmul.f32 %v689, 0.2
        %v722 = vmul.f32 %v690, 0.2
        %v723 = vmul.f32 %v691, 0.2
        %v724 = vmul.f32 %v692, 0.2
        %v725 = vmul.f32 %v693, 0.2
        %v726 = vmul.f32 %v694, 0.2
        %v727 = vmul.f32 %v695, 0.2
        %v728 = vmul.f32 %v696, 0.2
        %v729 = vmul.f32 %v697, 0.2
        %v730 = vmul.f32 %v698, 0.2
        %v731 = vmul.f32 %v699, 0.2
        %v732 = vmul.f32 %v700, 0.2
        %v733 = vmul.f32 %v701, 0.2
        %v734 = vmul.f32 %v702, 0.2
        %v735 = vmul.f32 %v703, 0.2
        %v736 = vmax.f32 %v672, %v704
        %v737 = vmax.f32 %v673, %v705
        %v738 = vmax.f32 %v674, %v706
        %v739 = vmax.f32 %v675, %v707
        %v740 = vmax.f32 %v676, %v708
        %v741 = vmax.f32 %v677, %v709
        %v742 = vmax.f32 %v678, %v710
        %v743 = vmax.f32 %v679, %v711
        %v744 = vmax.f32 %v680, %v712
        %v745 = vmax.f32 %v681, %v713
        %v746 = vmax.f32 %v682, %v714
        %v747 = vmax.f32 %v683, %v715
        %v748 = vmax.f32 %v684, %v716
        %v749 = vmax.f32 %v685, %v717
        %v750 = vmax.f32 %v686, %v718
        %v751 = vmax.f32 %v687, %v719
        %v752 = vmax.f32 %v688, %v720
        %v753 = vmax.f32 %v689, %v721
        %v754 = vmax.f32 %v690, %v722
        %v755 = vmax.f32 %v691, %v723
        %v756 = vmax.f32 %v692, %v724
        %v757 = vmax.f32 %v693, %v725
        %v758 = vmax.f32 %v694, %v726
        %v759 = vmax.f32 %v695, %v727
        %v760 = vmax.f32 %v696, %v728
        %v761 = vmax.f32 %v697, %v729
        %v762 = vmax.f32 %v698, %v730
        %v763 = vmax.f32 %v699, %v731
        %v764 = vmax.f32 %v700, %v732
        %v765 = vmax.f32 %v701, %v733
        %v766 = vmax.f32 %v702, %v734
        %v767 = vmax.f32 %v703, %v735
        %768 = vst [vmem:[#allocation2 + $0x18] sm:$0xff] %v736
        %769 = vst [vmem:[#allocation2 + $0x20] sm:$0xff] %v737
        %770 = vst [vmem:[#allocation2 + $0x28] sm:$0xff] %v738
        %771 = vst [vmem:[#allocation2 + $0x30] sm:$0xff] %v739
        %772 = vst [vmem:[#allocation2 + $0x38] sm:$0xff] %v740
        %773 = vst [vmem:[#allocation2 + $0x40] sm:$0xff] %v741
        %774 = vst [vmem:[#allocation2 + $0x48] sm:$0xff] %v742
        %775 = vst [vmem:[#allocation2 + $0x50] sm:$0xff] %v743
        %776 = vst [vmem:[#allocation2 + $0x58] sm:$0xff] %v744
        %777 = vst [vmem:[#allocation2 + $0x60] sm:$0xff] %v745
        %778 = vst [vmem:[#allocation2 + $0x68] sm:$0xff] %v746
        %779 = vst [vmem:[#allocation2 + $0x70] sm:$0xff] %v747
        %780 = vst [vmem:[#allocation2 + $0x78] sm:$0xff] %v748
        %781 = vst [vmem:[#allocation2 + $0x80] sm:$0xff] %v749
        %782 = vst [vmem:[#allocation2 + $0x88] sm:$0xff] %v750
        %783 = vst [vmem:[#allocation2 + $0x90] sm:$0xff] %v751
        %784 = vst [vmem:[#allocation2 + $0x98] sm:$0xff] %v752
        %785 = vst [vmem:[#allocation2 + $0xa0] sm:$0xff] %v753
        %786 = vst [vmem:[#allocation2 + $0xa8] sm:$0xff] %v754
        %787 = vst [vmem:[#allocation2 + $0xb0] sm:$0xff] %v755
        %788 = vst [vmem:[#allocation2 + $0xb8] sm:$0xff] %v756
        %789 = vst [vmem:[#allocation2 + $0xc0] sm:$0xff] %v757
        %790 = vst [vmem:[#allocation2 + $0xc8] sm:$0xff] %v758
        %791 = vst [vmem:[#allocation2 + $0xd0] sm:$0xff] %v759
        %792 = vst [vmem:[#allocation2 + $0xd8] sm:$0xff] %v760
        %793 = vst [vmem:[#allocation2 + $0xe0] sm:$0xff] %v761
        %794 = vst [vmem:[#allocation2 + $0xe8] sm:$0xff] %v762
        %795 = vst [vmem:[#allocation2 + $0xf0] sm:$0xff] %v763
        %796 = vst [vmem:[#allocation2 + $0xf8] sm:$0xff] %v764
        %797 = vst [vmem:[#allocation2 + $0x100] sm:$0xff] %v765
        %798 = vst [vmem:[#allocation2 + $0x108] sm:$0xff] %v766
        %799 = vst [vmem:[#allocation2 + $0x110] sm:$0xff] %v767
        %v800 = vld [vmem:[#allocation2 + $0x7] sm:$0xff]
        %v801 = vld [vmem:[#allocation2 + $0xf] sm:$0xff]
        %v802 = vld [vmem:[#allocation2 + $0x17] sm:$0xff]
        %v803 = vld [vmem:[#allocation2 + $0x1f] sm:$0xff]
        %v804 = vld [vmem:[#allocation2 + $0x27] sm:$0xff]
        %v805 = vld [vmem:[#allocation2 + $0x2f] sm:$0xff]
        %v806 = vld [vmem:[#allocation2 + $0x37] sm:$0xff]
        %v807 = vld [vmem:[#allocation2 + $0x3f] sm:$0xff]
        %v808 = vld [vmem:[#allocation2 + $0x47] sm:$0xff]
        %v809 = vld [vmem:[#allocation2 + $0x4f] sm:$0xff]
        %v810 = vld [vmem:[#allocation2 + $0x57] sm:$0xff]
        %v811 = vld [vmem:[#allocation2 + $0x5f] sm:$0xff]
        %v812 = vld [vmem:[#allocation2 + $0x67] sm:$0xff]
        %v813 = vld [vmem:[#allocation2 + $0x6f] sm:$0xff]
        %v814 = vld [vmem:[#allocation2 + $0x77] sm:$0xff]
        %v815 = vld [vmem:[#allocation2 + $0x7f] sm:$0xff]
        %v816 = vld [vmem:[#allocation2 + $0x87] sm:$0xff]
        %v817 = vld [vmem:[#allocation2 + $0x8f] sm:$0xff]
        %v818 = vld [vmem:[#allocation2 + $0x97] sm:$0xff]
        %v819 = vld [vmem:[#allocation2 + $0x9f] sm:$0xff]
        %v820 = vld [vmem:[#allocation2 + $0xa7] sm:$0xff]
        %v821 = vld [vmem:[#allocation2 + $0xaf] sm:$0xff]
        %v822 = vld [vmem:[#allocation2 + $0xb7] sm:$0xff]
        %v823 = vld [vmem:[#allocation2 + $0xbf] sm:$0xff]
        %v824 = vld [vmem:[#allocation2 + $0xc7] sm:$0xff]
        %v825 = vld [vmem:[#allocation2 + $0xcf] sm:$0xff]
        %v826 = vld [vmem:[#allocation2 + $0xd7] sm:$0xff]
        %v827 = vld [vmem:[#allocation2 + $0xdf] sm:$0xff]
        %v828 = vld [vmem:[#allocation2 + $0xe7] sm:$0xff]
        %v829 = vld [vmem:[#allocation2 + $0xef] sm:$0xff]
        %v830 = vld [vmem:[#allocation2 + $0xf7] sm:$0xff]
        %v831 = vld [vmem:[#allocation2 + $0xff] sm:$0xff]
        %v832 = vld [vmem:[%s7] sm:$0xff]
        %v833 = vld [vmem:[%s7 + $0x8] sm:$0xff]
        %v834 = vld [vmem:[%s7 + $0x10] sm:$0xff]
        %v835 = vld [vmem:[%s7 + $0x18] sm:$0xff]
        %v836 = vld [vmem:[%s7 + $0x20] sm:$0xff]
        %v837 = vld [vmem:[%s7 + $0x28] sm:$0xff]
        %v838 = vld [vmem:[%s7 + $0x30] sm:$0xff]
        %v839 = vld [vmem:[%s7 + $0x38] sm:$0xff]
        %v840 = vld [vmem:[%s7 + $0x40] sm:$0xff]
        %v841 = vld [vmem:[%s7 + $0x48] sm:$0xff]
        %v842 = vld [vmem:[%s7 + $0x50] sm:$0xff]
        %v843 = vld [vmem:[%s7 + $0x58] sm:$0xff]
        %v844 = vld [vmem:[%s7 + $0x60] sm:$0xff]
        %v845 = vld [vmem:[%s7 + $0x68] sm:$0xff]
        %v846 = vld [vmem:[%s7 + $0x70] sm:$0xff]
        %v847 = vld [vmem:[%s7 + $0x78] sm:$0xff]
        %v848 = vld [vmem:[%s7 + $0x80] sm:$0xff]
        %v849 = vld [vmem:[%s7 + $0x88] sm:$0xff]
        %v850 = vld [vmem:[%s7 + $0x90] sm:$0xff]
        %v851 = vld [vmem:[%s7 + $0x98] sm:$0xff]
        %v852 = vld [vmem:[%s7 + $0xa0] sm:$0xff]
        %v853 = vld [vmem:[%s7 + $0xa8] sm:$0xff]
        %v854 = vld [vmem:[%s7 + $0xb0] sm:$0xff]
        %v855 = vld [vmem:[%s7 + $0xb8] sm:$0xff]
        %v856 = vld [vmem:[%s7 + $0xc0] sm:$0xff]
        %v857 = vld [vmem:[%s7 + $0xc8] sm:$0xff]
        %v858 = vld [vmem:[%s7 + $0xd0] sm:$0xff]
        %v859 = vld [vmem:[%s7 + $0xd8] sm:$0xff]
        %v860 = vld [vmem:[%s7 + $0xe0] sm:$0xff]
        %v861 = vld [vmem:[%s7 + $0xe8] sm:$0xff]
        %v862 = vld [vmem:[%s7 + $0xf0] sm:$0xff]
        %v863 = vld [vmem:[%s7 + $0xf8] sm:$0xff]
        %865 = vset.pattern.permute.xlu0 0
        %866 = vperm.xlu0 %865, %v832
        %v867 = vpop.permute.xlu0 %866
        %870 = vset.pattern.permute.xlu0 0
        %871 = vperm.xlu0 %870, %v833
        %v872 = vpop.permute.xlu0 %871
        %875 = vset.pattern.permute.xlu0 0
        %876 = vperm.xlu0 %875, %v834
        %v877 = vpop.permute.xlu0 %876
        %880 = vset.pattern.permute.xlu0 0
        %881 = vperm.xlu0 %880, %v835
        %v882 = vpop.permute.xlu0 %881
        %885 = vset.pattern.permute.xlu0 0
        %886 = vperm.xlu0 %885, %v836
        %v887 = vpop.permute.xlu0 %886
        %890 = vset.pattern.permute.xlu0 0
        %891 = vperm.xlu0 %890, %v837
        %v892 = vpop.permute.xlu0 %891
        %895 = vset.pattern.permute.xlu0 0
        %896 = vperm.xlu0 %895, %v838
        %v897 = vpop.permute.xlu0 %896
        %900 = vset.pattern.permute.xlu0 0
        %901 = vperm.xlu0 %900, %v839
        %v902 = vpop.permute.xlu0 %901
        %905 = vset.pattern.permute.xlu0 0
        %906 = vperm.xlu0 %905, %v840
        %v907 = vpop.permute.xlu0 %906
        %910 = vset.pattern.permute.xlu0 0
        %911 = vperm.xlu0 %910, %v841
        %v912 = vpop.permute.xlu0 %911
        %915 = vset.pattern.permute.xlu0 0
        %916 = vperm.xlu0 %915, %v842
        %v917 = vpop.permute.xlu0 %916
        %920 = vset.pattern.permute.xlu0 0
        %921 = vperm.xlu0 %920, %v843
        %v922 = vpop.permute.xlu0 %921
        %925 = vset.pattern.permute.xlu0 0
        %926 = vperm.xlu0 %925, %v844
        %v927 = vpop.permute.xlu0 %926
        %930 = vset.pattern.permute.xlu0 0
        %931 = vperm.xlu0 %930, %v845
        %v932 = vpop.permute.xlu0 %931
        %935 = vset.pattern.permute.xlu0 0
        %936 = vperm.xlu0 %935, %v846
        %v937 = vpop.permute.xlu0 %936
        %940 = vset.pattern.permute.xlu0 0
        %941 = vperm.xlu0 %940, %v847
        %v942 = vpop.permute.xlu0 %941
        %945 = vset.pattern.permute.xlu0 0
        %946 = vperm.xlu0 %945, %v848
        %v947 = vpop.permute.xlu0 %946
        %950 = vset.pattern.permute.xlu0 0
        %951 = vperm.xlu0 %950, %v849
        %v952 = vpop.permute.xlu0 %951
        %955 = vset.pattern.permute.xlu0 0
        %956 = vperm.xlu0 %955, %v850
        %v957 = vpop.permute.xlu0 %956
        %960 = vset.pattern.permute.xlu0 0
        %961 = vperm.xlu0 %960, %v851
        %v962 = vpop.permute.xlu0 %961
        %965 = vset.pattern.permute.xlu0 0
        %966 = vperm.xlu0 %965, %v852
        %v967 = vpop.permute.xlu0 %966
        %970 = vset.pattern.permute.xlu0 0
        %971 = vperm.xlu0 %970, %v853
        %v972 = vpop.permute.xlu0 %971
        %975 = vset.pattern.permute.xlu0 0
        %976 = vperm.xlu0 %975, %v854
        %v977 = vpop.permute.xlu0 %976
        %980 = vset.pattern.permute.xlu0 0
        %981 = vperm.xlu0 %980, %v855
        %v982 = vpop.permute.xlu0 %981
        %985 = vset.pattern.permute.xlu0 0
        %986 = vperm.xlu0 %985, %v856
        %v987 = vpop.permute.xlu0 %986
        %990 = vset.pattern.permute.xlu0 0
        %991 = vperm.xlu0 %990, %v857
        %v992 = vpop.permute.xlu0 %991
        %995 = vset.pattern.permute.xlu0 0
        %996 = vperm.xlu0 %995, %v858
        %v997 = vpop.permute.xlu0 %996
        %1000 = vset.pattern.permute.xlu0 0
        %1001 = vperm.xlu0 %1000, %v859
        %v1002 = vpop.permute.xlu0 %1001
        %1005 = vset.pattern.permute.xlu0 0
        %1006 = vperm.xlu0 %1005, %v860
        %v1007 = vpop.permute.xlu0 %1006
        %1010 = vset.pattern.permute.xlu0 0
        %1011 = vperm.xlu0 %1010, %v861
        %v1012 = vpop.permute.xlu0 %1011
        %1015 = vset.pattern.permute.xlu0 0
        %1016 = vperm.xlu0 %1015, %v862
        %v1017 = vpop.permute.xlu0 %1016
        %1020 = vset.pattern.permute.xlu0 0
        %1021 = vperm.xlu0 %1020, %v863
        %v1022 = vpop.permute.xlu0 %1021
        %v1024 = vmul.f32 %v800, %v867
        %v1025 = vmul.f32 %v801, %v872
        %v1026 = vmul.f32 %v802, %v877
        %v1027 = vmul.f32 %v803, %v882
        %v1028 = vmul.f32 %v804, %v887
        %v1029 = vmul.f32 %v805, %v892
        %v1030 = vmul.f32 %v806, %v897
        %v1031 = vmul.f32 %v807, %v902
        %v1032 = vmul.f32 %v808, %v907
        %v1033 = vmul.f32 %v809, %v912
        %v1034 = vmul.f32 %v810, %v917
        %v1035 = vmul.f32 %v811, %v922
        %v1036 = vmul.f32 %v812, %v927
        %v1037 = vmul.f32 %v813, %v932
        %v1038 = vmul.f32 %v814, %v937
        %v1039 = vmul.f32 %v815, %v942
        %v1040 = vmul.f32 %v816, %v947
        %v1041 = vmul.f32 %v817, %v952
        %v1042 = vmul.f32 %v818, %v957
        %v1043 = vmul.f32 %v819, %v962
        %v1044 = vmul.f32 %v820, %v967
        %v1045 = vmul.f32 %v821, %v972
        %v1046 = vmul.f32 %v822, %v977
        %v1047 = vmul.f32 %v823, %v982
        %v1048 = vmul.f32 %v824, %v987
        %v1049 = vmul.f32 %v825, %v992
        %v1050 = vmul.f32 %v826, %v997
        %v1051 = vmul.f32 %v827, %v1002
        %v1052 = vmul.f32 %v828, %v1007
        %v1053 = vmul.f32 %v829, %v1012
        %v1054 = vmul.f32 %v830, %v1017
        %v1055 = vmul.f32 %v831, %v1022
        %v1056 = vpack.c.bf16 %v1025, %v1024
        %v1057 = vpack.c.bf16 %v1027, %v1026
        %v1058 = vpack.c.bf16 %v1029, %v1028
        %v1059 = vpack.c.bf16 %v1031, %v1030
        %v1060 = vpack.c.bf16 %v1033, %v1032
        %v1061 = vpack.c.bf16 %v1035, %v1034
        %v1062 = vpack.c.bf16 %v1037, %v1036
        %v1063 = vpack.c.bf16 %v1039, %v1038
        %v1064 = vpack.c.bf16 %v1041, %v1040
        %v1065 = vpack.c.bf16 %v1043, %v1042
        %v1066 = vpack.c.bf16 %v1045, %v1044
        %v1067 = vpack.c.bf16 %v1047, %v1046
        %v1068 = vpack.c.bf16 %v1049, %v1048
        %v1069 = vpack.c.bf16 %v1051, %v1050
        %v1070 = vpack.c.bf16 %v1053, %v1052
        %v1071 = vpack.c.bf16 %v1055, %v1054
        %v1072 = vld [vmem:[#allocation6] sm:$0xf]
        %v1073 = vld [vmem:[#allocation6 + $0x4] sm:$0xf]
        %v1074 = vld [vmem:[#allocation6 + $0x8] sm:$0xf]
        %v1075 = vld [vmem:[#allocation6 + $0xc] sm:$0xf]
        %v1076 = vld [vmem:[#allocation6 + $0x10] sm:$0xf]
        %v1077 = vld [vmem:[#allocation6 + $0x14] sm:$0xf]
        %v1078 = vld [vmem:[#allocation6 + $0x18] sm:$0xf]
        %v1079 = vld [vmem:[#allocation6 + $0x1c] sm:$0xf]
        %v1080 = vld [vmem:[#allocation6 + $0x20] sm:$0xf]
        %v1081 = vld [vmem:[#allocation6 + $0x24] sm:$0xf]
        %v1082 = vld [vmem:[#allocation6 + $0x28] sm:$0xf]
        %v1083 = vld [vmem:[#allocation6 + $0x2c] sm:$0xf]
        %v1084 = vld [vmem:[#allocation6 + $0x30] sm:$0xf]
        %v1085 = vld [vmem:[#allocation6 + $0x34] sm:$0xf]
        %v1086 = vld [vmem:[#allocation6 + $0x38] sm:$0xf]
        %v1087 = vld [vmem:[#allocation6 + $0x3c] sm:$0xf]
        %v1088 = vld [vmem:[#allocation2 + $0x8] sm:$0xff]
        %v1089 = vld [vmem:[#allocation2 + $0x10] sm:$0xff]
        %v1090 = vld [vmem:[#allocation2 + $0x18] sm:$0xff]
        %v1091 = vld [vmem:[#allocation2 + $0x20] sm:$0xff]
        %v1092 = vld [vmem:[#allocation2 + $0x28] sm:$0xff]
        %v1093 = vld [vmem:[#allocation2 + $0x30] sm:$0xff]
        %v1094 = vld [vmem:[#allocation2 + $0x38] sm:$0xff]
        %v1095 = vld [vmem:[#allocation2 + $0x40] sm:$0xff]
        %v1096 = vld [vmem:[#allocation2 + $0x48] sm:$0xff]
        %v1097 = vld [vmem:[#allocation2 + $0x50] sm:$0xff]
        %v1098 = vld [vmem:[#allocation2 + $0x58] sm:$0xff]
        %v1099 = vld [vmem:[#allocation2 + $0x60] sm:$0xff]
        %v1100 = vld [vmem:[#allocation2 + $0x68] sm:$0xff]
        %v1101 = vld [vmem:[#allocation2 + $0x70] sm:$0xff]
        %v1102 = vld [vmem:[#allocation2 + $0x78] sm:$0xff]
        %v1103 = vld [vmem:[#allocation2 + $0x80] sm:$0xff]
        %v1104 = vld [vmem:[#allocation2 + $0x88] sm:$0xff]
        %v1105 = vld [vmem:[#allocation2 + $0x90] sm:$0xff]
        %v1106 = vld [vmem:[#allocation2 + $0x98] sm:$0xff]
        %v1107 = vld [vmem:[#allocation2 + $0xa0] sm:$0xff]
        %v1108 = vld [vmem:[#allocation2 + $0xa8] sm:$0xff]
        %v1109 = vld [vmem:[#allocation2 + $0xb0] sm:$0xff]
        %v1110 = vld [vmem:[#allocation2 + $0xb8] sm:$0xff]
        %v1111 = vld [vmem:[#allocation2 + $0xc0] sm:$0xff]
        %v1112 = vld [vmem:[#allocation2 + $0xc8] sm:$0xff]
        %v1113 = vld [vmem:[#allocation2 + $0xd0] sm:$0xff]
        %v1114 = vld [vmem:[#allocation2 + $0xd8] sm:$0xff]
        %v1115 = vld [vmem:[#allocation2 + $0xe0] sm:$0xff]
        %v1116 = vld [vmem:[#allocation2 + $0xe8] sm:$0xff]
        %v1117 = vld [vmem:[#allocation2 + $0xf0] sm:$0xff]
        %v1118 = vld [vmem:[#allocation2 + $0xf8] sm:$0xff]
        %v1119 = vld [vmem:[#allocation2 + $0x100] sm:$0xff]
        %v1120 = vpack.c.bf16 %v1089, %v1088
        %v1121 = vpack.c.bf16 %v1091, %v1090
        %v1122 = vpack.c.bf16 %v1093, %v1092
        %v1123 = vpack.c.bf16 %v1095, %v1094
        %v1124 = vpack.c.bf16 %v1097, %v1096
        %v1125 = vpack.c.bf16 %v1099, %v1098
        %v1126 = vpack.c.bf16 %v1101, %v1100
        %v1127 = vpack.c.bf16 %v1103, %v1102
        %v1128 = vpack.c.bf16 %v1105, %v1104
        %v1129 = vpack.c.bf16 %v1107, %v1106
        %v1130 = vpack.c.bf16 %v1109, %v1108
        %v1131 = vpack.c.bf16 %v1111, %v1110
        %v1132 = vpack.c.bf16 %v1113, %v1112
        %v1133 = vpack.c.bf16 %v1115, %v1114
        %v1134 = vpack.c.bf16 %v1117, %v1116
        %v1135 = vpack.c.bf16 %v1119, %v1118
        %s1136 = scalar_lea.vmem [#allocation6], 64
        %v1137 = vld [vmem:[%s1136] sm:$0xf]
        %v1138 = vld [vmem:[%s1136 + $0x4] sm:$0xf]
        %v1139 = vld [vmem:[%s1136 + $0x8] sm:$0xf]
        %v1140 = vld [vmem:[%s1136 + $0xc] sm:$0xf]
        %v1141 = vld [vmem:[%s1136 + $0x10] sm:$0xf]
        %v1142 = vld [vmem:[%s1136 + $0x14] sm:$0xf]
        %v1143 = vld [vmem:[%s1136 + $0x18] sm:$0xf]
        %v1144 = vld [vmem:[%s1136 + $0x1c] sm:$0xf]
        %v1145 = vld [vmem:[%s1136 + $0x20] sm:$0xf]
        %v1146 = vld [vmem:[%s1136 + $0x24] sm:$0xf]
        %v1147 = vld [vmem:[%s1136 + $0x28] sm:$0xf]
        %v1148 = vld [vmem:[%s1136 + $0x2c] sm:$0xf]
        %v1149 = vld [vmem:[%s1136 + $0x30] sm:$0xf]
        %v1150 = vld [vmem:[%s1136 + $0x34] sm:$0xf]
        %v1151 = vld [vmem:[%s1136 + $0x38] sm:$0xf]
        %v1152 = vld [vmem:[%s1136 + $0x3c] sm:$0xf]
        %v1169 = vunpack.c.l.b16 %v1137
        %v1170 = vunpack.c.l.b16 %v1138
        %v1171 = vunpack.c.l.b16 %v1139
        %v1172 = vunpack.c.l.b16 %v1140
        %v1173 = vunpack.c.l.b16 %v1141
        %v1174 = vunpack.c.l.b16 %v1142
        %v1175 = vunpack.c.l.b16 %v1143
        %v1176 = vunpack.c.l.b16 %v1144
        %v1177 = vunpack.c.l.b16 %v1145
        %v1178 = vunpack.c.l.b16 %v1146
        %v1179 = vunpack.c.l.b16 %v1147
        %v1180 = vunpack.c.l.b16 %v1148
        %v1181 = vunpack.c.l.b16 %v1149
        %v1182 = vunpack.c.l.b16 %v1150
        %v1183 = vunpack.c.l.b16 %v1151
        %v1184 = vunpack.c.l.b16 %v1152
        %v1185 = vpack.c.b16 %v1170, %v1169
        %v1186 = vpack.c.b16 %v1172, %v1171
        %v1187 = vpack.c.b16 %v1174, %v1173
        %v1188 = vpack.c.b16 %v1176, %v1175
        %v1189 = vpack.c.b16 %v1178, %v1177
        %v1190 = vpack.c.b16 %v1180, %v1179
        %v1191 = vpack.c.b16 %v1182, %v1181
        %v1192 = vpack.c.b16 %v1184, %v1183
        %1201 = vmatprep.subr.bf16.mxu0 0
        %1202 = vmatpush1.bf16.msra.mxu0 %v1192
        %1203 = vmatprep.subr.bf16.mxu0 0
        %1204 = vmatpush1.bf16.msra.mxu0 %v1191
        %1205 = vmatprep.subr.bf16.mxu0 0
        %1206 = vmatpush1.bf16.msra.mxu0 %v1190
        %1207 = vmatprep.subr.bf16.mxu0 0
        %1208 = vmatpush1.bf16.msra.mxu0 %v1189
        %1209 = vmatprep.subr.bf16.mxu0 0
        %1210 = vmatpush1.bf16.msra.mxu0 %v1188
        %1211 = vmatprep.subr.bf16.mxu0 0
        %1212 = vmatpush1.bf16.msra.mxu0 %v1187
        %1213 = vmatprep.subr.bf16.mxu0 0
        %1214 = vmatpush1.bf16.msra.mxu0 %v1186
        %1215 = vmatprep.subr.bf16.mxu0 0
        %1216 = vmatpush1.bf16.msra.mxu0 %v1185
        %1217 = vmatprep.subr.bf16.mxu0 0
        %1218 = vmatpush2.bf16.msra.mxu0 0
        %1219 = vmatprep.subr.bf16.mxu0 0
        %1220 = vmatpush2.bf16.msra.mxu0 0
        %1221 = vmatprep.subr.bf16.mxu0 0
        %1222 = vmatpush2.bf16.msra.mxu0 0
        %1223 = vmatprep.subr.bf16.mxu0 0
        %1224 = vmatpush2.bf16.msra.mxu0 0
        %1225 = vmatprep.subr.bf16.mxu0 0
        %1226 = vmatpush2.bf16.msra.mxu0 0
        %1227 = vmatprep.subr.bf16.mxu0 0
        %1228 = vmatpush2.bf16.msra.mxu0 0
        %1229 = vmatprep.subr.bf16.mxu0 0
        %1230 = vmatpush2.bf16.msra.mxu0 0
        %1231 = vmatprep.subr.bf16.mxu0 0
        %1232 = vmatpush2.bf16.msra.mxu0 0
        %1233 = vmatprep.mubr.bf16.mxu0 0
        %1234 = vmatmul.mubr.bf16.gmra.mxu0 %v1120
        %v1235 = vpop.f32.mrf.mxu0
        %v1236 = vadd.f32 0.0, %v1235
        %v1237 = vpop.f32.mrf.mxu0
        %v1238 = vpop.f32.mrf.mxu0
        %v1239 = vadd.f32 0.0, %v1238
        %v1240 = vpop.f32.mrf.mxu0
        %1241 = vmatprep.mubr.bf16.mxu0 0
        %1242 = vmatmul.mubr.bf16.gmra.mxu0 %v1121
        %v1243 = vpop.f32.mrf.mxu0
        %v1244 = vadd.f32 0.0, %v1243
        %v1245 = vpop.f32.mrf.mxu0
        %v1246 = vpop.f32.mrf.mxu0
        %v1247 = vadd.f32 0.0, %v1246
        %v1248 = vpop.f32.mrf.mxu0
        %1249 = vmatprep.mubr.bf16.mxu0 0
        %1250 = vmatmul.mubr.bf16.gmra.mxu0 %v1122
        %v1251 = vpop.f32.mrf.mxu0
        %v1252 = vadd.f32 0.0, %v1251
        %v1253 = vpop.f32.mrf.mxu0
        %v1254 = vpop.f32.mrf.mxu0
        %v1255 = vadd.f32 0.0, %v1254
        %v1256 = vpop.f32.mrf.mxu0
        %1257 = vmatprep.mubr.bf16.mxu0 0
        %1258 = vmatmul.mubr.bf16.gmra.mxu0 %v1123
        %v1259 = vpop.f32.mrf.mxu0
        %v1260 = vadd.f32 0.0, %v1259
        %v1261 = vpop.f32.mrf.mxu0
        %v1262 = vpop.f32.mrf.mxu0
        %v1263 = vadd.f32 0.0, %v1262
        %v1264 = vpop.f32.mrf.mxu0
        %1265 = vmatprep.mubr.bf16.mxu0 0
        %1266 = vmatmul.mubr.bf16.gmra.mxu0 %v1124
        %v1267 = vpop.f32.mrf.mxu0
        %v1268 = vadd.f32 0.0, %v1267
        %v1269 = vpop.f32.mrf.mxu0
        %v1270 = vpop.f32.mrf.mxu0
        %v1271 = vadd.f32 0.0, %v1270
        %v1272 = vpop.f32.mrf.mxu0
        %1273 = vmatprep.mubr.bf16.mxu0 0
        %1274 = vmatmul.mubr.bf16.gmra.mxu0 %v1125
        %v1275 = vpop.f32.mrf.mxu0
        %v1276 = vadd.f32 0.0, %v1275
        %v1277 = vpop.f32.mrf.mxu0
        %v1278 = vpop.f32.mrf.mxu0
        %v1279 = vadd.f32 0.0, %v1278
        %v1280 = vpop.f32.mrf.mxu0
        %1281 = vmatprep.mubr.bf16.mxu0 0
        %1282 = vmatmul.mubr.bf16.gmra.mxu0 %v1126
        %v1283 = vpop.f32.mrf.mxu0
        %v1284 = vadd.f32 0.0, %v1283
        %v1285 = vpop.f32.mrf.mxu0
        %v1286 = vpop.f32.mrf.mxu0
        %v1287 = vadd.f32 0.0, %v1286
        %v1288 = vpop.f32.mrf.mxu0
        %1289 = vmatprep.mubr.bf16.mxu0 0
        %1290 = vmatmul.mubr.bf16.gmra.mxu0 %v1127
        %v1291 = vpop.f32.mrf.mxu0
        %v1292 = vadd.f32 0.0, %v1291
        %v1293 = vpop.f32.mrf.mxu0
        %v1294 = vpop.f32.mrf.mxu0
        %v1295 = vadd.f32 0.0, %v1294
        %v1296 = vpop.f32.mrf.mxu0
        %1297 = vmatprep.mubr.bf16.mxu0 0
        %1298 = vmatmul.mubr.bf16.gmra.mxu0 %v1128
        %v1299 = vpop.f32.mrf.mxu0
        %v1300 = vadd.f32 0.0, %v1299
        %v1301 = vpop.f32.mrf.mxu0
        %v1302 = vpop.f32.mrf.mxu0
        %v1303 = vadd.f32 0.0, %v1302
        %v1304 = vpop.f32.mrf.mxu0
        %1305 = vmatprep.mubr.bf16.mxu0 0
        %1306 = vmatmul.mubr.bf16.gmra.mxu0 %v1129
        %v1307 = vpop.f32.mrf.mxu0
        %v1308 = vadd.f32 0.0, %v1307
        %v1309 = vpop.f32.mrf.mxu0
        %v1310 = vpop.f32.mrf.mxu0
        %v1311 = vadd.f32 0.0, %v1310
        %v1312 = vpop.f32.mrf.mxu0
        %1313 = vmatprep.mubr.bf16.mxu0 0
        %1314 = vmatmul.mubr.bf16.gmra.mxu0 %v1130
        %v1315 = vpop.f32.mrf.mxu0
        %v1316 = vadd.f32 0.0, %v1315
        %v1317 = vpop.f32.mrf.mxu0
        %v1318 = vpop.f32.mrf.mxu0
        %v1319 = vadd.f32 0.0, %v1318
        %v1320 = vpop.f32.mrf.mxu0
        %1321 = vmatprep.mubr.bf16.mxu0 0
        %1322 = vmatmul.mubr.bf16.gmra.mxu0 %v1131
        %v1323 = vpop.f32.mrf.mxu0
        %v1324 = vadd.f32 0.0, %v1323
        %v1325 = vpop.f32.mrf.mxu0
        %v1326 = vpop.f32.mrf.mxu0
        %v1327 = vadd.f32 0.0, %v1326
        %v1328 = vpop.f32.mrf.mxu0
        %1329 = vmatprep.mubr.bf16.mxu0 0
        %1330 = vmatmul.mubr.bf16.gmra.mxu0 %v1132
        %v1331 = vpop.f32.mrf.mxu0
        %v1332 = vadd.f32 0.0, %v1331
        %v1333 = vpop.f32.mrf.mxu0
        %v1334 = vpop.f32.mrf.mxu0
        %v1335 = vadd.f32 0.0, %v1334
        %v1336 = vpop.f32.mrf.mxu0
        %1337 = vmatprep.mubr.bf16.mxu0 0
        %1338 = vmatmul.mubr.bf16.gmra.mxu0 %v1133
        %v1339 = vpop.f32.mrf.mxu0
        %v1340 = vadd.f32 0.0, %v1339
        %v1341 = vpop.f32.mrf.mxu0
        %v1342 = vpop.f32.mrf.mxu0
        %v1343 = vadd.f32 0.0, %v1342
        %v1344 = vpop.f32.mrf.mxu0
        %1345 = vmatprep.mubr.bf16.mxu0 0
        %1346 = vmatmul.mubr.bf16.gmra.mxu0 %v1134
        %v1347 = vpop.f32.mrf.mxu0
        %v1348 = vadd.f32 0.0, %v1347
        %v1349 = vpop.f32.mrf.mxu0
        %v1350 = vpop.f32.mrf.mxu0
        %v1351 = vadd.f32 0.0, %v1350
        %v1352 = vpop.f32.mrf.mxu0
        %1353 = vmatprep.mubr.bf16.mxu0 0
        %1354 = vmatmul.mubr.bf16.gmra.mxu0 %v1135
        %v1355 = vpop.f32.mrf.mxu0
        %v1356 = vadd.f32 0.0, %v1355
        %v1357 = vpop.f32.mrf.mxu0
        %v1358 = vpop.f32.mrf.mxu0
        %v1359 = vadd.f32 0.0, %v1358
        %v1360 = vpop.f32.mrf.mxu0
        %1361 = vdwg.mxu0
        %v1378 = vunpack.c.l.b16 %v1072
        %v1379 = vunpack.c.l.b16 %v1073
        %v1380 = vunpack.c.l.b16 %v1074
        %v1381 = vunpack.c.l.b16 %v1075
        %v1382 = vunpack.c.l.b16 %v1076
        %v1383 = vunpack.c.l.b16 %v1077
        %v1384 = vunpack.c.l.b16 %v1078
        %v1385 = vunpack.c.l.b16 %v1079
        %v1386 = vunpack.c.l.b16 %v1080
        %v1387 = vunpack.c.l.b16 %v1081
        %v1388 = vunpack.c.l.b16 %v1082
        %v1389 = vunpack.c.l.b16 %v1083
        %v1390 = vunpack.c.l.b16 %v1084
        %v1391 = vunpack.c.l.b16 %v1085
        %v1392 = vunpack.c.l.b16 %v1086
        %v1393 = vunpack.c.l.b16 %v1087
        %v1394 = vpack.c.b16 %v1379, %v1378
        %v1395 = vpack.c.b16 %v1381, %v1380
        %v1396 = vpack.c.b16 %v1383, %v1382
        %v1397 = vpack.c.b16 %v1385, %v1384
        %v1398 = vpack.c.b16 %v1387, %v1386
        %v1399 = vpack.c.b16 %v1389, %v1388
        %v1400 = vpack.c.b16 %v1391, %v1390
        %v1401 = vpack.c.b16 %v1393, %v1392
        %1410 = vmatprep.subr.bf16.mxu0 0
        %1411 = vmatpush1.bf16.msra.mxu0 %v1401
        %1412 = vmatprep.subr.bf16.mxu0 0
        %1413 = vmatpush1.bf16.msra.mxu0 %v1400
        %1414 = vmatprep.subr.bf16.mxu0 0
        %1415 = vmatpush1.bf16.msra.mxu0 %v1399
        %1416 = vmatprep.subr.bf16.mxu0 0
        %1417 = vmatpush1.bf16.msra.mxu0 %v1398
        %1418 = vmatprep.subr.bf16.mxu0 0
        %1419 = vmatpush1.bf16.msra.mxu0 %v1397
        %1420 = vmatprep.subr.bf16.mxu0 0
        %1421 = vmatpush1.bf16.msra.mxu0 %v1396
        %1422 = vmatprep.subr.bf16.mxu0 0
        %1423 = vmatpush1.bf16.msra.mxu0 %v1395
        %1424 = vmatprep.subr.bf16.mxu0 0
        %1425 = vmatpush1.bf16.msra.mxu0 %v1394
        %1426 = vmatprep.subr.bf16.mxu0 0
        %1427 = vmatpush2.bf16.msra.mxu0 0
        %1428 = vmatprep.subr.bf16.mxu0 0
        %1429 = vmatpush2.bf16.msra.mxu0 0
        %1430 = vmatprep.subr.bf16.mxu0 0
        %1431 = vmatpush2.bf16.msra.mxu0 0
        %1432 = vmatprep.subr.bf16.mxu0 0
        %1433 = vmatpush2.bf16.msra.mxu0 0
        %1434 = vmatprep.subr.bf16.mxu0 0
        %1435 = vmatpush2.bf16.msra.mxu0 0
        %1436 = vmatprep.subr.bf16.mxu0 0
        %1437 = vmatpush2.bf16.msra.mxu0 0
        %1438 = vmatprep.subr.bf16.mxu0 0
        %1439 = vmatpush2.bf16.msra.mxu0 0
        %1440 = vmatprep.subr.bf16.mxu0 0
        %1441 = vmatpush2.bf16.msra.mxu0 0
        %1442 = vmatprep.mubr.bf16.mxu0 0
        %1443 = vmatmul.mubr.bf16.gmra.mxu0 %v1056
        %v1444 = vpop.f32.mrf.mxu0
        %v1445 = vadd.f32 %v1236, %v1444
        %v1446 = vpop.f32.mrf.mxu0
        %v1447 = vpop.f32.mrf.mxu0
        %v1448 = vadd.f32 %v1239, %v1447
        %v1449 = vpop.f32.mrf.mxu0
        %1450 = vmatprep.mubr.bf16.mxu0 0
        %1451 = vmatmul.mubr.bf16.gmra.mxu0 %v1057
        %v1452 = vpop.f32.mrf.mxu0
        %v1453 = vadd.f32 %v1244, %v1452
        %v1454 = vpop.f32.mrf.mxu0
        %v1455 = vpop.f32.mrf.mxu0
        %v1456 = vadd.f32 %v1247, %v1455
        %v1457 = vpop.f32.mrf.mxu0
        %1458 = vmatprep.mubr.bf16.mxu0 0
        %1459 = vmatmul.mubr.bf16.gmra.mxu0 %v1058
        %v1460 = vpop.f32.mrf.mxu0
        %v1461 = vadd.f32 %v1252, %v1460
        %v1462 = vpop.f32.mrf.mxu0
        %v1463 = vpop.f32.mrf.mxu0
        %v1464 = vadd.f32 %v1255, %v1463
        %v1465 = vpop.f32.mrf.mxu0
        %1466 = vmatprep.mubr.bf16.mxu0 0
        %1467 = vmatmul.mubr.bf16.gmra.mxu0 %v1059
        %v1468 = vpop.f32.mrf.mxu0
        %v1469 = vadd.f32 %v1260, %v1468
        %v1470 = vpop.f32.mrf.mxu0
        %v1471 = vpop.f32.mrf.mxu0
        %v1472 = vadd.f32 %v1263, %v1471
        %v1473 = vpop.f32.mrf.mxu0
        %1474 = vmatprep.mubr.bf16.mxu0 0
        %1475 = vmatmul.mubr.bf16.gmra.mxu0 %v1060
        %v1476 = vpop.f32.mrf.mxu0
        %v1477 = vadd.f32 %v1268, %v1476
        %v1478 = vpop.f32.mrf.mxu0
        %v1479 = vpop.f32.mrf.mxu0
        %v1480 = vadd.f32 %v1271, %v1479
        %v1481 = vpop.f32.mrf.mxu0
        %1482 = vmatprep.mubr.bf16.mxu0 0
        %1483 = vmatmul.mubr.bf16.gmra.mxu0 %v1061
        %v1484 = vpop.f32.mrf.mxu0
        %v1485 = vadd.f32 %v1276, %v1484
        %v1486 = vpop.f32.mrf.mxu0
        %v1487 = vpop.f32.mrf.mxu0
        %v1488 = vadd.f32 %v1279, %v1487
        %v1489 = vpop.f32.mrf.mxu0
        %1490 = vmatprep.mubr.bf16.mxu0 0
        %1491 = vmatmul.mubr.bf16.gmra.mxu0 %v1062
        %v1492 = vpop.f32.mrf.mxu0
        %v1493 = vadd.f32 %v1284, %v1492
        %v1494 = vpop.f32.mrf.mxu0
        %v1495 = vpop.f32.mrf.mxu0
        %v1496 = vadd.f32 %v1287, %v1495
        %v1497 = vpop.f32.mrf.mxu0
        %1498 = vmatprep.mubr.bf16.mxu0 0
        %1499 = vmatmul.mubr.bf16.gmra.mxu0 %v1063
        %v1500 = vpop.f32.mrf.mxu0
        %v1501 = vadd.f32 %v1292, %v1500
        %v1502 = vpop.f32.mrf.mxu0
        %v1503 = vpop.f32.mrf.mxu0
        %v1504 = vadd.f32 %v1295, %v1503
        %v1505 = vpop.f32.mrf.mxu0
        %1506 = vmatprep.mubr.bf16.mxu0 0
        %1507 = vmatmul.mubr.bf16.gmra.mxu0 %v1064
        %v1508 = vpop.f32.mrf.mxu0
        %v1509 = vadd.f32 %v1300, %v1508
        %v1510 = vpop.f32.mrf.mxu0
        %v1511 = vpop.f32.mrf.mxu0
        %v1512 = vadd.f32 %v1303, %v1511
        %v1513 = vpop.f32.mrf.mxu0
        %1514 = vmatprep.mubr.bf16.mxu0 0
        %1515 = vmatmul.mubr.bf16.gmra.mxu0 %v1065
        %v1516 = vpop.f32.mrf.mxu0
        %v1517 = vadd.f32 %v1308, %v1516
        %v1518 = vpop.f32.mrf.mxu0
        %v1519 = vpop.f32.mrf.mxu0
        %v1520 = vadd.f32 %v1311, %v1519
        %v1521 = vpop.f32.mrf.mxu0
        %1522 = vmatprep.mubr.bf16.mxu0 0
        %1523 = vmatmul.mubr.bf16.gmra.mxu0 %v1066
        %v1524 = vpop.f32.mrf.mxu0
        %v1525 = vadd.f32 %v1316, %v1524
        %v1526 = vpop.f32.mrf.mxu0
        %v1527 = vpop.f32.mrf.mxu0
        %v1528 = vadd.f32 %v1319, %v1527
        %v1529 = vpop.f32.mrf.mxu0
        %1530 = vmatprep.mubr.bf16.mxu0 0
        %1531 = vmatmul.mubr.bf16.gmra.mxu0 %v1067
        %v1532 = vpop.f32.mrf.mxu0
        %v1533 = vadd.f32 %v1324, %v1532
        %v1534 = vpop.f32.mrf.mxu0
        %v1535 = vpop.f32.mrf.mxu0
        %v1536 = vadd.f32 %v1327, %v1535
        %v1537 = vpop.f32.mrf.mxu0
        %1538 = vmatprep.mubr.bf16.mxu0 0
        %1539 = vmatmul.mubr.bf16.gmra.mxu0 %v1068
        %v1540 = vpop.f32.mrf.mxu0
        %v1541 = vadd.f32 %v1332, %v1540
        %v1542 = vpop.f32.mrf.mxu0
        %v1543 = vpop.f32.mrf.mxu0
        %v1544 = vadd.f32 %v1335, %v1543
        %v1545 = vpop.f32.mrf.mxu0
        %1546 = vmatprep.mubr.bf16.mxu0 0
        %1547 = vmatmul.mubr.bf16.gmra.mxu0 %v1069
        %v1548 = vpop.f32.mrf.mxu0
        %v1549 = vadd.f32 %v1340, %v1548
        %v1550 = vpop.f32.mrf.mxu0
        %v1551 = vpop.f32.mrf.mxu0
        %v1552 = vadd.f32 %v1343, %v1551
        %v1553 = vpop.f32.mrf.mxu0
        %1554 = vmatprep.mubr.bf16.mxu0 0
        %1555 = vmatmul.mubr.bf16.gmra.mxu0 %v1070
        %v1556 = vpop.f32.mrf.mxu0
        %v1557 = vadd.f32 %v1348, %v1556
        %v1558 = vpop.f32.mrf.mxu0
        %v1559 = vpop.f32.mrf.mxu0
        %v1560 = vadd.f32 %v1351, %v1559
        %v1561 = vpop.f32.mrf.mxu0
        %1562 = vmatprep.mubr.bf16.mxu0 0
        %1563 = vmatmul.mubr.bf16.gmra.mxu0 %v1071
        %v1564 = vpop.f32.mrf.mxu0
        %v1565 = vadd.f32 %v1356, %v1564
        %v1566 = vpop.f32.mrf.mxu0
        %v1567 = vpop.f32.mrf.mxu0
        %v1568 = vadd.f32 %v1359, %v1567
        %v1569 = vpop.f32.mrf.mxu0
        %1570 = vdwg.mxu0
        %v1571 = vld [vmem:[#allocation2 + $0x9] sm:$0xff]
        %v1572 = vld [vmem:[#allocation2 + $0x11] sm:$0xff]
        %v1573 = vld [vmem:[#allocation2 + $0x19] sm:$0xff]
        %v1574 = vld [vmem:[#allocation2 + $0x21] sm:$0xff]
        %v1575 = vld [vmem:[#allocation2 + $0x29] sm:$0xff]
        %v1576 = vld [vmem:[#allocation2 + $0x31] sm:$0xff]
        %v1577 = vld [vmem:[#allocation2 + $0x39] sm:$0xff]
        %v1578 = vld [vmem:[#allocation2 + $0x41] sm:$0xff]
        %v1579 = vld [vmem:[#allocation2 + $0x49] sm:$0xff]
        %v1580 = vld [vmem:[#allocation2 + $0x51] sm:$0xff]
        %v1581 = vld [vmem:[#allocation2 + $0x59] sm:$0xff]
        %v1582 = vld [vmem:[#allocation2 + $0x61] sm:$0xff]
        %v1583 = vld [vmem:[#allocation2 + $0x69] sm:$0xff]
        %v1584 = vld [vmem:[#allocation2 + $0x71] sm:$0xff]
        %v1585 = vld [vmem:[#allocation2 + $0x79] sm:$0xff]
        %v1586 = vld [vmem:[#allocation2 + $0x81] sm:$0xff]
        %v1587 = vld [vmem:[#allocation2 + $0x89] sm:$0xff]
        %v1588 = vld [vmem:[#allocation2 + $0x91] sm:$0xff]
        %v1589 = vld [vmem:[#allocation2 + $0x99] sm:$0xff]
        %v1590 = vld [vmem:[#allocation2 + $0xa1] sm:$0xff]
        %v1591 = vld [vmem:[#allocation2 + $0xa9] sm:$0xff]
        %v1592 = vld [vmem:[#allocation2 + $0xb1] sm:$0xff]
        %v1593 = vld [vmem:[#allocation2 + $0xb9] sm:$0xff]
        %v1594 = vld [vmem:[#allocation2 + $0xc1] sm:$0xff]
        %v1595 = vld [vmem:[#allocation2 + $0xc9] sm:$0xff]
        %v1596 = vld [vmem:[#allocation2 + $0xd1] sm:$0xff]
        %v1597 = vld [vmem:[#allocation2 + $0xd9] sm:$0xff]
        %v1598 = vld [vmem:[#allocation2 + $0xe1] sm:$0xff]
        %v1599 = vld [vmem:[#allocation2 + $0xe9] sm:$0xff]
        %v1600 = vld [vmem:[#allocation2 + $0xf1] sm:$0xff]
        %v1601 = vld [vmem:[#allocation2 + $0xf9] sm:$0xff]
        %v1602 = vld [vmem:[#allocation2 + $0x101] sm:$0xff]
        %1603 = vset.pattern.permute.xlu0 2
        %1604 = vperm.xlu0 %1603, %v832
        %v1605 = vpop.permute.xlu0 %1604
        %1607 = vset.pattern.permute.xlu0 2
        %1608 = vperm.xlu0 %1607, %v833
        %v1609 = vpop.permute.xlu0 %1608
        %1611 = vset.pattern.permute.xlu0 2
        %1612 = vperm.xlu0 %1611, %v834
        %v1613 = vpop.permute.xlu0 %1612
        %1615 = vset.pattern.permute.xlu0 2
        %1616 = vperm.xlu0 %1615, %v835
        %v1617 = vpop.permute.xlu0 %1616
        %1619 = vset.pattern.permute.xlu0 2
        %1620 = vperm.xlu0 %1619, %v836
        %v1621 = vpop.permute.xlu0 %1620
        %1623 = vset.pattern.permute.xlu0 2
        %1624 = vperm.xlu0 %1623, %v837
        %v1625 = vpop.permute.xlu0 %1624
        %1627 = vset.pattern.permute.xlu0 2
        %1628 = vperm.xlu0 %1627, %v838
        %v1629 = vpop.permute.xlu0 %1628
        %1631 = vset.pattern.permute.xlu0 2
        %1632 = vperm.xlu0 %1631, %v839
        %v1633 = vpop.permute.xlu0 %1632
        %1635 = vset.pattern.permute.xlu0 2
        %1636 = vperm.xlu0 %1635, %v840
        %v1637 = vpop.permute.xlu0 %1636
        %1639 = vset.pattern.permute.xlu0 2
        %1640 = vperm.xlu0 %1639, %v841
        %v1641 = vpop.permute.xlu0 %1640
        %1643 = vset.pattern.permute.xlu0 2
        %1644 = vperm.xlu0 %1643, %v842
        %v1645 = vpop.permute.xlu0 %1644
        %1647 = vset.pattern.permute.xlu0 2
        %1648 = vperm.xlu0 %1647, %v843
        %v1649 = vpop.permute.xlu0 %1648
        %1651 = vset.pattern.permute.xlu0 2
        %1652 = vperm.xlu0 %1651, %v844
        %v1653 = vpop.permute.xlu0 %1652
        %1655 = vset.pattern.permute.xlu0 2
        %1656 = vperm.xlu0 %1655, %v845
        %v1657 = vpop.permute.xlu0 %1656
        %1659 = vset.pattern.permute.xlu0 2
        %1660 = vperm.xlu0 %1659, %v846
        %v1661 = vpop.permute.xlu0 %1660
        %1663 = vset.pattern.permute.xlu0 2
        %1664 = vperm.xlu0 %1663, %v847
        %v1665 = vpop.permute.xlu0 %1664
        %1667 = vset.pattern.permute.xlu0 2
        %1668 = vperm.xlu0 %1667, %v848
        %v1669 = vpop.permute.xlu0 %1668
        %1671 = vset.pattern.permute.xlu0 2
        %1672 = vperm.xlu0 %1671, %v849
        %v1673 = vpop.permute.xlu0 %1672
        %1675 = vset.pattern.permute.xlu0 2
        %1676 = vperm.xlu0 %1675, %v850
        %v1677 = vpop.permute.xlu0 %1676
        %1679 = vset.pattern.permute.xlu0 2
        %1680 = vperm.xlu0 %1679, %v851
        %v1681 = vpop.permute.xlu0 %1680
        %1683 = vset.pattern.permute.xlu0 2
        %1684 = vperm.xlu0 %1683, %v852
        %v1685 = vpop.permute.xlu0 %1684
        %1687 = vset.pattern.permute.xlu0 2
        %1688 = vperm.xlu0 %1687, %v853
        %v1689 = vpop.permute.xlu0 %1688
        %1691 = vset.pattern.permute.xlu0 2
        %1692 = vperm.xlu0 %1691, %v854
        %v1693 = vpop.permute.xlu0 %1692
        %1695 = vset.pattern.permute.xlu0 2
        %1696 = vperm.xlu0 %1695, %v855
        %v1697 = vpop.permute.xlu0 %1696
        %1699 = vset.pattern.permute.xlu0 2
        %1700 = vperm.xlu0 %1699, %v856
        %v1701 = vpop.permute.xlu0 %1700
        %1703 = vset.pattern.permute.xlu0 2
        %1704 = vperm.xlu0 %1703, %v857
        %v1705 = vpop.permute.xlu0 %1704
        %1707 = vset.pattern.permute.xlu0 2
        %1708 = vperm.xlu0 %1707, %v858
        %v1709 = vpop.permute.xlu0 %1708
        %1711 = vset.pattern.permute.xlu0 2
        %1712 = vperm.xlu0 %1711, %v859
        %v1713 = vpop.permute.xlu0 %1712
        %1715 = vset.pattern.permute.xlu0 2
        %1716 = vperm.xlu0 %1715, %v860
        %v1717 = vpop.permute.xlu0 %1716
        %1719 = vset.pattern.permute.xlu0 2
        %1720 = vperm.xlu0 %1719, %v861
        %v1721 = vpop.permute.xlu0 %1720
        %1723 = vset.pattern.permute.xlu0 2
        %1724 = vperm.xlu0 %1723, %v862
        %v1725 = vpop.permute.xlu0 %1724
        %1727 = vset.pattern.permute.xlu0 2
        %1728 = vperm.xlu0 %1727, %v863
        %v1729 = vpop.permute.xlu0 %1728
        %v1731 = vmul.f32 %v1571, %v1605
        %v1732 = vmul.f32 %v1572, %v1609
        %v1733 = vmul.f32 %v1573, %v1613
        %v1734 = vmul.f32 %v1574, %v1617
        %v1735 = vmul.f32 %v1575, %v1621
        %v1736 = vmul.f32 %v1576, %v1625
        %v1737 = vmul.f32 %v1577, %v1629
        %v1738 = vmul.f32 %v1578, %v1633
        %v1739 = vmul.f32 %v1579, %v1637
        %v1740 = vmul.f32 %v1580, %v1641
        %v1741 = vmul.f32 %v1581, %v1645
        %v1742 = vmul.f32 %v1582, %v1649
        %v1743 = vmul.f32 %v1583, %v1653
        %v1744 = vmul.f32 %v1584, %v1657
        %v1745 = vmul.f32 %v1585, %v1661
        %v1746 = vmul.f32 %v1586, %v1665
        %v1747 = vmul.f32 %v1587, %v1669
        %v1748 = vmul.f32 %v1588, %v1673
        %v1749 = vmul.f32 %v1589, %v1677
        %v1750 = vmul.f32 %v1590, %v1681
        %v1751 = vmul.f32 %v1591, %v1685
        %v1752 = vmul.f32 %v1592, %v1689
        %v1753 = vmul.f32 %v1593, %v1693
        %v1754 = vmul.f32 %v1594, %v1697
        %v1755 = vmul.f32 %v1595, %v1701
        %v1756 = vmul.f32 %v1596, %v1705
        %v1757 = vmul.f32 %v1597, %v1709
        %v1758 = vmul.f32 %v1598, %v1713
        %v1759 = vmul.f32 %v1599, %v1717
        %v1760 = vmul.f32 %v1600, %v1721
        %v1761 = vmul.f32 %v1601, %v1725
        %v1762 = vmul.f32 %v1602, %v1729
        %v1763 = vpack.c.bf16 %v1732, %v1731
        %v1764 = vpack.c.bf16 %v1734, %v1733
        %v1765 = vpack.c.bf16 %v1736, %v1735
        %v1766 = vpack.c.bf16 %v1738, %v1737
        %v1767 = vpack.c.bf16 %v1740, %v1739
        %v1768 = vpack.c.bf16 %v1742, %v1741
        %v1769 = vpack.c.bf16 %v1744, %v1743
        %v1770 = vpack.c.bf16 %v1746, %v1745
        %v1771 = vpack.c.bf16 %v1748, %v1747
        %v1772 = vpack.c.bf16 %v1750, %v1749
        %v1773 = vpack.c.bf16 %v1752, %v1751
        %v1774 = vpack.c.bf16 %v1754, %v1753
        %v1775 = vpack.c.bf16 %v1756, %v1755
        %v1776 = vpack.c.bf16 %v1758, %v1757
        %v1777 = vpack.c.bf16 %v1760, %v1759
        %v1778 = vpack.c.bf16 %v1762, %v1761
        %s1779 = scalar_lea.vmem [#allocation6], 128
        %v1780 = vld [vmem:[%s1779] sm:$0xf]
        %v1781 = vld [vmem:[%s1779 + $0x4] sm:$0xf]
        %v1782 = vld [vmem:[%s1779 + $0x8] sm:$0xf]
        %v1783 = vld [vmem:[%s1779 + $0xc] sm:$0xf]
        %v1784 = vld [vmem:[%s1779 + $0x10] sm:$0xf]
        %v1785 = vld [vmem:[%s1779 + $0x14] sm:$0xf]
        %v1786 = vld [vmem:[%s1779 + $0x18] sm:$0xf]
        %v1787 = vld [vmem:[%s1779 + $0x1c] sm:$0xf]
        %v1788 = vld [vmem:[%s1779 + $0x20] sm:$0xf]
        %v1789 = vld [vmem:[%s1779 + $0x24] sm:$0xf]
        %v1790 = vld [vmem:[%s1779 + $0x28] sm:$0xf]
        %v1791 = vld [vmem:[%s1779 + $0x2c] sm:$0xf]
        %v1792 = vld [vmem:[%s1779 + $0x30] sm:$0xf]
        %v1793 = vld [vmem:[%s1779 + $0x34] sm:$0xf]
        %v1794 = vld [vmem:[%s1779 + $0x38] sm:$0xf]
        %v1795 = vld [vmem:[%s1779 + $0x3c] sm:$0xf]
        %v1812 = vunpack.c.l.b16 %v1780
        %v1813 = vunpack.c.l.b16 %v1781
        %v1814 = vunpack.c.l.b16 %v1782
        %v1815 = vunpack.c.l.b16 %v1783
        %v1816 = vunpack.c.l.b16 %v1784
        %v1817 = vunpack.c.l.b16 %v1785
        %v1818 = vunpack.c.l.b16 %v1786
        %v1819 = vunpack.c.l.b16 %v1787
        %v1820 = vunpack.c.l.b16 %v1788
        %v1821 = vunpack.c.l.b16 %v1789
        %v1822 = vunpack.c.l.b16 %v1790
        %v1823 = vunpack.c.l.b16 %v1791
        %v1824 = vunpack.c.l.b16 %v1792
        %v1825 = vunpack.c.l.b16 %v1793
        %v1826 = vunpack.c.l.b16 %v1794
        %v1827 = vunpack.c.l.b16 %v1795
        %v1828 = vpack.c.b16 %v1813, %v1812
        %v1829 = vpack.c.b16 %v1815, %v1814
        %v1830 = vpack.c.b16 %v1817, %v1816
        %v1831 = vpack.c.b16 %v1819, %v1818
        %v1832 = vpack.c.b16 %v1821, %v1820
        %v1833 = vpack.c.b16 %v1823, %v1822
        %v1834 = vpack.c.b16 %v1825, %v1824
        %v1835 = vpack.c.b16 %v1827, %v1826
        %1844 = vmatprep.subr.bf16.mxu0 0
        %1845 = vmatpush1.bf16.msra.mxu0 %v1835
        %1846 = vmatprep.subr.bf16.mxu0 0
        %1847 = vmatpush1.bf16.msra.mxu0 %v1834
        %1848 = vmatprep.subr.bf16.mxu0 0
        %1849 = vmatpush1.bf16.msra.mxu0 %v1833
        %1850 = vmatprep.subr.bf16.mxu0 0
        %1851 = vmatpush1.bf16.msra.mxu0 %v1832
        %1852 = vmatprep.subr.bf16.mxu0 0
        %1853 = vmatpush1.bf16.msra.mxu0 %v1831
        %1854 = vmatprep.subr.bf16.mxu0 0
        %1855 = vmatpush1.bf16.msra.mxu0 %v1830
        %1856 = vmatprep.subr.bf16.mxu0 0
        %1857 = vmatpush1.bf16.msra.mxu0 %v1829
        %1858 = vmatprep.subr.bf16.mxu0 0
        %1859 = vmatpush1.bf16.msra.mxu0 %v1828
        %1860 = vmatprep.subr.bf16.mxu0 0
        %1861 = vmatpush2.bf16.msra.mxu0 0
        %1862 = vmatprep.subr.bf16.mxu0 0
        %1863 = vmatpush2.bf16.msra.mxu0 0
        %1864 = vmatprep.subr.bf16.mxu0 0
        %1865 = vmatpush2.bf16.msra.mxu0 0
        %1866 = vmatprep.subr.bf16.mxu0 0
        %1867 = vmatpush2.bf16.msra.mxu0 0
        %1868 = vmatprep.subr.bf16.mxu0 0
        %1869 = vmatpush2.bf16.msra.mxu0 0
        %1870 = vmatprep.subr.bf16.mxu0 0
        %1871 = vmatpush2.bf16.msra.mxu0 0
        %1872 = vmatprep.subr.bf16.mxu0 0
        %1873 = vmatpush2.bf16.msra.mxu0 0
        %1874 = vmatprep.subr.bf16.mxu0 0
        %1875 = vmatpush2.bf16.msra.mxu0 0
        %1876 = vmatprep.mubr.bf16.mxu0 0
        %1877 = vmatmul.mubr.bf16.gmra.mxu0 %v1763
        %v1878 = vpop.f32.mrf.mxu0
        %v1879 = vadd.f32 0.0, %v1878
        %v1880 = vpop.f32.mrf.mxu0
        %v1881 = vpop.f32.mrf.mxu0
        %v1882 = vadd.f32 0.0, %v1881
        %v1883 = vpop.f32.mrf.mxu0
        %1884 = vmatprep.mubr.bf16.mxu0 0
        %1885 = vmatmul.mubr.bf16.gmra.mxu0 %v1764
        %v1886 = vpop.f32.mrf.mxu0
        %v1887 = vadd.f32 0.0, %v1886
        %v1888 = vpop.f32.mrf.mxu0
        %v1889 = vpop.f32.mrf.mxu0
        %v1890 = vadd.f32 0.0, %v1889
        %v1891 = vpop.f32.mrf.mxu0
        %1892 = vmatprep.mubr.bf16.mxu0 0
        %1893 = vmatmul.mubr.bf16.gmra.mxu0 %v1765
        %v1894 = vpop.f32.mrf.mxu0
        %v1895 = vadd.f32 0.0, %v1894
        %v1896 = vpop.f32.mrf.mxu0
        %v1897 = vpop.f32.mrf.mxu0
        %v1898 = vadd.f32 0.0, %v1897
        %v1899 = vpop.f32.mrf.mxu0
        %1900 = vmatprep.mubr.bf16.mxu0 0
        %1901 = vmatmul.mubr.bf16.gmra.mxu0 %v1766
        %v1902 = vpop.f32.mrf.mxu0
        %v1903 = vadd.f32 0.0, %v1902
        %v1904 = vpop.f32.mrf.mxu0
        %v1905 = vpop.f32.mrf.mxu0
        %v1906 = vadd.f32 0.0, %v1905
        %v1907 = vpop.f32.mrf.mxu0
        %1908 = vmatprep.mubr.bf16.mxu0 0
        %1909 = vmatmul.mubr.bf16.gmra.mxu0 %v1767
        %v1910 = vpop.f32.mrf.mxu0
        %v1911 = vadd.f32 0.0, %v1910
        %v1912 = vpop.f32.mrf.mxu0
        %v1913 = vpop.f32.mrf.mxu0
        %v1914 = vadd.f32 0.0, %v1913
        %v1915 = vpop.f32.mrf.mxu0
        %1916 = vmatprep.mubr.bf16.mxu0 0
        %1917 = vmatmul.mubr.bf16.gmra.mxu0 %v1768
        %v1918 = vpop.f32.mrf.mxu0
        %v1919 = vadd.f32 0.0, %v1918
        %v1920 = vpop.f32.mrf.mxu0
        %v1921 = vpop.f32.mrf.mxu0
        %v1922 = vadd.f32 0.0, %v1921
        %v1923 = vpop.f32.mrf.mxu0
        %1924 = vmatprep.mubr.bf16.mxu0 0
        %1925 = vmatmul.mubr.bf16.gmra.mxu0 %v1769
        %v1926 = vpop.f32.mrf.mxu0
        %v1927 = vadd.f32 0.0, %v1926
        %v1928 = vpop.f32.mrf.mxu0
        %v1929 = vpop.f32.mrf.mxu0
        %v1930 = vadd.f32 0.0, %v1929
        %v1931 = vpop.f32.mrf.mxu0
        %1932 = vmatprep.mubr.bf16.mxu0 0
        %1933 = vmatmul.mubr.bf16.gmra.mxu0 %v1770
        %v1934 = vpop.f32.mrf.mxu0
        %v1935 = vadd.f32 0.0, %v1934
        %v1936 = vpop.f32.mrf.mxu0
        %v1937 = vpop.f32.mrf.mxu0
        %v1938 = vadd.f32 0.0, %v1937
        %v1939 = vpop.f32.mrf.mxu0
        %1940 = vmatprep.mubr.bf16.mxu0 0
        %1941 = vmatmul.mubr.bf16.gmra.mxu0 %v1771
        %v1942 = vpop.f32.mrf.mxu0
        %v1943 = vadd.f32 0.0, %v1942
        %v1944 = vpop.f32.mrf.mxu0
        %v1945 = vpop.f32.mrf.mxu0
        %v1946 = vadd.f32 0.0, %v1945
        %v1947 = vpop.f32.mrf.mxu0
        %1948 = vmatprep.mubr.bf16.mxu0 0
        %1949 = vmatmul.mubr.bf16.gmra.mxu0 %v1772
        %v1950 = vpop.f32.mrf.mxu0
        %v1951 = vadd.f32 0.0, %v1950
        %v1952 = vpop.f32.mrf.mxu0
        %v1953 = vpop.f32.mrf.mxu0
        %v1954 = vadd.f32 0.0, %v1953
        %v1955 = vpop.f32.mrf.mxu0
        %1956 = vmatprep.mubr.bf16.mxu0 0
        %1957 = vmatmul.mubr.bf16.gmra.mxu0 %v1773
        %v1958 = vpop.f32.mrf.mxu0
        %v1959 = vadd.f32 0.0, %v1958
        %v1960 = vpop.f32.mrf.mxu0
        %v1961 = vpop.f32.mrf.mxu0
        %v1962 = vadd.f32 0.0, %v1961
        %v1963 = vpop.f32.mrf.mxu0
        %1964 = vmatprep.mubr.bf16.mxu0 0
        %1965 = vmatmul.mubr.bf16.gmra.mxu0 %v1774
        %v1966 = vpop.f32.mrf.mxu0
        %v1967 = vadd.f32 0.0, %v1966
        %v1968 = vpop.f32.mrf.mxu0
        %v1969 = vpop.f32.mrf.mxu0
        %v1970 = vadd.f32 0.0, %v1969
        %v1971 = vpop.f32.mrf.mxu0
        %1972 = vmatprep.mubr.bf16.mxu0 0
        %1973 = vmatmul.mubr.bf16.gmra.mxu0 %v1775
        %v1974 = vpop.f32.mrf.mxu0
        %v1975 = vadd.f32 0.0, %v1974
        %v1976 = vpop.f32.mrf.mxu0
        %v1977 = vpop.f32.mrf.mxu0
        %v1978 = vadd.f32 0.0, %v1977
        %v1979 = vpop.f32.mrf.mxu0
        %1980 = vmatprep.mubr.bf16.mxu0 0
        %1981 = vmatmul.mubr.bf16.gmra.mxu0 %v1776
        %v1982 = vpop.f32.mrf.mxu0
        %v1983 = vadd.f32 0.0, %v1982
        %v1984 = vpop.f32.mrf.mxu0
        %v1985 = vpop.f32.mrf.mxu0
        %v1986 = vadd.f32 0.0, %v1985
        %v1987 = vpop.f32.mrf.mxu0
        %1988 = vmatprep.mubr.bf16.mxu0 0
        %1989 = vmatmul.mubr.bf16.gmra.mxu0 %v1777
        %v1990 = vpop.f32.mrf.mxu0
        %v1991 = vadd.f32 0.0, %v1990
        %v1992 = vpop.f32.mrf.mxu0
        %v1993 = vpop.f32.mrf.mxu0
        %v1994 = vadd.f32 0.0, %v1993
        %v1995 = vpop.f32.mrf.mxu0
        %1996 = vmatprep.mubr.bf16.mxu0 0
        %1997 = vmatmul.mubr.bf16.gmra.mxu0 %v1778
        %v1998 = vpop.f32.mrf.mxu0
        %v1999 = vadd.f32 0.0, %v1998
        %v2000 = vpop.f32.mrf.mxu0
        %v2001 = vpop.f32.mrf.mxu0
        %v2002 = vadd.f32 0.0, %v2001
        %v2003 = vpop.f32.mrf.mxu0
        %2004 = vdwg.mxu0
        %v2005 = vadd.f32 %v1445, %v1879
        %v2006 = vadd.f32 %v1448, %v1882
        %v2007 = vadd.f32 %v1453, %v1887
        %v2008 = vadd.f32 %v1456, %v1890
        %v2009 = vadd.f32 %v1461, %v1895
        %v2010 = vadd.f32 %v1464, %v1898
        %v2011 = vadd.f32 %v1469, %v1903
        %v2012 = vadd.f32 %v1472, %v1906
        %v2013 = vadd.f32 %v1477, %v1911
        %v2014 = vadd.f32 %v1480, %v1914
        %v2015 = vadd.f32 %v1485, %v1919
        %v2016 = vadd.f32 %v1488, %v1922
        %v2017 = vadd.f32 %v1493, %v1927
        %v2018 = vadd.f32 %v1496, %v1930
        %v2019 = vadd.f32 %v1501, %v1935
        %v2020 = vadd.f32 %v1504, %v1938
        %v2021 = vadd.f32 %v1509, %v1943
        %v2022 = vadd.f32 %v1512, %v1946
        %v2023 = vadd.f32 %v1517, %v1951
        %v2024 = vadd.f32 %v1520, %v1954
        %v2025 = vadd.f32 %v1525, %v1959
        %v2026 = vadd.f32 %v1528, %v1962
        %v2027 = vadd.f32 %v1533, %v1967
        %v2028 = vadd.f32 %v1536, %v1970
        %v2029 = vadd.f32 %v1541, %v1975
        %v2030 = vadd.f32 %v1544, %v1978
        %v2031 = vadd.f32 %v1549, %v1983
        %v2032 = vadd.f32 %v1552, %v1986
        %v2033 = vadd.f32 %v1557, %v1991
        %v2034 = vadd.f32 %v1560, %v1994
        %v2035 = vadd.f32 %v1565, %v1999
        %v2036 = vadd.f32 %v1568, %v2002
        %v2037 = vld [vmem:[#allocation2 + $0x17] sm:$0xff]
        %v2038 = vld [vmem:[#allocation2 + $0x1f] sm:$0xff]
        %v2039 = vld [vmem:[#allocation2 + $0x27] sm:$0xff]
        %v2040 = vld [vmem:[#allocation2 + $0x2f] sm:$0xff]
        %v2041 = vld [vmem:[#allocation2 + $0x37] sm:$0xff]
        %v2042 = vld [vmem:[#allocation2 + $0x3f] sm:$0xff]
        %v2043 = vld [vmem:[#allocation2 + $0x47] sm:$0xff]
        %v2044 = vld [vmem:[#allocation2 + $0x4f] sm:$0xff]
        %v2045 = vld [vmem:[#allocation2 + $0x57] sm:$0xff]
        %v2046 = vld [vmem:[#allocation2 + $0x5f] sm:$0xff]
        %v2047 = vld [vmem:[#allocation2 + $0x67] sm:$0xff]
        %v2048 = vld [vmem:[#allocation2 + $0x6f] sm:$0xff]
        %v2049 = vld [vmem:[#allocation2 + $0x77] sm:$0xff]
        %v2050 = vld [vmem:[#allocation2 + $0x7f] sm:$0xff]
        %v2051 = vld [vmem:[#allocation2 + $0x87] sm:$0xff]
        %v2052 = vld [vmem:[#allocation2 + $0x8f] sm:$0xff]
        %v2053 = vld [vmem:[#allocation2 + $0x97] sm:$0xff]
        %v2054 = vld [vmem:[#allocation2 + $0x9f] sm:$0xff]
        %v2055 = vld [vmem:[#allocation2 + $0xa7] sm:$0xff]
        %v2056 = vld [vmem:[#allocation2 + $0xaf] sm:$0xff]
        %v2057 = vld [vmem:[#allocation2 + $0xb7] sm:$0xff]
        %v2058 = vld [vmem:[#allocation2 + $0xbf] sm:$0xff]
        %v2059 = vld [vmem:[#allocation2 + $0xc7] sm:$0xff]
        %v2060 = vld [vmem:[#allocation2 + $0xcf] sm:$0xff]
        %v2061 = vld [vmem:[#allocation2 + $0xd7] sm:$0xff]
        %v2062 = vld [vmem:[#allocation2 + $0xdf] sm:$0xff]
        %v2063 = vld [vmem:[#allocation2 + $0xe7] sm:$0xff]
        %v2064 = vld [vmem:[#allocation2 + $0xef] sm:$0xff]
        %v2065 = vld [vmem:[#allocation2 + $0xf7] sm:$0xff]
        %v2066 = vld [vmem:[#allocation2 + $0xff] sm:$0xff]
        %v2067 = vld [vmem:[#allocation2 + $0x107] sm:$0xff]
        %v2068 = vld [vmem:[#allocation2 + $0x10f] sm:$0xff]
        %2069 = vset.pattern.permute.xlu0 3
        %2070 = vperm.xlu0 %2069, %v832
        %v2071 = vpop.permute.xlu0 %2070
        %2073 = vset.pattern.permute.xlu0 3
        %2074 = vperm.xlu0 %2073, %v833
        %v2075 = vpop.permute.xlu0 %2074
        %2077 = vset.pattern.permute.xlu0 3
        %2078 = vperm.xlu0 %2077, %v834
        %v2079 = vpop.permute.xlu0 %2078
        %2081 = vset.pattern.permute.xlu0 3
        %2082 = vperm.xlu0 %2081, %v835
        %v2083 = vpop.permute.xlu0 %2082
        %2085 = vset.pattern.permute.xlu0 3
        %2086 = vperm.xlu0 %2085, %v836
        %v2087 = vpop.permute.xlu0 %2086
        %2089 = vset.pattern.permute.xlu0 3
        %2090 = vperm.xlu0 %2089, %v837
        %v2091 = vpop.permute.xlu0 %2090
        %2093 = vset.pattern.permute.xlu0 3
        %2094 = vperm.xlu0 %2093, %v838
        %v2095 = vpop.permute.xlu0 %2094
        %2097 = vset.pattern.permute.xlu0 3
        %2098 = vperm.xlu0 %2097, %v839
        %v2099 = vpop.permute.xlu0 %2098
        %2101 = vset.pattern.permute.xlu0 3
        %2102 = vperm.xlu0 %2101, %v840
        %v2103 = vpop.permute.xlu0 %2102
        %2105 = vset.pattern.permute.xlu0 3
        %2106 = vperm.xlu0 %2105, %v841
        %v2107 = vpop.permute.xlu0 %2106
        %2109 = vset.pattern.permute.xlu0 3
        %2110 = vperm.xlu0 %2109, %v842
        %v2111 = vpop.permute.xlu0 %2110
        %2113 = vset.pattern.permute.xlu0 3
        %2114 = vperm.xlu0 %2113, %v843
        %v2115 = vpop.permute.xlu0 %2114
        %2117 = vset.pattern.permute.xlu0 3
        %2118 = vperm.xlu0 %2117, %v844
        %v2119 = vpop.permute.xlu0 %2118
        %2121 = vset.pattern.permute.xlu0 3
        %2122 = vperm.xlu0 %2121, %v845
        %v2123 = vpop.permute.xlu0 %2122
        %2125 = vset.pattern.permute.xlu0 3
        %2126 = vperm.xlu0 %2125, %v846
        %v2127 = vpop.permute.xlu0 %2126
        %2129 = vset.pattern.permute.xlu0 3
        %2130 = vperm.xlu0 %2129, %v847
        %v2131 = vpop.permute.xlu0 %2130
        %2133 = vset.pattern.permute.xlu0 3
        %2134 = vperm.xlu0 %2133, %v848
        %v2135 = vpop.permute.xlu0 %2134
        %2137 = vset.pattern.permute.xlu0 3
        %2138 = vperm.xlu0 %2137, %v849
        %v2139 = vpop.permute.xlu0 %2138
        %2141 = vset.pattern.permute.xlu0 3
        %2142 = vperm.xlu0 %2141, %v850
        %v2143 = vpop.permute.xlu0 %2142
        %2145 = vset.pattern.permute.xlu0 3
        %2146 = vperm.xlu0 %2145, %v851
        %v2147 = vpop.permute.xlu0 %2146
        %2149 = vset.pattern.permute.xlu0 3
        %2150 = vperm.xlu0 %2149, %v852
        %v2151 = vpop.permute.xlu0 %2150
        %2153 = vset.pattern.permute.xlu0 3
        %2154 = vperm.xlu0 %2153, %v853
        %v2155 = vpop.permute.xlu0 %2154
        %2157 = vset.pattern.permute.xlu0 3
        %2158 = vperm.xlu0 %2157, %v854
        %v2159 = vpop.permute.xlu0 %2158
        %2161 = vset.pattern.permute.xlu0 3
        %2162 = vperm.xlu0 %2161, %v855
        %v2163 = vpop.permute.xlu0 %2162
        %2165 = vset.pattern.permute.xlu0 3
        %2166 = vperm.xlu0 %2165, %v856
        %v2167 = vpop.permute.xlu0 %2166
        %2169 = vset.pattern.permute.xlu0 3
        %2170 = vperm.xlu0 %2169, %v857
        %v2171 = vpop.permute.xlu0 %2170
        %2173 = vset.pattern.permute.xlu0 3
        %2174 = vperm.xlu0 %2173, %v858
        %v2175 = vpop.permute.xlu0 %2174
        %2177 = vset.pattern.permute.xlu0 3
        %2178 = vperm.xlu0 %2177, %v859
        %v2179 = vpop.permute.xlu0 %2178
        %2181 = vset.pattern.permute.xlu0 3
        %2182 = vperm.xlu0 %2181, %v860
        %v2183 = vpop.permute.xlu0 %2182
        %2185 = vset.pattern.permute.xlu0 3
        %2186 = vperm.xlu0 %2185, %v861
        %v2187 = vpop.permute.xlu0 %2186
        %2189 = vset.pattern.permute.xlu0 3
        %2190 = vperm.xlu0 %2189, %v862
        %v2191 = vpop.permute.xlu0 %2190
        %2193 = vset.pattern.permute.xlu0 3
        %2194 = vperm.xlu0 %2193, %v863
        %v2195 = vpop.permute.xlu0 %2194
        %v2197 = vmul.f32 %v2037, %v2071
        %v2198 = vmul.f32 %v2038, %v2075
        %v2199 = vmul.f32 %v2039, %v2079
        %v2200 = vmul.f32 %v2040, %v2083
        %v2201 = vmul.f32 %v2041, %v2087
        %v2202 = vmul.f32 %v2042, %v2091
        %v2203 = vmul.f32 %v2043, %v2095
        %v2204 = vmul.f32 %v2044, %v2099
        %v2205 = vmul.f32 %v2045, %v2103
        %v2206 = vmul.f32 %v2046, %v2107
        %v2207 = vmul.f32 %v2047, %v2111
        %v2208 = vmul.f32 %v2048, %v2115
        %v2209 = vmul.f32 %v2049, %v2119
        %v2210 = vmul.f32 %v2050, %v2123
        %v2211 = vmul.f32 %v2051, %v2127
        %v2212 = vmul.f32 %v2052, %v2131
        %v2213 = vmul.f32 %v2053, %v2135
        %v2214 = vmul.f32 %v2054, %v2139
        %v2215 = vmul.f32 %v2055, %v2143
        %v2216 = vmul.f32 %v2056, %v2147
        %v2217 = vmul.f32 %v2057, %v2151
        %v2218 = vmul.f32 %v2058, %v2155
        %v2219 = vmul.f32 %v2059, %v2159
        %v2220 = vmul.f32 %v2060, %v2163
        %v2221 = vmul.f32 %v2061, %v2167
        %v2222 = vmul.f32 %v2062, %v2171
        %v2223 = vmul.f32 %v2063, %v2175
        %v2224 = vmul.f32 %v2064, %v2179
        %v2225 = vmul.f32 %v2065, %v2183
        %v2226 = vmul.f32 %v2066, %v2187
        %v2227 = vmul.f32 %v2067, %v2191
        %v2228 = vmul.f32 %v2068, %v2195
        %v2229 = vpack.c.bf16 %v2198, %v2197
        %v2230 = vpack.c.bf16 %v2200, %v2199
        %v2231 = vpack.c.bf16 %v2202, %v2201
        %v2232 = vpack.c.bf16 %v2204, %v2203
        %v2233 = vpack.c.bf16 %v2206, %v2205
        %v2234 = vpack.c.bf16 %v2208, %v2207
        %v2235 = vpack.c.bf16 %v2210, %v2209
        %v2236 = vpack.c.bf16 %v2212, %v2211
        %v2237 = vpack.c.bf16 %v2214, %v2213
        %v2238 = vpack.c.bf16 %v2216, %v2215
        %v2239 = vpack.c.bf16 %v2218, %v2217
        %v2240 = vpack.c.bf16 %v2220, %v2219
        %v2241 = vpack.c.bf16 %v2222, %v2221
        %v2242 = vpack.c.bf16 %v2224, %v2223
        %v2243 = vpack.c.bf16 %v2226, %v2225
        %v2244 = vpack.c.bf16 %v2228, %v2227
        %s2245 = scalar_lea.vmem [#allocation6], 192
        %v2246 = vld [vmem:[%s2245] sm:$0xf]
        %v2247 = vld [vmem:[%s2245 + $0x4] sm:$0xf]
        %v2248 = vld [vmem:[%s2245 + $0x8] sm:$0xf]
        %v2249 = vld [vmem:[%s2245 + $0xc] sm:$0xf]
        %v2250 = vld [vmem:[%s2245 + $0x10] sm:$0xf]
        %v2251 = vld [vmem:[%s2245 + $0x14] sm:$0xf]
        %v2252 = vld [vmem:[%s2245 + $0x18] sm:$0xf]
        %v2253 = vld [vmem:[%s2245 + $0x1c] sm:$0xf]
        %v2254 = vld [vmem:[%s2245 + $0x20] sm:$0xf]
        %v2255 = vld [vmem:[%s2245 + $0x24] sm:$0xf]
        %v2256 = vld [vmem:[%s2245 + $0x28] sm:$0xf]
        %v2257 = vld [vmem:[%s2245 + $0x2c] sm:$0xf]
        %v2258 = vld [vmem:[%s2245 + $0x30] sm:$0xf]
        %v2259 = vld [vmem:[%s2245 + $0x34] sm:$0xf]
        %v2260 = vld [vmem:[%s2245 + $0x38] sm:$0xf]
        %v2261 = vld [vmem:[%s2245 + $0x3c] sm:$0xf]
        %v2278 = vunpack.c.l.b16 %v2246
        %v2279 = vunpack.c.l.b16 %v2247
        %v2280 = vunpack.c.l.b16 %v2248
        %v2281 = vunpack.c.l.b16 %v2249
        %v2282 = vunpack.c.l.b16 %v2250
        %v2283 = vunpack.c.l.b16 %v2251
        %v2284 = vunpack.c.l.b16 %v2252
        %v2285 = vunpack.c.l.b16 %v2253
        %v2286 = vunpack.c.l.b16 %v2254
        %v2287 = vunpack.c.l.b16 %v2255
        %v2288 = vunpack.c.l.b16 %v2256
        %v2289 = vunpack.c.l.b16 %v2257
        %v2290 = vunpack.c.l.b16 %v2258
        %v2291 = vunpack.c.l.b16 %v2259
        %v2292 = vunpack.c.l.b16 %v2260
        %v2293 = vunpack.c.l.b16 %v2261
        %v2294 = vpack.c.b16 %v2279, %v2278
        %v2295 = vpack.c.b16 %v2281, %v2280
        %v2296 = vpack.c.b16 %v2283, %v2282
        %v2297 = vpack.c.b16 %v2285, %v2284
        %v2298 = vpack.c.b16 %v2287, %v2286
        %v2299 = vpack.c.b16 %v2289, %v2288
        %v2300 = vpack.c.b16 %v2291, %v2290
        %v2301 = vpack.c.b16 %v2293, %v2292
        %2310 = vmatprep.subr.bf16.mxu0 0
        %2311 = vmatpush1.bf16.msra.mxu0 %v2301
        %2312 = vmatprep.subr.bf16.mxu0 0
        %2313 = vmatpush1.bf16.msra.mxu0 %v2300
        %2314 = vmatprep.subr.bf16.mxu0 0
        %2315 = vmatpush1.bf16.msra.mxu0 %v2299
        %2316 = vmatprep.subr.bf16.mxu0 0
        %2317 = vmatpush1.bf16.msra.mxu0 %v2298
        %2318 = vmatprep.subr.bf16.mxu0 0
        %2319 = vmatpush1.bf16.msra.mxu0 %v2297
        %2320 = vmatprep.subr.bf16.mxu0 0
        %2321 = vmatpush1.bf16.msra.mxu0 %v2296
        %2322 = vmatprep.subr.bf16.mxu0 0
        %2323 = vmatpush1.bf16.msra.mxu0 %v2295
        %2324 = vmatprep.subr.bf16.mxu0 0
        %2325 = vmatpush1.bf16.msra.mxu0 %v2294
        %2326 = vmatprep.subr.bf16.mxu0 0
        %2327 = vmatpush2.bf16.msra.mxu0 0
        %2328 = vmatprep.subr.bf16.mxu0 0
        %2329 = vmatpush2.bf16.msra.mxu0 0
        %2330 = vmatprep.subr.bf16.mxu0 0
        %2331 = vmatpush2.bf16.msra.mxu0 0
        %2332 = vmatprep.subr.bf16.mxu0 0
        %2333 = vmatpush2.bf16.msra.mxu0 0
        %2334 = vmatprep.subr.bf16.mxu0 0
        %2335 = vmatpush2.bf16.msra.mxu0 0
        %2336 = vmatprep.subr.bf16.mxu0 0
        %2337 = vmatpush2.bf16.msra.mxu0 0
        %2338 = vmatprep.subr.bf16.mxu0 0
        %2339 = vmatpush2.bf16.msra.mxu0 0
        %2340 = vmatprep.subr.bf16.mxu0 0
        %2341 = vmatpush2.bf16.msra.mxu0 0
        %2342 = vmatprep.mubr.bf16.mxu0 0
        %2343 = vmatmul.mubr.bf16.gmra.mxu0 %v2229
        %v2344 = vpop.f32.mrf.mxu0
        %v2345 = vadd.f32 0.0, %v2344
        %v2346 = vpop.f32.mrf.mxu0
        %v2347 = vpop.f32.mrf.mxu0
        %v2348 = vadd.f32 0.0, %v2347
        %v2349 = vpop.f32.mrf.mxu0
        %2350 = vmatprep.mubr.bf16.mxu0 0
        %2351 = vmatmul.mubr.bf16.gmra.mxu0 %v2230
        %v2352 = vpop.f32.mrf.mxu0
        %v2353 = vadd.f32 0.0, %v2352
        %v2354 = vpop.f32.mrf.mxu0
        %v2355 = vpop.f32.mrf.mxu0
        %v2356 = vadd.f32 0.0, %v2355
        %v2357 = vpop.f32.mrf.mxu0
        %2358 = vmatprep.mubr.bf16.mxu0 0
        %2359 = vmatmul.mubr.bf16.gmra.mxu0 %v2231
        %v2360 = vpop.f32.mrf.mxu0
        %v2361 = vadd.f32 0.0, %v2360
        %v2362 = vpop.f32.mrf.mxu0
        %v2363 = vpop.f32.mrf.mxu0
        %v2364 = vadd.f32 0.0, %v2363
        %v2365 = vpop.f32.mrf.mxu0
        %2366 = vmatprep.mubr.bf16.mxu0 0
        %2367 = vmatmul.mubr.bf16.gmra.mxu0 %v2232
        %v2368 = vpop.f32.mrf.mxu0
        %v2369 = vadd.f32 0.0, %v2368
        %v2370 = vpop.f32.mrf.mxu0
        %v2371 = vpop.f32.mrf.mxu0
        %v2372 = vadd.f32 0.0, %v2371
        %v2373 = vpop.f32.mrf.mxu0
        %2374 = vmatprep.mubr.bf16.mxu0 0
        %2375 = vmatmul.mubr.bf16.gmra.mxu0 %v2233
        %v2376 = vpop.f32.mrf.mxu0
        %v2377 = vadd.f32 0.0, %v2376
        %v2378 = vpop.f32.mrf.mxu0
        %v2379 = vpop.f32.mrf.mxu0
        %v2380 = vadd.f32 0.0, %v2379
        %v2381 = vpop.f32.mrf.mxu0
        %2382 = vmatprep.mubr.bf16.mxu0 0
        %2383 = vmatmul.mubr.bf16.gmra.mxu0 %v2234
        %v2384 = vpop.f32.mrf.mxu0
        %v2385 = vadd.f32 0.0, %v2384
        %v2386 = vpop.f32.mrf.mxu0
        %v2387 = vpop.f32.mrf.mxu0
        %v2388 = vadd.f32 0.0, %v2387
        %v2389 = vpop.f32.mrf.mxu0
        %2390 = vmatprep.mubr.bf16.mxu0 0
        %2391 = vmatmul.mubr.bf16.gmra.mxu0 %v2235
        %v2392 = vpop.f32.mrf.mxu0
        %v2393 = vadd.f32 0.0, %v2392
        %v2394 = vpop.f32.mrf.mxu0
        %v2395 = vpop.f32.mrf.mxu0
        %v2396 = vadd.f32 0.0, %v2395
        %v2397 = vpop.f32.mrf.mxu0
        %2398 = vmatprep.mubr.bf16.mxu0 0
        %2399 = vmatmul.mubr.bf16.gmra.mxu0 %v2236
        %v2400 = vpop.f32.mrf.mxu0
        %v2401 = vadd.f32 0.0, %v2400
        %v2402 = vpop.f32.mrf.mxu0
        %v2403 = vpop.f32.mrf.mxu0
        %v2404 = vadd.f32 0.0, %v2403
        %v2405 = vpop.f32.mrf.mxu0
        %2406 = vmatprep.mubr.bf16.mxu0 0
        %2407 = vmatmul.mubr.bf16.gmra.mxu0 %v2237
        %v2408 = vpop.f32.mrf.mxu0
        %v2409 = vadd.f32 0.0, %v2408
        %v2410 = vpop.f32.mrf.mxu0
        %v2411 = vpop.f32.mrf.mxu0
        %v2412 = vadd.f32 0.0, %v2411
        %v2413 = vpop.f32.mrf.mxu0
        %2414 = vmatprep.mubr.bf16.mxu0 0
        %2415 = vmatmul.mubr.bf16.gmra.mxu0 %v2238
        %v2416 = vpop.f32.mrf.mxu0
        %v2417 = vadd.f32 0.0, %v2416
        %v2418 = vpop.f32.mrf.mxu0
        %v2419 = vpop.f32.mrf.mxu0
        %v2420 = vadd.f32 0.0, %v2419
        %v2421 = vpop.f32.mrf.mxu0
        %2422 = vmatprep.mubr.bf16.mxu0 0
        %2423 = vmatmul.mubr.bf16.gmra.mxu0 %v2239
        %v2424 = vpop.f32.mrf.mxu0
        %v2425 = vadd.f32 0.0, %v2424
        %v2426 = vpop.f32.mrf.mxu0
        %v2427 = vpop.f32.mrf.mxu0
        %v2428 = vadd.f32 0.0, %v2427
        %v2429 = vpop.f32.mrf.mxu0
        %2430 = vmatprep.mubr.bf16.mxu0 0
        %2431 = vmatmul.mubr.bf16.gmra.mxu0 %v2240
        %v2432 = vpop.f32.mrf.mxu0
        %v2433 = vadd.f32 0.0, %v2432
        %v2434 = vpop.f32.mrf.mxu0
        %v2435 = vpop.f32.mrf.mxu0
        %v2436 = vadd.f32 0.0, %v2435
        %v2437 = vpop.f32.mrf.mxu0
        %2438 = vmatprep.mubr.bf16.mxu0 0
        %2439 = vmatmul.mubr.bf16.gmra.mxu0 %v2241
        %v2440 = vpop.f32.mrf.mxu0
        %v2441 = vadd.f32 0.0, %v2440
        %v2442 = vpop.f32.mrf.mxu0
        %v2443 = vpop.f32.mrf.mxu0
        %v2444 = vadd.f32 0.0, %v2443
        %v2445 = vpop.f32.mrf.mxu0
        %2446 = vmatprep.mubr.bf16.mxu0 0
        %2447 = vmatmul.mubr.bf16.gmra.mxu0 %v2242
        %v2448 = vpop.f32.mrf.mxu0
        %v2449 = vadd.f32 0.0, %v2448
        %v2450 = vpop.f32.mrf.mxu0
        %v2451 = vpop.f32.mrf.mxu0
        %v2452 = vadd.f32 0.0, %v2451
        %v2453 = vpop.f32.mrf.mxu0
        %2454 = vmatprep.mubr.bf16.mxu0 0
        %2455 = vmatmul.mubr.bf16.gmra.mxu0 %v2243
        %v2456 = vpop.f32.mrf.mxu0
        %v2457 = vadd.f32 0.0, %v2456
        %v2458 = vpop.f32.mrf.mxu0
        %v2459 = vpop.f32.mrf.mxu0
        %v2460 = vadd.f32 0.0, %v2459
        %v2461 = vpop.f32.mrf.mxu0
        %2462 = vmatprep.mubr.bf16.mxu0 0
        %2463 = vmatmul.mubr.bf16.gmra.mxu0 %v2244
        %v2464 = vpop.f32.mrf.mxu0
        %v2465 = vadd.f32 0.0, %v2464
        %v2466 = vpop.f32.mrf.mxu0
        %v2467 = vpop.f32.mrf.mxu0
        %v2468 = vadd.f32 0.0, %v2467
        %v2469 = vpop.f32.mrf.mxu0
        %2470 = vdwg.mxu0
        %v2471 = vadd.f32 %v2005, %v2345
        %v2472 = vadd.f32 %v2006, %v2348
        %v2473 = vadd.f32 %v2007, %v2353
        %v2474 = vadd.f32 %v2008, %v2356
        %v2475 = vadd.f32 %v2009, %v2361
        %v2476 = vadd.f32 %v2010, %v2364
        %v2477 = vadd.f32 %v2011, %v2369
        %v2478 = vadd.f32 %v2012, %v2372
        %v2479 = vadd.f32 %v2013, %v2377
        %v2480 = vadd.f32 %v2014, %v2380
        %v2481 = vadd.f32 %v2015, %v2385
        %v2482 = vadd.f32 %v2016, %v2388
        %v2483 = vadd.f32 %v2017, %v2393
        %v2484 = vadd.f32 %v2018, %v2396
        %v2485 = vadd.f32 %v2019, %v2401
        %v2486 = vadd.f32 %v2020, %v2404
        %v2487 = vadd.f32 %v2021, %v2409
        %v2488 = vadd.f32 %v2022, %v2412
        %v2489 = vadd.f32 %v2023, %v2417
        %v2490 = vadd.f32 %v2024, %v2420
        %v2491 = vadd.f32 %v2025, %v2425
        %v2492 = vadd.f32 %v2026, %v2428
        %v2493 = vadd.f32 %v2027, %v2433
        %v2494 = vadd.f32 %v2028, %v2436
        %v2495 = vadd.f32 %v2029, %v2441
        %v2496 = vadd.f32 %v2030, %v2444
        %v2497 = vadd.f32 %v2031, %v2449
        %v2498 = vadd.f32 %v2032, %v2452
        %v2499 = vadd.f32 %v2033, %v2457
        %v2500 = vadd.f32 %v2034, %v2460
        %v2501 = vadd.f32 %v2035, %v2465
        %v2502 = vadd.f32 %v2036, %v2468
        %v2503 = vld [vmem:[#allocation2 + $0x18] sm:$0xff]
        %v2504 = vld [vmem:[#allocation2 + $0x20] sm:$0xff]
        %v2505 = vld [vmem:[#allocation2 + $0x28] sm:$0xff]
        %v2506 = vld [vmem:[#allocation2 + $0x30] sm:$0xff]
        %v2507 = vld [vmem:[#allocation2 + $0x38] sm:$0xff]
        %v2508 = vld [vmem:[#allocation2 + $0x40] sm:$0xff]
        %v2509 = vld [vmem:[#allocation2 + $0x48] sm:$0xff]
        %v2510 = vld [vmem:[#allocation2 + $0x50] sm:$0xff]
        %v2511 = vld [vmem:[#allocation2 + $0x58] sm:$0xff]
        %v2512 = vld [vmem:[#allocation2 + $0x60] sm:$0xff]
        %v2513 = vld [vmem:[#allocation2 + $0x68] sm:$0xff]
        %v2514 = vld [vmem:[#allocation2 + $0x70] sm:$0xff]
        %v2515 = vld [vmem:[#allocation2 + $0x78] sm:$0xff]
        %v2516 = vld [vmem:[#allocation2 + $0x80] sm:$0xff]
        %v2517 = vld [vmem:[#allocation2 + $0x88] sm:$0xff]
        %v2518 = vld [vmem:[#allocation2 + $0x90] sm:$0xff]
        %v2519 = vld [vmem:[#allocation2 + $0x98] sm:$0xff]
        %v2520 = vld [vmem:[#allocation2 + $0xa0] sm:$0xff]
        %v2521 = vld [vmem:[#allocation2 + $0xa8] sm:$0xff]
        %v2522 = vld [vmem:[#allocation2 + $0xb0] sm:$0xff]
        %v2523 = vld [vmem:[#allocation2 + $0xb8] sm:$0xff]
        %v2524 = vld [vmem:[#allocation2 + $0xc0] sm:$0xff]
        %v2525 = vld [vmem:[#allocation2 + $0xc8] sm:$0xff]
        %v2526 = vld [vmem:[#allocation2 + $0xd0] sm:$0xff]
        %v2527 = vld [vmem:[#allocation2 + $0xd8] sm:$0xff]
        %v2528 = vld [vmem:[#allocation2 + $0xe0] sm:$0xff]
        %v2529 = vld [vmem:[#allocation2 + $0xe8] sm:$0xff]
        %v2530 = vld [vmem:[#allocation2 + $0xf0] sm:$0xff]
        %v2531 = vld [vmem:[#allocation2 + $0xf8] sm:$0xff]
        %v2532 = vld [vmem:[#allocation2 + $0x100] sm:$0xff]
        %v2533 = vld [vmem:[#allocation2 + $0x108] sm:$0xff]
        %v2534 = vld [vmem:[#allocation2 + $0x110] sm:$0xff]
        %v2535 = vpack.c.bf16 %v2504, %v2503
        %v2536 = vpack.c.bf16 %v2506, %v2505
        %v2537 = vpack.c.bf16 %v2508, %v2507
        %v2538 = vpack.c.bf16 %v2510, %v2509
        %v2539 = vpack.c.bf16 %v2512, %v2511
        %v2540 = vpack.c.bf16 %v2514, %v2513
        %v2541 = vpack.c.bf16 %v2516, %v2515
        %v2542 = vpack.c.bf16 %v2518, %v2517
        %v2543 = vpack.c.bf16 %v2520, %v2519
        %v2544 = vpack.c.bf16 %v2522, %v2521
        %v2545 = vpack.c.bf16 %v2524, %v2523
        %v2546 = vpack.c.bf16 %v2526, %v2525
        %v2547 = vpack.c.bf16 %v2528, %v2527
        %v2548 = vpack.c.bf16 %v2530, %v2529
        %v2549 = vpack.c.bf16 %v2532, %v2531
        %v2550 = vpack.c.bf16 %v2534, %v2533
        %s2551 = scalar_lea.vmem [#allocation6], 256
        %v2552 = vld [vmem:[%s2551] sm:$0xf]
        %v2553 = vld [vmem:[%s2551 + $0x4] sm:$0xf]
        %v2554 = vld [vmem:[%s2551 + $0x8] sm:$0xf]
        %v2555 = vld [vmem:[%s2551 + $0xc] sm:$0xf]
        %v2556 = vld [vmem:[%s2551 + $0x10] sm:$0xf]
        %v2557 = vld [vmem:[%s2551 + $0x14] sm:$0xf]
        %v2558 = vld [vmem:[%s2551 + $0x18] sm:$0xf]
        %v2559 = vld [vmem:[%s2551 + $0x1c] sm:$0xf]
        %v2560 = vld [vmem:[%s2551 + $0x20] sm:$0xf]
        %v2561 = vld [vmem:[%s2551 + $0x24] sm:$0xf]
        %v2562 = vld [vmem:[%s2551 + $0x28] sm:$0xf]
        %v2563 = vld [vmem:[%s2551 + $0x2c] sm:$0xf]
        %v2564 = vld [vmem:[%s2551 + $0x30] sm:$0xf]
        %v2565 = vld [vmem:[%s2551 + $0x34] sm:$0xf]
        %v2566 = vld [vmem:[%s2551 + $0x38] sm:$0xf]
        %v2567 = vld [vmem:[%s2551 + $0x3c] sm:$0xf]
        %v2584 = vunpack.c.l.b16 %v2552
        %v2585 = vunpack.c.l.b16 %v2553
        %v2586 = vunpack.c.l.b16 %v2554
        %v2587 = vunpack.c.l.b16 %v2555
        %v2588 = vunpack.c.l.b16 %v2556
        %v2589 = vunpack.c.l.b16 %v2557
        %v2590 = vunpack.c.l.b16 %v2558
        %v2591 = vunpack.c.l.b16 %v2559
        %v2592 = vunpack.c.l.b16 %v2560
        %v2593 = vunpack.c.l.b16 %v2561
        %v2594 = vunpack.c.l.b16 %v2562
        %v2595 = vunpack.c.l.b16 %v2563
        %v2596 = vunpack.c.l.b16 %v2564
        %v2597 = vunpack.c.l.b16 %v2565
        %v2598 = vunpack.c.l.b16 %v2566
        %v2599 = vunpack.c.l.b16 %v2567
        %v2600 = vpack.c.b16 %v2585, %v2584
        %v2601 = vpack.c.b16 %v2587, %v2586
        %v2602 = vpack.c.b16 %v2589, %v2588
        %v2603 = vpack.c.b16 %v2591, %v2590
        %v2604 = vpack.c.b16 %v2593, %v2592
        %v2605 = vpack.c.b16 %v2595, %v2594
        %v2606 = vpack.c.b16 %v2597, %v2596
        %v2607 = vpack.c.b16 %v2599, %v2598
        %2616 = vmatprep.subr.bf16.mxu0 0
        %2617 = vmatpush1.bf16.msra.mxu0 %v2607
        %2618 = vmatprep.subr.bf16.mxu0 0
        %2619 = vmatpush1.bf16.msra.mxu0 %v2606
        %2620 = vmatprep.subr.bf16.mxu0 0
        %2621 = vmatpush1.bf16.msra.mxu0 %v2605
        %2622 = vmatprep.subr.bf16.mxu0 0
        %2623 = vmatpush1.bf16.msra.mxu0 %v2604
        %2624 = vmatprep.subr.bf16.mxu0 0
        %2625 = vmatpush1.bf16.msra.mxu0 %v2603
        %2626 = vmatprep.subr.bf16.mxu0 0
        %2627 = vmatpush1.bf16.msra.mxu0 %v2602
        %2628 = vmatprep.subr.bf16.mxu0 0
        %2629 = vmatpush1.bf16.msra.mxu0 %v2601
        %2630 = vmatprep.subr.bf16.mxu0 0
        %2631 = vmatpush1.bf16.msra.mxu0 %v2600
        %2632 = vmatprep.subr.bf16.mxu0 0
        %2633 = vmatpush2.bf16.msra.mxu0 0
        %2634 = vmatprep.subr.bf16.mxu0 0
        %2635 = vmatpush2.bf16.msra.mxu0 0
        %2636 = vmatprep.subr.bf16.mxu0 0
        %2637 = vmatpush2.bf16.msra.mxu0 0
        %2638 = vmatprep.subr.bf16.mxu0 0
        %2639 = vmatpush2.bf16.msra.mxu0 0
        %2640 = vmatprep.subr.bf16.mxu0 0
        %2641 = vmatpush2.bf16.msra.mxu0 0
        %2642 = vmatprep.subr.bf16.mxu0 0
        %2643 = vmatpush2.bf16.msra.mxu0 0
        %2644 = vmatprep.subr.bf16.mxu0 0
        %2645 = vmatpush2.bf16.msra.mxu0 0
        %2646 = vmatprep.subr.bf16.mxu0 0
        %2647 = vmatpush2.bf16.msra.mxu0 0
        %2648 = vmatprep.mubr.bf16.mxu0 0
        %2649 = vmatmul.mubr.bf16.gmra.mxu0 %v2535
        %v2650 = vpop.f32.mrf.mxu0
        %v2651 = vadd.f32 0.0, %v2650
        %v2652 = vpop.f32.mrf.mxu0
        %v2653 = vpop.f32.mrf.mxu0
        %v2654 = vadd.f32 0.0, %v2653
        %v2655 = vpop.f32.mrf.mxu0
        %2656 = vmatprep.mubr.bf16.mxu0 0
        %2657 = vmatmul.mubr.bf16.gmra.mxu0 %v2536
        %v2658 = vpop.f32.mrf.mxu0
        %v2659 = vadd.f32 0.0, %v2658
        %v2660 = vpop.f32.mrf.mxu0
        %v2661 = vpop.f32.mrf.mxu0
        %v2662 = vadd.f32 0.0, %v2661
        %v2663 = vpop.f32.mrf.mxu0
        %2664 = vmatprep.mubr.bf16.mxu0 0
        %2665 = vmatmul.mubr.bf16.gmra.mxu0 %v2537
        %v2666 = vpop.f32.mrf.mxu0
        %v2667 = vadd.f32 0.0, %v2666
        %v2668 = vpop.f32.mrf.mxu0
        %v2669 = vpop.f32.mrf.mxu0
        %v2670 = vadd.f32 0.0, %v2669
        %v2671 = vpop.f32.mrf.mxu0
        %2672 = vmatprep.mubr.bf16.mxu0 0
        %2673 = vmatmul.mubr.bf16.gmra.mxu0 %v2538
        %v2674 = vpop.f32.mrf.mxu0
        %v2675 = vadd.f32 0.0, %v2674
        %v2676 = vpop.f32.mrf.mxu0
        %v2677 = vpop.f32.mrf.mxu0
        %v2678 = vadd.f32 0.0, %v2677
        %v2679 = vpop.f32.mrf.mxu0
        %2680 = vmatprep.mubr.bf16.mxu0 0
        %2681 = vmatmul.mubr.bf16.gmra.mxu0 %v2539
        %v2682 = vpop.f32.mrf.mxu0
        %v2683 = vadd.f32 0.0, %v2682
        %v2684 = vpop.f32.mrf.mxu0
        %v2685 = vpop.f32.mrf.mxu0
        %v2686 = vadd.f32 0.0, %v2685
        %v2687 = vpop.f32.mrf.mxu0
        %2688 = vmatprep.mubr.bf16.mxu0 0
        %2689 = vmatmul.mubr.bf16.gmra.mxu0 %v2540
        %v2690 = vpop.f32.mrf.mxu0
        %v2691 = vadd.f32 0.0, %v2690
        %v2692 = vpop.f32.mrf.mxu0
        %v2693 = vpop.f32.mrf.mxu0
        %v2694 = vadd.f32 0.0, %v2693
        %v2695 = vpop.f32.mrf.mxu0
        %2696 = vmatprep.mubr.bf16.mxu0 0
        %2697 = vmatmul.mubr.bf16.gmra.mxu0 %v2541
        %v2698 = vpop.f32.mrf.mxu0
        %v2699 = vadd.f32 0.0, %v2698
        %v2700 = vpop.f32.mrf.mxu0
        %v2701 = vpop.f32.mrf.mxu0
        %v2702 = vadd.f32 0.0, %v2701
        %v2703 = vpop.f32.mrf.mxu0
        %2704 = vmatprep.mubr.bf16.mxu0 0
        %2705 = vmatmul.mubr.bf16.gmra.mxu0 %v2542
        %v2706 = vpop.f32.mrf.mxu0
        %v2707 = vadd.f32 0.0, %v2706
        %v2708 = vpop.f32.mrf.mxu0
        %v2709 = vpop.f32.mrf.mxu0
        %v2710 = vadd.f32 0.0, %v2709
        %v2711 = vpop.f32.mrf.mxu0
        %2712 = vmatprep.mubr.bf16.mxu0 0
        %2713 = vmatmul.mubr.bf16.gmra.mxu0 %v2543
        %v2714 = vpop.f32.mrf.mxu0
        %v2715 = vadd.f32 0.0, %v2714
        %v2716 = vpop.f32.mrf.mxu0
        %v2717 = vpop.f32.mrf.mxu0
        %v2718 = vadd.f32 0.0, %v2717
        %v2719 = vpop.f32.mrf.mxu0
        %2720 = vmatprep.mubr.bf16.mxu0 0
        %2721 = vmatmul.mubr.bf16.gmra.mxu0 %v2544
        %v2722 = vpop.f32.mrf.mxu0
        %v2723 = vadd.f32 0.0, %v2722
        %v2724 = vpop.f32.mrf.mxu0
        %v2725 = vpop.f32.mrf.mxu0
        %v2726 = vadd.f32 0.0, %v2725
        %v2727 = vpop.f32.mrf.mxu0
        %2728 = vmatprep.mubr.bf16.mxu0 0
        %2729 = vmatmul.mubr.bf16.gmra.mxu0 %v2545
        %v2730 = vpop.f32.mrf.mxu0
        %v2731 = vadd.f32 0.0, %v2730
        %v2732 = vpop.f32.mrf.mxu0
        %v2733 = vpop.f32.mrf.mxu0
        %v2734 = vadd.f32 0.0, %v2733
        %v2735 = vpop.f32.mrf.mxu0
        %2736 = vmatprep.mubr.bf16.mxu0 0
        %2737 = vmatmul.mubr.bf16.gmra.mxu0 %v2546
        %v2738 = vpop.f32.mrf.mxu0
        %v2739 = vadd.f32 0.0, %v2738
        %v2740 = vpop.f32.mrf.mxu0
        %v2741 = vpop.f32.mrf.mxu0
        %v2742 = vadd.f32 0.0, %v2741
        %v2743 = vpop.f32.mrf.mxu0
        %2744 = vmatprep.mubr.bf16.mxu0 0
        %2745 = vmatmul.mubr.bf16.gmra.mxu0 %v2547
        %v2746 = vpop.f32.mrf.mxu0
        %v2747 = vadd.f32 0.0, %v2746
        %v2748 = vpop.f32.mrf.mxu0
        %v2749 = vpop.f32.mrf.mxu0
        %v2750 = vadd.f32 0.0, %v2749
        %v2751 = vpop.f32.mrf.mxu0
        %2752 = vmatprep.mubr.bf16.mxu0 0
        %2753 = vmatmul.mubr.bf16.gmra.mxu0 %v2548
        %v2754 = vpop.f32.mrf.mxu0
        %v2755 = vadd.f32 0.0, %v2754
        %v2756 = vpop.f32.mrf.mxu0
        %v2757 = vpop.f32.mrf.mxu0
        %v2758 = vadd.f32 0.0, %v2757
        %v2759 = vpop.f32.mrf.mxu0
        %2760 = vmatprep.mubr.bf16.mxu0 0
        %2761 = vmatmul.mubr.bf16.gmra.mxu0 %v2549
        %v2762 = vpop.f32.mrf.mxu0
        %v2763 = vadd.f32 0.0, %v2762
        %v2764 = vpop.f32.mrf.mxu0
        %v2765 = vpop.f32.mrf.mxu0
        %v2766 = vadd.f32 0.0, %v2765
        %v2767 = vpop.f32.mrf.mxu0
        %2768 = vmatprep.mubr.bf16.mxu0 0
        %2769 = vmatmul.mubr.bf16.gmra.mxu0 %v2550
        %v2770 = vpop.f32.mrf.mxu0
        %v2771 = vadd.f32 0.0, %v2770
        %v2772 = vpop.f32.mrf.mxu0
        %v2773 = vpop.f32.mrf.mxu0
        %v2774 = vadd.f32 0.0, %v2773
        %v2775 = vpop.f32.mrf.mxu0
        %2776 = vdwg.mxu0
        %v2777 = vadd.f32 %v2471, %v2651
        %v2778 = vadd.f32 %v2472, %v2654
        %v2779 = vadd.f32 %v2473, %v2659
        %v2780 = vadd.f32 %v2474, %v2662
        %v2781 = vadd.f32 %v2475, %v2667
        %v2782 = vadd.f32 %v2476, %v2670
        %v2783 = vadd.f32 %v2477, %v2675
        %v2784 = vadd.f32 %v2478, %v2678
        %v2785 = vadd.f32 %v2479, %v2683
        %v2786 = vadd.f32 %v2480, %v2686
        %v2787 = vadd.f32 %v2481, %v2691
        %v2788 = vadd.f32 %v2482, %v2694
        %v2789 = vadd.f32 %v2483, %v2699
        %v2790 = vadd.f32 %v2484, %v2702
        %v2791 = vadd.f32 %v2485, %v2707
        %v2792 = vadd.f32 %v2486, %v2710
        %v2793 = vadd.f32 %v2487, %v2715
        %v2794 = vadd.f32 %v2488, %v2718
        %v2795 = vadd.f32 %v2489, %v2723
        %v2796 = vadd.f32 %v2490, %v2726
        %v2797 = vadd.f32 %v2491, %v2731
        %v2798 = vadd.f32 %v2492, %v2734
        %v2799 = vadd.f32 %v2493, %v2739
        %v2800 = vadd.f32 %v2494, %v2742
        %v2801 = vadd.f32 %v2495, %v2747
        %v2802 = vadd.f32 %v2496, %v2750
        %v2803 = vadd.f32 %v2497, %v2755
        %v2804 = vadd.f32 %v2498, %v2758
        %v2805 = vadd.f32 %v2499, %v2763
        %v2806 = vadd.f32 %v2500, %v2766
        %v2807 = vadd.f32 %v2501, %v2771
        %v2808 = vadd.f32 %v2502, %v2774
        %v2809 = vld [vmem:[#allocation2 + $0x19] sm:$0xff]
        %v2810 = vld [vmem:[#allocation2 + $0x21] sm:$0xff]
        %v2811 = vld [vmem:[#allocation2 + $0x29] sm:$0xff]
        %v2812 = vld [vmem:[#allocation2 + $0x31] sm:$0xff]
        %v2813 = vld [vmem:[#allocation2 + $0x39] sm:$0xff]
        %v2814 = vld [vmem:[#allocation2 + $0x41] sm:$0xff]
        %v2815 = vld [vmem:[#allocation2 + $0x49] sm:$0xff]
        %v2816 = vld [vmem:[#allocation2 + $0x51] sm:$0xff]
        %v2817 = vld [vmem:[#allocation2 + $0x59] sm:$0xff]
        %v2818 = vld [vmem:[#allocation2 + $0x61] sm:$0xff]
        %v2819 = vld [vmem:[#allocation2 + $0x69] sm:$0xff]
        %v2820 = vld [vmem:[#allocation2 + $0x71] sm:$0xff]
        %v2821 = vld [vmem:[#allocation2 + $0x79] sm:$0xff]
        %v2822 = vld [vmem:[#allocation2 + $0x81] sm:$0xff]
        %v2823 = vld [vmem:[#allocation2 + $0x89] sm:$0xff]
        %v2824 = vld [vmem:[#allocation2 + $0x91] sm:$0xff]
        %v2825 = vld [vmem:[#allocation2 + $0x99] sm:$0xff]
        %v2826 = vld [vmem:[#allocation2 + $0xa1] sm:$0xff]
        %v2827 = vld [vmem:[#allocation2 + $0xa9] sm:$0xff]
        %v2828 = vld [vmem:[#allocation2 + $0xb1] sm:$0xff]
        %v2829 = vld [vmem:[#allocation2 + $0xb9] sm:$0xff]
        %v2830 = vld [vmem:[#allocation2 + $0xc1] sm:$0xff]
        %v2831 = vld [vmem:[#allocation2 + $0xc9] sm:$0xff]
        %v2832 = vld [vmem:[#allocation2 + $0xd1] sm:$0xff]
        %v2833 = vld [vmem:[#allocation2 + $0xd9] sm:$0xff]
        %v2834 = vld [vmem:[#allocation2 + $0xe1] sm:$0xff]
        %v2835 = vld [vmem:[#allocation2 + $0xe9] sm:$0xff]
        %v2836 = vld [vmem:[#allocation2 + $0xf1] sm:$0xff]
        %v2837 = vld [vmem:[#allocation2 + $0xf9] sm:$0xff]
        %v2838 = vld [vmem:[#allocation2 + $0x101] sm:$0xff]
        %v2839 = vld [vmem:[#allocation2 + $0x109] sm:$0xff]
        %v2840 = vld [vmem:[#allocation2 + $0x111] sm:$0xff]
        %2841 = vset.pattern.permute.xlu0 5
        %2842 = vperm.xlu0 %2841, %v832
        %v2843 = vpop.permute.xlu0 %2842
        %2845 = vset.pattern.permute.xlu0 5
        %2846 = vperm.xlu0 %2845, %v833
        %v2847 = vpop.permute.xlu0 %2846
        %2849 = vset.pattern.permute.xlu0 5
        %2850 = vperm.xlu0 %2849, %v834
        %v2851 = vpop.permute.xlu0 %2850
        %2853 = vset.pattern.permute.xlu0 5
        %2854 = vperm.xlu0 %2853, %v835
        %v2855 = vpop.permute.xlu0 %2854
        %2857 = vset.pattern.permute.xlu0 5
        %2858 = vperm.xlu0 %2857, %v836
        %v2859 = vpop.permute.xlu0 %2858
        %2861 = vset.pattern.permute.xlu0 5
        %2862 = vperm.xlu0 %2861, %v837
        %v2863 = vpop.permute.xlu0 %2862
        %2865 = vset.pattern.permute.xlu0 5
        %2866 = vperm.xlu0 %2865, %v838
        %v2867 = vpop.permute.xlu0 %2866
        %2869 = vset.pattern.permute.xlu0 5
        %2870 = vperm.xlu0 %2869, %v839
        %v2871 = vpop.permute.xlu0 %2870
        %2873 = vset.pattern.permute.xlu0 5
        %2874 = vperm.xlu0 %2873, %v840
        %v2875 = vpop.permute.xlu0 %2874
        %2877 = vset.pattern.permute.xlu0 5
        %2878 = vperm.xlu0 %2877, %v841
        %v2879 = vpop.permute.xlu0 %2878
        %2881 = vset.pattern.permute.xlu0 5
        %2882 = vperm.xlu0 %2881, %v842
        %v2883 = vpop.permute.xlu0 %2882
        %2885 = vset.pattern.permute.xlu0 5
        %2886 = vperm.xlu0 %2885, %v843
        %v2887 = vpop.permute.xlu0 %2886
        %2889 = vset.pattern.permute.xlu0 5
        %2890 = vperm.xlu0 %2889, %v844
        %v2891 = vpop.permute.xlu0 %2890
        %2893 = vset.pattern.permute.xlu0 5
        %2894 = vperm.xlu0 %2893, %v845
        %v2895 = vpop.permute.xlu0 %2894
        %2897 = vset.pattern.permute.xlu0 5
        %2898 = vperm.xlu0 %2897, %v846
        %v2899 = vpop.permute.xlu0 %2898
        %2901 = vset.pattern.permute.xlu0 5
        %2902 = vperm.xlu0 %2901, %v847
        %v2903 = vpop.permute.xlu0 %2902
        %2905 = vset.pattern.permute.xlu0 5
        %2906 = vperm.xlu0 %2905, %v848
        %v2907 = vpop.permute.xlu0 %2906
        %2909 = vset.pattern.permute.xlu0 5
        %2910 = vperm.xlu0 %2909, %v849
        %v2911 = vpop.permute.xlu0 %2910
        %2913 = vset.pattern.permute.xlu0 5
        %2914 = vperm.xlu0 %2913, %v850
        %v2915 = vpop.permute.xlu0 %2914
        %2917 = vset.pattern.permute.xlu0 5
        %2918 = vperm.xlu0 %2917, %v851
        %v2919 = vpop.permute.xlu0 %2918
        %2921 = vset.pattern.permute.xlu0 5
        %2922 = vperm.xlu0 %2921, %v852
        %v2923 = vpop.permute.xlu0 %2922
        %2925 = vset.pattern.permute.xlu0 5
        %2926 = vperm.xlu0 %2925, %v853
        %v2927 = vpop.permute.xlu0 %2926
        %2929 = vset.pattern.permute.xlu0 5
        %2930 = vperm.xlu0 %2929, %v854
        %v2931 = vpop.permute.xlu0 %2930
        %2933 = vset.pattern.permute.xlu0 5
        %2934 = vperm.xlu0 %2933, %v855
        %v2935 = vpop.permute.xlu0 %2934
        %2937 = vset.pattern.permute.xlu0 5
        %2938 = vperm.xlu0 %2937, %v856
        %v2939 = vpop.permute.xlu0 %2938
        %2941 = vset.pattern.permute.xlu0 5
        %2942 = vperm.xlu0 %2941, %v857
        %v2943 = vpop.permute.xlu0 %2942
        %2945 = vset.pattern.permute.xlu0 5
        %2946 = vperm.xlu0 %2945, %v858
        %v2947 = vpop.permute.xlu0 %2946
        %2949 = vset.pattern.permute.xlu0 5
        %2950 = vperm.xlu0 %2949, %v859
        %v2951 = vpop.permute.xlu0 %2950
        %2953 = vset.pattern.permute.xlu0 5
        %2954 = vperm.xlu0 %2953, %v860
        %v2955 = vpop.permute.xlu0 %2954
        %2957 = vset.pattern.permute.xlu0 5
        %2958 = vperm.xlu0 %2957, %v861
        %v2959 = vpop.permute.xlu0 %2958
        %2961 = vset.pattern.permute.xlu0 5
        %2962 = vperm.xlu0 %2961, %v862
        %v2963 = vpop.permute.xlu0 %2962
        %2965 = vset.pattern.permute.xlu0 5
        %2966 = vperm.xlu0 %2965, %v863
        %v2967 = vpop.permute.xlu0 %2966
        %v2969 = vmul.f32 %v2809, %v2843
        %v2970 = vmul.f32 %v2810, %v2847
        %v2971 = vmul.f32 %v2811, %v2851
        %v2972 = vmul.f32 %v2812, %v2855
        %v2973 = vmul.f32 %v2813, %v2859
        %v2974 = vmul.f32 %v2814, %v2863
        %v2975 = vmul.f32 %v2815, %v2867
        %v2976 = vmul.f32 %v2816, %v2871
        %v2977 = vmul.f32 %v2817, %v2875
        %v2978 = vmul.f32 %v2818, %v2879
        %v2979 = vmul.f32 %v2819, %v2883
        %v2980 = vmul.f32 %v2820, %v2887
        %v2981 = vmul.f32 %v2821, %v2891
        %v2982 = vmul.f32 %v2822, %v2895
        %v2983 = vmul.f32 %v2823, %v2899
        %v2984 = vmul.f32 %v2824, %v2903
        %v2985 = vmul.f32 %v2825, %v2907
        %v2986 = vmul.f32 %v2826, %v2911
        %v2987 = vmul.f32 %v2827, %v2915
        %v2988 = vmul.f32 %v2828, %v2919
        %v2989 = vmul.f32 %v2829, %v2923
        %v2990 = vmul.f32 %v2830, %v2927
        %v2991 = vmul.f32 %v2831, %v2931
        %v2992 = vmul.f32 %v2832, %v2935
        %v2993 = vmul.f32 %v2833, %v2939
        %v2994 = vmul.f32 %v2834, %v2943
        %v2995 = vmul.f32 %v2835, %v2947
        %v2996 = vmul.f32 %v2836, %v2951
        %v2997 = vmul.f32 %v2837, %v2955
        %v2998 = vmul.f32 %v2838, %v2959
        %v2999 = vmul.f32 %v2839, %v2963
        %v3000 = vmul.f32 %v2840, %v2967
        %v3001 = vpack.c.bf16 %v2970, %v2969
        %v3002 = vpack.c.bf16 %v2972, %v2971
        %v3003 = vpack.c.bf16 %v2974, %v2973
        %v3004 = vpack.c.bf16 %v2976, %v2975
        %v3005 = vpack.c.bf16 %v2978, %v2977
        %v3006 = vpack.c.bf16 %v2980, %v2979
        %v3007 = vpack.c.bf16 %v2982, %v2981
        %v3008 = vpack.c.bf16 %v2984, %v2983
        %v3009 = vpack.c.bf16 %v2986, %v2985
        %v3010 = vpack.c.bf16 %v2988, %v2987
        %v3011 = vpack.c.bf16 %v2990, %v2989
        %v3012 = vpack.c.bf16 %v2992, %v2991
        %v3013 = vpack.c.bf16 %v2994, %v2993
        %v3014 = vpack.c.bf16 %v2996, %v2995
        %v3015 = vpack.c.bf16 %v2998, %v2997
        %v3016 = vpack.c.bf16 %v3000, %v2999
        %s3017 = scalar_lea.vmem [#allocation6], 320
        %v3018 = vld [vmem:[%s3017] sm:$0xf]
        %v3019 = vld [vmem:[%s3017 + $0x4] sm:$0xf]
        %v3020 = vld [vmem:[%s3017 + $0x8] sm:$0xf]
        %v3021 = vld [vmem:[%s3017 + $0xc] sm:$0xf]
        %v3022 = vld [vmem:[%s3017 + $0x10] sm:$0xf]
        %v3023 = vld [vmem:[%s3017 + $0x14] sm:$0xf]
        %v3024 = vld [vmem:[%s3017 + $0x18] sm:$0xf]
        %v3025 = vld [vmem:[%s3017 + $0x1c] sm:$0xf]
        %v3026 = vld [vmem:[%s3017 + $0x20] sm:$0xf]
        %v3027 = vld [vmem:[%s3017 + $0x24] sm:$0xf]
        %v3028 = vld [vmem:[%s3017 + $0x28] sm:$0xf]
        %v3029 = vld [vmem:[%s3017 + $0x2c] sm:$0xf]
        %v3030 = vld [vmem:[%s3017 + $0x30] sm:$0xf]
        %v3031 = vld [vmem:[%s3017 + $0x34] sm:$0xf]
        %v3032 = vld [vmem:[%s3017 + $0x38] sm:$0xf]
        %v3033 = vld [vmem:[%s3017 + $0x3c] sm:$0xf]
        %v3050 = vunpack.c.l.b16 %v3018
        %v3051 = vunpack.c.l.b16 %v3019
        %v3052 = vunpack.c.l.b16 %v3020
        %v3053 = vunpack.c.l.b16 %v3021
        %v3054 = vunpack.c.l.b16 %v3022
        %v3055 = vunpack.c.l.b16 %v3023
        %v3056 = vunpack.c.l.b16 %v3024
        %v3057 = vunpack.c.l.b16 %v3025
        %v3058 = vunpack.c.l.b16 %v3026
        %v3059 = vunpack.c.l.b16 %v3027
        %v3060 = vunpack.c.l.b16 %v3028
        %v3061 = vunpack.c.l.b16 %v3029
        %v3062 = vunpack.c.l.b16 %v3030
        %v3063 = vunpack.c.l.b16 %v3031
        %v3064 = vunpack.c.l.b16 %v3032
        %v3065 = vunpack.c.l.b16 %v3033
        %v3066 = vpack.c.b16 %v3051, %v3050
        %v3067 = vpack.c.b16 %v3053, %v3052
        %v3068 = vpack.c.b16 %v3055, %v3054
        %v3069 = vpack.c.b16 %v3057, %v3056
        %v3070 = vpack.c.b16 %v3059, %v3058
        %v3071 = vpack.c.b16 %v3061, %v3060
        %v3072 = vpack.c.b16 %v3063, %v3062
        %v3073 = vpack.c.b16 %v3065, %v3064
        %3082 = vmatprep.subr.bf16.mxu0 0
        %3083 = vmatpush1.bf16.msra.mxu0 %v3073
        %3084 = vmatprep.subr.bf16.mxu0 0
        %3085 = vmatpush1.bf16.msra.mxu0 %v3072
        %3086 = vmatprep.subr.bf16.mxu0 0
        %3087 = vmatpush1.bf16.msra.mxu0 %v3071
        %3088 = vmatprep.subr.bf16.mxu0 0
        %3089 = vmatpush1.bf16.msra.mxu0 %v3070
        %3090 = vmatprep.subr.bf16.mxu0 0
        %3091 = vmatpush1.bf16.msra.mxu0 %v3069
        %3092 = vmatprep.subr.bf16.mxu0 0
        %3093 = vmatpush1.bf16.msra.mxu0 %v3068
        %3094 = vmatprep.subr.bf16.mxu0 0
        %3095 = vmatpush1.bf16.msra.mxu0 %v3067
        %3096 = vmatprep.subr.bf16.mxu0 0
        %3097 = vmatpush1.bf16.msra.mxu0 %v3066
        %3098 = vmatprep.subr.bf16.mxu0 0
        %3099 = vmatpush2.bf16.msra.mxu0 0
        %3100 = vmatprep.subr.bf16.mxu0 0
        %3101 = vmatpush2.bf16.msra.mxu0 0
        %3102 = vmatprep.subr.bf16.mxu0 0
        %3103 = vmatpush2.bf16.msra.mxu0 0
        %3104 = vmatprep.subr.bf16.mxu0 0
        %3105 = vmatpush2.bf16.msra.mxu0 0
        %3106 = vmatprep.subr.bf16.mxu0 0
        %3107 = vmatpush2.bf16.msra.mxu0 0
        %3108 = vmatprep.subr.bf16.mxu0 0
        %3109 = vmatpush2.bf16.msra.mxu0 0
        %3110 = vmatprep.subr.bf16.mxu0 0
        %3111 = vmatpush2.bf16.msra.mxu0 0
        %3112 = vmatprep.subr.bf16.mxu0 0
        %3113 = vmatpush2.bf16.msra.mxu0 0
        %3114 = vmatprep.mubr.bf16.mxu0 0
        %3115 = vmatmul.mubr.bf16.gmra.mxu0 %v3001
        %v3116 = vpop.f32.mrf.mxu0
        %v3117 = vadd.f32 0.0, %v3116
        %v3118 = vpop.f32.mrf.mxu0
        %v3119 = vpop.f32.mrf.mxu0
        %v3120 = vadd.f32 0.0, %v3119
        %v3121 = vpop.f32.mrf.mxu0
        %3122 = vmatprep.mubr.bf16.mxu0 0
        %3123 = vmatmul.mubr.bf16.gmra.mxu0 %v3002
        %v3124 = vpop.f32.mrf.mxu0
        %v3125 = vadd.f32 0.0, %v3124
        %v3126 = vpop.f32.mrf.mxu0
        %v3127 = vpop.f32.mrf.mxu0
        %v3128 = vadd.f32 0.0, %v3127
        %v3129 = vpop.f32.mrf.mxu0
        %3130 = vmatprep.mubr.bf16.mxu0 0
        %3131 = vmatmul.mubr.bf16.gmra.mxu0 %v3003
        %v3132 = vpop.f32.mrf.mxu0
        %v3133 = vadd.f32 0.0, %v3132
        %v3134 = vpop.f32.mrf.mxu0
        %v3135 = vpop.f32.mrf.mxu0
        %v3136 = vadd.f32 0.0, %v3135
        %v3137 = vpop.f32.mrf.mxu0
        %3138 = vmatprep.mubr.bf16.mxu0 0
        %3139 = vmatmul.mubr.bf16.gmra.mxu0 %v3004
        %v3140 = vpop.f32.mrf.mxu0
        %v3141 = vadd.f32 0.0, %v3140
        %v3142 = vpop.f32.mrf.mxu0
        %v3143 = vpop.f32.mrf.mxu0
        %v3144 = vadd.f32 0.0, %v3143
        %v3145 = vpop.f32.mrf.mxu0
        %3146 = vmatprep.mubr.bf16.mxu0 0
        %3147 = vmatmul.mubr.bf16.gmra.mxu0 %v3005
        %v3148 = vpop.f32.mrf.mxu0
        %v3149 = vadd.f32 0.0, %v3148
        %v3150 = vpop.f32.mrf.mxu0
        %v3151 = vpop.f32.mrf.mxu0
        %v3152 = vadd.f32 0.0, %v3151
        %v3153 = vpop.f32.mrf.mxu0
        %3154 = vmatprep.mubr.bf16.mxu0 0
        %3155 = vmatmul.mubr.bf16.gmra.mxu0 %v3006
        %v3156 = vpop.f32.mrf.mxu0
        %v3157 = vadd.f32 0.0, %v3156
        %v3158 = vpop.f32.mrf.mxu0
        %v3159 = vpop.f32.mrf.mxu0
        %v3160 = vadd.f32 0.0, %v3159
        %v3161 = vpop.f32.mrf.mxu0
        %3162 = vmatprep.mubr.bf16.mxu0 0
        %3163 = vmatmul.mubr.bf16.gmra.mxu0 %v3007
        %v3164 = vpop.f32.mrf.mxu0
        %v3165 = vadd.f32 0.0, %v3164
        %v3166 = vpop.f32.mrf.mxu0
        %v3167 = vpop.f32.mrf.mxu0
        %v3168 = vadd.f32 0.0, %v3167
        %v3169 = vpop.f32.mrf.mxu0
        %3170 = vmatprep.mubr.bf16.mxu0 0
        %3171 = vmatmul.mubr.bf16.gmra.mxu0 %v3008
        %v3172 = vpop.f32.mrf.mxu0
        %v3173 = vadd.f32 0.0, %v3172
        %v3174 = vpop.f32.mrf.mxu0
        %v3175 = vpop.f32.mrf.mxu0
        %v3176 = vadd.f32 0.0, %v3175
        %v3177 = vpop.f32.mrf.mxu0
        %3178 = vmatprep.mubr.bf16.mxu0 0
        %3179 = vmatmul.mubr.bf16.gmra.mxu0 %v3009
        %v3180 = vpop.f32.mrf.mxu0
        %v3181 = vadd.f32 0.0, %v3180
        %v3182 = vpop.f32.mrf.mxu0
        %v3183 = vpop.f32.mrf.mxu0
        %v3184 = vadd.f32 0.0, %v3183
        %v3185 = vpop.f32.mrf.mxu0
        %3186 = vmatprep.mubr.bf16.mxu0 0
        %3187 = vmatmul.mubr.bf16.gmra.mxu0 %v3010
        %v3188 = vpop.f32.mrf.mxu0
        %v3189 = vadd.f32 0.0, %v3188
        %v3190 = vpop.f32.mrf.mxu0
        %v3191 = vpop.f32.mrf.mxu0
        %v3192 = vadd.f32 0.0, %v3191
        %v3193 = vpop.f32.mrf.mxu0
        %3194 = vmatprep.mubr.bf16.mxu0 0
        %3195 = vmatmul.mubr.bf16.gmra.mxu0 %v3011
        %v3196 = vpop.f32.mrf.mxu0
        %v3197 = vadd.f32 0.0, %v3196
        %v3198 = vpop.f32.mrf.mxu0
        %v3199 = vpop.f32.mrf.mxu0
        %v3200 = vadd.f32 0.0, %v3199
        %v3201 = vpop.f32.mrf.mxu0
        %3202 = vmatprep.mubr.bf16.mxu0 0
        %3203 = vmatmul.mubr.bf16.gmra.mxu0 %v3012
        %v3204 = vpop.f32.mrf.mxu0
        %v3205 = vadd.f32 0.0, %v3204
        %v3206 = vpop.f32.mrf.mxu0
        %v3207 = vpop.f32.mrf.mxu0
        %v3208 = vadd.f32 0.0, %v3207
        %v3209 = vpop.f32.mrf.mxu0
        %3210 = vmatprep.mubr.bf16.mxu0 0
        %3211 = vmatmul.mubr.bf16.gmra.mxu0 %v3013
        %v3212 = vpop.f32.mrf.mxu0
        %v3213 = vadd.f32 0.0, %v3212
        %v3214 = vpop.f32.mrf.mxu0
        %v3215 = vpop.f32.mrf.mxu0
        %v3216 = vadd.f32 0.0, %v3215
        %v3217 = vpop.f32.mrf.mxu0
        %3218 = vmatprep.mubr.bf16.mxu0 0
        %3219 = vmatmul.mubr.bf16.gmra.mxu0 %v3014
        %v3220 = vpop.f32.mrf.mxu0
        %v3221 = vadd.f32 0.0, %v3220
        %v3222 = vpop.f32.mrf.mxu0
        %v3223 = vpop.f32.mrf.mxu0
        %v3224 = vadd.f32 0.0, %v3223
        %v3225 = vpop.f32.mrf.mxu0
        %3226 = vmatprep.mubr.bf16.mxu0 0
        %3227 = vmatmul.mubr.bf16.gmra.mxu0 %v3015
        %v3228 = vpop.f32.mrf.mxu0
        %v3229 = vadd.f32 0.0, %v3228
        %v3230 = vpop.f32.mrf.mxu0
        %v3231 = vpop.f32.mrf.mxu0
        %v3232 = vadd.f32 0.0, %v3231
        %v3233 = vpop.f32.mrf.mxu0
        %3234 = vmatprep.mubr.bf16.mxu0 0
        %3235 = vmatmul.mubr.bf16.gmra.mxu0 %v3016
        %v3236 = vpop.f32.mrf.mxu0
        %v3237 = vadd.f32 0.0, %v3236
        %v3238 = vpop.f32.mrf.mxu0
        %v3239 = vpop.f32.mrf.mxu0
        %v3240 = vadd.f32 0.0, %v3239
        %v3241 = vpop.f32.mrf.mxu0
        %3242 = vdwg.mxu0
        %v3243 = vadd.f32 %v2777, %v3117
        %v3244 = vadd.f32 %v2778, %v3120
        %v3245 = vadd.f32 %v2779, %v3125
        %v3246 = vadd.f32 %v2780, %v3128
        %v3247 = vadd.f32 %v2781, %v3133
        %v3248 = vadd.f32 %v2782, %v3136
        %v3249 = vadd.f32 %v2783, %v3141
        %v3250 = vadd.f32 %v2784, %v3144
        %v3251 = vadd.f32 %v2785, %v3149
        %v3252 = vadd.f32 %v2786, %v3152
        %v3253 = vadd.f32 %v2787, %v3157
        %v3254 = vadd.f32 %v2788, %v3160
        %v3255 = vadd.f32 %v2789, %v3165
        %v3256 = vadd.f32 %v2790, %v3168
        %v3257 = vadd.f32 %v2791, %v3173
        %v3258 = vadd.f32 %v2792, %v3176
        %v3259 = vadd.f32 %v2793, %v3181
        %v3260 = vadd.f32 %v2794, %v3184
        %v3261 = vadd.f32 %v2795, %v3189
        %v3262 = vadd.f32 %v2796, %v3192
        %v3263 = vadd.f32 %v2797, %v3197
        %v3264 = vadd.f32 %v2798, %v3200
        %v3265 = vadd.f32 %v2799, %v3205
        %v3266 = vadd.f32 %v2800, %v3208
        %v3267 = vadd.f32 %v2801, %v3213
        %v3268 = vadd.f32 %v2802, %v3216
        %v3269 = vadd.f32 %v2803, %v3221
        %v3270 = vadd.f32 %v2804, %v3224
        %v3271 = vadd.f32 %v2805, %v3229
        %v3272 = vadd.f32 %v2806, %v3232
        %v3273 = vadd.f32 %v2807, %v3237
        %v3274 = vadd.f32 %v2808, %v3240
        %v3275 = vld [vmem:[#allocation2 + $0x27] sm:$0xff]
        %v3276 = vld [vmem:[#allocation2 + $0x2f] sm:$0xff]
        %v3277 = vld [vmem:[#allocation2 + $0x37] sm:$0xff]
        %v3278 = vld [vmem:[#allocation2 + $0x3f] sm:$0xff]
        %v3279 = vld [vmem:[#allocation2 + $0x47] sm:$0xff]
        %v3280 = vld [vmem:[#allocation2 + $0x4f] sm:$0xff]
        %v3281 = vld [vmem:[#allocation2 + $0x57] sm:$0xff]
        %v3282 = vld [vmem:[#allocation2 + $0x5f] sm:$0xff]
        %v3283 = vld [vmem:[#allocation2 + $0x67] sm:$0xff]
        %v3284 = vld [vmem:[#allocation2 + $0x6f] sm:$0xff]
        %v3285 = vld [vmem:[#allocation2 + $0x77] sm:$0xff]
        %v3286 = vld [vmem:[#allocation2 + $0x7f] sm:$0xff]
        %v3287 = vld [vmem:[#allocation2 + $0x87] sm:$0xff]
        %v3288 = vld [vmem:[#allocation2 + $0x8f] sm:$0xff]
        %v3289 = vld [vmem:[#allocation2 + $0x97] sm:$0xff]
        %v3290 = vld [vmem:[#allocation2 + $0x9f] sm:$0xff]
        %v3291 = vld [vmem:[#allocation2 + $0xa7] sm:$0xff]
        %v3292 = vld [vmem:[#allocation2 + $0xaf] sm:$0xff]
        %v3293 = vld [vmem:[#allocation2 + $0xb7] sm:$0xff]
        %v3294 = vld [vmem:[#allocation2 + $0xbf] sm:$0xff]
        %v3295 = vld [vmem:[#allocation2 + $0xc7] sm:$0xff]
        %v3296 = vld [vmem:[#allocation2 + $0xcf] sm:$0xff]
        %v3297 = vld [vmem:[#allocation2 + $0xd7] sm:$0xff]
        %v3298 = vld [vmem:[#allocation2 + $0xdf] sm:$0xff]
        %v3299 = vld [vmem:[#allocation2 + $0xe7] sm:$0xff]
        %v3300 = vld [vmem:[#allocation2 + $0xef] sm:$0xff]
        %v3301 = vld [vmem:[#allocation2 + $0xf7] sm:$0xff]
        %v3302 = vld [vmem:[#allocation2 + $0xff] sm:$0xff]
        %v3303 = vld [vmem:[#allocation2 + $0x107] sm:$0xff]
        %v3304 = vld [vmem:[#allocation2 + $0x10f] sm:$0xff]
        %v3305 = vld [vmem:[#allocation2 + $0x117] sm:$0xff]
        %v3306 = vld [vmem:[#allocation2 + $0x11f] sm:$0xff]
        %3307 = vset.pattern.permute.xlu0 6
        %3308 = vperm.xlu0 %3307, %v832
        %v3309 = vpop.permute.xlu0 %3308
        %3311 = vset.pattern.permute.xlu0 6
        %3312 = vperm.xlu0 %3311, %v833
        %v3313 = vpop.permute.xlu0 %3312
        %3315 = vset.pattern.permute.xlu0 6
        %3316 = vperm.xlu0 %3315, %v834
        %v3317 = vpop.permute.xlu0 %3316
        %3319 = vset.pattern.permute.xlu0 6
        %3320 = vperm.xlu0 %3319, %v835
        %v3321 = vpop.permute.xlu0 %3320
        %3323 = vset.pattern.permute.xlu0 6
        %3324 = vperm.xlu0 %3323, %v836
        %v3325 = vpop.permute.xlu0 %3324
        %3327 = vset.pattern.permute.xlu0 6
        %3328 = vperm.xlu0 %3327, %v837
        %v3329 = vpop.permute.xlu0 %3328
        %3331 = vset.pattern.permute.xlu0 6
        %3332 = vperm.xlu0 %3331, %v838
        %v3333 = vpop.permute.xlu0 %3332
        %3335 = vset.pattern.permute.xlu0 6
        %3336 = vperm.xlu0 %3335, %v839
        %v3337 = vpop.permute.xlu0 %3336
        %3339 = vset.pattern.permute.xlu0 6
        %3340 = vperm.xlu0 %3339, %v840
        %v3341 = vpop.permute.xlu0 %3340
        %3343 = vset.pattern.permute.xlu0 6
        %3344 = vperm.xlu0 %3343, %v841
        %v3345 = vpop.permute.xlu0 %3344
        %3347 = vset.pattern.permute.xlu0 6
        %3348 = vperm.xlu0 %3347, %v842
        %v3349 = vpop.permute.xlu0 %3348
        %3351 = vset.pattern.permute.xlu0 6
        %3352 = vperm.xlu0 %3351, %v843
        %v3353 = vpop.permute.xlu0 %3352
        %3355 = vset.pattern.permute.xlu0 6
        %3356 = vperm.xlu0 %3355, %v844
        %v3357 = vpop.permute.xlu0 %3356
        %3359 = vset.pattern.permute.xlu0 6
        %3360 = vperm.xlu0 %3359, %v845
        %v3361 = vpop.permute.xlu0 %3360
        %3363 = vset.pattern.permute.xlu0 6
        %3364 = vperm.xlu0 %3363, %v846
        %v3365 = vpop.permute.xlu0 %3364
        %3367 = vset.pattern.permute.xlu0 6
        %3368 = vperm.xlu0 %3367, %v847
        %v3369 = vpop.permute.xlu0 %3368
        %3371 = vset.pattern.permute.xlu0 6
        %3372 = vperm.xlu0 %3371, %v848
        %v3373 = vpop.permute.xlu0 %3372
        %3375 = vset.pattern.permute.xlu0 6
        %3376 = vperm.xlu0 %3375, %v849
        %v3377 = vpop.permute.xlu0 %3376
        %3379 = vset.pattern.permute.xlu0 6
        %3380 = vperm.xlu0 %3379, %v850
        %v3381 = vpop.permute.xlu0 %3380
        %3383 = vset.pattern.permute.xlu0 6
        %3384 = vperm.xlu0 %3383, %v851
        %v3385 = vpop.permute.xlu0 %3384
        %3387 = vset.pattern.permute.xlu0 6
        %3388 = vperm.xlu0 %3387, %v852
        %v3389 = vpop.permute.xlu0 %3388
        %3391 = vset.pattern.permute.xlu0 6
        %3392 = vperm.xlu0 %3391, %v853
        %v3393 = vpop.permute.xlu0 %3392
        %3395 = vset.pattern.permute.xlu0 6
        %3396 = vperm.xlu0 %3395, %v854
        %v3397 = vpop.permute.xlu0 %3396
        %3399 = vset.pattern.permute.xlu0 6
        %3400 = vperm.xlu0 %3399, %v855
        %v3401 = vpop.permute.xlu0 %3400
        %3403 = vset.pattern.permute.xlu0 6
        %3404 = vperm.xlu0 %3403, %v856
        %v3405 = vpop.permute.xlu0 %3404
        %3407 = vset.pattern.permute.xlu0 6
        %3408 = vperm.xlu0 %3407, %v857
        %v3409 = vpop.permute.xlu0 %3408
        %3411 = vset.pattern.permute.xlu0 6
        %3412 = vperm.xlu0 %3411, %v858
        %v3413 = vpop.permute.xlu0 %3412
        %3415 = vset.pattern.permute.xlu0 6
        %3416 = vperm.xlu0 %3415, %v859
        %v3417 = vpop.permute.xlu0 %3416
        %3419 = vset.pattern.permute.xlu0 6
        %3420 = vperm.xlu0 %3419, %v860
        %v3421 = vpop.permute.xlu0 %3420
        %3423 = vset.pattern.permute.xlu0 6
        %3424 = vperm.xlu0 %3423, %v861
        %v3425 = vpop.permute.xlu0 %3424
        %3427 = vset.pattern.permute.xlu0 6
        %3428 = vperm.xlu0 %3427, %v862
        %v3429 = vpop.permute.xlu0 %3428
        %3431 = vset.pattern.permute.xlu0 6
        %3432 = vperm.xlu0 %3431, %v863
        %v3433 = vpop.permute.xlu0 %3432
        %v3435 = vmul.f32 %v3275, %v3309
        %v3436 = vmul.f32 %v3276, %v3313
        %v3437 = vmul.f32 %v3277, %v3317
        %v3438 = vmul.f32 %v3278, %v3321
        %v3439 = vmul.f32 %v3279, %v3325
        %v3440 = vmul.f32 %v3280, %v3329
        %v3441 = vmul.f32 %v3281, %v3333
        %v3442 = vmul.f32 %v3282, %v3337
        %v3443 = vmul.f32 %v3283, %v3341
        %v3444 = vmul.f32 %v3284, %v3345
        %v3445 = vmul.f32 %v3285, %v3349
        %v3446 = vmul.f32 %v3286, %v3353
        %v3447 = vmul.f32 %v3287, %v3357
        %v3448 = vmul.f32 %v3288, %v3361
        %v3449 = vmul.f32 %v3289, %v3365
        %v3450 = vmul.f32 %v3290, %v3369
        %v3451 = vmul.f32 %v3291, %v3373
        %v3452 = vmul.f32 %v3292, %v3377
        %v3453 = vmul.f32 %v3293, %v3381
        %v3454 = vmul.f32 %v3294, %v3385
        %v3455 = vmul.f32 %v3295, %v3389
        %v3456 = vmul.f32 %v3296, %v3393
        %v3457 = vmul.f32 %v3297, %v3397
        %v3458 = vmul.f32 %v3298, %v3401
        %v3459 = vmul.f32 %v3299, %v3405
        %v3460 = vmul.f32 %v3300, %v3409
        %v3461 = vmul.f32 %v3301, %v3413
        %v3462 = vmul.f32 %v3302, %v3417
        %v3463 = vmul.f32 %v3303, %v3421
        %v3464 = vmul.f32 %v3304, %v3425
        %v3465 = vmul.f32 %v3305, %v3429
        %v3466 = vmul.f32 %v3306, %v3433
        %v3467 = vpack.c.bf16 %v3436, %v3435
        %v3468 = vpack.c.bf16 %v3438, %v3437
        %v3469 = vpack.c.bf16 %v3440, %v3439
        %v3470 = vpack.c.bf16 %v3442, %v3441
        %v3471 = vpack.c.bf16 %v3444, %v3443
        %v3472 = vpack.c.bf16 %v3446, %v3445
        %v3473 = vpack.c.bf16 %v3448, %v3447
        %v3474 = vpack.c.bf16 %v3450, %v3449
        %v3475 = vpack.c.bf16 %v3452, %v3451
        %v3476 = vpack.c.bf16 %v3454, %v3453
        %v3477 = vpack.c.bf16 %v3456, %v3455
        %v3478 = vpack.c.bf16 %v3458, %v3457
        %v3479 = vpack.c.bf16 %v3460, %v3459
        %v3480 = vpack.c.bf16 %v3462, %v3461
        %v3481 = vpack.c.bf16 %v3464, %v3463
        %v3482 = vpack.c.bf16 %v3466, %v3465
        %s3483 = scalar_lea.vmem [#allocation6], 384
        %v3484 = vld [vmem:[%s3483] sm:$0xf]
        %v3485 = vld [vmem:[%s3483 + $0x4] sm:$0xf]
        %v3486 = vld [vmem:[%s3483 + $0x8] sm:$0xf]
        %v3487 = vld [vmem:[%s3483 + $0xc] sm:$0xf]
        %v3488 = vld [vmem:[%s3483 + $0x10] sm:$0xf]
        %v3489 = vld [vmem:[%s3483 + $0x14] sm:$0xf]
        %v3490 = vld [vmem:[%s3483 + $0x18] sm:$0xf]
        %v3491 = vld [vmem:[%s3483 + $0x1c] sm:$0xf]
        %v3492 = vld [vmem:[%s3483 + $0x20] sm:$0xf]
        %v3493 = vld [vmem:[%s3483 + $0x24] sm:$0xf]
        %v3494 = vld [vmem:[%s3483 + $0x28] sm:$0xf]
        %v3495 = vld [vmem:[%s3483 + $0x2c] sm:$0xf]
        %v3496 = vld [vmem:[%s3483 + $0x30] sm:$0xf]
        %v3497 = vld [vmem:[%s3483 + $0x34] sm:$0xf]
        %v3498 = vld [vmem:[%s3483 + $0x38] sm:$0xf]
        %v3499 = vld [vmem:[%s3483 + $0x3c] sm:$0xf]
        %v3516 = vunpack.c.l.b16 %v3484
        %v3517 = vunpack.c.l.b16 %v3485
        %v3518 = vunpack.c.l.b16 %v3486
        %v3519 = vunpack.c.l.b16 %v3487
        %v3520 = vunpack.c.l.b16 %v3488
        %v3521 = vunpack.c.l.b16 %v3489
        %v3522 = vunpack.c.l.b16 %v3490
        %v3523 = vunpack.c.l.b16 %v3491
        %v3524 = vunpack.c.l.b16 %v3492
        %v3525 = vunpack.c.l.b16 %v3493
        %v3526 = vunpack.c.l.b16 %v3494
        %v3527 = vunpack.c.l.b16 %v3495
        %v3528 = vunpack.c.l.b16 %v3496
        %v3529 = vunpack.c.l.b16 %v3497
        %v3530 = vunpack.c.l.b16 %v3498
        %v3531 = vunpack.c.l.b16 %v3499
        %v3532 = vpack.c.b16 %v3517, %v3516
        %v3533 = vpack.c.b16 %v3519, %v3518
        %v3534 = vpack.c.b16 %v3521, %v3520
        %v3535 = vpack.c.b16 %v3523, %v3522
        %v3536 = vpack.c.b16 %v3525, %v3524
        %v3537 = vpack.c.b16 %v3527, %v3526
        %v3538 = vpack.c.b16 %v3529, %v3528
        %v3539 = vpack.c.b16 %v3531, %v3530
        %3548 = vmatprep.subr.bf16.mxu0 0
        %3549 = vmatpush1.bf16.msra.mxu0 %v3539
        %3550 = vmatprep.subr.bf16.mxu0 0
        %3551 = vmatpush1.bf16.msra.mxu0 %v3538
        %3552 = vmatprep.subr.bf16.mxu0 0
        %3553 = vmatpush1.bf16.msra.mxu0 %v3537
        %3554 = vmatprep.subr.bf16.mxu0 0
        %3555 = vmatpush1.bf16.msra.mxu0 %v3536
        %3556 = vmatprep.subr.bf16.mxu0 0
        %3557 = vmatpush1.bf16.msra.mxu0 %v3535
        %3558 = vmatprep.subr.bf16.mxu0 0
        %3559 = vmatpush1.bf16.msra.mxu0 %v3534
        %3560 = vmatprep.subr.bf16.mxu0 0
        %3561 = vmatpush1.bf16.msra.mxu0 %v3533
        %3562 = vmatprep.subr.bf16.mxu0 0
        %3563 = vmatpush1.bf16.msra.mxu0 %v3532
        %3564 = vmatprep.subr.bf16.mxu0 0
        %3565 = vmatpush2.bf16.msra.mxu0 0
        %3566 = vmatprep.subr.bf16.mxu0 0
        %3567 = vmatpush2.bf16.msra.mxu0 0
        %3568 = vmatprep.subr.bf16.mxu0 0
        %3569 = vmatpush2.bf16.msra.mxu0 0
        %3570 = vmatprep.subr.bf16.mxu0 0
        %3571 = vmatpush2.bf16.msra.mxu0 0
        %3572 = vmatprep.subr.bf16.mxu0 0
        %3573 = vmatpush2.bf16.msra.mxu0 0
        %3574 = vmatprep.subr.bf16.mxu0 0
        %3575 = vmatpush2.bf16.msra.mxu0 0
        %3576 = vmatprep.subr.bf16.mxu0 0
        %3577 = vmatpush2.bf16.msra.mxu0 0
        %3578 = vmatprep.subr.bf16.mxu0 0
        %3579 = vmatpush2.bf16.msra.mxu0 0
        %3580 = vmatprep.mubr.bf16.mxu0 0
        %3581 = vmatmul.mubr.bf16.gmra.mxu0 %v3467
        %v3582 = vpop.f32.mrf.mxu0
        %v3583 = vadd.f32 0.0, %v3582
        %v3584 = vpop.f32.mrf.mxu0
        %v3585 = vpop.f32.mrf.mxu0
        %v3586 = vadd.f32 0.0, %v3585
        %v3587 = vpop.f32.mrf.mxu0
        %3588 = vmatprep.mubr.bf16.mxu0 0
        %3589 = vmatmul.mubr.bf16.gmra.mxu0 %v3468
        %v3590 = vpop.f32.mrf.mxu0
        %v3591 = vadd.f32 0.0, %v3590
        %v3592 = vpop.f32.mrf.mxu0
        %v3593 = vpop.f32.mrf.mxu0
        %v3594 = vadd.f32 0.0, %v3593
        %v3595 = vpop.f32.mrf.mxu0
        %3596 = vmatprep.mubr.bf16.mxu0 0
        %3597 = vmatmul.mubr.bf16.gmra.mxu0 %v3469
        %v3598 = vpop.f32.mrf.mxu0
        %v3599 = vadd.f32 0.0, %v3598
        %v3600 = vpop.f32.mrf.mxu0
        %v3601 = vpop.f32.mrf.mxu0
        %v3602 = vadd.f32 0.0, %v3601
        %v3603 = vpop.f32.mrf.mxu0
        %3604 = vmatprep.mubr.bf16.mxu0 0
        %3605 = vmatmul.mubr.bf16.gmra.mxu0 %v3470
        %v3606 = vpop.f32.mrf.mxu0
        %v3607 = vadd.f32 0.0, %v3606
        %v3608 = vpop.f32.mrf.mxu0
        %v3609 = vpop.f32.mrf.mxu0
        %v3610 = vadd.f32 0.0, %v3609
        %v3611 = vpop.f32.mrf.mxu0
        %3612 = vmatprep.mubr.bf16.mxu0 0
        %3613 = vmatmul.mubr.bf16.gmra.mxu0 %v3471
        %v3614 = vpop.f32.mrf.mxu0
        %v3615 = vadd.f32 0.0, %v3614
        %v3616 = vpop.f32.mrf.mxu0
        %v3617 = vpop.f32.mrf.mxu0
        %v3618 = vadd.f32 0.0, %v3617
        %v3619 = vpop.f32.mrf.mxu0
        %3620 = vmatprep.mubr.bf16.mxu0 0
        %3621 = vmatmul.mubr.bf16.gmra.mxu0 %v3472
        %v3622 = vpop.f32.mrf.mxu0
        %v3623 = vadd.f32 0.0, %v3622
        %v3624 = vpop.f32.mrf.mxu0
        %v3625 = vpop.f32.mrf.mxu0
        %v3626 = vadd.f32 0.0, %v3625
        %v3627 = vpop.f32.mrf.mxu0
        %3628 = vmatprep.mubr.bf16.mxu0 0
        %3629 = vmatmul.mubr.bf16.gmra.mxu0 %v3473
        %v3630 = vpop.f32.mrf.mxu0
        %v3631 = vadd.f32 0.0, %v3630
        %v3632 = vpop.f32.mrf.mxu0
        %v3633 = vpop.f32.mrf.mxu0
        %v3634 = vadd.f32 0.0, %v3633
        %v3635 = vpop.f32.mrf.mxu0
        %3636 = vmatprep.mubr.bf16.mxu0 0
        %3637 = vmatmul.mubr.bf16.gmra.mxu0 %v3474
        %v3638 = vpop.f32.mrf.mxu0
        %v3639 = vadd.f32 0.0, %v3638
        %v3640 = vpop.f32.mrf.mxu0
        %v3641 = vpop.f32.mrf.mxu0
        %v3642 = vadd.f32 0.0, %v3641
        %v3643 = vpop.f32.mrf.mxu0
        %3644 = vmatprep.mubr.bf16.mxu0 0
        %3645 = vmatmul.mubr.bf16.gmra.mxu0 %v3475
        %v3646 = vpop.f32.mrf.mxu0
        %v3647 = vadd.f32 0.0, %v3646
        %v3648 = vpop.f32.mrf.mxu0
        %v3649 = vpop.f32.mrf.mxu0
        %v3650 = vadd.f32 0.0, %v3649
        %v3651 = vpop.f32.mrf.mxu0
        %3652 = vmatprep.mubr.bf16.mxu0 0
        %3653 = vmatmul.mubr.bf16.gmra.mxu0 %v3476
        %v3654 = vpop.f32.mrf.mxu0
        %v3655 = vadd.f32 0.0, %v3654
        %v3656 = vpop.f32.mrf.mxu0
        %v3657 = vpop.f32.mrf.mxu0
        %v3658 = vadd.f32 0.0, %v3657
        %v3659 = vpop.f32.mrf.mxu0
        %3660 = vmatprep.mubr.bf16.mxu0 0
        %3661 = vmatmul.mubr.bf16.gmra.mxu0 %v3477
        %v3662 = vpop.f32.mrf.mxu0
        %v3663 = vadd.f32 0.0, %v3662
        %v3664 = vpop.f32.mrf.mxu0
        %v3665 = vpop.f32.mrf.mxu0
        %v3666 = vadd.f32 0.0, %v3665
        %v3667 = vpop.f32.mrf.mxu0
        %3668 = vmatprep.mubr.bf16.mxu0 0
        %3669 = vmatmul.mubr.bf16.gmra.mxu0 %v3478
        %v3670 = vpop.f32.mrf.mxu0
        %v3671 = vadd.f32 0.0, %v3670
        %v3672 = vpop.f32.mrf.mxu0
        %v3673 = vpop.f32.mrf.mxu0
        %v3674 = vadd.f32 0.0, %v3673
        %v3675 = vpop.f32.mrf.mxu0
        %3676 = vmatprep.mubr.bf16.mxu0 0
        %3677 = vmatmul.mubr.bf16.gmra.mxu0 %v3479
        %v3678 = vpop.f32.mrf.mxu0
        %v3679 = vadd.f32 0.0, %v3678
        %v3680 = vpop.f32.mrf.mxu0
        %v3681 = vpop.f32.mrf.mxu0
        %v3682 = vadd.f32 0.0, %v3681
        %v3683 = vpop.f32.mrf.mxu0
        %3684 = vmatprep.mubr.bf16.mxu0 0
        %3685 = vmatmul.mubr.bf16.gmra.mxu0 %v3480
        %v3686 = vpop.f32.mrf.mxu0
        %v3687 = vadd.f32 0.0, %v3686
        %v3688 = vpop.f32.mrf.mxu0
        %v3689 = vpop.f32.mrf.mxu0
        %v3690 = vadd.f32 0.0, %v3689
        %v3691 = vpop.f32.mrf.mxu0
        %3692 = vmatprep.mubr.bf16.mxu0 0
        %3693 = vmatmul.mubr.bf16.gmra.mxu0 %v3481
        %v3694 = vpop.f32.mrf.mxu0
        %v3695 = vadd.f32 0.0, %v3694
        %v3696 = vpop.f32.mrf.mxu0
        %v3697 = vpop.f32.mrf.mxu0
        %v3698 = vadd.f32 0.0, %v3697
        %v3699 = vpop.f32.mrf.mxu0
        %3700 = vmatprep.mubr.bf16.mxu0 0
        %3701 = vmatmul.mubr.bf16.gmra.mxu0 %v3482
        %v3702 = vpop.f32.mrf.mxu0
        %v3703 = vadd.f32 0.0, %v3702
        %v3704 = vpop.f32.mrf.mxu0
        %v3705 = vpop.f32.mrf.mxu0
        %v3706 = vadd.f32 0.0, %v3705
        %v3707 = vpop.f32.mrf.mxu0
        %3708 = vdwg.mxu0
        %v3709 = vadd.f32 %v3243, %v3583
        %v3710 = vadd.f32 %v3244, %v3586
        %v3711 = vadd.f32 %v3245, %v3591
        %v3712 = vadd.f32 %v3246, %v3594
        %v3713 = vadd.f32 %v3247, %v3599
        %v3714 = vadd.f32 %v3248, %v3602
        %v3715 = vadd.f32 %v3249, %v3607
        %v3716 = vadd.f32 %v3250, %v3610
        %v3717 = vadd.f32 %v3251, %v3615
        %v3718 = vadd.f32 %v3252, %v3618
        %v3719 = vadd.f32 %v3253, %v3623
        %v3720 = vadd.f32 %v3254, %v3626
        %v3721 = vadd.f32 %v3255, %v3631
        %v3722 = vadd.f32 %v3256, %v3634
        %v3723 = vadd.f32 %v3257, %v3639
        %v3724 = vadd.f32 %v3258, %v3642
        %v3725 = vadd.f32 %v3259, %v3647
        %v3726 = vadd.f32 %v3260, %v3650
        %v3727 = vadd.f32 %v3261, %v3655
        %v3728 = vadd.f32 %v3262, %v3658
        %v3729 = vadd.f32 %v3263, %v3663
        %v3730 = vadd.f32 %v3264, %v3666
        %v3731 = vadd.f32 %v3265, %v3671
        %v3732 = vadd.f32 %v3266, %v3674
        %v3733 = vadd.f32 %v3267, %v3679
        %v3734 = vadd.f32 %v3268, %v3682
        %v3735 = vadd.f32 %v3269, %v3687
        %v3736 = vadd.f32 %v3270, %v3690
        %v3737 = vadd.f32 %v3271, %v3695
        %v3738 = vadd.f32 %v3272, %v3698
        %v3739 = vadd.f32 %v3273, %v3703
        %v3740 = vadd.f32 %v3274, %v3706
        %v3741 = vld [vmem:[#allocation2 + $0x28] sm:$0xff]
        %v3742 = vld [vmem:[#allocation2 + $0x30] sm:$0xff]
        %v3743 = vld [vmem:[#allocation2 + $0x38] sm:$0xff]
        %v3744 = vld [vmem:[#allocation2 + $0x40] sm:$0xff]
        %v3745 = vld [vmem:[#allocation2 + $0x48] sm:$0xff]
        %v3746 = vld [vmem:[#allocation2 + $0x50] sm:$0xff]
        %v3747 = vld [vmem:[#allocation2 + $0x58] sm:$0xff]
        %v3748 = vld [vmem:[#allocation2 + $0x60] sm:$0xff]
        %v3749 = vld [vmem:[#allocation2 + $0x68] sm:$0xff]
        %v3750 = vld [vmem:[#allocation2 + $0x70] sm:$0xff]
        %v3751 = vld [vmem:[#allocation2 + $0x78] sm:$0xff]
        %v3752 = vld [vmem:[#allocation2 + $0x80] sm:$0xff]
        %v3753 = vld [vmem:[#allocation2 + $0x88] sm:$0xff]
        %v3754 = vld [vmem:[#allocation2 + $0x90] sm:$0xff]
        %v3755 = vld [vmem:[#allocation2 + $0x98] sm:$0xff]
        %v3756 = vld [vmem:[#allocation2 + $0xa0] sm:$0xff]
        %v3757 = vld [vmem:[#allocation2 + $0xa8] sm:$0xff]
        %v3758 = vld [vmem:[#allocation2 + $0xb0] sm:$0xff]
        %v3759 = vld [vmem:[#allocation2 + $0xb8] sm:$0xff]
        %v3760 = vld [vmem:[#allocation2 + $0xc0] sm:$0xff]
        %v3761 = vld [vmem:[#allocation2 + $0xc8] sm:$0xff]
        %v3762 = vld [vmem:[#allocation2 + $0xd0] sm:$0xff]
        %v3763 = vld [vmem:[#allocation2 + $0xd8] sm:$0xff]
        %v3764 = vld [vmem:[#allocation2 + $0xe0] sm:$0xff]
        %v3765 = vld [vmem:[#allocation2 + $0xe8] sm:$0xff]
        %v3766 = vld [vmem:[#allocation2 + $0xf0] sm:$0xff]
        %v3767 = vld [vmem:[#allocation2 + $0xf8] sm:$0xff]
        %v3768 = vld [vmem:[#allocation2 + $0x100] sm:$0xff]
        %v3769 = vld [vmem:[#allocation2 + $0x108] sm:$0xff]
        %v3770 = vld [vmem:[#allocation2 + $0x110] sm:$0xff]
        %v3771 = vld [vmem:[#allocation2 + $0x118] sm:$0xff]
        %v3772 = vld [vmem:[#allocation2 + $0x120] sm:$0xff]
        %v3773 = vpack.c.bf16 %v3742, %v3741
        %v3774 = vpack.c.bf16 %v3744, %v3743
        %v3775 = vpack.c.bf16 %v3746, %v3745
        %v3776 = vpack.c.bf16 %v3748, %v3747
        %v3777 = vpack.c.bf16 %v3750, %v3749
        %v3778 = vpack.c.bf16 %v3752, %v3751
        %v3779 = vpack.c.bf16 %v3754, %v3753
        %v3780 = vpack.c.bf16 %v3756, %v3755
        %v3781 = vpack.c.bf16 %v3758, %v3757
        %v3782 = vpack.c.bf16 %v3760, %v3759
        %v3783 = vpack.c.bf16 %v3762, %v3761
        %v3784 = vpack.c.bf16 %v3764, %v3763
        %v3785 = vpack.c.bf16 %v3766, %v3765
        %v3786 = vpack.c.bf16 %v3768, %v3767
        %v3787 = vpack.c.bf16 %v3770, %v3769
        %v3788 = vpack.c.bf16 %v3772, %v3771
        %s3789 = scalar_lea.vmem [#allocation6], 448
        %v3790 = vld [vmem:[%s3789] sm:$0xf]
        %v3791 = vld [vmem:[%s3789 + $0x4] sm:$0xf]
        %v3792 = vld [vmem:[%s3789 + $0x8] sm:$0xf]
        %v3793 = vld [vmem:[%s3789 + $0xc] sm:$0xf]
        %v3794 = vld [vmem:[%s3789 + $0x10] sm:$0xf]
        %v3795 = vld [vmem:[%s3789 + $0x14] sm:$0xf]
        %v3796 = vld [vmem:[%s3789 + $0x18] sm:$0xf]
        %v3797 = vld [vmem:[%s3789 + $0x1c] sm:$0xf]
        %v3798 = vld [vmem:[%s3789 + $0x20] sm:$0xf]
        %v3799 = vld [vmem:[%s3789 + $0x24] sm:$0xf]
        %v3800 = vld [vmem:[%s3789 + $0x28] sm:$0xf]
        %v3801 = vld [vmem:[%s3789 + $0x2c] sm:$0xf]
        %v3802 = vld [vmem:[%s3789 + $0x30] sm:$0xf]
        %v3803 = vld [vmem:[%s3789 + $0x34] sm:$0xf]
        %v3804 = vld [vmem:[%s3789 + $0x38] sm:$0xf]
        %v3805 = vld [vmem:[%s3789 + $0x3c] sm:$0xf]
        %v3822 = vunpack.c.l.b16 %v3790
        %v3823 = vunpack.c.l.b16 %v3791
        %v3824 = vunpack.c.l.b16 %v3792
        %v3825 = vunpack.c.l.b16 %v3793
        %v3826 = vunpack.c.l.b16 %v3794
        %v3827 = vunpack.c.l.b16 %v3795
        %v3828 = vunpack.c.l.b16 %v3796
        %v3829 = vunpack.c.l.b16 %v3797
        %v3830 = vunpack.c.l.b16 %v3798
        %v3831 = vunpack.c.l.b16 %v3799
        %v3832 = vunpack.c.l.b16 %v3800
        %v3833 = vunpack.c.l.b16 %v3801
        %v3834 = vunpack.c.l.b16 %v3802
        %v3835 = vunpack.c.l.b16 %v3803
        %v3836 = vunpack.c.l.b16 %v3804
        %v3837 = vunpack.c.l.b16 %v3805
        %v3838 = vpack.c.b16 %v3823, %v3822
        %v3839 = vpack.c.b16 %v3825, %v3824
        %v3840 = vpack.c.b16 %v3827, %v3826
        %v3841 = vpack.c.b16 %v3829, %v3828
        %v3842 = vpack.c.b16 %v3831, %v3830
        %v3843 = vpack.c.b16 %v3833, %v3832
        %v3844 = vpack.c.b16 %v3835, %v3834
        %v3845 = vpack.c.b16 %v3837, %v3836
        %3854 = vmatprep.subr.bf16.mxu0 0
        %3855 = vmatpush1.bf16.msra.mxu0 %v3845
        %3856 = vmatprep.subr.bf16.mxu0 0
        %3857 = vmatpush1.bf16.msra.mxu0 %v3844
        %3858 = vmatprep.subr.bf16.mxu0 0
        %3859 = vmatpush1.bf16.msra.mxu0 %v3843
        %3860 = vmatprep.subr.bf16.mxu0 0
        %3861 = vmatpush1.bf16.msra.mxu0 %v3842
        %3862 = vmatprep.subr.bf16.mxu0 0
        %3863 = vmatpush1.bf16.msra.mxu0 %v3841
        %3864 = vmatprep.subr.bf16.mxu0 0
        %3865 = vmatpush1.bf16.msra.mxu0 %v3840
        %3866 = vmatprep.subr.bf16.mxu0 0
        %3867 = vmatpush1.bf16.msra.mxu0 %v3839
        %3868 = vmatprep.subr.bf16.mxu0 0
        %3869 = vmatpush1.bf16.msra.mxu0 %v3838
        %3870 = vmatprep.subr.bf16.mxu0 0
        %3871 = vmatpush2.bf16.msra.mxu0 0
        %3872 = vmatprep.subr.bf16.mxu0 0
        %3873 = vmatpush2.bf16.msra.mxu0 0
        %3874 = vmatprep.subr.bf16.mxu0 0
        %3875 = vmatpush2.bf16.msra.mxu0 0
        %3876 = vmatprep.subr.bf16.mxu0 0
        %3877 = vmatpush2.bf16.msra.mxu0 0
        %3878 = vmatprep.subr.bf16.mxu0 0
        %3879 = vmatpush2.bf16.msra.mxu0 0
        %3880 = vmatprep.subr.bf16.mxu0 0
        %3881 = vmatpush2.bf16.msra.mxu0 0
        %3882 = vmatprep.subr.bf16.mxu0 0
        %3883 = vmatpush2.bf16.msra.mxu0 0
        %3884 = vmatprep.subr.bf16.mxu0 0
        %3885 = vmatpush2.bf16.msra.mxu0 0
        %3886 = vmatprep.mubr.bf16.mxu0 0
        %3887 = vmatmul.mubr.bf16.gmra.mxu0 %v3773
        %v3888 = vpop.f32.mrf.mxu0
        %v3889 = vadd.f32 0.0, %v3888
        %v3890 = vpop.f32.mrf.mxu0
        %v3891 = vpop.f32.mrf.mxu0
        %v3892 = vadd.f32 0.0, %v3891
        %v3893 = vpop.f32.mrf.mxu0
        %3894 = vmatprep.mubr.bf16.mxu0 0
        %3895 = vmatmul.mubr.bf16.gmra.mxu0 %v3774
        %v3896 = vpop.f32.mrf.mxu0
        %v3897 = vadd.f32 0.0, %v3896
        %v3898 = vpop.f32.mrf.mxu0
        %v3899 = vpop.f32.mrf.mxu0
        %v3900 = vadd.f32 0.0, %v3899
        %v3901 = vpop.f32.mrf.mxu0
        %3902 = vmatprep.mubr.bf16.mxu0 0
        %3903 = vmatmul.mubr.bf16.gmra.mxu0 %v3775
        %v3904 = vpop.f32.mrf.mxu0
        %v3905 = vadd.f32 0.0, %v3904
        %v3906 = vpop.f32.mrf.mxu0
        %v3907 = vpop.f32.mrf.mxu0
        %v3908 = vadd.f32 0.0, %v3907
        %v3909 = vpop.f32.mrf.mxu0
        %3910 = vmatprep.mubr.bf16.mxu0 0
        %3911 = vmatmul.mubr.bf16.gmra.mxu0 %v3776
        %v3912 = vpop.f32.mrf.mxu0
        %v3913 = vadd.f32 0.0, %v3912
        %v3914 = vpop.f32.mrf.mxu0
        %v3915 = vpop.f32.mrf.mxu0
        %v3916 = vadd.f32 0.0, %v3915
        %v3917 = vpop.f32.mrf.mxu0
        %3918 = vmatprep.mubr.bf16.mxu0 0
        %3919 = vmatmul.mubr.bf16.gmra.mxu0 %v3777
        %v3920 = vpop.f32.mrf.mxu0
        %v3921 = vadd.f32 0.0, %v3920
        %v3922 = vpop.f32.mrf.mxu0
        %v3923 = vpop.f32.mrf.mxu0
        %v3924 = vadd.f32 0.0, %v3923
        %v3925 = vpop.f32.mrf.mxu0
        %3926 = vmatprep.mubr.bf16.mxu0 0
        %3927 = vmatmul.mubr.bf16.gmra.mxu0 %v3778
        %v3928 = vpop.f32.mrf.mxu0
        %v3929 = vadd.f32 0.0, %v3928
        %v3930 = vpop.f32.mrf.mxu0
        %v3931 = vpop.f32.mrf.mxu0
        %v3932 = vadd.f32 0.0, %v3931
        %v3933 = vpop.f32.mrf.mxu0
        %3934 = vmatprep.mubr.bf16.mxu0 0
        %3935 = vmatmul.mubr.bf16.gmra.mxu0 %v3779
        %v3936 = vpop.f32.mrf.mxu0
        %v3937 = vadd.f32 0.0, %v3936
        %v3938 = vpop.f32.mrf.mxu0
        %v3939 = vpop.f32.mrf.mxu0
        %v3940 = vadd.f32 0.0, %v3939
        %v3941 = vpop.f32.mrf.mxu0
        %3942 = vmatprep.mubr.bf16.mxu0 0
        %3943 = vmatmul.mubr.bf16.gmra.mxu0 %v3780
        %v3944 = vpop.f32.mrf.mxu0
        %v3945 = vadd.f32 0.0, %v3944
        %v3946 = vpop.f32.mrf.mxu0
        %v3947 = vpop.f32.mrf.mxu0
        %v3948 = vadd.f32 0.0, %v3947
        %v3949 = vpop.f32.mrf.mxu0
        %3950 = vmatprep.mubr.bf16.mxu0 0
        %3951 = vmatmul.mubr.bf16.gmra.mxu0 %v3781
        %v3952 = vpop.f32.mrf.mxu0
        %v3953 = vadd.f32 0.0, %v3952
        %v3954 = vpop.f32.mrf.mxu0
        %v3955 = vpop.f32.mrf.mxu0
        %v3956 = vadd.f32 0.0, %v3955
        %v3957 = vpop.f32.mrf.mxu0
        %3958 = vmatprep.mubr.bf16.mxu0 0
        %3959 = vmatmul.mubr.bf16.gmra.mxu0 %v3782
        %v3960 = vpop.f32.mrf.mxu0
        %v3961 = vadd.f32 0.0, %v3960
        %v3962 = vpop.f32.mrf.mxu0
        %v3963 = vpop.f32.mrf.mxu0
        %v3964 = vadd.f32 0.0, %v3963
        %v3965 = vpop.f32.mrf.mxu0
        %3966 = vmatprep.mubr.bf16.mxu0 0
        %3967 = vmatmul.mubr.bf16.gmra.mxu0 %v3783
        %v3968 = vpop.f32.mrf.mxu0
        %v3969 = vadd.f32 0.0, %v3968
        %v3970 = vpop.f32.mrf.mxu0
        %v3971 = vpop.f32.mrf.mxu0
        %v3972 = vadd.f32 0.0, %v3971
        %v3973 = vpop.f32.mrf.mxu0
        %3974 = vmatprep.mubr.bf16.mxu0 0
        %3975 = vmatmul.mubr.bf16.gmra.mxu0 %v3784
        %v3976 = vpop.f32.mrf.mxu0
        %v3977 = vadd.f32 0.0, %v3976
        %v3978 = vpop.f32.mrf.mxu0
        %v3979 = vpop.f32.mrf.mxu0
        %v3980 = vadd.f32 0.0, %v3979
        %v3981 = vpop.f32.mrf.mxu0
        %3982 = vmatprep.mubr.bf16.mxu0 0
        %3983 = vmatmul.mubr.bf16.gmra.mxu0 %v3785
        %v3984 = vpop.f32.mrf.mxu0
        %v3985 = vadd.f32 0.0, %v3984
        %v3986 = vpop.f32.mrf.mxu0
        %v3987 = vpop.f32.mrf.mxu0
        %v3988 = vadd.f32 0.0, %v3987
        %v3989 = vpop.f32.mrf.mxu0
        %3990 = vmatprep.mubr.bf16.mxu0 0
        %3991 = vmatmul.mubr.bf16.gmra.mxu0 %v3786
        %v3992 = vpop.f32.mrf.mxu0
        %v3993 = vadd.f32 0.0, %v3992
        %v3994 = vpop.f32.mrf.mxu0
        %v3995 = vpop.f32.mrf.mxu0
        %v3996 = vadd.f32 0.0, %v3995
        %v3997 = vpop.f32.mrf.mxu0
        %3998 = vmatprep.mubr.bf16.mxu0 0
        %3999 = vmatmul.mubr.bf16.gmra.mxu0 %v3787
        %v4000 = vpop.f32.mrf.mxu0
        %v4001 = vadd.f32 0.0, %v4000
        %v4002 = vpop.f32.mrf.mxu0
        %v4003 = vpop.f32.mrf.mxu0
        %v4004 = vadd.f32 0.0, %v4003
        %v4005 = vpop.f32.mrf.mxu0
        %4006 = vmatprep.mubr.bf16.mxu0 0
        %4007 = vmatmul.mubr.bf16.gmra.mxu0 %v3788
        %v4008 = vpop.f32.mrf.mxu0
        %v4009 = vadd.f32 0.0, %v4008
        %v4010 = vpop.f32.mrf.mxu0
        %v4011 = vpop.f32.mrf.mxu0
        %v4012 = vadd.f32 0.0, %v4011
        %v4013 = vpop.f32.mrf.mxu0
        %4014 = vdwg.mxu0
        %v4015 = vadd.f32 %v3709, %v3889
        %v4016 = vadd.f32 %v3710, %v3892
        %v4017 = vadd.f32 %v3711, %v3897
        %v4018 = vadd.f32 %v3712, %v3900
        %v4019 = vadd.f32 %v3713, %v3905
        %v4020 = vadd.f32 %v3714, %v3908
        %v4021 = vadd.f32 %v3715, %v3913
        %v4022 = vadd.f32 %v3716, %v3916
        %v4023 = vadd.f32 %v3717, %v3921
        %v4024 = vadd.f32 %v3718, %v3924
        %v4025 = vadd.f32 %v3719, %v3929
        %v4026 = vadd.f32 %v3720, %v3932
        %v4027 = vadd.f32 %v3721, %v3937
        %v4028 = vadd.f32 %v3722, %v3940
        %v4029 = vadd.f32 %v3723, %v3945
        %v4030 = vadd.f32 %v3724, %v3948
        %v4031 = vadd.f32 %v3725, %v3953
        %v4032 = vadd.f32 %v3726, %v3956
        %v4033 = vadd.f32 %v3727, %v3961
        %v4034 = vadd.f32 %v3728, %v3964
        %v4035 = vadd.f32 %v3729, %v3969
        %v4036 = vadd.f32 %v3730, %v3972
        %v4037 = vadd.f32 %v3731, %v3977
        %v4038 = vadd.f32 %v3732, %v3980
        %v4039 = vadd.f32 %v3733, %v3985
        %v4040 = vadd.f32 %v3734, %v3988
        %v4041 = vadd.f32 %v3735, %v3993
        %v4042 = vadd.f32 %v3736, %v3996
        %v4043 = vadd.f32 %v3737, %v4001
        %v4044 = vadd.f32 %v3738, %v4004
        %v4045 = vadd.f32 %v3739, %v4009
        %v4046 = vadd.f32 %v3740, %v4012
        %v4047 = vld [vmem:[#allocation2 + $0x29] sm:$0xff]
        %v4048 = vld [vmem:[#allocation2 + $0x31] sm:$0xff]
        %v4049 = vld [vmem:[#allocation2 + $0x39] sm:$0xff]
        %v4050 = vld [vmem:[#allocation2 + $0x41] sm:$0xff]
        %v4051 = vld [vmem:[#allocation2 + $0x49] sm:$0xff]
        %v4052 = vld [vmem:[#allocation2 + $0x51] sm:$0xff]
        %v4053 = vld [vmem:[#allocation2 + $0x59] sm:$0xff]
        %v4054 = vld [vmem:[#allocation2 + $0x61] sm:$0xff]
        %v4055 = vld [vmem:[#allocation2 + $0x69] sm:$0xff]
        %v4056 = vld [vmem:[#allocation2 + $0x71] sm:$0xff]
        %v4057 = vld [vmem:[#allocation2 + $0x79] sm:$0xff]
        %v4058 = vld [vmem:[#allocation2 + $0x81] sm:$0xff]
        %v4059 = vld [vmem:[#allocation2 + $0x89] sm:$0xff]
        %v4060 = vld [vmem:[#allocation2 + $0x91] sm:$0xff]
        %v4061 = vld [vmem:[#allocation2 + $0x99] sm:$0xff]
        %v4062 = vld [vmem:[#allocation2 + $0xa1] sm:$0xff]
        %v4063 = vld [vmem:[#allocation2 + $0xa9] sm:$0xff]
        %v4064 = vld [vmem:[#allocation2 + $0xb1] sm:$0xff]
        %v4065 = vld [vmem:[#allocation2 + $0xb9] sm:$0xff]
        %v4066 = vld [vmem:[#allocation2 + $0xc1] sm:$0xff]
        %v4067 = vld [vmem:[#allocation2 + $0xc9] sm:$0xff]
        %v4068 = vld [vmem:[#allocation2 + $0xd1] sm:$0xff]
        %v4069 = vld [vmem:[#allocation2 + $0xd9] sm:$0xff]
        %v4070 = vld [vmem:[#allocation2 + $0xe1] sm:$0xff]
        %v4071 = vld [vmem:[#allocation2 + $0xe9] sm:$0xff]
        %v4072 = vld [vmem:[#allocation2 + $0xf1] sm:$0xff]
        %v4073 = vld [vmem:[#allocation2 + $0xf9] sm:$0xff]
        %v4074 = vld [vmem:[#allocation2 + $0x101] sm:$0xff]
        %v4075 = vld [vmem:[#allocation2 + $0x109] sm:$0xff]
        %v4076 = vld [vmem:[#allocation2 + $0x111] sm:$0xff]
        %v4077 = vld [vmem:[#allocation2 + $0x119] sm:$0xff]
        %v4078 = vld [vmem:[#allocation2 + $0x121] sm:$0xff]
        %4079 = vset.pattern.permute.xlu0 8
        %4080 = vperm.xlu0 %4079, %v832
        %v4081 = vpop.permute.xlu0 %4080
        %4083 = vset.pattern.permute.xlu0 8
        %4084 = vperm.xlu0 %4083, %v833
        %v4085 = vpop.permute.xlu0 %4084
        %4087 = vset.pattern.permute.xlu0 8
        %4088 = vperm.xlu0 %4087, %v834
        %v4089 = vpop.permute.xlu0 %4088
        %4091 = vset.pattern.permute.xlu0 8
        %4092 = vperm.xlu0 %4091, %v835
        %v4093 = vpop.permute.xlu0 %4092
        %4095 = vset.pattern.permute.xlu0 8
        %4096 = vperm.xlu0 %4095, %v836
        %v4097 = vpop.permute.xlu0 %4096
        %4099 = vset.pattern.permute.xlu0 8
        %4100 = vperm.xlu0 %4099, %v837
        %v4101 = vpop.permute.xlu0 %4100
        %4103 = vset.pattern.permute.xlu0 8
        %4104 = vperm.xlu0 %4103, %v838
        %v4105 = vpop.permute.xlu0 %4104
        %4107 = vset.pattern.permute.xlu0 8
        %4108 = vperm.xlu0 %4107, %v839
        %v4109 = vpop.permute.xlu0 %4108
        %4111 = vset.pattern.permute.xlu0 8
        %4112 = vperm.xlu0 %4111, %v840
        %v4113 = vpop.permute.xlu0 %4112
        %4115 = vset.pattern.permute.xlu0 8
        %4116 = vperm.xlu0 %4115, %v841
        %v4117 = vpop.permute.xlu0 %4116
        %4119 = vset.pattern.permute.xlu0 8
        %4120 = vperm.xlu0 %4119, %v842
        %v4121 = vpop.permute.xlu0 %4120
        %4123 = vset.pattern.permute.xlu0 8
        %4124 = vperm.xlu0 %4123, %v843
        %v4125 = vpop.permute.xlu0 %4124
        %4127 = vset.pattern.permute.xlu0 8
        %4128 = vperm.xlu0 %4127, %v844
        %v4129 = vpop.permute.xlu0 %4128
        %4131 = vset.pattern.permute.xlu0 8
        %4132 = vperm.xlu0 %4131, %v845
        %v4133 = vpop.permute.xlu0 %4132
        %4135 = vset.pattern.permute.xlu0 8
        %4136 = vperm.xlu0 %4135, %v846
        %v4137 = vpop.permute.xlu0 %4136
        %4139 = vset.pattern.permute.xlu0 8
        %4140 = vperm.xlu0 %4139, %v847
        %v4141 = vpop.permute.xlu0 %4140
        %4143 = vset.pattern.permute.xlu0 8
        %4144 = vperm.xlu0 %4143, %v848
        %v4145 = vpop.permute.xlu0 %4144
        %4147 = vset.pattern.permute.xlu0 8
        %4148 = vperm.xlu0 %4147, %v849
        %v4149 = vpop.permute.xlu0 %4148
        %4151 = vset.pattern.permute.xlu0 8
        %4152 = vperm.xlu0 %4151, %v850
        %v4153 = vpop.permute.xlu0 %4152
        %4155 = vset.pattern.permute.xlu0 8
        %4156 = vperm.xlu0 %4155, %v851
        %v4157 = vpop.permute.xlu0 %4156
        %4159 = vset.pattern.permute.xlu0 8
        %4160 = vperm.xlu0 %4159, %v852
        %v4161 = vpop.permute.xlu0 %4160
        %4163 = vset.pattern.permute.xlu0 8
        %4164 = vperm.xlu0 %4163, %v853
        %v4165 = vpop.permute.xlu0 %4164
        %4167 = vset.pattern.permute.xlu0 8
        %4168 = vperm.xlu0 %4167, %v854
        %v4169 = vpop.permute.xlu0 %4168
        %4171 = vset.pattern.permute.xlu0 8
        %4172 = vperm.xlu0 %4171, %v855
        %v4173 = vpop.permute.xlu0 %4172
        %4175 = vset.pattern.permute.xlu0 8
        %4176 = vperm.xlu0 %4175, %v856
        %v4177 = vpop.permute.xlu0 %4176
        %4179 = vset.pattern.permute.xlu0 8
        %4180 = vperm.xlu0 %4179, %v857
        %v4181 = vpop.permute.xlu0 %4180
        %4183 = vset.pattern.permute.xlu0 8
        %4184 = vperm.xlu0 %4183, %v858
        %v4185 = vpop.permute.xlu0 %4184
        %4187 = vset.pattern.permute.xlu0 8
        %4188 = vperm.xlu0 %4187, %v859
        %v4189 = vpop.permute.xlu0 %4188
        %4191 = vset.pattern.permute.xlu0 8
        %4192 = vperm.xlu0 %4191, %v860
        %v4193 = vpop.permute.xlu0 %4192
        %4195 = vset.pattern.permute.xlu0 8
        %4196 = vperm.xlu0 %4195, %v861
        %v4197 = vpop.permute.xlu0 %4196
        %4199 = vset.pattern.permute.xlu0 8
        %4200 = vperm.xlu0 %4199, %v862
        %v4201 = vpop.permute.xlu0 %4200
        %4203 = vset.pattern.permute.xlu0 8
        %4204 = vperm.xlu0 %4203, %v863
        %v4205 = vpop.permute.xlu0 %4204
        %v4207 = vmul.f32 %v4047, %v4081
        %v4208 = vmul.f32 %v4048, %v4085
        %v4209 = vmul.f32 %v4049, %v4089
        %v4210 = vmul.f32 %v4050, %v4093
        %v4211 = vmul.f32 %v4051, %v4097
        %v4212 = vmul.f32 %v4052, %v4101
        %v4213 = vmul.f32 %v4053, %v4105
        %v4214 = vmul.f32 %v4054, %v4109
        %v4215 = vmul.f32 %v4055, %v4113
        %v4216 = vmul.f32 %v4056, %v4117
        %v4217 = vmul.f32 %v4057, %v4121
        %v4218 = vmul.f32 %v4058, %v4125
        %v4219 = vmul.f32 %v4059, %v4129
        %v4220 = vmul.f32 %v4060, %v4133
        %v4221 = vmul.f32 %v4061, %v4137
        %v4222 = vmul.f32 %v4062, %v4141
        %v4223 = vmul.f32 %v4063, %v4145
        %v4224 = vmul.f32 %v4064, %v4149
        %v4225 = vmul.f32 %v4065, %v4153
        %v4226 = vmul.f32 %v4066, %v4157
        %v4227 = vmul.f32 %v4067, %v4161
        %v4228 = vmul.f32 %v4068, %v4165
        %v4229 = vmul.f32 %v4069, %v4169
        %v4230 = vmul.f32 %v4070, %v4173
        %v4231 = vmul.f32 %v4071, %v4177
        %v4232 = vmul.f32 %v4072, %v4181
        %v4233 = vmul.f32 %v4073, %v4185
        %v4234 = vmul.f32 %v4074, %v4189
        %v4235 = vmul.f32 %v4075, %v4193
        %v4236 = vmul.f32 %v4076, %v4197
        %v4237 = vmul.f32 %v4077, %v4201
        %v4238 = vmul.f32 %v4078, %v4205
        %v4239 = vpack.c.bf16 %v4208, %v4207
        %v4240 = vpack.c.bf16 %v4210, %v4209
        %v4241 = vpack.c.bf16 %v4212, %v4211
        %v4242 = vpack.c.bf16 %v4214, %v4213
        %v4243 = vpack.c.bf16 %v4216, %v4215
        %v4244 = vpack.c.bf16 %v4218, %v4217
        %v4245 = vpack.c.bf16 %v4220, %v4219
        %v4246 = vpack.c.bf16 %v4222, %v4221
        %v4247 = vpack.c.bf16 %v4224, %v4223
        %v4248 = vpack.c.bf16 %v4226, %v4225
        %v4249 = vpack.c.bf16 %v4228, %v4227
        %v4250 = vpack.c.bf16 %v4230, %v4229
        %v4251 = vpack.c.bf16 %v4232, %v4231
        %v4252 = vpack.c.bf16 %v4234, %v4233
        %v4253 = vpack.c.bf16 %v4236, %v4235
        %v4254 = vpack.c.bf16 %v4238, %v4237
        %s4255 = scalar_lea.vmem [#allocation6], 512
        %v4256 = vld [vmem:[%s4255] sm:$0xf]
        %v4257 = vld [vmem:[%s4255 + $0x4] sm:$0xf]
        %v4258 = vld [vmem:[%s4255 + $0x8] sm:$0xf]
        %v4259 = vld [vmem:[%s4255 + $0xc] sm:$0xf]
        %v4260 = vld [vmem:[%s4255 + $0x10] sm:$0xf]
        %v4261 = vld [vmem:[%s4255 + $0x14] sm:$0xf]
        %v4262 = vld [vmem:[%s4255 + $0x18] sm:$0xf]
        %v4263 = vld [vmem:[%s4255 + $0x1c] sm:$0xf]
        %v4264 = vld [vmem:[%s4255 + $0x20] sm:$0xf]
        %v4265 = vld [vmem:[%s4255 + $0x24] sm:$0xf]
        %v4266 = vld [vmem:[%s4255 + $0x28] sm:$0xf]
        %v4267 = vld [vmem:[%s4255 + $0x2c] sm:$0xf]
        %v4268 = vld [vmem:[%s4255 + $0x30] sm:$0xf]
        %v4269 = vld [vmem:[%s4255 + $0x34] sm:$0xf]
        %v4270 = vld [vmem:[%s4255 + $0x38] sm:$0xf]
        %v4271 = vld [vmem:[%s4255 + $0x3c] sm:$0xf]
        %v4288 = vunpack.c.l.b16 %v4256
        %v4289 = vunpack.c.l.b16 %v4257
        %v4290 = vunpack.c.l.b16 %v4258
        %v4291 = vunpack.c.l.b16 %v4259
        %v4292 = vunpack.c.l.b16 %v4260
        %v4293 = vunpack.c.l.b16 %v4261
        %v4294 = vunpack.c.l.b16 %v4262
        %v4295 = vunpack.c.l.b16 %v4263
        %v4296 = vunpack.c.l.b16 %v4264
        %v4297 = vunpack.c.l.b16 %v4265
        %v4298 = vunpack.c.l.b16 %v4266
        %v4299 = vunpack.c.l.b16 %v4267
        %v4300 = vunpack.c.l.b16 %v4268
        %v4301 = vunpack.c.l.b16 %v4269
        %v4302 = vunpack.c.l.b16 %v4270
        %v4303 = vunpack.c.l.b16 %v4271
        %v4304 = vpack.c.b16 %v4289, %v4288
        %v4305 = vpack.c.b16 %v4291, %v4290
        %v4306 = vpack.c.b16 %v4293, %v4292
        %v4307 = vpack.c.b16 %v4295, %v4294
        %v4308 = vpack.c.b16 %v4297, %v4296
        %v4309 = vpack.c.b16 %v4299, %v4298
        %v4310 = vpack.c.b16 %v4301, %v4300
        %v4311 = vpack.c.b16 %v4303, %v4302
        %4320 = vmatprep.subr.bf16.mxu0 0
        %4321 = vmatpush1.bf16.msra.mxu0 %v4311
        %4322 = vmatprep.subr.bf16.mxu0 0
        %4323 = vmatpush1.bf16.msra.mxu0 %v4310
        %4324 = vmatprep.subr.bf16.mxu0 0
        %4325 = vmatpush1.bf16.msra.mxu0 %v4309
        %4326 = vmatprep.subr.bf16.mxu0 0
        %4327 = vmatpush1.bf16.msra.mxu0 %v4308
        %4328 = vmatprep.subr.bf16.mxu0 0
        %4329 = vmatpush1.bf16.msra.mxu0 %v4307
        %4330 = vmatprep.subr.bf16.mxu0 0
        %4331 = vmatpush1.bf16.msra.mxu0 %v4306
        %4332 = vmatprep.subr.bf16.mxu0 0
        %4333 = vmatpush1.bf16.msra.mxu0 %v4305
        %4334 = vmatprep.subr.bf16.mxu0 0
        %4335 = vmatpush1.bf16.msra.mxu0 %v4304
        %4336 = vmatprep.subr.bf16.mxu0 0
        %4337 = vmatpush2.bf16.msra.mxu0 0
        %4338 = vmatprep.subr.bf16.mxu0 0
        %4339 = vmatpush2.bf16.msra.mxu0 0
        %4340 = vmatprep.subr.bf16.mxu0 0
        %4341 = vmatpush2.bf16.msra.mxu0 0
        %4342 = vmatprep.subr.bf16.mxu0 0
        %4343 = vmatpush2.bf16.msra.mxu0 0
        %4344 = vmatprep.subr.bf16.mxu0 0
        %4345 = vmatpush2.bf16.msra.mxu0 0
        %4346 = vmatprep.subr.bf16.mxu0 0
        %4347 = vmatpush2.bf16.msra.mxu0 0
        %4348 = vmatprep.subr.bf16.mxu0 0
        %4349 = vmatpush2.bf16.msra.mxu0 0
        %4350 = vmatprep.subr.bf16.mxu0 0
        %4351 = vmatpush2.bf16.msra.mxu0 0
        %4352 = vmatprep.mubr.bf16.mxu0 0
        %4353 = vmatmul.mubr.bf16.gmra.mxu0 %v4239
        %v4354 = vpop.f32.mrf.mxu0
        %v4355 = vadd.f32 0.0, %v4354
        %v4356 = vpop.f32.mrf.mxu0
        %v4357 = vpop.f32.mrf.mxu0
        %v4358 = vadd.f32 0.0, %v4357
        %v4359 = vpop.f32.mrf.mxu0
        %4360 = vmatprep.mubr.bf16.mxu0 0
        %4361 = vmatmul.mubr.bf16.gmra.mxu0 %v4240
        %v4362 = vpop.f32.mrf.mxu0
        %v4363 = vadd.f32 0.0, %v4362
        %v4364 = vpop.f32.mrf.mxu0
        %v4365 = vpop.f32.mrf.mxu0
        %v4366 = vadd.f32 0.0, %v4365
        %v4367 = vpop.f32.mrf.mxu0
        %4368 = vmatprep.mubr.bf16.mxu0 0
        %4369 = vmatmul.mubr.bf16.gmra.mxu0 %v4241
        %v4370 = vpop.f32.mrf.mxu0
        %v4371 = vadd.f32 0.0, %v4370
        %v4372 = vpop.f32.mrf.mxu0
        %v4373 = vpop.f32.mrf.mxu0
        %v4374 = vadd.f32 0.0, %v4373
        %v4375 = vpop.f32.mrf.mxu0
        %4376 = vmatprep.mubr.bf16.mxu0 0
        %4377 = vmatmul.mubr.bf16.gmra.mxu0 %v4242
        %v4378 = vpop.f32.mrf.mxu0
        %v4379 = vadd.f32 0.0, %v4378
        %v4380 = vpop.f32.mrf.mxu0
        %v4381 = vpop.f32.mrf.mxu0
        %v4382 = vadd.f32 0.0, %v4381
        %v4383 = vpop.f32.mrf.mxu0
        %4384 = vmatprep.mubr.bf16.mxu0 0
        %4385 = vmatmul.mubr.bf16.gmra.mxu0 %v4243
        %v4386 = vpop.f32.mrf.mxu0
        %v4387 = vadd.f32 0.0, %v4386
        %v4388 = vpop.f32.mrf.mxu0
        %v4389 = vpop.f32.mrf.mxu0
        %v4390 = vadd.f32 0.0, %v4389
        %v4391 = vpop.f32.mrf.mxu0
        %4392 = vmatprep.mubr.bf16.mxu0 0
        %4393 = vmatmul.mubr.bf16.gmra.mxu0 %v4244
        %v4394 = vpop.f32.mrf.mxu0
        %v4395 = vadd.f32 0.0, %v4394
        %v4396 = vpop.f32.mrf.mxu0
        %v4397 = vpop.f32.mrf.mxu0
        %v4398 = vadd.f32 0.0, %v4397
        %v4399 = vpop.f32.mrf.mxu0
        %4400 = vmatprep.mubr.bf16.mxu0 0
        %4401 = vmatmul.mubr.bf16.gmra.mxu0 %v4245
        %v4402 = vpop.f32.mrf.mxu0
        %v4403 = vadd.f32 0.0, %v4402
        %v4404 = vpop.f32.mrf.mxu0
        %v4405 = vpop.f32.mrf.mxu0
        %v4406 = vadd.f32 0.0, %v4405
        %v4407 = vpop.f32.mrf.mxu0
        %4408 = vmatprep.mubr.bf16.mxu0 0
        %4409 = vmatmul.mubr.bf16.gmra.mxu0 %v4246
        %v4410 = vpop.f32.mrf.mxu0
        %v4411 = vadd.f32 0.0, %v4410
        %v4412 = vpop.f32.mrf.mxu0
        %v4413 = vpop.f32.mrf.mxu0
        %v4414 = vadd.f32 0.0, %v4413
        %v4415 = vpop.f32.mrf.mxu0
        %4416 = vmatprep.mubr.bf16.mxu0 0
        %4417 = vmatmul.mubr.bf16.gmra.mxu0 %v4247
        %v4418 = vpop.f32.mrf.mxu0
        %v4419 = vadd.f32 0.0, %v4418
        %v4420 = vpop.f32.mrf.mxu0
        %v4421 = vpop.f32.mrf.mxu0
        %v4422 = vadd.f32 0.0, %v4421
        %v4423 = vpop.f32.mrf.mxu0
        %4424 = vmatprep.mubr.bf16.mxu0 0
        %4425 = vmatmul.mubr.bf16.gmra.mxu0 %v4248
        %v4426 = vpop.f32.mrf.mxu0
        %v4427 = vadd.f32 0.0, %v4426
        %v4428 = vpop.f32.mrf.mxu0
        %v4429 = vpop.f32.mrf.mxu0
        %v4430 = vadd.f32 0.0, %v4429
        %v4431 = vpop.f32.mrf.mxu0
        %4432 = vmatprep.mubr.bf16.mxu0 0
        %4433 = vmatmul.mubr.bf16.gmra.mxu0 %v4249
        %v4434 = vpop.f32.mrf.mxu0
        %v4435 = vadd.f32 0.0, %v4434
        %v4436 = vpop.f32.mrf.mxu0
        %v4437 = vpop.f32.mrf.mxu0
        %v4438 = vadd.f32 0.0, %v4437
        %v4439 = vpop.f32.mrf.mxu0
        %4440 = vmatprep.mubr.bf16.mxu0 0
        %4441 = vmatmul.mubr.bf16.gmra.mxu0 %v4250
        %v4442 = vpop.f32.mrf.mxu0
        %v4443 = vadd.f32 0.0, %v4442
        %v4444 = vpop.f32.mrf.mxu0
        %v4445 = vpop.f32.mrf.mxu0
        %v4446 = vadd.f32 0.0, %v4445
        %v4447 = vpop.f32.mrf.mxu0
        %4448 = vmatprep.mubr.bf16.mxu0 0
        %4449 = vmatmul.mubr.bf16.gmra.mxu0 %v4251
        %v4450 = vpop.f32.mrf.mxu0
        %v4451 = vadd.f32 0.0, %v4450
        %v4452 = vpop.f32.mrf.mxu0
        %v4453 = vpop.f32.mrf.mxu0
        %v4454 = vadd.f32 0.0, %v4453
        %v4455 = vpop.f32.mrf.mxu0
        %4456 = vmatprep.mubr.bf16.mxu0 0
        %4457 = vmatmul.mubr.bf16.gmra.mxu0 %v4252
        %v4458 = vpop.f32.mrf.mxu0
        %v4459 = vadd.f32 0.0, %v4458
        %v4460 = vpop.f32.mrf.mxu0
        %v4461 = vpop.f32.mrf.mxu0
        %v4462 = vadd.f32 0.0, %v4461
        %v4463 = vpop.f32.mrf.mxu0
        %4464 = vmatprep.mubr.bf16.mxu0 0
        %4465 = vmatmul.mubr.bf16.gmra.mxu0 %v4253
        %v4466 = vpop.f32.mrf.mxu0
        %v4467 = vadd.f32 0.0, %v4466
        %v4468 = vpop.f32.mrf.mxu0
        %v4469 = vpop.f32.mrf.mxu0
        %v4470 = vadd.f32 0.0, %v4469
        %v4471 = vpop.f32.mrf.mxu0
        %4472 = vmatprep.mubr.bf16.mxu0 0
        %4473 = vmatmul.mubr.bf16.gmra.mxu0 %v4254
        %v4474 = vpop.f32.mrf.mxu0
        %v4475 = vadd.f32 0.0, %v4474
        %v4476 = vpop.f32.mrf.mxu0
        %v4477 = vpop.f32.mrf.mxu0
        %v4478 = vadd.f32 0.0, %v4477
        %v4479 = vpop.f32.mrf.mxu0
        %4480 = vdwg.mxu0
        %v4481 = vadd.f32 %v4015, %v4355
        %v4482 = vadd.f32 %v4016, %v4358
        %v4483 = vadd.f32 %v4017, %v4363
        %v4484 = vadd.f32 %v4018, %v4366
        %v4485 = vadd.f32 %v4019, %v4371
        %v4486 = vadd.f32 %v4020, %v4374
        %v4487 = vadd.f32 %v4021, %v4379
        %v4488 = vadd.f32 %v4022, %v4382
        %v4489 = vadd.f32 %v4023, %v4387
        %v4490 = vadd.f32 %v4024, %v4390
        %v4491 = vadd.f32 %v4025, %v4395
        %v4492 = vadd.f32 %v4026, %v4398
        %v4493 = vadd.f32 %v4027, %v4403
        %v4494 = vadd.f32 %v4028, %v4406
        %v4495 = vadd.f32 %v4029, %v4411
        %v4496 = vadd.f32 %v4030, %v4414
        %v4497 = vadd.f32 %v4031, %v4419
        %v4498 = vadd.f32 %v4032, %v4422
        %v4499 = vadd.f32 %v4033, %v4427
        %v4500 = vadd.f32 %v4034, %v4430
        %v4501 = vadd.f32 %v4035, %v4435
        %v4502 = vadd.f32 %v4036, %v4438
        %v4503 = vadd.f32 %v4037, %v4443
        %v4504 = vadd.f32 %v4038, %v4446
        %v4505 = vadd.f32 %v4039, %v4451
        %v4506 = vadd.f32 %v4040, %v4454
        %v4507 = vadd.f32 %v4041, %v4459
        %v4508 = vadd.f32 %v4042, %v4462
        %v4509 = vadd.f32 %v4043, %v4467
        %v4510 = vadd.f32 %v4044, %v4470
        %v4511 = vadd.f32 %v4045, %v4475
        %v4512 = vadd.f32 %v4046, %v4478
        %v4513 = vld [vmem:[%s4] sm:$0x1]
        %v4515 = vlaneseq
        %v4516 = vshrl.u32 %v4515, 7
        %v4517 = vsub.s32 0, %v4516
        %v4518 = vrot.slane %v4513, %v4517
        %v4520 = vadd.f32 %v4481, %v4518
        %v4521 = vadd.f32 %v4482, %v4518
        %v4522 = vadd.f32 %v4483, %v4518
        %v4523 = vadd.f32 %v4484, %v4518
        %v4524 = vadd.f32 %v4485, %v4518
        %v4525 = vadd.f32 %v4486, %v4518
        %v4526 = vadd.f32 %v4487, %v4518
        %v4527 = vadd.f32 %v4488, %v4518
        %v4528 = vadd.f32 %v4489, %v4518
        %v4529 = vadd.f32 %v4490, %v4518
        %v4530 = vadd.f32 %v4491, %v4518
        %v4531 = vadd.f32 %v4492, %v4518
        %v4532 = vadd.f32 %v4493, %v4518
        %v4533 = vadd.f32 %v4494, %v4518
        %v4534 = vadd.f32 %v4495, %v4518
        %v4535 = vadd.f32 %v4496, %v4518
        %v4536 = vadd.f32 %v4497, %v4518
        %v4537 = vadd.f32 %v4498, %v4518
        %v4538 = vadd.f32 %v4499, %v4518
        %v4539 = vadd.f32 %v4500, %v4518
        %v4540 = vadd.f32 %v4501, %v4518
        %v4541 = vadd.f32 %v4502, %v4518
        %v4542 = vadd.f32 %v4503, %v4518
        %v4543 = vadd.f32 %v4504, %v4518
        %v4544 = vadd.f32 %v4505, %v4518
        %v4545 = vadd.f32 %v4506, %v4518
        %v4546 = vadd.f32 %v4507, %v4518
        %v4547 = vadd.f32 %v4508, %v4518
        %v4548 = vadd.f32 %v4509, %v4518
        %v4549 = vadd.f32 %v4510, %v4518
        %v4550 = vadd.f32 %v4511, %v4518
        %v4551 = vadd.f32 %v4512, %v4518
        %v4552 = vadd.f32 %v4520, %v4521
        %v4553 = vadd.f32 %v4552, %v4522
        %v4554 = vadd.f32 %v4553, %v4523
        %v4555 = vadd.f32 %v4554, %v4524
        %v4556 = vadd.f32 %v4555, %v4525
        %v4557 = vadd.f32 %v4556, %v4526
        %v4558 = vadd.f32 %v4557, %v4527
        %v4559 = vadd.f32 %v4558, %v4528
        %v4560 = vadd.f32 %v4559, %v4529
        %v4561 = vadd.f32 %v4560, %v4530
        %v4562 = vadd.f32 %v4561, %v4531
        %v4563 = vadd.f32 %v4562, %v4532
        %v4564 = vadd.f32 %v4563, %v4533
        %v4565 = vadd.f32 %v4564, %v4534
        %v4566 = vadd.f32 %v4565, %v4535
        %v4567 = vadd.f32 %v4566, %v4536
        %v4568 = vadd.f32 %v4567, %v4537
        %v4569 = vadd.f32 %v4568, %v4538
        %v4570 = vadd.f32 %v4569, %v4539
        %v4571 = vadd.f32 %v4570, %v4540
        %v4572 = vadd.f32 %v4571, %v4541
        %v4573 = vadd.f32 %v4572, %v4542
        %v4574 = vadd.f32 %v4573, %v4543
        %v4575 = vadd.f32 %v4574, %v4544
        %v4576 = vadd.f32 %v4575, %v4545
        %v4577 = vadd.f32 %v4576, %v4546
        %v4578 = vadd.f32 %v4577, %v4547
        %v4579 = vadd.f32 %v4578, %v4548
        %v4580 = vadd.f32 %v4579, %v4549
        %v4581 = vadd.f32 %v4580, %v4550
        %v4582 = vadd.f32 %v4581, %v4551
        %v4583 = vrot.slane %v4582, 4
        %v4584 = vadd.f32 %v4582, %v4583
        %v4585 = vrot.slane %v4584, 2
        %v4586 = vadd.f32 %v4584, %v4585
        %v4587 = vrot.slane %v4586, 1
        %v4588 = vadd.f32 %v4586, %v4587
        %v4589 = vmul.f32 %v4588, %v490
        %v4590 = vmul.f32 %v4520, %v4520
        %v4591 = vmul.f32 %v4521, %v4521
        %v4592 = vmul.f32 %v4522, %v4522
        %v4593 = vmul.f32 %v4523, %v4523
        %v4594 = vmul.f32 %v4524, %v4524
        %v4595 = vmul.f32 %v4525, %v4525
        %v4596 = vmul.f32 %v4526, %v4526
        %v4597 = vmul.f32 %v4527, %v4527
        %v4598 = vmul.f32 %v4528, %v4528
        %v4599 = vmul.f32 %v4529, %v4529
        %v4600 = vmul.f32 %v4530, %v4530
        %v4601 = vmul.f32 %v4531, %v4531
        %v4602 = vmul.f32 %v4532, %v4532
        %v4603 = vmul.f32 %v4533, %v4533
        %v4604 = vmul.f32 %v4534, %v4534
        %v4605 = vmul.f32 %v4535, %v4535
        %v4606 = vmul.f32 %v4536, %v4536
        %v4607 = vmul.f32 %v4537, %v4537
        %v4608 = vmul.f32 %v4538, %v4538
        %v4609 = vmul.f32 %v4539, %v4539
        %v4610 = vmul.f32 %v4540, %v4540
        %v4611 = vmul.f32 %v4541, %v4541
        %v4612 = vmul.f32 %v4542, %v4542
        %v4613 = vmul.f32 %v4543, %v4543
        %v4614 = vmul.f32 %v4544, %v4544
        %v4615 = vmul.f32 %v4545, %v4545
        %v4616 = vmul.f32 %v4546, %v4546
        %v4617 = vmul.f32 %v4547, %v4547
        %v4618 = vmul.f32 %v4548, %v4548
        %v4619 = vmul.f32 %v4549, %v4549
        %v4620 = vmul.f32 %v4550, %v4550
        %v4621 = vmul.f32 %v4551, %v4551
        %v4622 = vadd.f32 %v4590, %v4591
        %v4623 = vadd.f32 %v4622, %v4592
        %v4624 = vadd.f32 %v4623, %v4593
        %v4625 = vadd.f32 %v4624, %v4594
        %v4626 = vadd.f32 %v4625, %v4595
        %v4627 = vadd.f32 %v4626, %v4596
        %v4628 = vadd.f32 %v4627, %v4597
        %v4629 = vadd.f32 %v4628, %v4598
        %v4630 = vadd.f32 %v4629, %v4599
        %v4631 = vadd.f32 %v4630, %v4600
        %v4632 = vadd.f32 %v4631, %v4601
        %v4633 = vadd.f32 %v4632, %v4602
        %v4634 = vadd.f32 %v4633, %v4603
        %v4635 = vadd.f32 %v4634, %v4604
        %v4636 = vadd.f32 %v4635, %v4605
        %v4637 = vadd.f32 %v4636, %v4606
        %v4638 = vadd.f32 %v4637, %v4607
        %v4639 = vadd.f32 %v4638, %v4608
        %v4640 = vadd.f32 %v4639, %v4609
        %v4641 = vadd.f32 %v4640, %v4610
        %v4642 = vadd.f32 %v4641, %v4611
        %v4643 = vadd.f32 %v4642, %v4612
        %v4644 = vadd.f32 %v4643, %v4613
        %v4645 = vadd.f32 %v4644, %v4614
        %v4646 = vadd.f32 %v4645, %v4615
        %v4647 = vadd.f32 %v4646, %v4616
        %v4648 = vadd.f32 %v4647, %v4617
        %v4649 = vadd.f32 %v4648, %v4618
        %v4650 = vadd.f32 %v4649, %v4619
        %v4651 = vadd.f32 %v4650, %v4620
        %v4652 = vadd.f32 %v4651, %v4621
        %v4653 = vrot.slane %v4652, 4
        %v4654 = vadd.f32 %v4652, %v4653
        %v4655 = vrot.slane %v4654, 2
        %v4656 = vadd.f32 %v4654, %v4655
        %v4657 = vrot.slane %v4656, 1
        %v4658 = vadd.f32 %v4656, %v4657
        %v4659 = vmul.f32 %v4658, %v490
        %v4660 = vmul.f32 %v4589, %v4589
        %v4661 = vsub.f32 %v4659, %v4660
        %v4662 = vld [vmem:[%s413] sm:$0x3]
        %v4663 = vsub.f32 %v4520, %v4589
        %v4664 = vsub.f32 %v4521, %v4589
        %v4665 = vsub.f32 %v4522, %v4589
        %v4666 = vsub.f32 %v4523, %v4589
        %v4667 = vsub.f32 %v4524, %v4589
        %v4668 = vsub.f32 %v4525, %v4589
        %v4669 = vsub.f32 %v4526, %v4589
        %v4670 = vsub.f32 %v4527, %v4589
        %v4671 = vsub.f32 %v4528, %v4589
        %v4672 = vsub.f32 %v4529, %v4589
        %v4673 = vsub.f32 %v4530, %v4589
        %v4674 = vsub.f32 %v4531, %v4589
        %v4675 = vsub.f32 %v4532, %v4589
        %v4676 = vsub.f32 %v4533, %v4589
        %v4677 = vsub.f32 %v4534, %v4589
        %v4678 = vsub.f32 %v4535, %v4589
        %v4679 = vsub.f32 %v4536, %v4589
        %v4680 = vsub.f32 %v4537, %v4589
        %v4681 = vsub.f32 %v4538, %v4589
        %v4682 = vsub.f32 %v4539, %v4589
        %v4683 = vsub.f32 %v4540, %v4589
        %v4684 = vsub.f32 %v4541, %v4589
        %v4685 = vsub.f32 %v4542, %v4589
        %v4686 = vsub.f32 %v4543, %v4589
        %v4687 = vsub.f32 %v4544, %v4589
        %v4688 = vsub.f32 %v4545, %v4589
        %v4689 = vsub.f32 %v4546, %v4589
        %v4690 = vsub.f32 %v4547, %v4589
        %v4691 = vsub.f32 %v4548, %v4589
        %v4692 = vsub.f32 %v4549, %v4589
        %v4693 = vsub.f32 %v4550, %v4589
        %v4694 = vsub.f32 %v4551, %v4589
        %v4695 = vadd.f32 %v4661, 1e-05
        %v4696 = vrsqrt.pop %v4695
        %v4697 = vmul.f32 %v4663, %v4696
        %v4698 = vmul.f32 %v4664, %v4696
        %v4699 = vmul.f32 %v4665, %v4696
        %v4700 = vmul.f32 %v4666, %v4696
        %v4701 = vmul.f32 %v4667, %v4696
        %v4702 = vmul.f32 %v4668, %v4696
        %v4703 = vmul.f32 %v4669, %v4696
        %v4704 = vmul.f32 %v4670, %v4696
        %v4705 = vmul.f32 %v4671, %v4696
        %v4706 = vmul.f32 %v4672, %v4696
        %v4707 = vmul.f32 %v4673, %v4696
        %v4708 = vmul.f32 %v4674, %v4696
        %v4709 = vmul.f32 %v4675, %v4696
        %v4710 = vmul.f32 %v4676, %v4696
        %v4711 = vmul.f32 %v4677, %v4696
        %v4712 = vmul.f32 %v4678, %v4696
        %v4713 = vmul.f32 %v4679, %v4696
        %v4714 = vmul.f32 %v4680, %v4696
        %v4715 = vmul.f32 %v4681, %v4696
        %v4716 = vmul.f32 %v4682, %v4696
        %v4717 = vmul.f32 %v4683, %v4696
        %v4718 = vmul.f32 %v4684, %v4696
        %v4719 = vmul.f32 %v4685, %v4696
        %v4720 = vmul.f32 %v4686, %v4696
        %v4721 = vmul.f32 %v4687, %v4696
        %v4722 = vmul.f32 %v4688, %v4696
        %v4723 = vmul.f32 %v4689, %v4696
        %v4724 = vmul.f32 %v4690, %v4696
        %v4725 = vmul.f32 %v4691, %v4696
        %v4726 = vmul.f32 %v4692, %v4696
        %v4727 = vmul.f32 %v4693, %v4696
        %v4728 = vmul.f32 %v4694, %v4696
        %v4729 = vadd.f32 %v4662, 1.0
        %v4730 = vlaneseq
        %v4731 = vshrl.u32 %v4730, 7
        %v4732 = vsub.s32 0, %v4731
        %v4733 = vrot.slane %v4729, %v4732
        %v4734 = vmul.f32 %v4733, %v4697
        %v4735 = vmul.f32 %v4733, %v4698
        %v4736 = vmul.f32 %v4733, %v4699
        %v4737 = vmul.f32 %v4733, %v4700
        %v4738 = vmul.f32 %v4733, %v4701
        %v4739 = vmul.f32 %v4733, %v4702
        %v4740 = vmul.f32 %v4733, %v4703
        %v4741 = vmul.f32 %v4733, %v4704
        %v4742 = vmul.f32 %v4733, %v4705
        %v4743 = vmul.f32 %v4733, %v4706
        %v4744 = vmul.f32 %v4733, %v4707
        %v4745 = vmul.f32 %v4733, %v4708
        %v4746 = vmul.f32 %v4733, %v4709
        %v4747 = vmul.f32 %v4733, %v4710
        %v4748 = vmul.f32 %v4733, %v4711
        %v4749 = vmul.f32 %v4733, %v4712
        %v4750 = vmul.f32 %v4733, %v4713
        %v4751 = vmul.f32 %v4733, %v4714
        %v4752 = vmul.f32 %v4733, %v4715
        %v4753 = vmul.f32 %v4733, %v4716
        %v4754 = vmul.f32 %v4733, %v4717
        %v4755 = vmul.f32 %v4733, %v4718
        %v4756 = vmul.f32 %v4733, %v4719
        %v4757 = vmul.f32 %v4733, %v4720
        %v4758 = vmul.f32 %v4733, %v4721
        %v4759 = vmul.f32 %v4733, %v4722
        %v4760 = vmul.f32 %v4733, %v4723
        %v4761 = vmul.f32 %v4733, %v4724
        %v4762 = vmul.f32 %v4733, %v4725
        %v4763 = vmul.f32 %v4733, %v4726
        %v4764 = vmul.f32 %v4733, %v4727
        %v4765 = vmul.f32 %v4733, %v4728
        %v4766 = vlaneseq
        %v4767 = vshrl.u32 %v4766, 7
        %v4768 = vsub.s32 1, %v4767
        %v4769 = vrot.slane %v4662, %v4768
        %v4770 = vadd.f32 %v4734, %v4769
        %v4771 = vadd.f32 %v4735, %v4769
        %v4772 = vadd.f32 %v4736, %v4769
        %v4773 = vadd.f32 %v4737, %v4769
        %v4774 = vadd.f32 %v4738, %v4769
        %v4775 = vadd.f32 %v4739, %v4769
        %v4776 = vadd.f32 %v4740, %v4769
        %v4777 = vadd.f32 %v4741, %v4769
        %v4778 = vadd.f32 %v4742, %v4769
        %v4779 = vadd.f32 %v4743, %v4769
        %v4780 = vadd.f32 %v4744, %v4769
        %v4781 = vadd.f32 %v4745, %v4769
        %v4782 = vadd.f32 %v4746, %v4769
        %v4783 = vadd.f32 %v4747, %v4769
        %v4784 = vadd.f32 %v4748, %v4769
        %v4785 = vadd.f32 %v4749, %v4769
        %v4786 = vadd.f32 %v4750, %v4769
        %v4787 = vadd.f32 %v4751, %v4769
        %v4788 = vadd.f32 %v4752, %v4769
        %v4789 = vadd.f32 %v4753, %v4769
        %v4790 = vadd.f32 %v4754, %v4769
        %v4791 = vadd.f32 %v4755, %v4769
        %v4792 = vadd.f32 %v4756, %v4769
        %v4793 = vadd.f32 %v4757, %v4769
        %v4794 = vadd.f32 %v4758, %v4769
        %v4795 = vadd.f32 %v4759, %v4769
        %v4796 = vadd.f32 %v4760, %v4769
        %v4797 = vadd.f32 %v4761, %v4769
        %v4798 = vadd.f32 %v4762, %v4769
        %v4799 = vadd.f32 %v4763, %v4769
        %v4800 = vadd.f32 %v4764, %v4769
        %v4801 = vadd.f32 %v4765, %v4769
        %v4802 = vmul.f32 %v4770, 0.2
        %v4803 = vmul.f32 %v4771, 0.2
        %v4804 = vmul.f32 %v4772, 0.2
        %v4805 = vmul.f32 %v4773, 0.2
        %v4806 = vmul.f32 %v4774, 0.2
        %v4807 = vmul.f32 %v4775, 0.2
        %v4808 = vmul.f32 %v4776, 0.2
        %v4809 = vmul.f32 %v4777, 0.2
        %v4810 = vmul.f32 %v4778, 0.2
        %v4811 = vmul.f32 %v4779, 0.2
        %v4812 = vmul.f32 %v4780, 0.2
        %v4813 = vmul.f32 %v4781, 0.2
        %v4814 = vmul.f32 %v4782, 0.2
        %v4815 = vmul.f32 %v4783, 0.2
        %v4816 = vmul.f32 %v4784, 0.2
        %v4817 = vmul.f32 %v4785, 0.2
        %v4818 = vmul.f32 %v4786, 0.2
        %v4819 = vmul.f32 %v4787, 0.2
        %v4820 = vmul.f32 %v4788, 0.2
        %v4821 = vmul.f32 %v4789, 0.2
        %v4822 = vmul.f32 %v4790, 0.2
        %v4823 = vmul.f32 %v4791, 0.2
        %v4824 = vmul.f32 %v4792, 0.2
        %v4825 = vmul.f32 %v4793, 0.2
        %v4826 = vmul.f32 %v4794, 0.2
        %v4827 = vmul.f32 %v4795, 0.2
        %v4828 = vmul.f32 %v4796, 0.2
        %v4829 = vmul.f32 %v4797, 0.2
        %v4830 = vmul.f32 %v4798, 0.2
        %v4831 = vmul.f32 %v4799, 0.2
        %v4832 = vmul.f32 %v4800, 0.2
        %v4833 = vmul.f32 %v4801, 0.2
        %v4834 = vmax.f32 %v4770, %v4802
        %v4835 = vmax.f32 %v4771, %v4803
        %v4836 = vmax.f32 %v4772, %v4804
        %v4837 = vmax.f32 %v4773, %v4805
        %v4838 = vmax.f32 %v4774, %v4806
        %v4839 = vmax.f32 %v4775, %v4807
        %v4840 = vmax.f32 %v4776, %v4808
        %v4841 = vmax.f32 %v4777, %v4809
        %v4842 = vmax.f32 %v4778, %v4810
        %v4843 = vmax.f32 %v4779, %v4811
        %v4844 = vmax.f32 %v4780, %v4812
        %v4845 = vmax.f32 %v4781, %v4813
        %v4846 = vmax.f32 %v4782, %v4814
        %v4847 = vmax.f32 %v4783, %v4815
        %v4848 = vmax.f32 %v4784, %v4816
        %v4849 = vmax.f32 %v4785, %v4817
        %v4850 = vmax.f32 %v4786, %v4818
        %v4851 = vmax.f32 %v4787, %v4819
        %v4852 = vmax.f32 %v4788, %v4820
        %v4853 = vmax.f32 %v4789, %v4821
        %v4854 = vmax.f32 %v4790, %v4822
        %v4855 = vmax.f32 %v4791, %v4823
        %v4856 = vmax.f32 %v4792, %v4824
        %v4857 = vmax.f32 %v4793, %v4825
        %v4858 = vmax.f32 %v4794, %v4826
        %v4859 = vmax.f32 %v4795, %v4827
        %v4860 = vmax.f32 %v4796, %v4828
        %v4861 = vmax.f32 %v4797, %v4829
        %v4862 = vmax.f32 %v4798, %v4830
        %v4863 = vmax.f32 %v4799, %v4831
        %v4864 = vmax.f32 %v4800, %v4832
        %v4865 = vmax.f32 %v4801, %v4833
        %4866 = vst [vmem:[#allocation2 + $0x18] sm:$0xff] %v4834
        %4867 = vst [vmem:[#allocation2 + $0x20] sm:$0xff] %v4835
        %4868 = vst [vmem:[#allocation2 + $0x28] sm:$0xff] %v4836
        %4869 = vst [vmem:[#allocation2 + $0x30] sm:$0xff] %v4837
        %4870 = vst [vmem:[#allocation2 + $0x38] sm:$0xff] %v4838
        %4871 = vst [vmem:[#allocation2 + $0x40] sm:$0xff] %v4839
        %4872 = vst [vmem:[#allocation2 + $0x48] sm:$0xff] %v4840
        %4873 = vst [vmem:[#allocation2 + $0x50] sm:$0xff] %v4841
        %4874 = vst [vmem:[#allocation2 + $0x58] sm:$0xff] %v4842
        %4875 = vst [vmem:[#allocation2 + $0x60] sm:$0xff] %v4843
        %4876 = vst [vmem:[#allocation2 + $0x68] sm:$0xff] %v4844
        %4877 = vst [vmem:[#allocation2 + $0x70] sm:$0xff] %v4845
        %4878 = vst [vmem:[#allocation2 + $0x78] sm:$0xff] %v4846
        %4879 = vst [vmem:[#allocation2 + $0x80] sm:$0xff] %v4847
        %4880 = vst [vmem:[#allocation2 + $0x88] sm:$0xff] %v4848
        %4881 = vst [vmem:[#allocation2 + $0x90] sm:$0xff] %v4849
        %4882 = vst [vmem:[#allocation2 + $0x98] sm:$0xff] %v4850
        %4883 = vst [vmem:[#allocation2 + $0xa0] sm:$0xff] %v4851
        %4884 = vst [vmem:[#allocation2 + $0xa8] sm:$0xff] %v4852
        %4885 = vst [vmem:[#allocation2 + $0xb0] sm:$0xff] %v4853
        %4886 = vst [vmem:[#allocation2 + $0xb8] sm:$0xff] %v4854
        %4887 = vst [vmem:[#allocation2 + $0xc0] sm:$0xff] %v4855
        %4888 = vst [vmem:[#allocation2 + $0xc8] sm:$0xff] %v4856
        %4889 = vst [vmem:[#allocation2 + $0xd0] sm:$0xff] %v4857
        %4890 = vst [vmem:[#allocation2 + $0xd8] sm:$0xff] %v4858
        %4891 = vst [vmem:[#allocation2 + $0xe0] sm:$0xff] %v4859
        %4892 = vst [vmem:[#allocation2 + $0xe8] sm:$0xff] %v4860
        %4893 = vst [vmem:[#allocation2 + $0xf0] sm:$0xff] %v4861
        %4894 = vst [vmem:[#allocation2 + $0xf8] sm:$0xff] %v4862
        %4895 = vst [vmem:[#allocation2 + $0x100] sm:$0xff] %v4863
        %4896 = vst [vmem:[#allocation2 + $0x108] sm:$0xff] %v4864
        %4897 = vst [vmem:[#allocation2 + $0x110] sm:$0xff] %v4865
        %v4898 = vld [vmem:[#allocation2 + $0x7] sm:$0xff]
        %v4899 = vld [vmem:[#allocation2 + $0xf] sm:$0xff]
        %v4900 = vld [vmem:[#allocation2 + $0x17] sm:$0xff]
        %v4901 = vld [vmem:[#allocation2 + $0x1f] sm:$0xff]
        %v4902 = vld [vmem:[#allocation2 + $0x27] sm:$0xff]
        %v4903 = vld [vmem:[#allocation2 + $0x2f] sm:$0xff]
        %v4904 = vld [vmem:[#allocation2 + $0x37] sm:$0xff]
        %v4905 = vld [vmem:[#allocation2 + $0x3f] sm:$0xff]
        %v4906 = vld [vmem:[#allocation2 + $0x47] sm:$0xff]
        %v4907 = vld [vmem:[#allocation2 + $0x4f] sm:$0xff]
        %v4908 = vld [vmem:[#allocation2 + $0x57] sm:$0xff]
        %v4909 = vld [vmem:[#allocation2 + $0x5f] sm:$0xff]
        %v4910 = vld [vmem:[#allocation2 + $0x67] sm:$0xff]
        %v4911 = vld [vmem:[#allocation2 + $0x6f] sm:$0xff]
        %v4912 = vld [vmem:[#allocation2 + $0x77] sm:$0xff]
        %v4913 = vld [vmem:[#allocation2 + $0x7f] sm:$0xff]
        %v4914 = vld [vmem:[#allocation2 + $0x87] sm:$0xff]
        %v4915 = vld [vmem:[#allocation2 + $0x8f] sm:$0xff]
        %v4916 = vld [vmem:[#allocation2 + $0x97] sm:$0xff]
        %v4917 = vld [vmem:[#allocation2 + $0x9f] sm:$0xff]
        %v4918 = vld [vmem:[#allocation2 + $0xa7] sm:$0xff]
        %v4919 = vld [vmem:[#allocation2 + $0xaf] sm:$0xff]
        %v4920 = vld [vmem:[#allocation2 + $0xb7] sm:$0xff]
        %v4921 = vld [vmem:[#allocation2 + $0xbf] sm:$0xff]
        %v4922 = vld [vmem:[#allocation2 + $0xc7] sm:$0xff]
        %v4923 = vld [vmem:[#allocation2 + $0xcf] sm:$0xff]
        %v4924 = vld [vmem:[#allocation2 + $0xd7] sm:$0xff]
        %v4925 = vld [vmem:[#allocation2 + $0xdf] sm:$0xff]
        %v4926 = vld [vmem:[#allocation2 + $0xe7] sm:$0xff]
        %v4927 = vld [vmem:[#allocation2 + $0xef] sm:$0xff]
        %v4928 = vld [vmem:[#allocation2 + $0xf7] sm:$0xff]
        %v4929 = vld [vmem:[#allocation2 + $0xff] sm:$0xff]
        %v4930 = vld [vmem:[%s7] sm:$0xff]
        %v4931 = vld [vmem:[%s7 + $0x8] sm:$0xff]
        %v4932 = vld [vmem:[%s7 + $0x10] sm:$0xff]
        %v4933 = vld [vmem:[%s7 + $0x18] sm:$0xff]
        %v4934 = vld [vmem:[%s7 + $0x20] sm:$0xff]
        %v4935 = vld [vmem:[%s7 + $0x28] sm:$0xff]
        %v4936 = vld [vmem:[%s7 + $0x30] sm:$0xff]
        %v4937 = vld [vmem:[%s7 + $0x38] sm:$0xff]
        %v4938 = vld [vmem:[%s7 + $0x40] sm:$0xff]
        %v4939 = vld [vmem:[%s7 + $0x48] sm:$0xff]
        %v4940 = vld [vmem:[%s7 + $0x50] sm:$0xff]
        %v4941 = vld [vmem:[%s7 + $0x58] sm:$0xff]
        %v4942 = vld [vmem:[%s7 + $0x60] sm:$0xff]
        %v4943 = vld [vmem:[%s7 + $0x68] sm:$0xff]
        %v4944 = vld [vmem:[%s7 + $0x70] sm:$0xff]
        %v4945 = vld [vmem:[%s7 + $0x78] sm:$0xff]
        %v4946 = vld [vmem:[%s7 + $0x80] sm:$0xff]
        %v4947 = vld [vmem:[%s7 + $0x88] sm:$0xff]
        %v4948 = vld [vmem:[%s7 + $0x90] sm:$0xff]
        %v4949 = vld [vmem:[%s7 + $0x98] sm:$0xff]
        %v4950 = vld [vmem:[%s7 + $0xa0] sm:$0xff]
        %v4951 = vld [vmem:[%s7 + $0xa8] sm:$0xff]
        %v4952 = vld [vmem:[%s7 + $0xb0] sm:$0xff]
        %v4953 = vld [vmem:[%s7 + $0xb8] sm:$0xff]
        %v4954 = vld [vmem:[%s7 + $0xc0] sm:$0xff]
        %v4955 = vld [vmem:[%s7 + $0xc8] sm:$0xff]
        %v4956 = vld [vmem:[%s7 + $0xd0] sm:$0xff]
        %v4957 = vld [vmem:[%s7 + $0xd8] sm:$0xff]
        %v4958 = vld [vmem:[%s7 + $0xe0] sm:$0xff]
        %v4959 = vld [vmem:[%s7 + $0xe8] sm:$0xff]
        %v4960 = vld [vmem:[%s7 + $0xf0] sm:$0xff]
        %v4961 = vld [vmem:[%s7 + $0xf8] sm:$0xff]
        %4963 = vset.pattern.permute.xlu0 0
        %4964 = vperm.xlu0 %4963, %v4930
        %v4965 = vpop.permute.xlu0 %4964
        %4968 = vset.pattern.permute.xlu0 0
        %4969 = vperm.xlu0 %4968, %v4931
        %v4970 = vpop.permute.xlu0 %4969
        %4973 = vset.pattern.permute.xlu0 0
        %4974 = vperm.xlu0 %4973, %v4932
        %v4975 = vpop.permute.xlu0 %4974
        %4978 = vset.pattern.permute.xlu0 0
        %4979 = vperm.xlu0 %4978, %v4933
        %v4980 = vpop.permute.xlu0 %4979
        %4983 = vset.pattern.permute.xlu0 0
        %4984 = vperm.xlu0 %4983, %v4934
        %v4985 = vpop.permute.xlu0 %4984
        %4988 = vset.pattern.permute.xlu0 0
        %4989 = vperm.xlu0 %4988, %v4935
        %v4990 = vpop.permute.xlu0 %4989
        %4993 = vset.pattern.permute.xlu0 0
        %4994 = vperm.xlu0 %4993, %v4936
        %v4995 = vpop.permute.xlu0 %4994
        %4998 = vset.pattern.permute.xlu0 0
        %4999 = vperm.xlu0 %4998, %v4937
        %v5000 = vpop.permute.xlu0 %4999
        %5003 = vset.pattern.permute.xlu0 0
        %5004 = vperm.xlu0 %5003, %v4938
        %v5005 = vpop.permute.xlu0 %5004
        %5008 = vset.pattern.permute.xlu0 0
        %5009 = vperm.xlu0 %5008, %v4939
        %v5010 = vpop.permute.xlu0 %5009
        %5013 = vset.pattern.permute.xlu0 0
        %5014 = vperm.xlu0 %5013, %v4940
        %v5015 = vpop.permute.xlu0 %5014
        %5018 = vset.pattern.permute.xlu0 0
        %5019 = vperm.xlu0 %5018, %v4941
        %v5020 = vpop.permute.xlu0 %5019
        %5023 = vset.pattern.permute.xlu0 0
        %5024 = vperm.xlu0 %5023, %v4942
        %v5025 = vpop.permute.xlu0 %5024
        %5028 = vset.pattern.permute.xlu0 0
        %5029 = vperm.xlu0 %5028, %v4943
        %v5030 = vpop.permute.xlu0 %5029
        %5033 = vset.pattern.permute.xlu0 0
        %5034 = vperm.xlu0 %5033, %v4944
        %v5035 = vpop.permute.xlu0 %5034
        %5038 = vset.pattern.permute.xlu0 0
        %5039 = vperm.xlu0 %5038, %v4945
        %v5040 = vpop.permute.xlu0 %5039
        %5043 = vset.pattern.permute.xlu0 0
        %5044 = vperm.xlu0 %5043, %v4946
        %v5045 = vpop.permute.xlu0 %5044
        %5048 = vset.pattern.permute.xlu0 0
        %5049 = vperm.xlu0 %5048, %v4947
        %v5050 = vpop.permute.xlu0 %5049
        %5053 = vset.pattern.permute.xlu0 0
        %5054 = vperm.xlu0 %5053, %v4948
        %v5055 = vpop.permute.xlu0 %5054
        %5058 = vset.pattern.permute.xlu0 0
        %5059 = vperm.xlu0 %5058, %v4949
        %v5060 = vpop.permute.xlu0 %5059
        %5063 = vset.pattern.permute.xlu0 0
        %5064 = vperm.xlu0 %5063, %v4950
        %v5065 = vpop.permute.xlu0 %5064
        %5068 = vset.pattern.permute.xlu0 0
        %5069 = vperm.xlu0 %5068, %v4951
        %v5070 = vpop.permute.xlu0 %5069
        %5073 = vset.pattern.permute.xlu0 0
        %5074 = vperm.xlu0 %5073, %v4952
        %v5075 = vpop.permute.xlu0 %5074
        %5078 = vset.pattern.permute.xlu0 0
        %5079 = vperm.xlu0 %5078, %v4953
        %v5080 = vpop.permute.xlu0 %5079
        %5083 = vset.pattern.permute.xlu0 0
        %5084 = vperm.xlu0 %5083, %v4954
        %v5085 = vpop.permute.xlu0 %5084
        %5088 = vset.pattern.permute.xlu0 0
        %5089 = vperm.xlu0 %5088, %v4955
        %v5090 = vpop.permute.xlu0 %5089
        %5093 = vset.pattern.permute.xlu0 0
        %5094 = vperm.xlu0 %5093, %v4956
        %v5095 = vpop.permute.xlu0 %5094
        %5098 = vset.pattern.permute.xlu0 0
        %5099 = vperm.xlu0 %5098, %v4957
        %v5100 = vpop.permute.xlu0 %5099
        %5103 = vset.pattern.permute.xlu0 0
        %5104 = vperm.xlu0 %5103, %v4958
        %v5105 = vpop.permute.xlu0 %5104
        %5108 = vset.pattern.permute.xlu0 0
        %5109 = vperm.xlu0 %5108, %v4959
        %v5110 = vpop.permute.xlu0 %5109
        %5113 = vset.pattern.permute.xlu0 0
        %5114 = vperm.xlu0 %5113, %v4960
        %v5115 = vpop.permute.xlu0 %5114
        %5118 = vset.pattern.permute.xlu0 0
        %5119 = vperm.xlu0 %5118, %v4961
        %v5120 = vpop.permute.xlu0 %5119
        %v5122 = vmul.f32 %v4898, %v4965
        %v5123 = vmul.f32 %v4899, %v4970
        %v5124 = vmul.f32 %v4900, %v4975
        %v5125 = vmul.f32 %v4901, %v4980
        %v5126 = vmul.f32 %v4902, %v4985
        %v5127 = vmul.f32 %v4903, %v4990
        %v5128 = vmul.f32 %v4904, %v4995
        %v5129 = vmul.f32 %v4905, %v5000
        %v5130 = vmul.f32 %v4906, %v5005
        %v5131 = vmul.f32 %v4907, %v5010
        %v5132 = vmul.f32 %v4908, %v5015
        %v5133 = vmul.f32 %v4909, %v5020
        %v5134 = vmul.f32 %v4910, %v5025
        %v5135 = vmul.f32 %v4911, %v5030
        %v5136 = vmul.f32 %v4912, %v5035
        %v5137 = vmul.f32 %v4913, %v5040
        %v5138 = vmul.f32 %v4914, %v5045
        %v5139 = vmul.f32 %v4915, %v5050
        %v5140 = vmul.f32 %v4916, %v5055
        %v5141 = vmul.f32 %v4917, %v5060
        %v5142 = vmul.f32 %v4918, %v5065
        %v5143 = vmul.f32 %v4919, %v5070
        %v5144 = vmul.f32 %v4920, %v5075
        %v5145 = vmul.f32 %v4921, %v5080
        %v5146 = vmul.f32 %v4922, %v5085
        %v5147 = vmul.f32 %v4923, %v5090
        %v5148 = vmul.f32 %v4924, %v5095
        %v5149 = vmul.f32 %v4925, %v5100
        %v5150 = vmul.f32 %v4926, %v5105
        %v5151 = vmul.f32 %v4927, %v5110
        %v5152 = vmul.f32 %v4928, %v5115
        %v5153 = vmul.f32 %v4929, %v5120
        %v5154 = vpack.c.bf16 %v5123, %v5122
        %v5155 = vpack.c.bf16 %v5125, %v5124
        %v5156 = vpack.c.bf16 %v5127, %v5126
        %v5157 = vpack.c.bf16 %v5129, %v5128
        %v5158 = vpack.c.bf16 %v5131, %v5130
        %v5159 = vpack.c.bf16 %v5133, %v5132
        %v5160 = vpack.c.bf16 %v5135, %v5134
        %v5161 = vpack.c.bf16 %v5137, %v5136
        %v5162 = vpack.c.bf16 %v5139, %v5138
        %v5163 = vpack.c.bf16 %v5141, %v5140
        %v5164 = vpack.c.bf16 %v5143, %v5142
        %v5165 = vpack.c.bf16 %v5145, %v5144
        %v5166 = vpack.c.bf16 %v5147, %v5146
        %v5167 = vpack.c.bf16 %v5149, %v5148
        %v5168 = vpack.c.bf16 %v5151, %v5150
        %v5169 = vpack.c.bf16 %v5153, %v5152
        %v5170 = vld [vmem:[#allocation8] sm:$0xf]
        %v5171 = vld [vmem:[#allocation8 + $0x4] sm:$0xf]
        %v5172 = vld [vmem:[#allocation8 + $0x8] sm:$0xf]
        %v5173 = vld [vmem:[#allocation8 + $0xc] sm:$0xf]
        %v5174 = vld [vmem:[#allocation8 + $0x10] sm:$0xf]
        %v5175 = vld [vmem:[#allocation8 + $0x14] sm:$0xf]
        %v5176 = vld [vmem:[#allocation8 + $0x18] sm:$0xf]
        %v5177 = vld [vmem:[#allocation8 + $0x1c] sm:$0xf]
        %v5178 = vld [vmem:[#allocation8 + $0x20] sm:$0xf]
        %v5179 = vld [vmem:[#allocation8 + $0x24] sm:$0xf]
        %v5180 = vld [vmem:[#allocation8 + $0x28] sm:$0xf]
        %v5181 = vld [vmem:[#allocation8 + $0x2c] sm:$0xf]
        %v5182 = vld [vmem:[#allocation8 + $0x30] sm:$0xf]
        %v5183 = vld [vmem:[#allocation8 + $0x34] sm:$0xf]
        %v5184 = vld [vmem:[#allocation8 + $0x38] sm:$0xf]
        %v5185 = vld [vmem:[#allocation8 + $0x3c] sm:$0xf]
        %v5186 = vld [vmem:[#allocation2 + $0x8] sm:$0xff]
        %v5187 = vld [vmem:[#allocation2 + $0x10] sm:$0xff]
        %v5188 = vld [vmem:[#allocation2 + $0x18] sm:$0xff]
        %v5189 = vld [vmem:[#allocation2 + $0x20] sm:$0xff]
        %v5190 = vld [vmem:[#allocation2 + $0x28] sm:$0xff]
        %v5191 = vld [vmem:[#allocation2 + $0x30] sm:$0xff]
        %v5192 = vld [vmem:[#allocation2 + $0x38] sm:$0xff]
        %v5193 = vld [vmem:[#allocation2 + $0x40] sm:$0xff]
        %v5194 = vld [vmem:[#allocation2 + $0x48] sm:$0xff]
        %v5195 = vld [vmem:[#allocation2 + $0x50] sm:$0xff]
        %v5196 = vld [vmem:[#allocation2 + $0x58] sm:$0xff]
        %v5197 = vld [vmem:[#allocation2 + $0x60] sm:$0xff]
        %v5198 = vld [vmem:[#allocation2 + $0x68] sm:$0xff]
        %v5199 = vld [vmem:[#allocation2 + $0x70] sm:$0xff]
        %v5200 = vld [vmem:[#allocation2 + $0x78] sm:$0xff]
        %v5201 = vld [vmem:[#allocation2 + $0x80] sm:$0xff]
        %v5202 = vld [vmem:[#allocation2 + $0x88] sm:$0xff]
        %v5203 = vld [vmem:[#allocation2 + $0x90] sm:$0xff]
        %v5204 = vld [vmem:[#allocation2 + $0x98] sm:$0xff]
        %v5205 = vld [vmem:[#allocation2 + $0xa0] sm:$0xff]
        %v5206 = vld [vmem:[#allocation2 + $0xa8] sm:$0xff]
        %v5207 = vld [vmem:[#allocation2 + $0xb0] sm:$0xff]
        %v5208 = vld [vmem:[#allocation2 + $0xb8] sm:$0xff]
        %v5209 = vld [vmem:[#allocation2 + $0xc0] sm:$0xff]
        %v5210 = vld [vmem:[#allocation2 + $0xc8] sm:$0xff]
        %v5211 = vld [vmem:[#allocation2 + $0xd0] sm:$0xff]
        %v5212 = vld [vmem:[#allocation2 + $0xd8] sm:$0xff]
        %v5213 = vld [vmem:[#allocation2 + $0xe0] sm:$0xff]
        %v5214 = vld [vmem:[#allocation2 + $0xe8] sm:$0xff]
        %v5215 = vld [vmem:[#allocation2 + $0xf0] sm:$0xff]
        %v5216 = vld [vmem:[#allocation2 + $0xf8] sm:$0xff]
        %v5217 = vld [vmem:[#allocation2 + $0x100] sm:$0xff]
        %v5218 = vpack.c.bf16 %v5187, %v5186
        %v5219 = vpack.c.bf16 %v5189, %v5188
        %v5220 = vpack.c.bf16 %v5191, %v5190
        %v5221 = vpack.c.bf16 %v5193, %v5192
        %v5222 = vpack.c.bf16 %v5195, %v5194
        %v5223 = vpack.c.bf16 %v5197, %v5196
        %v5224 = vpack.c.bf16 %v5199, %v5198
        %v5225 = vpack.c.bf16 %v5201, %v5200
        %v5226 = vpack.c.bf16 %v5203, %v5202
        %v5227 = vpack.c.bf16 %v5205, %v5204
        %v5228 = vpack.c.bf16 %v5207, %v5206
        %v5229 = vpack.c.bf16 %v5209, %v5208
        %v5230 = vpack.c.bf16 %v5211, %v5210
        %v5231 = vpack.c.bf16 %v5213, %v5212
        %v5232 = vpack.c.bf16 %v5215, %v5214
        %v5233 = vpack.c.bf16 %v5217, %v5216
        %s5234 = scalar_lea.vmem [#allocation8], 64
        %v5235 = vld [vmem:[%s5234] sm:$0xf]
        %v5236 = vld [vmem:[%s5234 + $0x4] sm:$0xf]
        %v5237 = vld [vmem:[%s5234 + $0x8] sm:$0xf]
        %v5238 = vld [vmem:[%s5234 + $0xc] sm:$0xf]
        %v5239 = vld [vmem:[%s5234 + $0x10] sm:$0xf]
        %v5240 = vld [vmem:[%s5234 + $0x14] sm:$0xf]
        %v5241 = vld [vmem:[%s5234 + $0x18] sm:$0xf]
        %v5242 = vld [vmem:[%s5234 + $0x1c] sm:$0xf]
        %v5243 = vld [vmem:[%s5234 + $0x20] sm:$0xf]
        %v5244 = vld [vmem:[%s5234 + $0x24] sm:$0xf]
        %v5245 = vld [vmem:[%s5234 + $0x28] sm:$0xf]
        %v5246 = vld [vmem:[%s5234 + $0x2c] sm:$0xf]
        %v5247 = vld [vmem:[%s5234 + $0x30] sm:$0xf]
        %v5248 = vld [vmem:[%s5234 + $0x34] sm:$0xf]
        %v5249 = vld [vmem:[%s5234 + $0x38] sm:$0xf]
        %v5250 = vld [vmem:[%s5234 + $0x3c] sm:$0xf]
        %v5267 = vunpack.c.l.b16 %v5235
        %v5268 = vunpack.c.l.b16 %v5236
        %v5269 = vunpack.c.l.b16 %v5237
        %v5270 = vunpack.c.l.b16 %v5238
        %v5271 = vunpack.c.l.b16 %v5239
        %v5272 = vunpack.c.l.b16 %v5240
        %v5273 = vunpack.c.l.b16 %v5241
        %v5274 = vunpack.c.l.b16 %v5242
        %v5275 = vunpack.c.l.b16 %v5243
        %v5276 = vunpack.c.l.b16 %v5244
        %v5277 = vunpack.c.l.b16 %v5245
        %v5278 = vunpack.c.l.b16 %v5246
        %v5279 = vunpack.c.l.b16 %v5247
        %v5280 = vunpack.c.l.b16 %v5248
        %v5281 = vunpack.c.l.b16 %v5249
        %v5282 = vunpack.c.l.b16 %v5250
        %v5283 = vpack.c.b16 %v5268, %v5267
        %v5284 = vpack.c.b16 %v5270, %v5269
        %v5285 = vpack.c.b16 %v5272, %v5271
        %v5286 = vpack.c.b16 %v5274, %v5273
        %v5287 = vpack.c.b16 %v5276, %v5275
        %v5288 = vpack.c.b16 %v5278, %v5277
        %v5289 = vpack.c.b16 %v5280, %v5279
        %v5290 = vpack.c.b16 %v5282, %v5281
        %5299 = vmatprep.subr.bf16.mxu0 0
        %5300 = vmatpush1.bf16.msra.mxu0 %v5290
        %5301 = vmatprep.subr.bf16.mxu0 0
        %5302 = vmatpush1.bf16.msra.mxu0 %v5289
        %5303 = vmatprep.subr.bf16.mxu0 0
        %5304 = vmatpush1.bf16.msra.mxu0 %v5288
        %5305 = vmatprep.subr.bf16.mxu0 0
        %5306 = vmatpush1.bf16.msra.mxu0 %v5287
        %5307 = vmatprep.subr.bf16.mxu0 0
        %5308 = vmatpush1.bf16.msra.mxu0 %v5286
        %5309 = vmatprep.subr.bf16.mxu0 0
        %5310 = vmatpush1.bf16.msra.mxu0 %v5285
        %5311 = vmatprep.subr.bf16.mxu0 0
        %5312 = vmatpush1.bf16.msra.mxu0 %v5284
        %5313 = vmatprep.subr.bf16.mxu0 0
        %5314 = vmatpush1.bf16.msra.mxu0 %v5283
        %5315 = vmatprep.subr.bf16.mxu0 0
        %5316 = vmatpush2.bf16.msra.mxu0 0
        %5317 = vmatprep.subr.bf16.mxu0 0
        %5318 = vmatpush2.bf16.msra.mxu0 0
        %5319 = vmatprep.subr.bf16.mxu0 0
        %5320 = vmatpush2.bf16.msra.mxu0 0
        %5321 = vmatprep.subr.bf16.mxu0 0
        %5322 = vmatpush2.bf16.msra.mxu0 0
        %5323 = vmatprep.subr.bf16.mxu0 0
        %5324 = vmatpush2.bf16.msra.mxu0 0
        %5325 = vmatprep.subr.bf16.mxu0 0
        %5326 = vmatpush2.bf16.msra.mxu0 0
        %5327 = vmatprep.subr.bf16.mxu0 0
        %5328 = vmatpush2.bf16.msra.mxu0 0
        %5329 = vmatprep.subr.bf16.mxu0 0
        %5330 = vmatpush2.bf16.msra.mxu0 0
        %5331 = vmatprep.mubr.bf16.mxu0 0
        %5332 = vmatmul.mubr.bf16.gmra.mxu0 %v5218
        %v5333 = vpop.f32.mrf.mxu0
        %v5334 = vadd.f32 0.0, %v5333
        %v5335 = vpop.f32.mrf.mxu0
        %v5336 = vpop.f32.mrf.mxu0
        %v5337 = vadd.f32 0.0, %v5336
        %v5338 = vpop.f32.mrf.mxu0
        %5339 = vmatprep.mubr.bf16.mxu0 0
        %5340 = vmatmul.mubr.bf16.gmra.mxu0 %v5219
        %v5341 = vpop.f32.mrf.mxu0
        %v5342 = vadd.f32 0.0, %v5341
        %v5343 = vpop.f32.mrf.mxu0
        %v5344 = vpop.f32.mrf.mxu0
        %v5345 = vadd.f32 0.0, %v5344
        %v5346 = vpop.f32.mrf.mxu0
        %5347 = vmatprep.mubr.bf16.mxu0 0
        %5348 = vmatmul.mubr.bf16.gmra.mxu0 %v5220
        %v5349 = vpop.f32.mrf.mxu0
        %v5350 = vadd.f32 0.0, %v5349
        %v5351 = vpop.f32.mrf.mxu0
        %v5352 = vpop.f32.mrf.mxu0
        %v5353 = vadd.f32 0.0, %v5352
        %v5354 = vpop.f32.mrf.mxu0
        %5355 = vmatprep.mubr.bf16.mxu0 0
        %5356 = vmatmul.mubr.bf16.gmra.mxu0 %v5221
        %v5357 = vpop.f32.mrf.mxu0
        %v5358 = vadd.f32 0.0, %v5357
        %v5359 = vpop.f32.mrf.mxu0
        %v5360 = vpop.f32.mrf.mxu0
        %v5361 = vadd.f32 0.0, %v5360
        %v5362 = vpop.f32.mrf.mxu0
        %5363 = vmatprep.mubr.bf16.mxu0 0
        %5364 = vmatmul.mubr.bf16.gmra.mxu0 %v5222
        %v5365 = vpop.f32.mrf.mxu0
        %v5366 = vadd.f32 0.0, %v5365
        %v5367 = vpop.f32.mrf.mxu0
        %v5368 = vpop.f32.mrf.mxu0
        %v5369 = vadd.f32 0.0, %v5368
        %v5370 = vpop.f32.mrf.mxu0
        %5371 = vmatprep.mubr.bf16.mxu0 0
        %5372 = vmatmul.mubr.bf16.gmra.mxu0 %v5223
        %v5373 = vpop.f32.mrf.mxu0
        %v5374 = vadd.f32 0.0, %v5373
        %v5375 = vpop.f32.mrf.mxu0
        %v5376 = vpop.f32.mrf.mxu0
        %v5377 = vadd.f32 0.0, %v5376
        %v5378 = vpop.f32.mrf.mxu0
        %5379 = vmatprep.mubr.bf16.mxu0 0
        %5380 = vmatmul.mubr.bf16.gmra.mxu0 %v5224
        %v5381 = vpop.f32.mrf.mxu0
        %v5382 = vadd.f32 0.0, %v5381
        %v5383 = vpop.f32.mrf.mxu0
        %v5384 = vpop.f32.mrf.mxu0
        %v5385 = vadd.f32 0.0, %v5384
        %v5386 = vpop.f32.mrf.mxu0
        %5387 = vmatprep.mubr.bf16.mxu0 0
        %5388 = vmatmul.mubr.bf16.gmra.mxu0 %v5225
        %v5389 = vpop.f32.mrf.mxu0
        %v5390 = vadd.f32 0.0, %v5389
        %v5391 = vpop.f32.mrf.mxu0
        %v5392 = vpop.f32.mrf.mxu0
        %v5393 = vadd.f32 0.0, %v5392
        %v5394 = vpop.f32.mrf.mxu0
        %5395 = vmatprep.mubr.bf16.mxu0 0
        %5396 = vmatmul.mubr.bf16.gmra.mxu0 %v5226
        %v5397 = vpop.f32.mrf.mxu0
        %v5398 = vadd.f32 0.0, %v5397
        %v5399 = vpop.f32.mrf.mxu0
        %v5400 = vpop.f32.mrf.mxu0
        %v5401 = vadd.f32 0.0, %v5400
        %v5402 = vpop.f32.mrf.mxu0
        %5403 = vmatprep.mubr.bf16.mxu0 0
        %5404 = vmatmul.mubr.bf16.gmra.mxu0 %v5227
        %v5405 = vpop.f32.mrf.mxu0
        %v5406 = vadd.f32 0.0, %v5405
        %v5407 = vpop.f32.mrf.mxu0
        %v5408 = vpop.f32.mrf.mxu0
        %v5409 = vadd.f32 0.0, %v5408
        %v5410 = vpop.f32.mrf.mxu0
        %5411 = vmatprep.mubr.bf16.mxu0 0
        %5412 = vmatmul.mubr.bf16.gmra.mxu0 %v5228
        %v5413 = vpop.f32.mrf.mxu0
        %v5414 = vadd.f32 0.0, %v5413
        %v5415 = vpop.f32.mrf.mxu0
        %v5416 = vpop.f32.mrf.mxu0
        %v5417 = vadd.f32 0.0, %v5416
        %v5418 = vpop.f32.mrf.mxu0
        %5419 = vmatprep.mubr.bf16.mxu0 0
        %5420 = vmatmul.mubr.bf16.gmra.mxu0 %v5229
        %v5421 = vpop.f32.mrf.mxu0
        %v5422 = vadd.f32 0.0, %v5421
        %v5423 = vpop.f32.mrf.mxu0
        %v5424 = vpop.f32.mrf.mxu0
        %v5425 = vadd.f32 0.0, %v5424
        %v5426 = vpop.f32.mrf.mxu0
        %5427 = vmatprep.mubr.bf16.mxu0 0
        %5428 = vmatmul.mubr.bf16.gmra.mxu0 %v5230
        %v5429 = vpop.f32.mrf.mxu0
        %v5430 = vadd.f32 0.0, %v5429
        %v5431 = vpop.f32.mrf.mxu0
        %v5432 = vpop.f32.mrf.mxu0
        %v5433 = vadd.f32 0.0, %v5432
        %v5434 = vpop.f32.mrf.mxu0
        %5435 = vmatprep.mubr.bf16.mxu0 0
        %5436 = vmatmul.mubr.bf16.gmra.mxu0 %v5231
        %v5437 = vpop.f32.mrf.mxu0
        %v5438 = vadd.f32 0.0, %v5437
        %v5439 = vpop.f32.mrf.mxu0
        %v5440 = vpop.f32.mrf.mxu0
        %v5441 = vadd.f32 0.0, %v5440
        %v5442 = vpop.f32.mrf.mxu0
        %5443 = vmatprep.mubr.bf16.mxu0 0
        %5444 = vmatmul.mubr.bf16.gmra.mxu0 %v5232
        %v5445 = vpop.f32.mrf.mxu0
        %v5446 = vadd.f32 0.0, %v5445
        %v5447 = vpop.f32.mrf.mxu0
        %v5448 = vpop.f32.mrf.mxu0
        %v5449 = vadd.f32 0.0, %v5448
        %v5450 = vpop.f32.mrf.mxu0
        %5451 = vmatprep.mubr.bf16.mxu0 0
        %5452 = vmatmul.mubr.bf16.gmra.mxu0 %v5233
        %v5453 = vpop.f32.mrf.mxu0
        %v5454 = vadd.f32 0.0, %v5453
        %v5455 = vpop.f32.mrf.mxu0
        %v5456 = vpop.f32.mrf.mxu0
        %v5457 = vadd.f32 0.0, %v5456
        %v5458 = vpop.f32.mrf.mxu0
        %5459 = vdwg.mxu0
        %v5476 = vunpack.c.l.b16 %v5170
        %v5477 = vunpack.c.l.b16 %v5171
        %v5478 = vunpack.c.l.b16 %v5172
        %v5479 = vunpack.c.l.b16 %v5173
        %v5480 = vunpack.c.l.b16 %v5174
        %v5481 = vunpack.c.l.b16 %v5175
        %v5482 = vunpack.c.l.b16 %v5176
        %v5483 = vunpack.c.l.b16 %v5177
        %v5484 = vunpack.c.l.b16 %v5178
        %v5485 = vunpack.c.l.b16 %v5179
        %v5486 = vunpack.c.l.b16 %v5180
        %v5487 = vunpack.c.l.b16 %v5181
        %v5488 = vunpack.c.l.b16 %v5182
        %v5489 = vunpack.c.l.b16 %v5183
        %v5490 = vunpack.c.l.b16 %v5184
        %v5491 = vunpack.c.l.b16 %v5185
        %v5492 = vpack.c.b16 %v5477, %v5476
        %v5493 = vpack.c.b16 %v5479, %v5478
        %v5494 = vpack.c.b16 %v5481, %v5480
        %v5495 = vpack.c.b16 %v5483, %v5482
        %v5496 = vpack.c.b16 %v5485, %v5484
        %v5497 = vpack.c.b16 %v5487, %v5486
        %v5498 = vpack.c.b16 %v5489, %v5488
        %v5499 = vpack.c.b16 %v5491, %v5490
        %5508 = vmatprep.subr.bf16.mxu0 0
        %5509 = vmatpush1.bf16.msra.mxu0 %v5499
        %5510 = vmatprep.subr.bf16.mxu0 0
        %5511 = vmatpush1.bf16.msra.mxu0 %v5498
        %5512 = vmatprep.subr.bf16.mxu0 0
        %5513 = vmatpush1.bf16.msra.mxu0 %v5497
        %5514 = vmatprep.subr.bf16.mxu0 0
        %5515 = vmatpush1.bf16.msra.mxu0 %v5496
        %5516 = vmatprep.subr.bf16.mxu0 0
        %5517 = vmatpush1.bf16.msra.mxu0 %v5495
        %5518 = vmatprep.subr.bf16.mxu0 0
        %5519 = vmatpush1.bf16.msra.mxu0 %v5494
        %5520 = vmatprep.subr.bf16.mxu0 0
        %5521 = vmatpush1.bf16.msra.mxu0 %v5493
        %5522 = vmatprep.subr.bf16.mxu0 0
        %5523 = vmatpush1.bf16.msra.mxu0 %v5492
        %5524 = vmatprep.subr.bf16.mxu0 0
        %5525 = vmatpush2.bf16.msra.mxu0 0
        %5526 = vmatprep.subr.bf16.mxu0 0
        %5527 = vmatpush2.bf16.msra.mxu0 0
        %5528 = vmatprep.subr.bf16.mxu0 0
        %5529 = vmatpush2.bf16.msra.mxu0 0
        %5530 = vmatprep.subr.bf16.mxu0 0
        %5531 = vmatpush2.bf16.msra.mxu0 0
        %5532 = vmatprep.subr.bf16.mxu0 0
        %5533 = vmatpush2.bf16.msra.mxu0 0
        %5534 = vmatprep.subr.bf16.mxu0 0
        %5535 = vmatpush2.bf16.msra.mxu0 0
        %5536 = vmatprep.subr.bf16.mxu0 0
        %5537 = vmatpush2.bf16.msra.mxu0 0
        %5538 = vmatprep.subr.bf16.mxu0 0
        %5539 = vmatpush2.bf16.msra.mxu0 0
        %5540 = vmatprep.mubr.bf16.mxu0 0
        %5541 = vmatmul.mubr.bf16.gmra.mxu0 %v5154
        %v5542 = vpop.f32.mrf.mxu0
        %v5543 = vadd.f32 %v5334, %v5542
        %v5544 = vpop.f32.mrf.mxu0
        %v5545 = vpop.f32.mrf.mxu0
        %v5546 = vadd.f32 %v5337, %v5545
        %v5547 = vpop.f32.mrf.mxu0
        %5548 = vmatprep.mubr.bf16.mxu0 0
        %5549 = vmatmul.mubr.bf16.gmra.mxu0 %v5155
        %v5550 = vpop.f32.mrf.mxu0
        %v5551 = vadd.f32 %v5342, %v5550
        %v5552 = vpop.f32.mrf.mxu0
        %v5553 = vpop.f32.mrf.mxu0
        %v5554 = vadd.f32 %v5345, %v5553
        %v5555 = vpop.f32.mrf.mxu0
        %5556 = vmatprep.mubr.bf16.mxu0 0
        %5557 = vmatmul.mubr.bf16.gmra.mxu0 %v5156
        %v5558 = vpop.f32.mrf.mxu0
        %v5559 = vadd.f32 %v5350, %v5558
        %v5560 = vpop.f32.mrf.mxu0
        %v5561 = vpop.f32.mrf.mxu0
        %v5562 = vadd.f32 %v5353, %v5561
        %v5563 = vpop.f32.mrf.mxu0
        %5564 = vmatprep.mubr.bf16.mxu0 0
        %5565 = vmatmul.mubr.bf16.gmra.mxu0 %v5157
        %v5566 = vpop.f32.mrf.mxu0
        %v5567 = vadd.f32 %v5358, %v5566
        %v5568 = vpop.f32.mrf.mxu0
        %v5569 = vpop.f32.mrf.mxu0
        %v5570 = vadd.f32 %v5361, %v5569
        %v5571 = vpop.f32.mrf.mxu0
        %5572 = vmatprep.mubr.bf16.mxu0 0
        %5573 = vmatmul.mubr.bf16.gmra.mxu0 %v5158
        %v5574 = vpop.f32.mrf.mxu0
        %v5575 = vadd.f32 %v5366, %v5574
        %v5576 = vpop.f32.mrf.mxu0
        %v5577 = vpop.f32.mrf.mxu0
        %v5578 = vadd.f32 %v5369, %v5577
        %v5579 = vpop.f32.mrf.mxu0
        %5580 = vmatprep.mubr.bf16.mxu0 0
        %5581 = vmatmul.mubr.bf16.gmra.mxu0 %v5159
        %v5582 = vpop.f32.mrf.mxu0
        %v5583 = vadd.f32 %v5374, %v5582
        %v5584 = vpop.f32.mrf.mxu0
        %v5585 = vpop.f32.mrf.mxu0
        %v5586 = vadd.f32 %v5377, %v5585
        %v5587 = vpop.f32.mrf.mxu0
        %5588 = vmatprep.mubr.bf16.mxu0 0
        %5589 = vmatmul.mubr.bf16.gmra.mxu0 %v5160
        %v5590 = vpop.f32.mrf.mxu0
        %v5591 = vadd.f32 %v5382, %v5590
        %v5592 = vpop.f32.mrf.mxu0
        %v5593 = vpop.f32.mrf.mxu0
        %v5594 = vadd.f32 %v5385, %v5593
        %v5595 = vpop.f32.mrf.mxu0
        %5596 = vmatprep.mubr.bf16.mxu0 0
        %5597 = vmatmul.mubr.bf16.gmra.mxu0 %v5161
        %v5598 = vpop.f32.mrf.mxu0
        %v5599 = vadd.f32 %v5390, %v5598
        %v5600 = vpop.f32.mrf.mxu0
        %v5601 = vpop.f32.mrf.mxu0
        %v5602 = vadd.f32 %v5393, %v5601
        %v5603 = vpop.f32.mrf.mxu0
        %5604 = vmatprep.mubr.bf16.mxu0 0
        %5605 = vmatmul.mubr.bf16.gmra.mxu0 %v5162
        %v5606 = vpop.f32.mrf.mxu0
        %v5607 = vadd.f32 %v5398, %v5606
        %v5608 = vpop.f32.mrf.mxu0
        %v5609 = vpop.f32.mrf.mxu0
        %v5610 = vadd.f32 %v5401, %v5609
        %v5611 = vpop.f32.mrf.mxu0
        %5612 = vmatprep.mubr.bf16.mxu0 0
        %5613 = vmatmul.mubr.bf16.gmra.mxu0 %v5163
        %v5614 = vpop.f32.mrf.mxu0
        %v5615 = vadd.f32 %v5406, %v5614
        %v5616 = vpop.f32.mrf.mxu0
        %v5617 = vpop.f32.mrf.mxu0
        %v5618 = vadd.f32 %v5409, %v5617
        %v5619 = vpop.f32.mrf.mxu0
        %5620 = vmatprep.mubr.bf16.mxu0 0
        %5621 = vmatmul.mubr.bf16.gmra.mxu0 %v5164
        %v5622 = vpop.f32.mrf.mxu0
        %v5623 = vadd.f32 %v5414, %v5622
        %v5624 = vpop.f32.mrf.mxu0
        %v5625 = vpop.f32.mrf.mxu0
        %v5626 = vadd.f32 %v5417, %v5625
        %v5627 = vpop.f32.mrf.mxu0
        %5628 = vmatprep.mubr.bf16.mxu0 0
        %5629 = vmatmul.mubr.bf16.gmra.mxu0 %v5165
        %v5630 = vpop.f32.mrf.mxu0
        %v5631 = vadd.f32 %v5422, %v5630
        %v5632 = vpop.f32.mrf.mxu0
        %v5633 = vpop.f32.mrf.mxu0
        %v5634 = vadd.f32 %v5425, %v5633
        %v5635 = vpop.f32.mrf.mxu0
        %5636 = vmatprep.mubr.bf16.mxu0 0
        %5637 = vmatmul.mubr.bf16.gmra.mxu0 %v5166
        %v5638 = vpop.f32.mrf.mxu0
        %v5639 = vadd.f32 %v5430, %v5638
        %v5640 = vpop.f32.mrf.mxu0
        %v5641 = vpop.f32.mrf.mxu0
        %v5642 = vadd.f32 %v5433, %v5641
        %v5643 = vpop.f32.mrf.mxu0
        %5644 = vmatprep.mubr.bf16.mxu0 0
        %5645 = vmatmul.mubr.bf16.gmra.mxu0 %v5167
        %v5646 = vpop.f32.mrf.mxu0
        %v5647 = vadd.f32 %v5438, %v5646
        %v5648 = vpop.f32.mrf.mxu0
        %v5649 = vpop.f32.mrf.mxu0
        %v5650 = vadd.f32 %v5441, %v5649
        %v5651 = vpop.f32.mrf.mxu0
        %5652 = vmatprep.mubr.bf16.mxu0 0
        %5653 = vmatmul.mubr.bf16.gmra.mxu0 %v5168
        %v5654 = vpop.f32.mrf.mxu0
        %v5655 = vadd.f32 %v5446, %v5654
        %v5656 = vpop.f32.mrf.mxu0
        %v5657 = vpop.f32.mrf.mxu0
        %v5658 = vadd.f32 %v5449, %v5657
        %v5659 = vpop.f32.mrf.mxu0
        %5660 = vmatprep.mubr.bf16.mxu0 0
        %5661 = vmatmul.mubr.bf16.gmra.mxu0 %v5169
        %v5662 = vpop.f32.mrf.mxu0
        %v5663 = vadd.f32 %v5454, %v5662
        %v5664 = vpop.f32.mrf.mxu0
        %v5665 = vpop.f32.mrf.mxu0
        %v5666 = vadd.f32 %v5457, %v5665
        %v5667 = vpop.f32.mrf.mxu0
        %5668 = vdwg.mxu0
        %v5669 = vld [vmem:[#allocation2 + $0x9] sm:$0xff]
        %v5670 = vld [vmem:[#allocation2 + $0x11] sm:$0xff]
        %v5671 = vld [vmem:[#allocation2 + $0x19] sm:$0xff]
        %v5672 = vld [vmem:[#allocation2 + $0x21] sm:$0xff]
        %v5673 = vld [vmem:[#allocation2 + $0x29] sm:$0xff]
        %v5674 = vld [vmem:[#allocation2 + $0x31] sm:$0xff]
        %v5675 = vld [vmem:[#allocation2 + $0x39] sm:$0xff]
        %v5676 = vld [vmem:[#allocation2 + $0x41] sm:$0xff]
        %v5677 = vld [vmem:[#allocation2 + $0x49] sm:$0xff]
        %v5678 = vld [vmem:[#allocation2 + $0x51] sm:$0xff]
        %v5679 = vld [vmem:[#allocation2 + $0x59] sm:$0xff]
        %v5680 = vld [vmem:[#allocation2 + $0x61] sm:$0xff]
        %v5681 = vld [vmem:[#allocation2 + $0x69] sm:$0xff]
        %v5682 = vld [vmem:[#allocation2 + $0x71] sm:$0xff]
        %v5683 = vld [vmem:[#allocation2 + $0x79] sm:$0xff]
        %v5684 = vld [vmem:[#allocation2 + $0x81] sm:$0xff]
        %v5685 = vld [vmem:[#allocation2 + $0x89] sm:$0xff]
        %v5686 = vld [vmem:[#allocation2 + $0x91] sm:$0xff]
        %v5687 = vld [vmem:[#allocation2 + $0x99] sm:$0xff]
        %v5688 = vld [vmem:[#allocation2 + $0xa1] sm:$0xff]
        %v5689 = vld [vmem:[#allocation2 + $0xa9] sm:$0xff]
        %v5690 = vld [vmem:[#allocation2 + $0xb1] sm:$0xff]
        %v5691 = vld [vmem:[#allocation2 + $0xb9] sm:$0xff]
        %v5692 = vld [vmem:[#allocation2 + $0xc1] sm:$0xff]
        %v5693 = vld [vmem:[#allocation2 + $0xc9] sm:$0xff]
        %v5694 = vld [vmem:[#allocation2 + $0xd1] sm:$0xff]
        %v5695 = vld [vmem:[#allocation2 + $0xd9] sm:$0xff]
        %v5696 = vld [vmem:[#allocation2 + $0xe1] sm:$0xff]
        %v5697 = vld [vmem:[#allocation2 + $0xe9] sm:$0xff]
        %v5698 = vld [vmem:[#allocation2 + $0xf1] sm:$0xff]
        %v5699 = vld [vmem:[#allocation2 + $0xf9] sm:$0xff]
        %v5700 = vld [vmem:[#allocation2 + $0x101] sm:$0xff]
        %5701 = vset.pattern.permute.xlu0 2
        %5702 = vperm.xlu0 %5701, %v4930
        %v5703 = vpop.permute.xlu0 %5702
        %5705 = vset.pattern.permute.xlu0 2
        %5706 = vperm.xlu0 %5705, %v4931
        %v5707 = vpop.permute.xlu0 %5706
        %5709 = vset.pattern.permute.xlu0 2
        %5710 = vperm.xlu0 %5709, %v4932
        %v5711 = vpop.permute.xlu0 %5710
        %5713 = vset.pattern.permute.xlu0 2
        %5714 = vperm.xlu0 %5713, %v4933
        %v5715 = vpop.permute.xlu0 %5714
        %5717 = vset.pattern.permute.xlu0 2
        %5718 = vperm.xlu0 %5717, %v4934
        %v5719 = vpop.permute.xlu0 %5718
        %5721 = vset.pattern.permute.xlu0 2
        %5722 = vperm.xlu0 %5721, %v4935
        %v5723 = vpop.permute.xlu0 %5722
        %5725 = vset.pattern.permute.xlu0 2
        %5726 = vperm.xlu0 %5725, %v4936
        %v5727 = vpop.permute.xlu0 %5726
        %5729 = vset.pattern.permute.xlu0 2
        %5730 = vperm.xlu0 %5729, %v4937
        %v5731 = vpop.permute.xlu0 %5730
        %5733 = vset.pattern.permute.xlu0 2
        %5734 = vperm.xlu0 %5733, %v4938
        %v5735 = vpop.permute.xlu0 %5734
        %5737 = vset.pattern.permute.xlu0 2
        %5738 = vperm.xlu0 %5737, %v4939
        %v5739 = vpop.permute.xlu0 %5738
        %5741 = vset.pattern.permute.xlu0 2
        %5742 = vperm.xlu0 %5741, %v4940
        %v5743 = vpop.permute.xlu0 %5742
        %5745 = vset.pattern.permute.xlu0 2
        %5746 = vperm.xlu0 %5745, %v4941
        %v5747 = vpop.permute.xlu0 %5746
        %5749 = vset.pattern.permute.xlu0 2
        %5750 = vperm.xlu0 %5749, %v4942
        %v5751 = vpop.permute.xlu0 %5750
        %5753 = vset.pattern.permute.xlu0 2
        %5754 = vperm.xlu0 %5753, %v4943
        %v5755 = vpop.permute.xlu0 %5754
        %5757 = vset.pattern.permute.xlu0 2
        %5758 = vperm.xlu0 %5757, %v4944
        %v5759 = vpop.permute.xlu0 %5758
        %5761 = vset.pattern.permute.xlu0 2
        %5762 = vperm.xlu0 %5761, %v4945
        %v5763 = vpop.permute.xlu0 %5762
        %5765 = vset.pattern.permute.xlu0 2
        %5766 = vperm.xlu0 %5765, %v4946
        %v5767 = vpop.permute.xlu0 %5766
        %5769 = vset.pattern.permute.xlu0 2
        %5770 = vperm.xlu0 %5769, %v4947
        %v5771 = vpop.permute.xlu0 %5770
        %5773 = vset.pattern.permute.xlu0 2
        %5774 = vperm.xlu0 %5773, %v4948
        %v5775 = vpop.permute.xlu0 %5774
        %5777 = vset.pattern.permute.xlu0 2
        %5778 = vperm.xlu0 %5777, %v4949
        %v5779 = vpop.permute.xlu0 %5778
        %5781 = vset.pattern.permute.xlu0 2
        %5782 = vperm.xlu0 %5781, %v4950
        %v5783 = vpop.permute.xlu0 %5782
        %5785 = vset.pattern.permute.xlu0 2
        %5786 = vperm.xlu0 %5785, %v4951
        %v5787 = vpop.permute.xlu0 %5786
        %5789 = vset.pattern.permute.xlu0 2
        %5790 = vperm.xlu0 %5789, %v4952
        %v5791 = vpop.permute.xlu0 %5790
        %5793 = vset.pattern.permute.xlu0 2
        %5794 = vperm.xlu0 %5793, %v4953
        %v5795 = vpop.permute.xlu0 %5794
        %5797 = vset.pattern.permute.xlu0 2
        %5798 = vperm.xlu0 %5797, %v4954
        %v5799 = vpop.permute.xlu0 %5798
        %5801 = vset.pattern.permute.xlu0 2
        %5802 = vperm.xlu0 %5801, %v4955
        %v5803 = vpop.permute.xlu0 %5802
        %5805 = vset.pattern.permute.xlu0 2
        %5806 = vperm.xlu0 %5805, %v4956
        %v5807 = vpop.permute.xlu0 %5806
        %5809 = vset.pattern.permute.xlu0 2
        %5810 = vperm.xlu0 %5809, %v4957
        %v5811 = vpop.permute.xlu0 %5810
        %5813 = vset.pattern.permute.xlu0 2
        %5814 = vperm.xlu0 %5813, %v4958
        %v5815 = vpop.permute.xlu0 %5814
        %5817 = vset.pattern.permute.xlu0 2
        %5818 = vperm.xlu0 %5817, %v4959
        %v5819 = vpop.permute.xlu0 %5818
        %5821 = vset.pattern.permute.xlu0 2
        %5822 = vperm.xlu0 %5821, %v4960
        %v5823 = vpop.permute.xlu0 %5822
        %5825 = vset.pattern.permute.xlu0 2
        %5826 = vperm.xlu0 %5825, %v4961
        %v5827 = vpop.permute.xlu0 %5826
        %v5829 = vmul.f32 %v5669, %v5703
        %v5830 = vmul.f32 %v5670, %v5707
        %v5831 = vmul.f32 %v5671, %v5711
        %v5832 = vmul.f32 %v5672, %v5715
        %v5833 = vmul.f32 %v5673, %v5719
        %v5834 = vmul.f32 %v5674, %v5723
        %v5835 = vmul.f32 %v5675, %v5727
        %v5836 = vmul.f32 %v5676, %v5731
        %v5837 = vmul.f32 %v5677, %v5735
        %v5838 = vmul.f32 %v5678, %v5739
        %v5839 = vmul.f32 %v5679, %v5743
        %v5840 = vmul.f32 %v5680, %v5747
        %v5841 = vmul.f32 %v5681, %v5751
        %v5842 = vmul.f32 %v5682, %v5755
        %v5843 = vmul.f32 %v5683, %v5759
        %v5844 = vmul.f32 %v5684, %v5763
        %v5845 = vmul.f32 %v5685, %v5767
        %v5846 = vmul.f32 %v5686, %v5771
        %v5847 = vmul.f32 %v5687, %v5775
        %v5848 = vmul.f32 %v5688, %v5779
        %v5849 = vmul.f32 %v5689, %v5783
        %v5850 = vmul.f32 %v5690, %v5787
        %v5851 = vmul.f32 %v5691, %v5791
        %v5852 = vmul.f32 %v5692, %v5795
        %v5853 = vmul.f32 %v5693, %v5799
        %v5854 = vmul.f32 %v5694, %v5803
        %v5855 = vmul.f32 %v5695, %v5807
        %v5856 = vmul.f32 %v5696, %v5811
        %v5857 = vmul.f32 %v5697, %v5815
        %v5858 = vmul.f32 %v5698, %v5819
        %v5859 = vmul.f32 %v5699, %v5823
        %v5860 = vmul.f32 %v5700, %v5827
        %v5861 = vpack.c.bf16 %v5830, %v5829
        %v5862 = vpack.c.bf16 %v5832, %v5831
        %v5863 = vpack.c.bf16 %v5834, %v5833
        %v5864 = vpack.c.bf16 %v5836, %v5835
        %v5865 = vpack.c.bf16 %v5838, %v5837
        %v5866 = vpack.c.bf16 %v5840, %v5839
        %v5867 = vpack.c.bf16 %v5842, %v5841
        %v5868 = vpack.c.bf16 %v5844, %v5843
        %v5869 = vpack.c.bf16 %v5846, %v5845
        %v5870 = vpack.c.bf16 %v5848, %v5847
        %v5871 = vpack.c.bf16 %v5850, %v5849
        %v5872 = vpack.c.bf16 %v5852, %v5851
        %v5873 = vpack.c.bf16 %v5854, %v5853
        %v5874 = vpack.c.bf16 %v5856, %v5855
        %v5875 = vpack.c.bf16 %v5858, %v5857
        %v5876 = vpack.c.bf16 %v5860, %v5859
        %s5877 = scalar_lea.vmem [#allocation8], 128
        %v5878 = vld [vmem:[%s5877] sm:$0xf]
        %v5879 = vld [vmem:[%s5877 + $0x4] sm:$0xf]
        %v5880 = vld [vmem:[%s5877 + $0x8] sm:$0xf]
        %v5881 = vld [vmem:[%s5877 + $0xc] sm:$0xf]
        %v5882 = vld [vmem:[%s5877 + $0x10] sm:$0xf]
        %v5883 = vld [vmem:[%s5877 + $0x14] sm:$0xf]
        %v5884 = vld [vmem:[%s5877 + $0x18] sm:$0xf]
        %v5885 = vld [vmem:[%s5877 + $0x1c] sm:$0xf]
        %v5886 = vld [vmem:[%s5877 + $0x20] sm:$0xf]
        %v5887 = vld [vmem:[%s5877 + $0x24] sm:$0xf]
        %v5888 = vld [vmem:[%s5877 + $0x28] sm:$0xf]
        %v5889 = vld [vmem:[%s5877 + $0x2c] sm:$0xf]
        %v5890 = vld [vmem:[%s5877 + $0x30] sm:$0xf]
        %v5891 = vld [vmem:[%s5877 + $0x34] sm:$0xf]
        %v5892 = vld [vmem:[%s5877 + $0x38] sm:$0xf]
        %v5893 = vld [vmem:[%s5877 + $0x3c] sm:$0xf]
        %v5910 = vunpack.c.l.b16 %v5878
        %v5911 = vunpack.c.l.b16 %v5879
        %v5912 = vunpack.c.l.b16 %v5880
        %v5913 = vunpack.c.l.b16 %v5881
        %v5914 = vunpack.c.l.b16 %v5882
        %v5915 = vunpack.c.l.b16 %v5883
        %v5916 = vunpack.c.l.b16 %v5884
        %v5917 = vunpack.c.l.b16 %v5885
        %v5918 = vunpack.c.l.b16 %v5886
        %v5919 = vunpack.c.l.b16 %v5887
        %v5920 = vunpack.c.l.b16 %v5888
        %v5921 = vunpack.c.l.b16 %v5889
        %v5922 = vunpack.c.l.b16 %v5890
        %v5923 = vunpack.c.l.b16 %v5891
        %v5924 = vunpack.c.l.b16 %v5892
        %v5925 = vunpack.c.l.b16 %v5893
        %v5926 = vpack.c.b16 %v5911, %v5910
        %v5927 = vpack.c.b16 %v5913, %v5912
        %v5928 = vpack.c.b16 %v5915, %v5914
        %v5929 = vpack.c.b16 %v5917, %v5916
        %v5930 = vpack.c.b16 %v5919, %v5918
        %v5931 = vpack.c.b16 %v5921, %v5920
        %v5932 = vpack.c.b16 %v5923, %v5922
        %v5933 = vpack.c.b16 %v5925, %v5924
        %5942 = vmatprep.subr.bf16.mxu0 0
        %5943 = vmatpush1.bf16.msra.mxu0 %v5933
        %5944 = vmatprep.subr.bf16.mxu0 0
        %5945 = vmatpush1.bf16.msra.mxu0 %v5932
        %5946 = vmatprep.subr.bf16.mxu0 0
        %5947 = vmatpush1.bf16.msra.mxu0 %v5931
        %5948 = vmatprep.subr.bf16.mxu0 0
        %5949 = vmatpush1.bf16.msra.mxu0 %v5930
        %5950 = vmatprep.subr.bf16.mxu0 0
        %5951 = vmatpush1.bf16.msra.mxu0 %v5929
        %5952 = vmatprep.subr.bf16.mxu0 0
        %5953 = vmatpush1.bf16.msra.mxu0 %v5928
        %5954 = vmatprep.subr.bf16.mxu0 0
        %5955 = vmatpush1.bf16.msra.mxu0 %v5927
        %5956 = vmatprep.subr.bf16.mxu0 0
        %5957 = vmatpush1.bf16.msra.mxu0 %v5926
        %5958 = vmatprep.subr.bf16.mxu0 0
        %5959 = vmatpush2.bf16.msra.mxu0 0
        %5960 = vmatprep.subr.bf16.mxu0 0
        %5961 = vmatpush2.bf16.msra.mxu0 0
        %5962 = vmatprep.subr.bf16.mxu0 0
        %5963 = vmatpush2.bf16.msra.mxu0 0
        %5964 = vmatprep.subr.bf16.mxu0 0
        %5965 = vmatpush2.bf16.msra.mxu0 0
        %5966 = vmatprep.subr.bf16.mxu0 0
        %5967 = vmatpush2.bf16.msra.mxu0 0
        %5968 = vmatprep.subr.bf16.mxu0 0
        %5969 = vmatpush2.bf16.msra.mxu0 0
        %5970 = vmatprep.subr.bf16.mxu0 0
        %5971 = vmatpush2.bf16.msra.mxu0 0
        %5972 = vmatprep.subr.bf16.mxu0 0
        %5973 = vmatpush2.bf16.msra.mxu0 0
        %5974 = vmatprep.mubr.bf16.mxu0 0
        %5975 = vmatmul.mubr.bf16.gmra.mxu0 %v5861
        %v5976 = vpop.f32.mrf.mxu0
        %v5977 = vadd.f32 0.0, %v5976
        %v5978 = vpop.f32.mrf.mxu0
        %v5979 = vpop.f32.mrf.mxu0
        %v5980 = vadd.f32 0.0, %v5979
        %v5981 = vpop.f32.mrf.mxu0
        %5982 = vmatprep.mubr.bf16.mxu0 0
        %5983 = vmatmul.mubr.bf16.gmra.mxu0 %v5862
        %v5984 = vpop.f32.mrf.mxu0
        %v5985 = vadd.f32 0.0, %v5984
        %v5986 = vpop.f32.mrf.mxu0
        %v5987 = vpop.f32.mrf.mxu0
        %v5988 = vadd.f32 0.0, %v5987
        %v5989 = vpop.f32.mrf.mxu0
        %5990 = vmatprep.mubr.bf16.mxu0 0
        %5991 = vmatmul.mubr.bf16.gmra.mxu0 %v5863
        %v5992 = vpop.f32.mrf.mxu0
        %v5993 = vadd.f32 0.0, %v5992
        %v5994 = vpop.f32.mrf.mxu0
        %v5995 = vpop.f32.mrf.mxu0
        %v5996 = vadd.f32 0.0, %v5995
        %v5997 = vpop.f32.mrf.mxu0
        %5998 = vmatprep.mubr.bf16.mxu0 0
        %5999 = vmatmul.mubr.bf16.gmra.mxu0 %v5864
        %v6000 = vpop.f32.mrf.mxu0
        %v6001 = vadd.f32 0.0, %v6000
        %v6002 = vpop.f32.mrf.mxu0
        %v6003 = vpop.f32.mrf.mxu0
        %v6004 = vadd.f32 0.0, %v6003
        %v6005 = vpop.f32.mrf.mxu0
        %6006 = vmatprep.mubr.bf16.mxu0 0
        %6007 = vmatmul.mubr.bf16.gmra.mxu0 %v5865
        %v6008 = vpop.f32.mrf.mxu0
        %v6009 = vadd.f32 0.0, %v6008
        %v6010 = vpop.f32.mrf.mxu0
        %v6011 = vpop.f32.mrf.mxu0
        %v6012 = vadd.f32 0.0, %v6011
        %v6013 = vpop.f32.mrf.mxu0
        %6014 = vmatprep.mubr.bf16.mxu0 0
        %6015 = vmatmul.mubr.bf16.gmra.mxu0 %v5866
        %v6016 = vpop.f32.mrf.mxu0
        %v6017 = vadd.f32 0.0, %v6016
        %v6018 = vpop.f32.mrf.mxu0
        %v6019 = vpop.f32.mrf.mxu0
        %v6020 = vadd.f32 0.0, %v6019
        %v6021 = vpop.f32.mrf.mxu0
        %6022 = vmatprep.mubr.bf16.mxu0 0
        %6023 = vmatmul.mubr.bf16.gmra.mxu0 %v5867
        %v6024 = vpop.f32.mrf.mxu0
        %v6025 = vadd.f32 0.0, %v6024
        %v6026 = vpop.f32.mrf.mxu0
        %v6027 = vpop.f32.mrf.mxu0
        %v6028 = vadd.f32 0.0, %v6027
        %v6029 = vpop.f32.mrf.mxu0
        %6030 = vmatprep.mubr.bf16.mxu0 0
        %6031 = vmatmul.mubr.bf16.gmra.mxu0 %v5868
        %v6032 = vpop.f32.mrf.mxu0
        %v6033 = vadd.f32 0.0, %v6032
        %v6034 = vpop.f32.mrf.mxu0
        %v6035 = vpop.f32.mrf.mxu0
        %v6036 = vadd.f32 0.0, %v6035
        %v6037 = vpop.f32.mrf.mxu0
        %6038 = vmatprep.mubr.bf16.mxu0 0
        %6039 = vmatmul.mubr.bf16.gmra.mxu0 %v5869
        %v6040 = vpop.f32.mrf.mxu0
        %v6041 = vadd.f32 0.0, %v6040
        %v6042 = vpop.f32.mrf.mxu0
        %v6043 = vpop.f32.mrf.mxu0
        %v6044 = vadd.f32 0.0, %v6043
        %v6045 = vpop.f32.mrf.mxu0
        %6046 = vmatprep.mubr.bf16.mxu0 0
        %6047 = vmatmul.mubr.bf16.gmra.mxu0 %v5870
        %v6048 = vpop.f32.mrf.mxu0
        %v6049 = vadd.f32 0.0, %v6048
        %v6050 = vpop.f32.mrf.mxu0
        %v6051 = vpop.f32.mrf.mxu0
        %v6052 = vadd.f32 0.0, %v6051
        %v6053 = vpop.f32.mrf.mxu0
        %6054 = vmatprep.mubr.bf16.mxu0 0
        %6055 = vmatmul.mubr.bf16.gmra.mxu0 %v5871
        %v6056 = vpop.f32.mrf.mxu0
        %v6057 = vadd.f32 0.0, %v6056
        %v6058 = vpop.f32.mrf.mxu0
        %v6059 = vpop.f32.mrf.mxu0
        %v6060 = vadd.f32 0.0, %v6059
        %v6061 = vpop.f32.mrf.mxu0
        %6062 = vmatprep.mubr.bf16.mxu0 0
        %6063 = vmatmul.mubr.bf16.gmra.mxu0 %v5872
        %v6064 = vpop.f32.mrf.mxu0
        %v6065 = vadd.f32 0.0, %v6064
        %v6066 = vpop.f32.mrf.mxu0
        %v6067 = vpop.f32.mrf.mxu0
        %v6068 = vadd.f32 0.0, %v6067
        %v6069 = vpop.f32.mrf.mxu0
        %6070 = vmatprep.mubr.bf16.mxu0 0
        %6071 = vmatmul.mubr.bf16.gmra.mxu0 %v5873
        %v6072 = vpop.f32.mrf.mxu0
        %v6073 = vadd.f32 0.0, %v6072
        %v6074 = vpop.f32.mrf.mxu0
        %v6075 = vpop.f32.mrf.mxu0
        %v6076 = vadd.f32 0.0, %v6075
        %v6077 = vpop.f32.mrf.mxu0
        %6078 = vmatprep.mubr.bf16.mxu0 0
        %6079 = vmatmul.mubr.bf16.gmra.mxu0 %v5874
        %v6080 = vpop.f32.mrf.mxu0
        %v6081 = vadd.f32 0.0, %v6080
        %v6082 = vpop.f32.mrf.mxu0
        %v6083 = vpop.f32.mrf.mxu0
        %v6084 = vadd.f32 0.0, %v6083
        %v6085 = vpop.f32.mrf.mxu0
        %6086 = vmatprep.mubr.bf16.mxu0 0
        %6087 = vmatmul.mubr.bf16.gmra.mxu0 %v5875
        %v6088 = vpop.f32.mrf.mxu0
        %v6089 = vadd.f32 0.0, %v6088
        %v6090 = vpop.f32.mrf.mxu0
        %v6091 = vpop.f32.mrf.mxu0
        %v6092 = vadd.f32 0.0, %v6091
        %v6093 = vpop.f32.mrf.mxu0
        %6094 = vmatprep.mubr.bf16.mxu0 0
        %6095 = vmatmul.mubr.bf16.gmra.mxu0 %v5876
        %v6096 = vpop.f32.mrf.mxu0
        %v6097 = vadd.f32 0.0, %v6096
        %v6098 = vpop.f32.mrf.mxu0
        %v6099 = vpop.f32.mrf.mxu0
        %v6100 = vadd.f32 0.0, %v6099
        %v6101 = vpop.f32.mrf.mxu0
        %6102 = vdwg.mxu0
        %v6103 = vadd.f32 %v5543, %v5977
        %v6104 = vadd.f32 %v5546, %v5980
        %v6105 = vadd.f32 %v5551, %v5985
        %v6106 = vadd.f32 %v5554, %v5988
        %v6107 = vadd.f32 %v5559, %v5993
        %v6108 = vadd.f32 %v5562, %v5996
        %v6109 = vadd.f32 %v5567, %v6001
        %v6110 = vadd.f32 %v5570, %v6004
        %v6111 = vadd.f32 %v5575, %v6009
        %v6112 = vadd.f32 %v5578, %v6012
        %v6113 = vadd.f32 %v5583, %v6017
        %v6114 = vadd.f32 %v5586, %v6020
        %v6115 = vadd.f32 %v5591, %v6025
        %v6116 = vadd.f32 %v5594, %v6028
        %v6117 = vadd.f32 %v5599, %v6033
        %v6118 = vadd.f32 %v5602, %v6036
        %v6119 = vadd.f32 %v5607, %v6041
        %v6120 = vadd.f32 %v5610, %v6044
        %v6121 = vadd.f32 %v5615, %v6049
        %v6122 = vadd.f32 %v5618, %v6052
        %v6123 = vadd.f32 %v5623, %v6057
        %v6124 = vadd.f32 %v5626, %v6060
        %v6125 = vadd.f32 %v5631, %v6065
        %v6126 = vadd.f32 %v5634, %v6068
        %v6127 = vadd.f32 %v5639, %v6073
        %v6128 = vadd.f32 %v5642, %v6076
        %v6129 = vadd.f32 %v5647, %v6081
        %v6130 = vadd.f32 %v5650, %v6084
        %v6131 = vadd.f32 %v5655, %v6089
        %v6132 = vadd.f32 %v5658, %v6092
        %v6133 = vadd.f32 %v5663, %v6097
        %v6134 = vadd.f32 %v5666, %v6100
        %v6135 = vld [vmem:[#allocation2 + $0x17] sm:$0xff]
        %v6136 = vld [vmem:[#allocation2 + $0x1f] sm:$0xff]
        %v6137 = vld [vmem:[#allocation2 + $0x27] sm:$0xff]
        %v6138 = vld [vmem:[#allocation2 + $0x2f] sm:$0xff]
        %v6139 = vld [vmem:[#allocation2 + $0x37] sm:$0xff]
        %v6140 = vld [vmem:[#allocation2 + $0x3f] sm:$0xff]
        %v6141 = vld [vmem:[#allocation2 + $0x47] sm:$0xff]
        %v6142 = vld [vmem:[#allocation2 + $0x4f] sm:$0xff]
        %v6143 = vld [vmem:[#allocation2 + $0x57] sm:$0xff]
        %v6144 = vld [vmem:[#allocation2 + $0x5f] sm:$0xff]
        %v6145 = vld [vmem:[#allocation2 + $0x67] sm:$0xff]
        %v6146 = vld [vmem:[#allocation2 + $0x6f] sm:$0xff]
        %v6147 = vld [vmem:[#allocation2 + $0x77] sm:$0xff]
        %v6148 = vld [vmem:[#allocation2 + $0x7f] sm:$0xff]
        %v6149 = vld [vmem:[#allocation2 + $0x87] sm:$0xff]
        %v6150 = vld [vmem:[#allocation2 + $0x8f] sm:$0xff]
        %v6151 = vld [vmem:[#allocation2 + $0x97] sm:$0xff]
        %v6152 = vld [vmem:[#allocation2 + $0x9f] sm:$0xff]
        %v6153 = vld [vmem:[#allocation2 + $0xa7] sm:$0xff]
        %v6154 = vld [vmem:[#allocation2 + $0xaf] sm:$0xff]
        %v6155 = vld [vmem:[#allocation2 + $0xb7] sm:$0xff]
        %v6156 = vld [vmem:[#allocation2 + $0xbf] sm:$0xff]
        %v6157 = vld [vmem:[#allocation2 + $0xc7] sm:$0xff]
        %v6158 = vld [vmem:[#allocation2 + $0xcf] sm:$0xff]
        %v6159 = vld [vmem:[#allocation2 + $0xd7] sm:$0xff]
        %v6160 = vld [vmem:[#allocation2 + $0xdf] sm:$0xff]
        %v6161 = vld [vmem:[#allocation2 + $0xe7] sm:$0xff]
        %v6162 = vld [vmem:[#allocation2 + $0xef] sm:$0xff]
        %v6163 = vld [vmem:[#allocation2 + $0xf7] sm:$0xff]
        %v6164 = vld [vmem:[#allocation2 + $0xff] sm:$0xff]
        %v6165 = vld [vmem:[#allocation2 + $0x107] sm:$0xff]
        %v6166 = vld [vmem:[#allocation2 + $0x10f] sm:$0xff]
        %6167 = vset.pattern.permute.xlu0 3
        %6168 = vperm.xlu0 %6167, %v4930
        %v6169 = vpop.permute.xlu0 %6168
        %6171 = vset.pattern.permute.xlu0 3
        %6172 = vperm.xlu0 %6171, %v4931
        %v6173 = vpop.permute.xlu0 %6172
        %6175 = vset.pattern.permute.xlu0 3
        %6176 = vperm.xlu0 %6175, %v4932
        %v6177 = vpop.permute.xlu0 %6176
        %6179 = vset.pattern.permute.xlu0 3
        %6180 = vperm.xlu0 %6179, %v4933
        %v6181 = vpop.permute.xlu0 %6180
        %6183 = vset.pattern.permute.xlu0 3
        %6184 = vperm.xlu0 %6183, %v4934
        %v6185 = vpop.permute.xlu0 %6184
        %6187 = vset.pattern.permute.xlu0 3
        %6188 = vperm.xlu0 %6187, %v4935
        %v6189 = vpop.permute.xlu0 %6188
        %6191 = vset.pattern.permute.xlu0 3
        %6192 = vperm.xlu0 %6191, %v4936
        %v6193 = vpop.permute.xlu0 %6192
        %6195 = vset.pattern.permute.xlu0 3
        %6196 = vperm.xlu0 %6195, %v4937
        %v6197 = vpop.permute.xlu0 %6196
        %6199 = vset.pattern.permute.xlu0 3
        %6200 = vperm.xlu0 %6199, %v4938
        %v6201 = vpop.permute.xlu0 %6200
        %6203 = vset.pattern.permute.xlu0 3
        %6204 = vperm.xlu0 %6203, %v4939
        %v6205 = vpop.permute.xlu0 %6204
        %6207 = vset.pattern.permute.xlu0 3
        %6208 = vperm.xlu0 %6207, %v4940
        %v6209 = vpop.permute.xlu0 %6208
        %6211 = vset.pattern.permute.xlu0 3
        %6212 = vperm.xlu0 %6211, %v4941
        %v6213 = vpop.permute.xlu0 %6212
        %6215 = vset.pattern.permute.xlu0 3
        %6216 = vperm.xlu0 %6215, %v4942
        %v6217 = vpop.permute.xlu0 %6216
        %6219 = vset.pattern.permute.xlu0 3
        %6220 = vperm.xlu0 %6219, %v4943
        %v6221 = vpop.permute.xlu0 %6220
        %6223 = vset.pattern.permute.xlu0 3
        %6224 = vperm.xlu0 %6223, %v4944
        %v6225 = vpop.permute.xlu0 %6224
        %6227 = vset.pattern.permute.xlu0 3
        %6228 = vperm.xlu0 %6227, %v4945
        %v6229 = vpop.permute.xlu0 %6228
        %6231 = vset.pattern.permute.xlu0 3
        %6232 = vperm.xlu0 %6231, %v4946
        %v6233 = vpop.permute.xlu0 %6232
        %6235 = vset.pattern.permute.xlu0 3
        %6236 = vperm.xlu0 %6235, %v4947
        %v6237 = vpop.permute.xlu0 %6236
        %6239 = vset.pattern.permute.xlu0 3
        %6240 = vperm.xlu0 %6239, %v4948
        %v6241 = vpop.permute.xlu0 %6240
        %6243 = vset.pattern.permute.xlu0 3
        %6244 = vperm.xlu0 %6243, %v4949
        %v6245 = vpop.permute.xlu0 %6244
        %6247 = vset.pattern.permute.xlu0 3
        %6248 = vperm.xlu0 %6247, %v4950
        %v6249 = vpop.permute.xlu0 %6248
        %6251 = vset.pattern.permute.xlu0 3
        %6252 = vperm.xlu0 %6251, %v4951
        %v6253 = vpop.permute.xlu0 %6252
        %6255 = vset.pattern.permute.xlu0 3
        %6256 = vperm.xlu0 %6255, %v4952
        %v6257 = vpop.permute.xlu0 %6256
        %6259 = vset.pattern.permute.xlu0 3
        %6260 = vperm.xlu0 %6259, %v4953
        %v6261 = vpop.permute.xlu0 %6260
        %6263 = vset.pattern.permute.xlu0 3
        %6264 = vperm.xlu0 %6263, %v4954
        %v6265 = vpop.permute.xlu0 %6264
        %6267 = vset.pattern.permute.xlu0 3
        %6268 = vperm.xlu0 %6267, %v4955
        %v6269 = vpop.permute.xlu0 %6268
        %6271 = vset.pattern.permute.xlu0 3
        %6272 = vperm.xlu0 %6271, %v4956
        %v6273 = vpop.permute.xlu0 %6272
        %6275 = vset.pattern.permute.xlu0 3
        %6276 = vperm.xlu0 %6275, %v4957
        %v6277 = vpop.permute.xlu0 %6276
        %6279 = vset.pattern.permute.xlu0 3
        %6280 = vperm.xlu0 %6279, %v4958
        %v6281 = vpop.permute.xlu0 %6280
        %6283 = vset.pattern.permute.xlu0 3
        %6284 = vperm.xlu0 %6283, %v4959
        %v6285 = vpop.permute.xlu0 %6284
        %6287 = vset.pattern.permute.xlu0 3
        %6288 = vperm.xlu0 %6287, %v4960
        %v6289 = vpop.permute.xlu0 %6288
        %6291 = vset.pattern.permute.xlu0 3
        %6292 = vperm.xlu0 %6291, %v4961
        %v6293 = vpop.permute.xlu0 %6292
        %v6295 = vmul.f32 %v6135, %v6169
        %v6296 = vmul.f32 %v6136, %v6173
        %v6297 = vmul.f32 %v6137, %v6177
        %v6298 = vmul.f32 %v6138, %v6181
        %v6299 = vmul.f32 %v6139, %v6185
        %v6300 = vmul.f32 %v6140, %v6189
        %v6301 = vmul.f32 %v6141, %v6193
        %v6302 = vmul.f32 %v6142, %v6197
        %v6303 = vmul.f32 %v6143, %v6201
        %v6304 = vmul.f32 %v6144, %v6205
        %v6305 = vmul.f32 %v6145, %v6209
        %v6306 = vmul.f32 %v6146, %v6213
        %v6307 = vmul.f32 %v6147, %v6217
        %v6308 = vmul.f32 %v6148, %v6221
        %v6309 = vmul.f32 %v6149, %v6225
        %v6310 = vmul.f32 %v6150, %v6229
        %v6311 = vmul.f32 %v6151, %v6233
        %v6312 = vmul.f32 %v6152, %v6237
        %v6313 = vmul.f32 %v6153, %v6241
        %v6314 = vmul.f32 %v6154, %v6245
        %v6315 = vmul.f32 %v6155, %v6249
        %v6316 = vmul.f32 %v6156, %v6253
        %v6317 = vmul.f32 %v6157, %v6257
        %v6318 = vmul.f32 %v6158, %v6261
        %v6319 = vmul.f32 %v6159, %v6265
        %v6320 = vmul.f32 %v6160, %v6269
        %v6321 = vmul.f32 %v6161, %v6273
        %v6322 = vmul.f32 %v6162, %v6277
        %v6323 = vmul.f32 %v6163, %v6281
        %v6324 = vmul.f32 %v6164, %v6285
        %v6325 = vmul.f32 %v6165, %v6289
        %v6326 = vmul.f32 %v6166, %v6293
        %v6327 = vpack.c.bf16 %v6296, %v6295
        %v6328 = vpack.c.bf16 %v6298, %v6297
        %v6329 = vpack.c.bf16 %v6300, %v6299
        %v6330 = vpack.c.bf16 %v6302, %v6301
        %v6331 = vpack.c.bf16 %v6304, %v6303
        %v6332 = vpack.c.bf16 %v6306, %v6305
        %v6333 = vpack.c.bf16 %v6308, %v6307
        %v6334 = vpack.c.bf16 %v6310, %v6309
        %v6335 = vpack.c.bf16 %v6312, %v6311
        %v6336 = vpack.c.bf16 %v6314, %v6313
        %v6337 = vpack.c.bf16 %v6316, %v6315
        %v6338 = vpack.c.bf16 %v6318, %v6317
        %v6339 = vpack.c.bf16 %v6320, %v6319
        %v6340 = vpack.c.bf16 %v6322, %v6321
        %v6341 = vpack.c.bf16 %v6324, %v6323
        %v6342 = vpack.c.bf16 %v6326, %v6325
        %s6343 = scalar_lea.vmem [#allocation8], 192
        %v6344 = vld [vmem:[%s6343] sm:$0xf]
        %v6345 = vld [vmem:[%s6343 + $0x4] sm:$0xf]
        %v6346 = vld [vmem:[%s6343 + $0x8] sm:$0xf]
        %v6347 = vld [vmem:[%s6343 + $0xc] sm:$0xf]
        %v6348 = vld [vmem:[%s6343 + $0x10] sm:$0xf]
        %v6349 = vld [vmem:[%s6343 + $0x14] sm:$0xf]
        %v6350 = vld [vmem:[%s6343 + $0x18] sm:$0xf]
        %v6351 = vld [vmem:[%s6343 + $0x1c] sm:$0xf]
        %v6352 = vld [vmem:[%s6343 + $0x20] sm:$0xf]
        %v6353 = vld [vmem:[%s6343 + $0x24] sm:$0xf]
        %v6354 = vld [vmem:[%s6343 + $0x28] sm:$0xf]
        %v6355 = vld [vmem:[%s6343 + $0x2c] sm:$0xf]
        %v6356 = vld [vmem:[%s6343 + $0x30] sm:$0xf]
        %v6357 = vld [vmem:[%s6343 + $0x34] sm:$0xf]
        %v6358 = vld [vmem:[%s6343 + $0x38] sm:$0xf]
        %v6359 = vld [vmem:[%s6343 + $0x3c] sm:$0xf]
        %v6376 = vunpack.c.l.b16 %v6344
        %v6377 = vunpack.c.l.b16 %v6345
        %v6378 = vunpack.c.l.b16 %v6346
        %v6379 = vunpack.c.l.b16 %v6347
        %v6380 = vunpack.c.l.b16 %v6348
        %v6381 = vunpack.c.l.b16 %v6349
        %v6382 = vunpack.c.l.b16 %v6350
        %v6383 = vunpack.c.l.b16 %v6351
        %v6384 = vunpack.c.l.b16 %v6352
        %v6385 = vunpack.c.l.b16 %v6353
        %v6386 = vunpack.c.l.b16 %v6354
        %v6387 = vunpack.c.l.b16 %v6355
        %v6388 = vunpack.c.l.b16 %v6356
        %v6389 = vunpack.c.l.b16 %v6357
        %v6390 = vunpack.c.l.b16 %v6358
        %v6391 = vunpack.c.l.b16 %v6359
        %v6392 = vpack.c.b16 %v6377, %v6376
        %v6393 = vpack.c.b16 %v6379, %v6378
        %v6394 = vpack.c.b16 %v6381, %v6380
        %v6395 = vpack.c.b16 %v6383, %v6382
        %v6396 = vpack.c.b16 %v6385, %v6384
        %v6397 = vpack.c.b16 %v6387, %v6386
        %v6398 = vpack.c.b16 %v6389, %v6388
        %v6399 = vpack.c.b16 %v6391, %v6390
        %6408 = vmatprep.subr.bf16.mxu0 0
        %6409 = vmatpush1.bf16.msra.mxu0 %v6399
        %6410 = vmatprep.subr.bf16.mxu0 0
        %6411 = vmatpush1.bf16.msra.mxu0 %v6398
        %6412 = vmatprep.subr.bf16.mxu0 0
        %6413 = vmatpush1.bf16.msra.mxu0 %v6397
        %6414 = vmatprep.subr.bf16.mxu0 0
        %6415 = vmatpush1.bf16.msra.mxu0 %v6396
        %6416 = vmatprep.subr.bf16.mxu0 0
        %6417 = vmatpush1.bf16.msra.mxu0 %v6395
        %6418 = vmatprep.subr.bf16.mxu0 0
        %6419 = vmatpush1.bf16.msra.mxu0 %v6394
        %6420 = vmatprep.subr.bf16.mxu0 0
        %6421 = vmatpush1.bf16.msra.mxu0 %v6393
        %6422 = vmatprep.subr.bf16.mxu0 0
        %6423 = vmatpush1.bf16.msra.mxu0 %v6392
        %6424 = vmatprep.subr.bf16.mxu0 0
        %6425 = vmatpush2.bf16.msra.mxu0 0
        %6426 = vmatprep.subr.bf16.mxu0 0
        %6427 = vmatpush2.bf16.msra.mxu0 0
        %6428 = vmatprep.subr.bf16.mxu0 0
        %6429 = vmatpush2.bf16.msra.mxu0 0
        %6430 = vmatprep.subr.bf16.mxu0 0
        %6431 = vmatpush2.bf16.msra.mxu0 0
        %6432 = vmatprep.subr.bf16.mxu0 0
        %6433 = vmatpush2.bf16.msra.mxu0 0
        %6434 = vmatprep.subr.bf16.mxu0 0
        %6435 = vmatpush2.bf16.msra.mxu0 0
        %6436 = vmatprep.subr.bf16.mxu0 0
        %6437 = vmatpush2.bf16.msra.mxu0 0
        %6438 = vmatprep.subr.bf16.mxu0 0
        %6439 = vmatpush2.bf16.msra.mxu0 0
        %6440 = vmatprep.mubr.bf16.mxu0 0
        %6441 = vmatmul.mubr.bf16.gmra.mxu0 %v6327
        %v6442 = vpop.f32.mrf.mxu0
        %v6443 = vadd.f32 0.0, %v6442
        %v6444 = vpop.f32.mrf.mxu0
        %v6445 = vpop.f32.mrf.mxu0
        %v6446 = vadd.f32 0.0, %v6445
        %v6447 = vpop.f32.mrf.mxu0
        %6448 = vmatprep.mubr.bf16.mxu0 0
        %6449 = vmatmul.mubr.bf16.gmra.mxu0 %v6328
        %v6450 = vpop.f32.mrf.mxu0
        %v6451 = vadd.f32 0.0, %v6450
        %v6452 = vpop.f32.mrf.mxu0
        %v6453 = vpop.f32.mrf.mxu0
        %v6454 = vadd.f32 0.0, %v6453
        %v6455 = vpop.f32.mrf.mxu0
        %6456 = vmatprep.mubr.bf16.mxu0 0
        %6457 = vmatmul.mubr.bf16.gmra.mxu0 %v6329
        %v6458 = vpop.f32.mrf.mxu0
        %v6459 = vadd.f32 0.0, %v6458
        %v6460 = vpop.f32.mrf.mxu0
        %v6461 = vpop.f32.mrf.mxu0
        %v6462 = vadd.f32 0.0, %v6461
        %v6463 = vpop.f32.mrf.mxu0
        %6464 = vmatprep.mubr.bf16.mxu0 0
        %6465 = vmatmul.mubr.bf16.gmra.mxu0 %v6330
        %v6466 = vpop.f32.mrf.mxu0
        %v6467 = vadd.f32 0.0, %v6466
        %v6468 = vpop.f32.mrf.mxu0
        %v6469 = vpop.f32.mrf.mxu0
        %v6470 = vadd.f32 0.0, %v6469
        %v6471 = vpop.f32.mrf.mxu0
        %6472 = vmatprep.mubr.bf16.mxu0 0
        %6473 = vmatmul.mubr.bf16.gmra.mxu0 %v6331
        %v6474 = vpop.f32.mrf.mxu0
        %v6475 = vadd.f32 0.0, %v6474
        %v6476 = vpop.f32.mrf.mxu0
        %v6477 = vpop.f32.mrf.mxu0
        %v6478 = vadd.f32 0.0, %v6477
        %v6479 = vpop.f32.mrf.mxu0
        %6480 = vmatprep.mubr.bf16.mxu0 0
        %6481 = vmatmul.mubr.bf16.gmra.mxu0 %v6332
        %v6482 = vpop.f32.mrf.mxu0
        %v6483 = vadd.f32 0.0, %v6482
        %v6484 = vpop.f32.mrf.mxu0
        %v6485 = vpop.f32.mrf.mxu0
        %v6486 = vadd.f32 0.0, %v6485
        %v6487 = vpop.f32.mrf.mxu0
        %6488 = vmatprep.mubr.bf16.mxu0 0
        %6489 = vmatmul.mubr.bf16.gmra.mxu0 %v6333
        %v6490 = vpop.f32.mrf.mxu0
        %v6491 = vadd.f32 0.0, %v6490
        %v6492 = vpop.f32.mrf.mxu0
        %v6493 = vpop.f32.mrf.mxu0
        %v6494 = vadd.f32 0.0, %v6493
        %v6495 = vpop.f32.mrf.mxu0
        %6496 = vmatprep.mubr.bf16.mxu0 0
        %6497 = vmatmul.mubr.bf16.gmra.mxu0 %v6334
        %v6498 = vpop.f32.mrf.mxu0
        %v6499 = vadd.f32 0.0, %v6498
        %v6500 = vpop.f32.mrf.mxu0
        %v6501 = vpop.f32.mrf.mxu0
        %v6502 = vadd.f32 0.0, %v6501
        %v6503 = vpop.f32.mrf.mxu0
        %6504 = vmatprep.mubr.bf16.mxu0 0
        %6505 = vmatmul.mubr.bf16.gmra.mxu0 %v6335
        %v6506 = vpop.f32.mrf.mxu0
        %v6507 = vadd.f32 0.0, %v6506
        %v6508 = vpop.f32.mrf.mxu0
        %v6509 = vpop.f32.mrf.mxu0
        %v6510 = vadd.f32 0.0, %v6509
        %v6511 = vpop.f32.mrf.mxu0
        %6512 = vmatprep.mubr.bf16.mxu0 0
        %6513 = vmatmul.mubr.bf16.gmra.mxu0 %v6336
        %v6514 = vpop.f32.mrf.mxu0
        %v6515 = vadd.f32 0.0, %v6514
        %v6516 = vpop.f32.mrf.mxu0
        %v6517 = vpop.f32.mrf.mxu0
        %v6518 = vadd.f32 0.0, %v6517
        %v6519 = vpop.f32.mrf.mxu0
        %6520 = vmatprep.mubr.bf16.mxu0 0
        %6521 = vmatmul.mubr.bf16.gmra.mxu0 %v6337
        %v6522 = vpop.f32.mrf.mxu0
        %v6523 = vadd.f32 0.0, %v6522
        %v6524 = vpop.f32.mrf.mxu0
        %v6525 = vpop.f32.mrf.mxu0
        %v6526 = vadd.f32 0.0, %v6525
        %v6527 = vpop.f32.mrf.mxu0
        %6528 = vmatprep.mubr.bf16.mxu0 0
        %6529 = vmatmul.mubr.bf16.gmra.mxu0 %v6338
        %v6530 = vpop.f32.mrf.mxu0
        %v6531 = vadd.f32 0.0, %v6530
        %v6532 = vpop.f32.mrf.mxu0
        %v6533 = vpop.f32.mrf.mxu0
        %v6534 = vadd.f32 0.0, %v6533
        %v6535 = vpop.f32.mrf.mxu0
        %6536 = vmatprep.mubr.bf16.mxu0 0
        %6537 = vmatmul.mubr.bf16.gmra.mxu0 %v6339
        %v6538 = vpop.f32.mrf.mxu0
        %v6539 = vadd.f32 0.0, %v6538
        %v6540 = vpop.f32.mrf.mxu0
        %v6541 = vpop.f32.mrf.mxu0
        %v6542 = vadd.f32 0.0, %v6541
        %v6543 = vpop.f32.mrf.mxu0
        %6544 = vmatprep.mubr.bf16.mxu0 0
        %6545 = vmatmul.mubr.bf16.gmra.mxu0 %v6340
        %v6546 = vpop.f32.mrf.mxu0
        %v6547 = vadd.f32 0.0, %v6546
        %v6548 = vpop.f32.mrf.mxu0
        %v6549 = vpop.f32.mrf.mxu0
        %v6550 = vadd.f32 0.0, %v6549
        %v6551 = vpop.f32.mrf.mxu0
        %6552 = vmatprep.mubr.bf16.mxu0 0
        %6553 = vmatmul.mubr.bf16.gmra.mxu0 %v6341
        %v6554 = vpop.f32.mrf.mxu0
        %v6555 = vadd.f32 0.0, %v6554
        %v6556 = vpop.f32.mrf.mxu0
        %v6557 = vpop.f32.mrf.mxu0
        %v6558 = vadd.f32 0.0, %v6557
        %v6559 = vpop.f32.mrf.mxu0
        %6560 = vmatprep.mubr.bf16.mxu0 0
        %6561 = vmatmul.mubr.bf16.gmra.mxu0 %v6342
        %v6562 = vpop.f32.mrf.mxu0
        %v6563 = vadd.f32 0.0, %v6562
        %v6564 = vpop.f32.mrf.mxu0
        %v6565 = vpop.f32.mrf.mxu0
        %v6566 = vadd.f32 0.0, %v6565
        %v6567 = vpop.f32.mrf.mxu0
        %6568 = vdwg.mxu0
        %v6569 = vadd.f32 %v6103, %v6443
        %v6570 = vadd.f32 %v6104, %v6446
        %v6571 = vadd.f32 %v6105, %v6451
        %v6572 = vadd.f32 %v6106, %v6454
        %v6573 = vadd.f32 %v6107, %v6459
        %v6574 = vadd.f32 %v6108, %v6462
        %v6575 = vadd.f32 %v6109, %v6467
        %v6576 = vadd.f32 %v6110, %v6470
        %v6577 = vadd.f32 %v6111, %v6475
        %v6578 = vadd.f32 %v6112, %v6478
        %v6579 = vadd.f32 %v6113, %v6483
        %v6580 = vadd.f32 %v6114, %v6486
        %v6581 = vadd.f32 %v6115, %v6491
        %v6582 = vadd.f32 %v6116, %v6494
        %v6583 = vadd.f32 %v6117, %v6499
        %v6584 = vadd.f32 %v6118, %v6502
        %v6585 = vadd.f32 %v6119, %v6507
        %v6586 = vadd.f32 %v6120, %v6510
        %v6587 = vadd.f32 %v6121, %v6515
        %v6588 = vadd.f32 %v6122, %v6518
        %v6589 = vadd.f32 %v6123, %v6523
        %v6590 = vadd.f32 %v6124, %v6526
        %v6591 = vadd.f32 %v6125, %v6531
        %v6592 = vadd.f32 %v6126, %v6534
        %v6593 = vadd.f32 %v6127, %v6539
        %v6594 = vadd.f32 %v6128, %v6542
        %v6595 = vadd.f32 %v6129, %v6547
        %v6596 = vadd.f32 %v6130, %v6550
        %v6597 = vadd.f32 %v6131, %v6555
        %v6598 = vadd.f32 %v6132, %v6558
        %v6599 = vadd.f32 %v6133, %v6563
        %v6600 = vadd.f32 %v6134, %v6566
        %v6601 = vld [vmem:[#allocation2 + $0x18] sm:$0xff]
        %v6602 = vld [vmem:[#allocation2 + $0x20] sm:$0xff]
        %v6603 = vld [vmem:[#allocation2 + $0x28] sm:$0xff]
        %v6604 = vld [vmem:[#allocation2 + $0x30] sm:$0xff]
        %v6605 = vld [vmem:[#allocation2 + $0x38] sm:$0xff]
        %v6606 = vld [vmem:[#allocation2 + $0x40] sm:$0xff]
        %v6607 = vld [vmem:[#allocation2 + $0x48] sm:$0xff]
        %v6608 = vld [vmem:[#allocation2 + $0x50] sm:$0xff]
        %v6609 = vld [vmem:[#allocation2 + $0x58] sm:$0xff]
        %v6610 = vld [vmem:[#allocation2 + $0x60] sm:$0xff]
        %v6611 = vld [vmem:[#allocation2 + $0x68] sm:$0xff]
        %v6612 = vld [vmem:[#allocation2 + $0x70] sm:$0xff]
        %v6613 = vld [vmem:[#allocation2 + $0x78] sm:$0xff]
        %v6614 = vld [vmem:[#allocation2 + $0x80] sm:$0xff]
        %v6615 = vld [vmem:[#allocation2 + $0x88] sm:$0xff]
        %v6616 = vld [vmem:[#allocation2 + $0x90] sm:$0xff]
        %v6617 = vld [vmem:[#allocation2 + $0x98] sm:$0xff]
        %v6618 = vld [vmem:[#allocation2 + $0xa0] sm:$0xff]
        %v6619 = vld [vmem:[#allocation2 + $0xa8] sm:$0xff]
        %v6620 = vld [vmem:[#allocation2 + $0xb0] sm:$0xff]
        %v6621 = vld [vmem:[#allocation2 + $0xb8] sm:$0xff]
        %v6622 = vld [vmem:[#allocation2 + $0xc0] sm:$0xff]
        %v6623 = vld [vmem:[#allocation2 + $0xc8] sm:$0xff]
        %v6624 = vld [vmem:[#allocation2 + $0xd0] sm:$0xff]
        %v6625 = vld [vmem:[#allocation2 + $0xd8] sm:$0xff]
        %v6626 = vld [vmem:[#allocation2 + $0xe0] sm:$0xff]
        %v6627 = vld [vmem:[#allocation2 + $0xe8] sm:$0xff]
        %v6628 = vld [vmem:[#allocation2 + $0xf0] sm:$0xff]
        %v6629 = vld [vmem:[#allocation2 + $0xf8] sm:$0xff]
        %v6630 = vld [vmem:[#allocation2 + $0x100] sm:$0xff]
        %v6631 = vld [vmem:[#allocation2 + $0x108] sm:$0xff]
        %v6632 = vld [vmem:[#allocation2 + $0x110] sm:$0xff]
        %v6633 = vpack.c.bf16 %v6602, %v6601
        %v6634 = vpack.c.bf16 %v6604, %v6603
        %v6635 = vpack.c.bf16 %v6606, %v6605
        %v6636 = vpack.c.bf16 %v6608, %v6607
        %v6637 = vpack.c.bf16 %v6610, %v6609
        %v6638 = vpack.c.bf16 %v6612, %v6611
        %v6639 = vpack.c.bf16 %v6614, %v6613
        %v6640 = vpack.c.bf16 %v6616, %v6615
        %v6641 = vpack.c.bf16 %v6618, %v6617
        %v6642 = vpack.c.bf16 %v6620, %v6619
        %v6643 = vpack.c.bf16 %v6622, %v6621
        %v6644 = vpack.c.bf16 %v6624, %v6623
        %v6645 = vpack.c.bf16 %v6626, %v6625
        %v6646 = vpack.c.bf16 %v6628, %v6627
        %v6647 = vpack.c.bf16 %v6630, %v6629
        %v6648 = vpack.c.bf16 %v6632, %v6631
        %s6649 = scalar_lea.vmem [#allocation8], 256
        %v6650 = vld [vmem:[%s6649] sm:$0xf]
        %v6651 = vld [vmem:[%s6649 + $0x4] sm:$0xf]
        %v6652 = vld [vmem:[%s6649 + $0x8] sm:$0xf]
        %v6653 = vld [vmem:[%s6649 + $0xc] sm:$0xf]
        %v6654 = vld [vmem:[%s6649 + $0x10] sm:$0xf]
        %v6655 = vld [vmem:[%s6649 + $0x14] sm:$0xf]
        %v6656 = vld [vmem:[%s6649 + $0x18] sm:$0xf]
        %v6657 = vld [vmem:[%s6649 + $0x1c] sm:$0xf]
        %v6658 = vld [vmem:[%s6649 + $0x20] sm:$0xf]
        %v6659 = vld [vmem:[%s6649 + $0x24] sm:$0xf]
        %v6660 = vld [vmem:[%s6649 + $0x28] sm:$0xf]
        %v6661 = vld [vmem:[%s6649 + $0x2c] sm:$0xf]
        %v6662 = vld [vmem:[%s6649 + $0x30] sm:$0xf]
        %v6663 = vld [vmem:[%s6649 + $0x34] sm:$0xf]
        %v6664 = vld [vmem:[%s6649 + $0x38] sm:$0xf]
        %v6665 = vld [vmem:[%s6649 + $0x3c] sm:$0xf]
        %v6682 = vunpack.c.l.b16 %v6650
        %v6683 = vunpack.c.l.b16 %v6651
        %v6684 = vunpack.c.l.b16 %v6652
        %v6685 = vunpack.c.l.b16 %v6653
        %v6686 = vunpack.c.l.b16 %v6654
        %v6687 = vunpack.c.l.b16 %v6655
        %v6688 = vunpack.c.l.b16 %v6656
        %v6689 = vunpack.c.l.b16 %v6657
        %v6690 = vunpack.c.l.b16 %v6658
        %v6691 = vunpack.c.l.b16 %v6659
        %v6692 = vunpack.c.l.b16 %v6660
        %v6693 = vunpack.c.l.b16 %v6661
        %v6694 = vunpack.c.l.b16 %v6662
        %v6695 = vunpack.c.l.b16 %v6663
        %v6696 = vunpack.c.l.b16 %v6664
        %v6697 = vunpack.c.l.b16 %v6665
        %v6698 = vpack.c.b16 %v6683, %v6682
        %v6699 = vpack.c.b16 %v6685, %v6684
        %v6700 = vpack.c.b16 %v6687, %v6686
        %v6701 = vpack.c.b16 %v6689, %v6688
        %v6702 = vpack.c.b16 %v6691, %v6690
        %v6703 = vpack.c.b16 %v6693, %v6692
        %v6704 = vpack.c.b16 %v6695, %v6694
        %v6705 = vpack.c.b16 %v6697, %v6696
        %6714 = vmatprep.subr.bf16.mxu0 0
        %6715 = vmatpush1.bf16.msra.mxu0 %v6705
        %6716 = vmatprep.subr.bf16.mxu0 0
        %6717 = vmatpush1.bf16.msra.mxu0 %v6704
        %6718 = vmatprep.subr.bf16.mxu0 0
        %6719 = vmatpush1.bf16.msra.mxu0 %v6703
        %6720 = vmatprep.subr.bf16.mxu0 0
        %6721 = vmatpush1.bf16.msra.mxu0 %v6702
        %6722 = vmatprep.subr.bf16.mxu0 0
        %6723 = vmatpush1.bf16.msra.mxu0 %v6701
        %6724 = vmatprep.subr.bf16.mxu0 0
        %6725 = vmatpush1.bf16.msra.mxu0 %v6700
        %6726 = vmatprep.subr.bf16.mxu0 0
        %6727 = vmatpush1.bf16.msra.mxu0 %v6699
        %6728 = vmatprep.subr.bf16.mxu0 0
        %6729 = vmatpush1.bf16.msra.mxu0 %v6698
        %6730 = vmatprep.subr.bf16.mxu0 0
        %6731 = vmatpush2.bf16.msra.mxu0 0
        %6732 = vmatprep.subr.bf16.mxu0 0
        %6733 = vmatpush2.bf16.msra.mxu0 0
        %6734 = vmatprep.subr.bf16.mxu0 0
        %6735 = vmatpush2.bf16.msra.mxu0 0
        %6736 = vmatprep.subr.bf16.mxu0 0
        %6737 = vmatpush2.bf16.msra.mxu0 0
        %6738 = vmatprep.subr.bf16.mxu0 0
        %6739 = vmatpush2.bf16.msra.mxu0 0
        %6740 = vmatprep.subr.bf16.mxu0 0
        %6741 = vmatpush2.bf16.msra.mxu0 0
        %6742 = vmatprep.subr.bf16.mxu0 0
        %6743 = vmatpush2.bf16.msra.mxu0 0
        %6744 = vmatprep.subr.bf16.mxu0 0
        %6745 = vmatpush2.bf16.msra.mxu0 0
        %6746 = vmatprep.mubr.bf16.mxu0 0
        %6747 = vmatmul.mubr.bf16.gmra.mxu0 %v6633
        %v6748 = vpop.f32.mrf.mxu0
        %v6749 = vadd.f32 0.0, %v6748
        %v6750 = vpop.f32.mrf.mxu0
        %v6751 = vpop.f32.mrf.mxu0
        %v6752 = vadd.f32 0.0, %v6751
        %v6753 = vpop.f32.mrf.mxu0
        %6754 = vmatprep.mubr.bf16.mxu0 0
        %6755 = vmatmul.mubr.bf16.gmra.mxu0 %v6634
        %v6756 = vpop.f32.mrf.mxu0
        %v6757 = vadd.f32 0.0, %v6756
        %v6758 = vpop.f32.mrf.mxu0
        %v6759 = vpop.f32.mrf.mxu0
        %v6760 = vadd.f32 0.0, %v6759
        %v6761 = vpop.f32.mrf.mxu0
        %6762 = vmatprep.mubr.bf16.mxu0 0
        %6763 = vmatmul.mubr.bf16.gmra.mxu0 %v6635
        %v6764 = vpop.f32.mrf.mxu0
        %v6765 = vadd.f32 0.0, %v6764
        %v6766 = vpop.f32.mrf.mxu0
        %v6767 = vpop.f32.mrf.mxu0
        %v6768 = vadd.f32 0.0, %v6767
        %v6769 = vpop.f32.mrf.mxu0
        %6770 = vmatprep.mubr.bf16.mxu0 0
        %6771 = vmatmul.mubr.bf16.gmra.mxu0 %v6636
        %v6772 = vpop.f32.mrf.mxu0
        %v6773 = vadd.f32 0.0, %v6772
        %v6774 = vpop.f32.mrf.mxu0
        %v6775 = vpop.f32.mrf.mxu0
        %v6776 = vadd.f32 0.0, %v6775
        %v6777 = vpop.f32.mrf.mxu0
        %6778 = vmatprep.mubr.bf16.mxu0 0
        %6779 = vmatmul.mubr.bf16.gmra.mxu0 %v6637
        %v6780 = vpop.f32.mrf.mxu0
        %v6781 = vadd.f32 0.0, %v6780
        %v6782 = vpop.f32.mrf.mxu0
        %v6783 = vpop.f32.mrf.mxu0
        %v6784 = vadd.f32 0.0, %v6783
        %v6785 = vpop.f32.mrf.mxu0
        %6786 = vmatprep.mubr.bf16.mxu0 0
        %6787 = vmatmul.mubr.bf16.gmra.mxu0 %v6638
        %v6788 = vpop.f32.mrf.mxu0
        %v6789 = vadd.f32 0.0, %v6788
        %v6790 = vpop.f32.mrf.mxu0
        %v6791 = vpop.f32.mrf.mxu0
        %v6792 = vadd.f32 0.0, %v6791
        %v6793 = vpop.f32.mrf.mxu0
        %6794 = vmatprep.mubr.bf16.mxu0 0
        %6795 = vmatmul.mubr.bf16.gmra.mxu0 %v6639
        %v6796 = vpop.f32.mrf.mxu0
        %v6797 = vadd.f32 0.0, %v6796
        %v6798 = vpop.f32.mrf.mxu0
        %v6799 = vpop.f32.mrf.mxu0
        %v6800 = vadd.f32 0.0, %v6799
        %v6801 = vpop.f32.mrf.mxu0
        %6802 = vmatprep.mubr.bf16.mxu0 0
        %6803 = vmatmul.mubr.bf16.gmra.mxu0 %v6640
        %v6804 = vpop.f32.mrf.mxu0
        %v6805 = vadd.f32 0.0, %v6804
        %v6806 = vpop.f32.mrf.mxu0
        %v6807 = vpop.f32.mrf.mxu0
        %v6808 = vadd.f32 0.0, %v6807
        %v6809 = vpop.f32.mrf.mxu0
        %6810 = vmatprep.mubr.bf16.mxu0 0
        %6811 = vmatmul.mubr.bf16.gmra.mxu0 %v6641
        %v6812 = vpop.f32.mrf.mxu0
        %v6813 = vadd.f32 0.0, %v6812
        %v6814 = vpop.f32.mrf.mxu0
        %v6815 = vpop.f32.mrf.mxu0
        %v6816 = vadd.f32 0.0, %v6815
        %v6817 = vpop.f32.mrf.mxu0
        %6818 = vmatprep.mubr.bf16.mxu0 0
        %6819 = vmatmul.mubr.bf16.gmra.mxu0 %v6642
        %v6820 = vpop.f32.mrf.mxu0
        %v6821 = vadd.f32 0.0, %v6820
        %v6822 = vpop.f32.mrf.mxu0
        %v6823 = vpop.f32.mrf.mxu0
        %v6824 = vadd.f32 0.0, %v6823
        %v6825 = vpop.f32.mrf.mxu0
        %6826 = vmatprep.mubr.bf16.mxu0 0
        %6827 = vmatmul.mubr.bf16.gmra.mxu0 %v6643
        %v6828 = vpop.f32.mrf.mxu0
        %v6829 = vadd.f32 0.0, %v6828
        %v6830 = vpop.f32.mrf.mxu0
        %v6831 = vpop.f32.mrf.mxu0
        %v6832 = vadd.f32 0.0, %v6831
        %v6833 = vpop.f32.mrf.mxu0
        %6834 = vmatprep.mubr.bf16.mxu0 0
        %6835 = vmatmul.mubr.bf16.gmra.mxu0 %v6644
        %v6836 = vpop.f32.mrf.mxu0
        %v6837 = vadd.f32 0.0, %v6836
        %v6838 = vpop.f32.mrf.mxu0
        %v6839 = vpop.f32.mrf.mxu0
        %v6840 = vadd.f32 0.0, %v6839
        %v6841 = vpop.f32.mrf.mxu0
        %6842 = vmatprep.mubr.bf16.mxu0 0
        %6843 = vmatmul.mubr.bf16.gmra.mxu0 %v6645
        %v6844 = vpop.f32.mrf.mxu0
        %v6845 = vadd.f32 0.0, %v6844
        %v6846 = vpop.f32.mrf.mxu0
        %v6847 = vpop.f32.mrf.mxu0
        %v6848 = vadd.f32 0.0, %v6847
        %v6849 = vpop.f32.mrf.mxu0
        %6850 = vmatprep.mubr.bf16.mxu0 0
        %6851 = vmatmul.mubr.bf16.gmra.mxu0 %v6646
        %v6852 = vpop.f32.mrf.mxu0
        %v6853 = vadd.f32 0.0, %v6852
        %v6854 = vpop.f32.mrf.mxu0
        %v6855 = vpop.f32.mrf.mxu0
        %v6856 = vadd.f32 0.0, %v6855
        %v6857 = vpop.f32.mrf.mxu0
        %6858 = vmatprep.mubr.bf16.mxu0 0
        %6859 = vmatmul.mubr.bf16.gmra.mxu0 %v6647
        %v6860 = vpop.f32.mrf.mxu0
        %v6861 = vadd.f32 0.0, %v6860
        %v6862 = vpop.f32.mrf.mxu0
        %v6863 = vpop.f32.mrf.mxu0
        %v6864 = vadd.f32 0.0, %v6863
        %v6865 = vpop.f32.mrf.mxu0
        %6866 = vmatprep.mubr.bf16.mxu0 0
        %6867 = vmatmul.mubr.bf16.gmra.mxu0 %v6648
        %v6868 = vpop.f32.mrf.mxu0
        %v6869 = vadd.f32 0.0, %v6868
        %v6870 = vpop.f32.mrf.mxu0
        %v6871 = vpop.f32.mrf.mxu0
        %v6872 = vadd.f32 0.0, %v6871
        %v6873 = vpop.f32.mrf.mxu0
        %6874 = vdwg.mxu0
        %v6875 = vadd.f32 %v6569, %v6749
        %v6876 = vadd.f32 %v6570, %v6752
        %v6877 = vadd.f32 %v6571, %v6757
        %v6878 = vadd.f32 %v6572, %v6760
        %v6879 = vadd.f32 %v6573, %v6765
        %v6880 = vadd.f32 %v6574, %v6768
        %v6881 = vadd.f32 %v6575, %v6773
        %v6882 = vadd.f32 %v6576, %v6776
        %v6883 = vadd.f32 %v6577, %v6781
        %v6884 = vadd.f32 %v6578, %v6784
        %v6885 = vadd.f32 %v6579, %v6789
        %v6886 = vadd.f32 %v6580, %v6792
        %v6887 = vadd.f32 %v6581, %v6797
        %v6888 = vadd.f32 %v6582, %v6800
        %v6889 = vadd.f32 %v6583, %v6805
        %v6890 = vadd.f32 %v6584, %v6808
        %v6891 = vadd.f32 %v6585, %v6813
        %v6892 = vadd.f32 %v6586, %v6816
        %v6893 = vadd.f32 %v6587, %v6821
        %v6894 = vadd.f32 %v6588, %v6824
        %v6895 = vadd.f32 %v6589, %v6829
        %v6896 = vadd.f32 %v6590, %v6832
        %v6897 = vadd.f32 %v6591, %v6837
        %v6898 = vadd.f32 %v6592, %v6840
        %v6899 = vadd.f32 %v6593, %v6845
        %v6900 = vadd.f32 %v6594, %v6848
        %v6901 = vadd.f32 %v6595, %v6853
        %v6902 = vadd.f32 %v6596, %v6856
        %v6903 = vadd.f32 %v6597, %v6861
        %v6904 = vadd.f32 %v6598, %v6864
        %v6905 = vadd.f32 %v6599, %v6869
        %v6906 = vadd.f32 %v6600, %v6872
        %v6907 = vld [vmem:[#allocation2 + $0x19] sm:$0xff]
        %v6908 = vld [vmem:[#allocation2 + $0x21] sm:$0xff]
        %v6909 = vld [vmem:[#allocation2 + $0x29] sm:$0xff]
        %v6910 = vld [vmem:[#allocation2 + $0x31] sm:$0xff]
        %v6911 = vld [vmem:[#allocation2 + $0x39] sm:$0xff]
        %v6912 = vld [vmem:[#allocation2 + $0x41] sm:$0xff]
        %v6913 = vld [vmem:[#allocation2 + $0x49] sm:$0xff]
        %v6914 = vld [vmem:[#allocation2 + $0x51] sm:$0xff]
        %v6915 = vld [vmem:[#allocation2 + $0x59] sm:$0xff]
        %v6916 = vld [vmem:[#allocation2 + $0x61] sm:$0xff]
        %v6917 = vld [vmem:[#allocation2 + $0x69] sm:$0xff]
        %v6918 = vld [vmem:[#allocation2 + $0x71] sm:$0xff]
        %v6919 = vld [vmem:[#allocation2 + $0x79] sm:$0xff]
        %v6920 = vld [vmem:[#allocation2 + $0x81] sm:$0xff]
        %v6921 = vld [vmem:[#allocation2 + $0x89] sm:$0xff]
        %v6922 = vld [vmem:[#allocation2 + $0x91] sm:$0xff]
        %v6923 = vld [vmem:[#allocation2 + $0x99] sm:$0xff]
        %v6924 = vld [vmem:[#allocation2 + $0xa1] sm:$0xff]
        %v6925 = vld [vmem:[#allocation2 + $0xa9] sm:$0xff]
        %v6926 = vld [vmem:[#allocation2 + $0xb1] sm:$0xff]
        %v6927 = vld [vmem:[#allocation2 + $0xb9] sm:$0xff]
        %v6928 = vld [vmem:[#allocation2 + $0xc1] sm:$0xff]
        %v6929 = vld [vmem:[#allocation2 + $0xc9] sm:$0xff]
        %v6930 = vld [vmem:[#allocation2 + $0xd1] sm:$0xff]
        %v6931 = vld [vmem:[#allocation2 + $0xd9] sm:$0xff]
        %v6932 = vld [vmem:[#allocation2 + $0xe1] sm:$0xff]
        %v6933 = vld [vmem:[#allocation2 + $0xe9] sm:$0xff]
        %v6934 = vld [vmem:[#allocation2 + $0xf1] sm:$0xff]
        %v6935 = vld [vmem:[#allocation2 + $0xf9] sm:$0xff]
        %v6936 = vld [vmem:[#allocation2 + $0x101] sm:$0xff]
        %v6937 = vld [vmem:[#allocation2 + $0x109] sm:$0xff]
        %v6938 = vld [vmem:[#allocation2 + $0x111] sm:$0xff]
        %6939 = vset.pattern.permute.xlu0 5
        %6940 = vperm.xlu0 %6939, %v4930
        %v6941 = vpop.permute.xlu0 %6940
        %6943 = vset.pattern.permute.xlu0 5
        %6944 = vperm.xlu0 %6943, %v4931
        %v6945 = vpop.permute.xlu0 %6944
        %6947 = vset.pattern.permute.xlu0 5
        %6948 = vperm.xlu0 %6947, %v4932
        %v6949 = vpop.permute.xlu0 %6948
        %6951 = vset.pattern.permute.xlu0 5
        %6952 = vperm.xlu0 %6951, %v4933
        %v6953 = vpop.permute.xlu0 %6952
        %6955 = vset.pattern.permute.xlu0 5
        %6956 = vperm.xlu0 %6955, %v4934
        %v6957 = vpop.permute.xlu0 %6956
        %6959 = vset.pattern.permute.xlu0 5
        %6960 = vperm.xlu0 %6959, %v4935
        %v6961 = vpop.permute.xlu0 %6960
        %6963 = vset.pattern.permute.xlu0 5
        %6964 = vperm.xlu0 %6963, %v4936
        %v6965 = vpop.permute.xlu0 %6964
        %6967 = vset.pattern.permute.xlu0 5
        %6968 = vperm.xlu0 %6967, %v4937
        %v6969 = vpop.permute.xlu0 %6968
        %6971 = vset.pattern.permute.xlu0 5
        %6972 = vperm.xlu0 %6971, %v4938
        %v6973 = vpop.permute.xlu0 %6972
        %6975 = vset.pattern.permute.xlu0 5
        %6976 = vperm.xlu0 %6975, %v4939
        %v6977 = vpop.permute.xlu0 %6976
        %6979 = vset.pattern.permute.xlu0 5
        %6980 = vperm.xlu0 %6979, %v4940
        %v6981 = vpop.permute.xlu0 %6980
        %6983 = vset.pattern.permute.xlu0 5
        %6984 = vperm.xlu0 %6983, %v4941
        %v6985 = vpop.permute.xlu0 %6984
        %6987 = vset.pattern.permute.xlu0 5
        %6988 = vperm.xlu0 %6987, %v4942
        %v6989 = vpop.permute.xlu0 %6988
        %6991 = vset.pattern.permute.xlu0 5
        %6992 = vperm.xlu0 %6991, %v4943
        %v6993 = vpop.permute.xlu0 %6992
        %6995 = vset.pattern.permute.xlu0 5
        %6996 = vperm.xlu0 %6995, %v4944
        %v6997 = vpop.permute.xlu0 %6996
        %6999 = vset.pattern.permute.xlu0 5
        %7000 = vperm.xlu0 %6999, %v4945
        %v7001 = vpop.permute.xlu0 %7000
        %7003 = vset.pattern.permute.xlu0 5
        %7004 = vperm.xlu0 %7003, %v4946
        %v7005 = vpop.permute.xlu0 %7004
        %7007 = vset.pattern.permute.xlu0 5
        %7008 = vperm.xlu0 %7007, %v4947
        %v7009 = vpop.permute.xlu0 %7008
        %7011 = vset.pattern.permute.xlu0 5
        %7012 = vperm.xlu0 %7011, %v4948
        %v7013 = vpop.permute.xlu0 %7012
        %7015 = vset.pattern.permute.xlu0 5
        %7016 = vperm.xlu0 %7015, %v4949
        %v7017 = vpop.permute.xlu0 %7016
        %7019 = vset.pattern.permute.xlu0 5
        %7020 = vperm.xlu0 %7019, %v4950
        %v7021 = vpop.permute.xlu0 %7020
        %7023 = vset.pattern.permute.xlu0 5
        %7024 = vperm.xlu0 %7023, %v4951
        %v7025 = vpop.permute.xlu0 %7024
        %7027 = vset.pattern.permute.xlu0 5
        %7028 = vperm.xlu0 %7027, %v4952
        %v7029 = vpop.permute.xlu0 %7028
        %7031 = vset.pattern.permute.xlu0 5
        %7032 = vperm.xlu0 %7031, %v4953
        %v7033 = vpop.permute.xlu0 %7032
        %7035 = vset.pattern.permute.xlu0 5
        %7036 = vperm.xlu0 %7035, %v4954
        %v7037 = vpop.permute.xlu0 %7036
        %7039 = vset.pattern.permute.xlu0 5
        %7040 = vperm.xlu0 %7039, %v4955
        %v7041 = vpop.permute.xlu0 %7040
        %7043 = vset.pattern.permute.xlu0 5
        %7044 = vperm.xlu0 %7043, %v4956
        %v7045 = vpop.permute.xlu0 %7044
        %7047 = vset.pattern.permute.xlu0 5
        %7048 = vperm.xlu0 %7047, %v4957
        %v7049 = vpop.permute.xlu0 %7048
        %7051 = vset.pattern.permute.xlu0 5
        %7052 = vperm.xlu0 %7051, %v4958
        %v7053 = vpop.permute.xlu0 %7052
        %7055 = vset.pattern.permute.xlu0 5
        %7056 = vperm.xlu0 %7055, %v4959
        %v7057 = vpop.permute.xlu0 %7056
        %7059 = vset.pattern.permute.xlu0 5
        %7060 = vperm.xlu0 %7059, %v4960
        %v7061 = vpop.permute.xlu0 %7060
        %7063 = vset.pattern.permute.xlu0 5
        %7064 = vperm.xlu0 %7063, %v4961
        %v7065 = vpop.permute.xlu0 %7064
        %v7067 = vmul.f32 %v6907, %v6941
        %v7068 = vmul.f32 %v6908, %v6945
        %v7069 = vmul.f32 %v6909, %v6949
        %v7070 = vmul.f32 %v6910, %v6953
        %v7071 = vmul.f32 %v6911, %v6957
        %v7072 = vmul.f32 %v6912, %v6961
        %v7073 = vmul.f32 %v6913, %v6965
        %v7074 = vmul.f32 %v6914, %v6969
        %v7075 = vmul.f32 %v6915, %v6973
        %v7076 = vmul.f32 %v6916, %v6977
        %v7077 = vmul.f32 %v6917, %v6981
        %v7078 = vmul.f32 %v6918, %v6985
        %v7079 = vmul.f32 %v6919, %v6989
        %v7080 = vmul.f32 %v6920, %v6993
        %v7081 = vmul.f32 %v6921, %v6997
        %v7082 = vmul.f32 %v6922, %v7001
        %v7083 = vmul.f32 %v6923, %v7005
        %v7084 = vmul.f32 %v6924, %v7009
        %v7085 = vmul.f32 %v6925, %v7013
        %v7086 = vmul.f32 %v6926, %v7017
        %v7087 = vmul.f32 %v6927, %v7021
        %v7088 = vmul.f32 %v6928, %v7025
        %v7089 = vmul.f32 %v6929, %v7029
        %v7090 = vmul.f32 %v6930, %v7033
        %v7091 = vmul.f32 %v6931, %v7037
        %v7092 = vmul.f32 %v6932, %v7041
        %v7093 = vmul.f32 %v6933, %v7045
        %v7094 = vmul.f32 %v6934, %v7049
        %v7095 = vmul.f32 %v6935, %v7053
        %v7096 = vmul.f32 %v6936, %v7057
        %v7097 = vmul.f32 %v6937, %v7061
        %v7098 = vmul.f32 %v6938, %v7065
        %v7099 = vpack.c.bf16 %v7068, %v7067
        %v7100 = vpack.c.bf16 %v7070, %v7069
        %v7101 = vpack.c.bf16 %v7072, %v7071
        %v7102 = vpack.c.bf16 %v7074, %v7073
        %v7103 = vpack.c.bf16 %v7076, %v7075
        %v7104 = vpack.c.bf16 %v7078, %v7077
        %v7105 = vpack.c.bf16 %v7080, %v7079
        %v7106 = vpack.c.bf16 %v7082, %v7081
        %v7107 = vpack.c.bf16 %v7084, %v7083
        %v7108 = vpack.c.bf16 %v7086, %v7085
        %v7109 = vpack.c.bf16 %v7088, %v7087
        %v7110 = vpack.c.bf16 %v7090, %v7089
        %v7111 = vpack.c.bf16 %v7092, %v7091
        %v7112 = vpack.c.bf16 %v7094, %v7093
        %v7113 = vpack.c.bf16 %v7096, %v7095
        %v7114 = vpack.c.bf16 %v7098, %v7097
        %s7115 = scalar_lea.vmem [#allocation8], 320
        %v7116 = vld [vmem:[%s7115] sm:$0xf]
        %v7117 = vld [vmem:[%s7115 + $0x4] sm:$0xf]
        %v7118 = vld [vmem:[%s7115 + $0x8] sm:$0xf]
        %v7119 = vld [vmem:[%s7115 + $0xc] sm:$0xf]
        %v7120 = vld [vmem:[%s7115 + $0x10] sm:$0xf]
        %v7121 = vld [vmem:[%s7115 + $0x14] sm:$0xf]
        %v7122 = vld [vmem:[%s7115 + $0x18] sm:$0xf]
        %v7123 = vld [vmem:[%s7115 + $0x1c] sm:$0xf]
        %v7124 = vld [vmem:[%s7115 + $0x20] sm:$0xf]
        %v7125 = vld [vmem:[%s7115 + $0x24] sm:$0xf]
        %v7126 = vld [vmem:[%s7115 + $0x28] sm:$0xf]
        %v7127 = vld [vmem:[%s7115 + $0x2c] sm:$0xf]
        %v7128 = vld [vmem:[%s7115 + $0x30] sm:$0xf]
        %v7129 = vld [vmem:[%s7115 + $0x34] sm:$0xf]
        %v7130 = vld [vmem:[%s7115 + $0x38] sm:$0xf]
        %v7131 = vld [vmem:[%s7115 + $0x3c] sm:$0xf]
        %v7148 = vunpack.c.l.b16 %v7116
        %v7149 = vunpack.c.l.b16 %v7117
        %v7150 = vunpack.c.l.b16 %v7118
        %v7151 = vunpack.c.l.b16 %v7119
        %v7152 = vunpack.c.l.b16 %v7120
        %v7153 = vunpack.c.l.b16 %v7121
        %v7154 = vunpack.c.l.b16 %v7122
        %v7155 = vunpack.c.l.b16 %v7123
        %v7156 = vunpack.c.l.b16 %v7124
        %v7157 = vunpack.c.l.b16 %v7125
        %v7158 = vunpack.c.l.b16 %v7126
        %v7159 = vunpack.c.l.b16 %v7127
        %v7160 = vunpack.c.l.b16 %v7128
        %v7161 = vunpack.c.l.b16 %v7129
        %v7162 = vunpack.c.l.b16 %v7130
        %v7163 = vunpack.c.l.b16 %v7131
        %v7164 = vpack.c.b16 %v7149, %v7148
        %v7165 = vpack.c.b16 %v7151, %v7150
        %v7166 = vpack.c.b16 %v7153, %v7152
        %v7167 = vpack.c.b16 %v7155, %v7154
        %v7168 = vpack.c.b16 %v7157, %v7156
        %v7169 = vpack.c.b16 %v7159, %v7158
        %v7170 = vpack.c.b16 %v7161, %v7160
        %v7171 = vpack.c.b16 %v7163, %v7162
        %7180 = vmatprep.subr.bf16.mxu0 0
        %7181 = vmatpush1.bf16.msra.mxu0 %v7171
        %7182 = vmatprep.subr.bf16.mxu0 0
        %7183 = vmatpush1.bf16.msra.mxu0 %v7170
        %7184 = vmatprep.subr.bf16.mxu0 0
        %7185 = vmatpush1.bf16.msra.mxu0 %v7169
        %7186 = vmatprep.subr.bf16.mxu0 0
        %7187 = vmatpush1.bf16.msra.mxu0 %v7168
        %7188 = vmatprep.subr.bf16.mxu0 0
        %7189 = vmatpush1.bf16.msra.mxu0 %v7167
        %7190 = vmatprep.subr.bf16.mxu0 0
        %7191 = vmatpush1.bf16.msra.mxu0 %v7166
        %7192 = vmatprep.subr.bf16.mxu0 0
        %7193 = vmatpush1.bf16.msra.mxu0 %v7165
        %7194 = vmatprep.subr.bf16.mxu0 0
        %7195 = vmatpush1.bf16.msra.mxu0 %v7164
        %7196 = vmatprep.subr.bf16.mxu0 0
        %7197 = vmatpush2.bf16.msra.mxu0 0
        %7198 = vmatprep.subr.bf16.mxu0 0
        %7199 = vmatpush2.bf16.msra.mxu0 0
        %7200 = vmatprep.subr.bf16.mxu0 0
        %7201 = vmatpush2.bf16.msra.mxu0 0
        %7202 = vmatprep.subr.bf16.mxu0 0
        %7203 = vmatpush2.bf16.msra.mxu0 0
        %7204 = vmatprep.subr.bf16.mxu0 0
        %7205 = vmatpush2.bf16.msra.mxu0 0
        %7206 = vmatprep.subr.bf16.mxu0 0
        %7207 = vmatpush2.bf16.msra.mxu0 0
        %7208 = vmatprep.subr.bf16.mxu0 0
        %7209 = vmatpush2.bf16.msra.mxu0 0
        %7210 = vmatprep.subr.bf16.mxu0 0
        %7211 = vmatpush2.bf16.msra.mxu0 0
        %7212 = vmatprep.mubr.bf16.mxu0 0
        %7213 = vmatmul.mubr.bf16.gmra.mxu0 %v7099
        %v7214 = vpop.f32.mrf.mxu0
        %v7215 = vadd.f32 0.0, %v7214
        %v7216 = vpop.f32.mrf.mxu0
        %v7217 = vpop.f32.mrf.mxu0
        %v7218 = vadd.f32 0.0, %v7217
        %v7219 = vpop.f32.mrf.mxu0
        %7220 = vmatprep.mubr.bf16.mxu0 0
        %7221 = vmatmul.mubr.bf16.gmra.mxu0 %v7100
        %v7222 = vpop.f32.mrf.mxu0
        %v7223 = vadd.f32 0.0, %v7222
        %v7224 = vpop.f32.mrf.mxu0
        %v7225 = vpop.f32.mrf.mxu0
        %v7226 = vadd.f32 0.0, %v7225
        %v7227 = vpop.f32.mrf.mxu0
        %7228 = vmatprep.mubr.bf16.mxu0 0
        %7229 = vmatmul.mubr.bf16.gmra.mxu0 %v7101
        %v7230 = vpop.f32.mrf.mxu0
        %v7231 = vadd.f32 0.0, %v7230
        %v7232 = vpop.f32.mrf.mxu0
        %v7233 = vpop.f32.mrf.mxu0
        %v7234 = vadd.f32 0.0, %v7233
        %v7235 = vpop.f32.mrf.mxu0
        %7236 = vmatprep.mubr.bf16.mxu0 0
        %7237 = vmatmul.mubr.bf16.gmra.mxu0 %v7102
        %v7238 = vpop.f32.mrf.mxu0
        %v7239 = vadd.f32 0.0, %v7238
        %v7240 = vpop.f32.mrf.mxu0
        %v7241 = vpop.f32.mrf.mxu0
        %v7242 = vadd.f32 0.0, %v7241
        %v7243 = vpop.f32.mrf.mxu0
        %7244 = vmatprep.mubr.bf16.mxu0 0
        %7245 = vmatmul.mubr.bf16.gmra.mxu0 %v7103
        %v7246 = vpop.f32.mrf.mxu0
        %v7247 = vadd.f32 0.0, %v7246
        %v7248 = vpop.f32.mrf.mxu0
        %v7249 = vpop.f32.mrf.mxu0
        %v7250 = vadd.f32 0.0, %v7249
        %v7251 = vpop.f32.mrf.mxu0
        %7252 = vmatprep.mubr.bf16.mxu0 0
        %7253 = vmatmul.mubr.bf16.gmra.mxu0 %v7104
        %v7254 = vpop.f32.mrf.mxu0
        %v7255 = vadd.f32 0.0, %v7254
        %v7256 = vpop.f32.mrf.mxu0
        %v7257 = vpop.f32.mrf.mxu0
        %v7258 = vadd.f32 0.0, %v7257
        %v7259 = vpop.f32.mrf.mxu0
        %7260 = vmatprep.mubr.bf16.mxu0 0
        %7261 = vmatmul.mubr.bf16.gmra.mxu0 %v7105
        %v7262 = vpop.f32.mrf.mxu0
        %v7263 = vadd.f32 0.0, %v7262
        %v7264 = vpop.f32.mrf.mxu0
        %v7265 = vpop.f32.mrf.mxu0
        %v7266 = vadd.f32 0.0, %v7265
        %v7267 = vpop.f32.mrf.mxu0
        %7268 = vmatprep.mubr.bf16.mxu0 0
        %7269 = vmatmul.mubr.bf16.gmra.mxu0 %v7106
        %v7270 = vpop.f32.mrf.mxu0
        %v7271 = vadd.f32 0.0, %v7270
        %v7272 = vpop.f32.mrf.mxu0
        %v7273 = vpop.f32.mrf.mxu0
        %v7274 = vadd.f32 0.0, %v7273
        %v7275 = vpop.f32.mrf.mxu0
        %7276 = vmatprep.mubr.bf16.mxu0 0
        %7277 = vmatmul.mubr.bf16.gmra.mxu0 %v7107
        %v7278 = vpop.f32.mrf.mxu0
        %v7279 = vadd.f32 0.0, %v7278
        %v7280 = vpop.f32.mrf.mxu0
        %v7281 = vpop.f32.mrf.mxu0
        %v7282 = vadd.f32 0.0, %v7281
        %v7283 = vpop.f32.mrf.mxu0
        %7284 = vmatprep.mubr.bf16.mxu0 0
        %7285 = vmatmul.mubr.bf16.gmra.mxu0 %v7108
        %v7286 = vpop.f32.mrf.mxu0
        %v7287 = vadd.f32 0.0, %v7286
        %v7288 = vpop.f32.mrf.mxu0
        %v7289 = vpop.f32.mrf.mxu0
        %v7290 = vadd.f32 0.0, %v7289
        %v7291 = vpop.f32.mrf.mxu0
        %7292 = vmatprep.mubr.bf16.mxu0 0
        %7293 = vmatmul.mubr.bf16.gmra.mxu0 %v7109
        %v7294 = vpop.f32.mrf.mxu0
        %v7295 = vadd.f32 0.0, %v7294
        %v7296 = vpop.f32.mrf.mxu0
        %v7297 = vpop.f32.mrf.mxu0
        %v7298 = vadd.f32 0.0, %v7297
        %v7299 = vpop.f32.mrf.mxu0
        %7300 = vmatprep.mubr.bf16.mxu0 0
        %7301 = vmatmul.mubr.bf16.gmra.mxu0 %v7110
        %v7302 = vpop.f32.mrf.mxu0
        %v7303 = vadd.f32 0.0, %v7302
        %v7304 = vpop.f32.mrf.mxu0
        %v7305 = vpop.f32.mrf.mxu0
        %v7306 = vadd.f32 0.0, %v7305
        %v7307 = vpop.f32.mrf.mxu0
        %7308 = vmatprep.mubr.bf16.mxu0 0
        %7309 = vmatmul.mubr.bf16.gmra.mxu0 %v7111
        %v7310 = vpop.f32.mrf.mxu0
        %v7311 = vadd.f32 0.0, %v7310
        %v7312 = vpop.f32.mrf.mxu0
        %v7313 = vpop.f32.mrf.mxu0
        %v7314 = vadd.f32 0.0, %v7313
        %v7315 = vpop.f32.mrf.mxu0
        %7316 = vmatprep.mubr.bf16.mxu0 0
        %7317 = vmatmul.mubr.bf16.gmra.mxu0 %v7112
        %v7318 = vpop.f32.mrf.mxu0
        %v7319 = vadd.f32 0.0, %v7318
        %v7320 = vpop.f32.mrf.mxu0
        %v7321 = vpop.f32.mrf.mxu0
        %v7322 = vadd.f32 0.0, %v7321
        %v7323 = vpop.f32.mrf.mxu0
        %7324 = vmatprep.mubr.bf16.mxu0 0
        %7325 = vmatmul.mubr.bf16.gmra.mxu0 %v7113
        %v7326 = vpop.f32.mrf.mxu0
        %v7327 = vadd.f32 0.0, %v7326
        %v7328 = vpop.f32.mrf.mxu0
        %v7329 = vpop.f32.mrf.mxu0
        %v7330 = vadd.f32 0.0, %v7329
        %v7331 = vpop.f32.mrf.mxu0
        %7332 = vmatprep.mubr.bf16.mxu0 0
        %7333 = vmatmul.mubr.bf16.gmra.mxu0 %v7114
        %v7334 = vpop.f32.mrf.mxu0
        %v7335 = vadd.f32 0.0, %v7334
        %v7336 = vpop.f32.mrf.mxu0
        %v7337 = vpop.f32.mrf.mxu0
        %v7338 = vadd.f32 0.0, %v7337
        %v7339 = vpop.f32.mrf.mxu0
        %7340 = vdwg.mxu0
        %v7341 = vadd.f32 %v6875, %v7215
        %v7342 = vadd.f32 %v6876, %v7218
        %v7343 = vadd.f32 %v6877, %v7223
        %v7344 = vadd.f32 %v6878, %v7226
        %v7345 = vadd.f32 %v6879, %v7231
        %v7346 = vadd.f32 %v6880, %v7234
        %v7347 = vadd.f32 %v6881, %v7239
        %v7348 = vadd.f32 %v6882, %v7242
        %v7349 = vadd.f32 %v6883, %v7247
        %v7350 = vadd.f32 %v6884, %v7250
        %v7351 = vadd.f32 %v6885, %v7255
        %v7352 = vadd.f32 %v6886, %v7258
        %v7353 = vadd.f32 %v6887, %v7263
        %v7354 = vadd.f32 %v6888, %v7266
        %v7355 = vadd.f32 %v6889, %v7271
        %v7356 = vadd.f32 %v6890, %v7274
        %v7357 = vadd.f32 %v6891, %v7279
        %v7358 = vadd.f32 %v6892, %v7282
        %v7359 = vadd.f32 %v6893, %v7287
        %v7360 = vadd.f32 %v6894, %v7290
        %v7361 = vadd.f32 %v6895, %v7295
        %v7362 = vadd.f32 %v6896, %v7298
        %v7363 = vadd.f32 %v6897, %v7303
        %v7364 = vadd.f32 %v6898, %v7306
        %v7365 = vadd.f32 %v6899, %v7311
        %v7366 = vadd.f32 %v6900, %v7314
        %v7367 = vadd.f32 %v6901, %v7319
        %v7368 = vadd.f32 %v6902, %v7322
        %v7369 = vadd.f32 %v6903, %v7327
        %v7370 = vadd.f32 %v6904, %v7330
        %v7371 = vadd.f32 %v6905, %v7335
        %v7372 = vadd.f32 %v6906, %v7338
        %v7373 = vld [vmem:[#allocation2 + $0x27] sm:$0xff]
        %v7374 = vld [vmem:[#allocation2 + $0x2f] sm:$0xff]
        %v7375 = vld [vmem:[#allocation2 + $0x37] sm:$0xff]
        %v7376 = vld [vmem:[#allocation2 + $0x3f] sm:$0xff]
        %v7377 = vld [vmem:[#allocation2 + $0x47] sm:$0xff]
        %v7378 = vld [vmem:[#allocation2 + $0x4f] sm:$0xff]
        %v7379 = vld [vmem:[#allocation2 + $0x57] sm:$0xff]
        %v7380 = vld [vmem:[#allocation2 + $0x5f] sm:$0xff]
        %v7381 = vld [vmem:[#allocation2 + $0x67] sm:$0xff]
        %v7382 = vld [vmem:[#allocation2 + $0x6f] sm:$0xff]
        %v7383 = vld [vmem:[#allocation2 + $0x77] sm:$0xff]
        %v7384 = vld [vmem:[#allocation2 + $0x7f] sm:$0xff]
        %v7385 = vld [vmem:[#allocation2 + $0x87] sm:$0xff]
        %v7386 = vld [vmem:[#allocation2 + $0x8f] sm:$0xff]
        %v7387 = vld [vmem:[#allocation2 + $0x97] sm:$0xff]
        %v7388 = vld [vmem:[#allocation2 + $0x9f] sm:$0xff]
        %v7389 = vld [vmem:[#allocation2 + $0xa7] sm:$0xff]
        %v7390 = vld [vmem:[#allocation2 + $0xaf] sm:$0xff]
        %v7391 = vld [vmem:[#allocation2 + $0xb7] sm:$0xff]
        %v7392 = vld [vmem:[#allocation2 + $0xbf] sm:$0xff]
        %v7393 = vld [vmem:[#allocation2 + $0xc7] sm:$0xff]
        %v7394 = vld [vmem:[#allocation2 + $0xcf] sm:$0xff]
        %v7395 = vld [vmem:[#allocation2 + $0xd7] sm:$0xff]
        %v7396 = vld [vmem:[#allocation2 + $0xdf] sm:$0xff]
        %v7397 = vld [vmem:[#allocation2 + $0xe7] sm:$0xff]
        %v7398 = vld [vmem:[#allocation2 + $0xef] sm:$0xff]
        %v7399 = vld [vmem:[#allocation2 + $0xf7] sm:$0xff]
        %v7400 = vld [vmem:[#allocation2 + $0xff] sm:$0xff]
        %v7401 = vld [vmem:[#allocation2 + $0x107] sm:$0xff]
        %v7402 = vld [vmem:[#allocation2 + $0x10f] sm:$0xff]
        %v7403 = vld [vmem:[#allocation2 + $0x117] sm:$0xff]
        %v7404 = vld [vmem:[#allocation2 + $0x11f] sm:$0xff]
        %7405 = vset.pattern.permute.xlu0 6
        %7406 = vperm.xlu0 %7405, %v4930
        %v7407 = vpop.permute.xlu0 %7406
        %7409 = vset.pattern.permute.xlu0 6
        %7410 = vperm.xlu0 %7409, %v4931
        %v7411 = vpop.permute.xlu0 %7410
        %7413 = vset.pattern.permute.xlu0 6
        %7414 = vperm.xlu0 %7413, %v4932
        %v7415 = vpop.permute.xlu0 %7414
        %7417 = vset.pattern.permute.xlu0 6
        %7418 = vperm.xlu0 %7417, %v4933
        %v7419 = vpop.permute.xlu0 %7418
        %7421 = vset.pattern.permute.xlu0 6
        %7422 = vperm.xlu0 %7421, %v4934
        %v7423 = vpop.permute.xlu0 %7422
        %7425 = vset.pattern.permute.xlu0 6
        %7426 = vperm.xlu0 %7425, %v4935
        %v7427 = vpop.permute.xlu0 %7426
        %7429 = vset.pattern.permute.xlu0 6
        %7430 = vperm.xlu0 %7429, %v4936
        %v7431 = vpop.permute.xlu0 %7430
        %7433 = vset.pattern.permute.xlu0 6
        %7434 = vperm.xlu0 %7433, %v4937
        %v7435 = vpop.permute.xlu0 %7434
        %7437 = vset.pattern.permute.xlu0 6
        %7438 = vperm.xlu0 %7437, %v4938
        %v7439 = vpop.permute.xlu0 %7438
        %7441 = vset.pattern.permute.xlu0 6
        %7442 = vperm.xlu0 %7441, %v4939
        %v7443 = vpop.permute.xlu0 %7442
        %7445 = vset.pattern.permute.xlu0 6
        %7446 = vperm.xlu0 %7445, %v4940
        %v7447 = vpop.permute.xlu0 %7446
        %7449 = vset.pattern.permute.xlu0 6
        %7450 = vperm.xlu0 %7449, %v4941
        %v7451 = vpop.permute.xlu0 %7450
        %7453 = vset.pattern.permute.xlu0 6
        %7454 = vperm.xlu0 %7453, %v4942
        %v7455 = vpop.permute.xlu0 %7454
        %7457 = vset.pattern.permute.xlu0 6
        %7458 = vperm.xlu0 %7457, %v4943
        %v7459 = vpop.permute.xlu0 %7458
        %7461 = vset.pattern.permute.xlu0 6
        %7462 = vperm.xlu0 %7461, %v4944
        %v7463 = vpop.permute.xlu0 %7462
        %7465 = vset.pattern.permute.xlu0 6
        %7466 = vperm.xlu0 %7465, %v4945
        %v7467 = vpop.permute.xlu0 %7466
        %7469 = vset.pattern.permute.xlu0 6
        %7470 = vperm.xlu0 %7469, %v4946
        %v7471 = vpop.permute.xlu0 %7470
        %7473 = vset.pattern.permute.xlu0 6
        %7474 = vperm.xlu0 %7473, %v4947
        %v7475 = vpop.permute.xlu0 %7474
        %7477 = vset.pattern.permute.xlu0 6
        %7478 = vperm.xlu0 %7477, %v4948
        %v7479 = vpop.permute.xlu0 %7478
        %7481 = vset.pattern.permute.xlu0 6
        %7482 = vperm.xlu0 %7481, %v4949
        %v7483 = vpop.permute.xlu0 %7482
        %7485 = vset.pattern.permute.xlu0 6
        %7486 = vperm.xlu0 %7485, %v4950
        %v7487 = vpop.permute.xlu0 %7486
        %7489 = vset.pattern.permute.xlu0 6
        %7490 = vperm.xlu0 %7489, %v4951
        %v7491 = vpop.permute.xlu0 %7490
        %7493 = vset.pattern.permute.xlu0 6
        %7494 = vperm.xlu0 %7493, %v4952
        %v7495 = vpop.permute.xlu0 %7494
        %7497 = vset.pattern.permute.xlu0 6
        %7498 = vperm.xlu0 %7497, %v4953
        %v7499 = vpop.permute.xlu0 %7498
        %7501 = vset.pattern.permute.xlu0 6
        %7502 = vperm.xlu0 %7501, %v4954
        %v7503 = vpop.permute.xlu0 %7502
        %7505 = vset.pattern.permute.xlu0 6
        %7506 = vperm.xlu0 %7505, %v4955
        %v7507 = vpop.permute.xlu0 %7506
        %7509 = vset.pattern.permute.xlu0 6
        %7510 = vperm.xlu0 %7509, %v4956
        %v7511 = vpop.permute.xlu0 %7510
        %7513 = vset.pattern.permute.xlu0 6
        %7514 = vperm.xlu0 %7513, %v4957
        %v7515 = vpop.permute.xlu0 %7514
        %7517 = vset.pattern.permute.xlu0 6
        %7518 = vperm.xlu0 %7517, %v4958
        %v7519 = vpop.permute.xlu0 %7518
        %7521 = vset.pattern.permute.xlu0 6
        %7522 = vperm.xlu0 %7521, %v4959
        %v7523 = vpop.permute.xlu0 %7522
        %7525 = vset.pattern.permute.xlu0 6
        %7526 = vperm.xlu0 %7525, %v4960
        %v7527 = vpop.permute.xlu0 %7526
        %7529 = vset.pattern.permute.xlu0 6
        %7530 = vperm.xlu0 %7529, %v4961
        %v7531 = vpop.permute.xlu0 %7530
        %v7533 = vmul.f32 %v7373, %v7407
        %v7534 = vmul.f32 %v7374, %v7411
        %v7535 = vmul.f32 %v7375, %v7415
        %v7536 = vmul.f32 %v7376, %v7419
        %v7537 = vmul.f32 %v7377, %v7423
        %v7538 = vmul.f32 %v7378, %v7427
        %v7539 = vmul.f32 %v7379, %v7431
        %v7540 = vmul.f32 %v7380, %v7435
        %v7541 = vmul.f32 %v7381, %v7439
        %v7542 = vmul.f32 %v7382, %v7443
        %v7543 = vmul.f32 %v7383, %v7447
        %v7544 = vmul.f32 %v7384, %v7451
        %v7545 = vmul.f32 %v7385, %v7455
        %v7546 = vmul.f32 %v7386, %v7459
        %v7547 = vmul.f32 %v7387, %v7463
        %v7548 = vmul.f32 %v7388, %v7467
        %v7549 = vmul.f32 %v7389, %v7471
        %v7550 = vmul.f32 %v7390, %v7475
        %v7551 = vmul.f32 %v7391, %v7479
        %v7552 = vmul.f32 %v7392, %v7483
        %v7553 = vmul.f32 %v7393, %v7487
        %v7554 = vmul.f32 %v7394, %v7491
        %v7555 = vmul.f32 %v7395, %v7495
        %v7556 = vmul.f32 %v7396, %v7499
        %v7557 = vmul.f32 %v7397, %v7503
        %v7558 = vmul.f32 %v7398, %v7507
        %v7559 = vmul.f32 %v7399, %v7511
        %v7560 = vmul.f32 %v7400, %v7515
        %v7561 = vmul.f32 %v7401, %v7519
        %v7562 = vmul.f32 %v7402, %v7523
        %v7563 = vmul.f32 %v7403, %v7527
        %v7564 = vmul.f32 %v7404, %v7531
        %v7565 = vpack.c.bf16 %v7534, %v7533
        %v7566 = vpack.c.bf16 %v7536, %v7535
        %v7567 = vpack.c.bf16 %v7538, %v7537
        %v7568 = vpack.c.bf16 %v7540, %v7539
        %v7569 = vpack.c.bf16 %v7542, %v7541
        %v7570 = vpack.c.bf16 %v7544, %v7543
        %v7571 = vpack.c.bf16 %v7546, %v7545
        %v7572 = vpack.c.bf16 %v7548, %v7547
        %v7573 = vpack.c.bf16 %v7550, %v7549
        %v7574 = vpack.c.bf16 %v7552, %v7551
        %v7575 = vpack.c.bf16 %v7554, %v7553
        %v7576 = vpack.c.bf16 %v7556, %v7555
        %v7577 = vpack.c.bf16 %v7558, %v7557
        %v7578 = vpack.c.bf16 %v7560, %v7559
        %v7579 = vpack.c.bf16 %v7562, %v7561
        %v7580 = vpack.c.bf16 %v7564, %v7563
        %s7581 = scalar_lea.vmem [#allocation8], 384
        %v7582 = vld [vmem:[%s7581] sm:$0xf]
        %v7583 = vld [vmem:[%s7581 + $0x4] sm:$0xf]
        %v7584 = vld [vmem:[%s7581 + $0x8] sm:$0xf]
        %v7585 = vld [vmem:[%s7581 + $0xc] sm:$0xf]
        %v7586 = vld [vmem:[%s7581 + $0x10] sm:$0xf]
        %v7587 = vld [vmem:[%s7581 + $0x14] sm:$0xf]
        %v7588 = vld [vmem:[%s7581 + $0x18] sm:$0xf]
        %v7589 = vld [vmem:[%s7581 + $0x1c] sm:$0xf]
        %v7590 = vld [vmem:[%s7581 + $0x20] sm:$0xf]
        %v7591 = vld [vmem:[%s7581 + $0x24] sm:$0xf]
        %v7592 = vld [vmem:[%s7581 + $0x28] sm:$0xf]
        %v7593 = vld [vmem:[%s7581 + $0x2c] sm:$0xf]
        %v7594 = vld [vmem:[%s7581 + $0x30] sm:$0xf]
        %v7595 = vld [vmem:[%s7581 + $0x34] sm:$0xf]
        %v7596 = vld [vmem:[%s7581 + $0x38] sm:$0xf]
        %v7597 = vld [vmem:[%s7581 + $0x3c] sm:$0xf]
        %v7614 = vunpack.c.l.b16 %v7582
        %v7615 = vunpack.c.l.b16 %v7583
        %v7616 = vunpack.c.l.b16 %v7584
        %v7617 = vunpack.c.l.b16 %v7585
        %v7618 = vunpack.c.l.b16 %v7586
        %v7619 = vunpack.c.l.b16 %v7587
        %v7620 = vunpack.c.l.b16 %v7588
        %v7621 = vunpack.c.l.b16 %v7589
        %v7622 = vunpack.c.l.b16 %v7590
        %v7623 = vunpack.c.l.b16 %v7591
        %v7624 = vunpack.c.l.b16 %v7592
        %v7625 = vunpack.c.l.b16 %v7593
        %v7626 = vunpack.c.l.b16 %v7594
        %v7627 = vunpack.c.l.b16 %v7595
        %v7628 = vunpack.c.l.b16 %v7596
        %v7629 = vunpack.c.l.b16 %v7597
        %v7630 = vpack.c.b16 %v7615, %v7614
        %v7631 = vpack.c.b16 %v7617, %v7616
        %v7632 = vpack.c.b16 %v7619, %v7618
        %v7633 = vpack.c.b16 %v7621, %v7620
        %v7634 = vpack.c.b16 %v7623, %v7622
        %v7635 = vpack.c.b16 %v7625, %v7624
        %v7636 = vpack.c.b16 %v7627, %v7626
        %v7637 = vpack.c.b16 %v7629, %v7628
        %7646 = vmatprep.subr.bf16.mxu0 0
        %7647 = vmatpush1.bf16.msra.mxu0 %v7637
        %7648 = vmatprep.subr.bf16.mxu0 0
        %7649 = vmatpush1.bf16.msra.mxu0 %v7636
        %7650 = vmatprep.subr.bf16.mxu0 0
        %7651 = vmatpush1.bf16.msra.mxu0 %v7635
        %7652 = vmatprep.subr.bf16.mxu0 0
        %7653 = vmatpush1.bf16.msra.mxu0 %v7634
        %7654 = vmatprep.subr.bf16.mxu0 0
        %7655 = vmatpush1.bf16.msra.mxu0 %v7633
        %7656 = vmatprep.subr.bf16.mxu0 0
        %7657 = vmatpush1.bf16.msra.mxu0 %v7632
        %7658 = vmatprep.subr.bf16.mxu0 0
        %7659 = vmatpush1.bf16.msra.mxu0 %v7631
        %7660 = vmatprep.subr.bf16.mxu0 0
        %7661 = vmatpush1.bf16.msra.mxu0 %v7630
        %7662 = vmatprep.subr.bf16.mxu0 0
        %7663 = vmatpush2.bf16.msra.mxu0 0
        %7664 = vmatprep.subr.bf16.mxu0 0
        %7665 = vmatpush2.bf16.msra.mxu0 0
        %7666 = vmatprep.subr.bf16.mxu0 0
        %7667 = vmatpush2.bf16.msra.mxu0 0
        %7668 = vmatprep.subr.bf16.mxu0 0
        %7669 = vmatpush2.bf16.msra.mxu0 0
        %7670 = vmatprep.subr.bf16.mxu0 0
        %7671 = vmatpush2.bf16.msra.mxu0 0
        %7672 = vmatprep.subr.bf16.mxu0 0
        %7673 = vmatpush2.bf16.msra.mxu0 0
        %7674 = vmatprep.subr.bf16.mxu0 0
        %7675 = vmatpush2.bf16.msra.mxu0 0
        %7676 = vmatprep.subr.bf16.mxu0 0
        %7677 = vmatpush2.bf16.msra.mxu0 0
        %7678 = vmatprep.mubr.bf16.mxu0 0
        %7679 = vmatmul.mubr.bf16.gmra.mxu0 %v7565
        %v7680 = vpop.f32.mrf.mxu0
        %v7681 = vadd.f32 0.0, %v7680
        %v7682 = vpop.f32.mrf.mxu0
        %v7683 = vpop.f32.mrf.mxu0
        %v7684 = vadd.f32 0.0, %v7683
        %v7685 = vpop.f32.mrf.mxu0
        %7686 = vmatprep.mubr.bf16.mxu0 0
        %7687 = vmatmul.mubr.bf16.gmra.mxu0 %v7566
        %v7688 = vpop.f32.mrf.mxu0
        %v7689 = vadd.f32 0.0, %v7688
        %v7690 = vpop.f32.mrf.mxu0
        %v7691 = vpop.f32.mrf.mxu0
        %v7692 = vadd.f32 0.0, %v7691
        %v7693 = vpop.f32.mrf.mxu0
        %7694 = vmatprep.mubr.bf16.mxu0 0
        %7695 = vmatmul.mubr.bf16.gmra.mxu0 %v7567
        %v7696 = vpop.f32.mrf.mxu0
        %v7697 = vadd.f32 0.0, %v7696
        %v7698 = vpop.f32.mrf.mxu0
        %v7699 = vpop.f32.mrf.mxu0
        %v7700 = vadd.f32 0.0, %v7699
        %v7701 = vpop.f32.mrf.mxu0
        %7702 = vmatprep.mubr.bf16.mxu0 0
        %7703 = vmatmul.mubr.bf16.gmra.mxu0 %v7568
        %v7704 = vpop.f32.mrf.mxu0
        %v7705 = vadd.f32 0.0, %v7704
        %v7706 = vpop.f32.mrf.mxu0
        %v7707 = vpop.f32.mrf.mxu0
        %v7708 = vadd.f32 0.0, %v7707
        %v7709 = vpop.f32.mrf.mxu0
        %7710 = vmatprep.mubr.bf16.mxu0 0
        %7711 = vmatmul.mubr.bf16.gmra.mxu0 %v7569
        %v7712 = vpop.f32.mrf.mxu0
        %v7713 = vadd.f32 0.0, %v7712
        %v7714 = vpop.f32.mrf.mxu0
        %v7715 = vpop.f32.mrf.mxu0
        %v7716 = vadd.f32 0.0, %v7715
        %v7717 = vpop.f32.mrf.mxu0
        %7718 = vmatprep.mubr.bf16.mxu0 0
        %7719 = vmatmul.mubr.bf16.gmra.mxu0 %v7570
        %v7720 = vpop.f32.mrf.mxu0
        %v7721 = vadd.f32 0.0, %v7720
        %v7722 = vpop.f32.mrf.mxu0
        %v7723 = vpop.f32.mrf.mxu0
        %v7724 = vadd.f32 0.0, %v7723
        %v7725 = vpop.f32.mrf.mxu0
        %7726 = vmatprep.mubr.bf16.mxu0 0
        %7727 = vmatmul.mubr.bf16.gmra.mxu0 %v7571
        %v7728 = vpop.f32.mrf.mxu0
        %v7729 = vadd.f32 0.0, %v7728
        %v7730 = vpop.f32.mrf.mxu0
        %v7731 = vpop.f32.mrf.mxu0
        %v7732 = vadd.f32 0.0, %v7731
        %v7733 = vpop.f32.mrf.mxu0
        %7734 = vmatprep.mubr.bf16.mxu0 0
        %7735 = vmatmul.mubr.bf16.gmra.mxu0 %v7572
        %v7736 = vpop.f32.mrf.mxu0
        %v7737 = vadd.f32 0.0, %v7736
        %v7738 = vpop.f32.mrf.mxu0
        %v7739 = vpop.f32.mrf.mxu0
        %v7740 = vadd.f32 0.0, %v7739
        %v7741 = vpop.f32.mrf.mxu0
        %7742 = vmatprep.mubr.bf16.mxu0 0
        %7743 = vmatmul.mubr.bf16.gmra.mxu0 %v7573
        %v7744 = vpop.f32.mrf.mxu0
        %v7745 = vadd.f32 0.0, %v7744
        %v7746 = vpop.f32.mrf.mxu0
        %v7747 = vpop.f32.mrf.mxu0
        %v7748 = vadd.f32 0.0, %v7747
        %v7749 = vpop.f32.mrf.mxu0
        %7750 = vmatprep.mubr.bf16.mxu0 0
        %7751 = vmatmul.mubr.bf16.gmra.mxu0 %v7574
        %v7752 = vpop.f32.mrf.mxu0
        %v7753 = vadd.f32 0.0, %v7752
        %v7754 = vpop.f32.mrf.mxu0
        %v7755 = vpop.f32.mrf.mxu0
        %v7756 = vadd.f32 0.0, %v7755
        %v7757 = vpop.f32.mrf.mxu0
        %7758 = vmatprep.mubr.bf16.mxu0 0
        %7759 = vmatmul.mubr.bf16.gmra.mxu0 %v7575
        %v7760 = vpop.f32.mrf.mxu0
        %v7761 = vadd.f32 0.0, %v7760
        %v7762 = vpop.f32.mrf.mxu0
        %v7763 = vpop.f32.mrf.mxu0
        %v7764 = vadd.f32 0.0, %v7763
        %v7765 = vpop.f32.mrf.mxu0
        %7766 = vmatprep.mubr.bf16.mxu0 0
        %7767 = vmatmul.mubr.bf16.gmra.mxu0 %v7576
        %v7768 = vpop.f32.mrf.mxu0
        %v7769 = vadd.f32 0.0, %v7768
        %v7770 = vpop.f32.mrf.mxu0
        %v7771 = vpop.f32.mrf.mxu0
        %v7772 = vadd.f32 0.0, %v7771
        %v7773 = vpop.f32.mrf.mxu0
        %7774 = vmatprep.mubr.bf16.mxu0 0
        %7775 = vmatmul.mubr.bf16.gmra.mxu0 %v7577
        %v7776 = vpop.f32.mrf.mxu0
        %v7777 = vadd.f32 0.0, %v7776
        %v7778 = vpop.f32.mrf.mxu0
        %v7779 = vpop.f32.mrf.mxu0
        %v7780 = vadd.f32 0.0, %v7779
        %v7781 = vpop.f32.mrf.mxu0
        %7782 = vmatprep.mubr.bf16.mxu0 0
        %7783 = vmatmul.mubr.bf16.gmra.mxu0 %v7578
        %v7784 = vpop.f32.mrf.mxu0
        %v7785 = vadd.f32 0.0, %v7784
        %v7786 = vpop.f32.mrf.mxu0
        %v7787 = vpop.f32.mrf.mxu0
        %v7788 = vadd.f32 0.0, %v7787
        %v7789 = vpop.f32.mrf.mxu0
        %7790 = vmatprep.mubr.bf16.mxu0 0
        %7791 = vmatmul.mubr.bf16.gmra.mxu0 %v7579
        %v7792 = vpop.f32.mrf.mxu0
        %v7793 = vadd.f32 0.0, %v7792
        %v7794 = vpop.f32.mrf.mxu0
        %v7795 = vpop.f32.mrf.mxu0
        %v7796 = vadd.f32 0.0, %v7795
        %v7797 = vpop.f32.mrf.mxu0
        %7798 = vmatprep.mubr.bf16.mxu0 0
        %7799 = vmatmul.mubr.bf16.gmra.mxu0 %v7580
        %v7800 = vpop.f32.mrf.mxu0
        %v7801 = vadd.f32 0.0, %v7800
        %v7802 = vpop.f32.mrf.mxu0
        %v7803 = vpop.f32.mrf.mxu0
        %v7804 = vadd.f32 0.0, %v7803
        %v7805 = vpop.f32.mrf.mxu0
        %7806 = vdwg.mxu0
        %v7807 = vadd.f32 %v7341, %v7681
        %v7808 = vadd.f32 %v7342, %v7684
        %v7809 = vadd.f32 %v7343, %v7689
        %v7810 = vadd.f32 %v7344, %v7692
        %v7811 = vadd.f32 %v7345, %v7697
        %v7812 = vadd.f32 %v7346, %v7700
        %v7813 = vadd.f32 %v7347, %v7705
        %v7814 = vadd.f32 %v7348, %v7708
        %v7815 = vadd.f32 %v7349, %v7713
        %v7816 = vadd.f32 %v7350, %v7716
        %v7817 = vadd.f32 %v7351, %v7721
        %v7818 = vadd.f32 %v7352, %v7724
        %v7819 = vadd.f32 %v7353, %v7729
        %v7820 = vadd.f32 %v7354, %v7732
        %v7821 = vadd.f32 %v7355, %v7737
        %v7822 = vadd.f32 %v7356, %v7740
        %v7823 = vadd.f32 %v7357, %v7745
        %v7824 = vadd.f32 %v7358, %v7748
        %v7825 = vadd.f32 %v7359, %v7753
        %v7826 = vadd.f32 %v7360, %v7756
        %v7827 = vadd.f32 %v7361, %v7761
        %v7828 = vadd.f32 %v7362, %v7764
        %v7829 = vadd.f32 %v7363, %v7769
        %v7830 = vadd.f32 %v7364, %v7772
        %v7831 = vadd.f32 %v7365, %v7777
        %v7832 = vadd.f32 %v7366, %v7780
        %v7833 = vadd.f32 %v7367, %v7785
        %v7834 = vadd.f32 %v7368, %v7788
        %v7835 = vadd.f32 %v7369, %v7793
        %v7836 = vadd.f32 %v7370, %v7796
        %v7837 = vadd.f32 %v7371, %v7801
        %v7838 = vadd.f32 %v7372, %v7804
        %v7839 = vld [vmem:[#allocation2 + $0x28] sm:$0xff]
        %v7840 = vld [vmem:[#allocation2 + $0x30] sm:$0xff]
        %v7841 = vld [vmem:[#allocation2 + $0x38] sm:$0xff]
        %v7842 = vld [vmem:[#allocation2 + $0x40] sm:$0xff]
        %v7843 = vld [vmem:[#allocation2 + $0x48] sm:$0xff]
        %v7844 = vld [vmem:[#allocation2 + $0x50] sm:$0xff]
        %v7845 = vld [vmem:[#allocation2 + $0x58] sm:$0xff]
        %v7846 = vld [vmem:[#allocation2 + $0x60] sm:$0xff]
        %v7847 = vld [vmem:[#allocation2 + $0x68] sm:$0xff]
        %v7848 = vld [vmem:[#allocation2 + $0x70] sm:$0xff]
        %v7849 = vld [vmem:[#allocation2 + $0x78] sm:$0xff]
        %v7850 = vld [vmem:[#allocation2 + $0x80] sm:$0xff]
        %v7851 = vld [vmem:[#allocation2 + $0x88] sm:$0xff]
        %v7852 = vld [vmem:[#allocation2 + $0x90] sm:$0xff]
        %v7853 = vld [vmem:[#allocation2 + $0x98] sm:$0xff]
        %v7854 = vld [vmem:[#allocation2 + $0xa0] sm:$0xff]
        %v7855 = vld [vmem:[#allocation2 + $0xa8] sm:$0xff]
        %v7856 = vld [vmem:[#allocation2 + $0xb0] sm:$0xff]
        %v7857 = vld [vmem:[#allocation2 + $0xb8] sm:$0xff]
        %v7858 = vld [vmem:[#allocation2 + $0xc0] sm:$0xff]
        %v7859 = vld [vmem:[#allocation2 + $0xc8] sm:$0xff]
        %v7860 = vld [vmem:[#allocation2 + $0xd0] sm:$0xff]
        %v7861 = vld [vmem:[#allocation2 + $0xd8] sm:$0xff]
        %v7862 = vld [vmem:[#allocation2 + $0xe0] sm:$0xff]
        %v7863 = vld [vmem:[#allocation2 + $0xe8] sm:$0xff]
        %v7864 = vld [vmem:[#allocation2 + $0xf0] sm:$0xff]
        %v7865 = vld [vmem:[#allocation2 + $0xf8] sm:$0xff]
        %v7866 = vld [vmem:[#allocation2 + $0x100] sm:$0xff]
        %v7867 = vld [vmem:[#allocation2 + $0x108] sm:$0xff]
        %v7868 = vld [vmem:[#allocation2 + $0x110] sm:$0xff]
        %v7869 = vld [vmem:[#allocation2 + $0x118] sm:$0xff]
        %v7870 = vld [vmem:[#allocation2 + $0x120] sm:$0xff]
        %v7871 = vpack.c.bf16 %v7840, %v7839
        %v7872 = vpack.c.bf16 %v7842, %v7841
        %v7873 = vpack.c.bf16 %v7844, %v7843
        %v7874 = vpack.c.bf16 %v7846, %v7845
        %v7875 = vpack.c.bf16 %v7848, %v7847
        %v7876 = vpack.c.bf16 %v7850, %v7849
        %v7877 = vpack.c.bf16 %v7852, %v7851
        %v7878 = vpack.c.bf16 %v7854, %v7853
        %v7879 = vpack.c.bf16 %v7856, %v7855
        %v7880 = vpack.c.bf16 %v7858, %v7857
        %v7881 = vpack.c.bf16 %v7860, %v7859
        %v7882 = vpack.c.bf16 %v7862, %v7861
        %v7883 = vpack.c.bf16 %v7864, %v7863
        %v7884 = vpack.c.bf16 %v7866, %v7865
        %v7885 = vpack.c.bf16 %v7868, %v7867
        %v7886 = vpack.c.bf16 %v7870, %v7869
        %s7887 = scalar_lea.vmem [#allocation8], 448
        %v7888 = vld [vmem:[%s7887] sm:$0xf]
        %v7889 = vld [vmem:[%s7887 + $0x4] sm:$0xf]
        %v7890 = vld [vmem:[%s7887 + $0x8] sm:$0xf]
        %v7891 = vld [vmem:[%s7887 + $0xc] sm:$0xf]
        %v7892 = vld [vmem:[%s7887 + $0x10] sm:$0xf]
        %v7893 = vld [vmem:[%s7887 + $0x14] sm:$0xf]
        %v7894 = vld [vmem:[%s7887 + $0x18] sm:$0xf]
        %v7895 = vld [vmem:[%s7887 + $0x1c] sm:$0xf]
        %v7896 = vld [vmem:[%s7887 + $0x20] sm:$0xf]
        %v7897 = vld [vmem:[%s7887 + $0x24] sm:$0xf]
        %v7898 = vld [vmem:[%s7887 + $0x28] sm:$0xf]
        %v7899 = vld [vmem:[%s7887 + $0x2c] sm:$0xf]
        %v7900 = vld [vmem:[%s7887 + $0x30] sm:$0xf]
        %v7901 = vld [vmem:[%s7887 + $0x34] sm:$0xf]
        %v7902 = vld [vmem:[%s7887 + $0x38] sm:$0xf]
        %v7903 = vld [vmem:[%s7887 + $0x3c] sm:$0xf]
        %v7920 = vunpack.c.l.b16 %v7888
        %v7921 = vunpack.c.l.b16 %v7889
        %v7922 = vunpack.c.l.b16 %v7890
        %v7923 = vunpack.c.l.b16 %v7891
        %v7924 = vunpack.c.l.b16 %v7892
        %v7925 = vunpack.c.l.b16 %v7893
        %v7926 = vunpack.c.l.b16 %v7894
        %v7927 = vunpack.c.l.b16 %v7895
        %v7928 = vunpack.c.l.b16 %v7896
        %v7929 = vunpack.c.l.b16 %v7897
        %v7930 = vunpack.c.l.b16 %v7898
        %v7931 = vunpack.c.l.b16 %v7899
        %v7932 = vunpack.c.l.b16 %v7900
        %v7933 = vunpack.c.l.b16 %v7901
        %v7934 = vunpack.c.l.b16 %v7902
        %v7935 = vunpack.c.l.b16 %v7903
        %v7936 = vpack.c.b16 %v7921, %v7920
        %v7937 = vpack.c.b16 %v7923, %v7922
        %v7938 = vpack.c.b16 %v7925, %v7924
        %v7939 = vpack.c.b16 %v7927, %v7926
        %v7940 = vpack.c.b16 %v7929, %v7928
        %v7941 = vpack.c.b16 %v7931, %v7930
        %v7942 = vpack.c.b16 %v7933, %v7932
        %v7943 = vpack.c.b16 %v7935, %v7934
        %7952 = vmatprep.subr.bf16.mxu0 0
        %7953 = vmatpush1.bf16.msra.mxu0 %v7943
        %7954 = vmatprep.subr.bf16.mxu0 0
        %7955 = vmatpush1.bf16.msra.mxu0 %v7942
        %7956 = vmatprep.subr.bf16.mxu0 0
        %7957 = vmatpush1.bf16.msra.mxu0 %v7941
        %7958 = vmatprep.subr.bf16.mxu0 0
        %7959 = vmatpush1.bf16.msra.mxu0 %v7940
        %7960 = vmatprep.subr.bf16.mxu0 0
        %7961 = vmatpush1.bf16.msra.mxu0 %v7939
        %7962 = vmatprep.subr.bf16.mxu0 0
        %7963 = vmatpush1.bf16.msra.mxu0 %v7938
        %7964 = vmatprep.subr.bf16.mxu0 0
        %7965 = vmatpush1.bf16.msra.mxu0 %v7937
        %7966 = vmatprep.subr.bf16.mxu0 0
        %7967 = vmatpush1.bf16.msra.mxu0 %v7936
        %7968 = vmatprep.subr.bf16.mxu0 0
        %7969 = vmatpush2.bf16.msra.mxu0 0
        %7970 = vmatprep.subr.bf16.mxu0 0
        %7971 = vmatpush2.bf16.msra.mxu0 0
        %7972 = vmatprep.subr.bf16.mxu0 0
        %7973 = vmatpush2.bf16.msra.mxu0 0
        %7974 = vmatprep.subr.bf16.mxu0 0
        %7975 = vmatpush2.bf16.msra.mxu0 0
        %7976 = vmatprep.subr.bf16.mxu0 0
        %7977 = vmatpush2.bf16.msra.mxu0 0
        %7978 = vmatprep.subr.bf16.mxu0 0
        %7979 = vmatpush2.bf16.msra.mxu0 0
        %7980 = vmatprep.subr.bf16.mxu0 0
        %7981 = vmatpush2.bf16.msra.mxu0 0
        %7982 = vmatprep.subr.bf16.mxu0 0
        %7983 = vmatpush2.bf16.msra.mxu0 0
        %7984 = vmatprep.mubr.bf16.mxu0 0
        %7985 = vmatmul.mubr.bf16.gmra.mxu0 %v7871
        %v7986 = vpop.f32.mrf.mxu0
        %v7987 = vadd.f32 0.0, %v7986
        %v7988 = vpop.f32.mrf.mxu0
        %v7989 = vpop.f32.mrf.mxu0
        %v7990 = vadd.f32 0.0, %v7989
        %v7991 = vpop.f32.mrf.mxu0
        %7992 = vmatprep.mubr.bf16.mxu0 0
        %7993 = vmatmul.mubr.bf16.gmra.mxu0 %v7872
        %v7994 = vpop.f32.mrf.mxu0
        %v7995 = vadd.f32 0.0, %v7994
        %v7996 = vpop.f32.mrf.mxu0
        %v7997 = vpop.f32.mrf.mxu0
        %v7998 = vadd.f32 0.0, %v7997
        %v7999 = vpop.f32.mrf.mxu0
        %8000 = vmatprep.mubr.bf16.mxu0 0
        %8001 = vmatmul.mubr.bf16.gmra.mxu0 %v7873
        %v8002 = vpop.f32.mrf.mxu0
        %v8003 = vadd.f32 0.0, %v8002
        %v8004 = vpop.f32.mrf.mxu0
        %v8005 = vpop.f32.mrf.mxu0
        %v8006 = vadd.f32 0.0, %v8005
        %v8007 = vpop.f32.mrf.mxu0
        %8008 = vmatprep.mubr.bf16.mxu0 0
        %8009 = vmatmul.mubr.bf16.gmra.mxu0 %v7874
        %v8010 = vpop.f32.mrf.mxu0
        %v8011 = vadd.f32 0.0, %v8010
        %v8012 = vpop.f32.mrf.mxu0
        %v8013 = vpop.f32.mrf.mxu0
        %v8014 = vadd.f32 0.0, %v8013
        %v8015 = vpop.f32.mrf.mxu0
        %8016 = vmatprep.mubr.bf16.mxu0 0
        %8017 = vmatmul.mubr.bf16.gmra.mxu0 %v7875
        %v8018 = vpop.f32.mrf.mxu0
        %v8019 = vadd.f32 0.0, %v8018
        %v8020 = vpop.f32.mrf.mxu0
        %v8021 = vpop.f32.mrf.mxu0
        %v8022 = vadd.f32 0.0, %v8021
        %v8023 = vpop.f32.mrf.mxu0
        %8024 = vmatprep.mubr.bf16.mxu0 0
        %8025 = vmatmul.mubr.bf16.gmra.mxu0 %v7876
        %v8026 = vpop.f32.mrf.mxu0
        %v8027 = vadd.f32 0.0, %v8026
        %v8028 = vpop.f32.mrf.mxu0
        %v8029 = vpop.f32.mrf.mxu0
        %v8030 = vadd.f32 0.0, %v8029
        %v8031 = vpop.f32.mrf.mxu0
        %8032 = vmatprep.mubr.bf16.mxu0 0
        %8033 = vmatmul.mubr.bf16.gmra.mxu0 %v7877
        %v8034 = vpop.f32.mrf.mxu0
        %v8035 = vadd.f32 0.0, %v8034
        %v8036 = vpop.f32.mrf.mxu0
        %v8037 = vpop.f32.mrf.mxu0
        %v8038 = vadd.f32 0.0, %v8037
        %v8039 = vpop.f32.mrf.mxu0
        %8040 = vmatprep.mubr.bf16.mxu0 0
        %8041 = vmatmul.mubr.bf16.gmra.mxu0 %v7878
        %v8042 = vpop.f32.mrf.mxu0
        %v8043 = vadd.f32 0.0, %v8042
        %v8044 = vpop.f32.mrf.mxu0
        %v8045 = vpop.f32.mrf.mxu0
        %v8046 = vadd.f32 0.0, %v8045
        %v8047 = vpop.f32.mrf.mxu0
        %8048 = vmatprep.mubr.bf16.mxu0 0
        %8049 = vmatmul.mubr.bf16.gmra.mxu0 %v7879
        %v8050 = vpop.f32.mrf.mxu0
        %v8051 = vadd.f32 0.0, %v8050
        %v8052 = vpop.f32.mrf.mxu0
        %v8053 = vpop.f32.mrf.mxu0
        %v8054 = vadd.f32 0.0, %v8053
        %v8055 = vpop.f32.mrf.mxu0
        %8056 = vmatprep.mubr.bf16.mxu0 0
        %8057 = vmatmul.mubr.bf16.gmra.mxu0 %v7880
        %v8058 = vpop.f32.mrf.mxu0
        %v8059 = vadd.f32 0.0, %v8058
        %v8060 = vpop.f32.mrf.mxu0
        %v8061 = vpop.f32.mrf.mxu0
        %v8062 = vadd.f32 0.0, %v8061
        %v8063 = vpop.f32.mrf.mxu0
        %8064 = vmatprep.mubr.bf16.mxu0 0
        %8065 = vmatmul.mubr.bf16.gmra.mxu0 %v7881
        %v8066 = vpop.f32.mrf.mxu0
        %v8067 = vadd.f32 0.0, %v8066
        %v8068 = vpop.f32.mrf.mxu0
        %v8069 = vpop.f32.mrf.mxu0
        %v8070 = vadd.f32 0.0, %v8069
        %v8071 = vpop.f32.mrf.mxu0
        %8072 = vmatprep.mubr.bf16.mxu0 0
        %8073 = vmatmul.mubr.bf16.gmra.mxu0 %v7882
        %v8074 = vpop.f32.mrf.mxu0
        %v8075 = vadd.f32 0.0, %v8074
        %v8076 = vpop.f32.mrf.mxu0
        %v8077 = vpop.f32.mrf.mxu0
        %v8078 = vadd.f32 0.0, %v8077
        %v8079 = vpop.f32.mrf.mxu0
        %8080 = vmatprep.mubr.bf16.mxu0 0
        %8081 = vmatmul.mubr.bf16.gmra.mxu0 %v7883
        %v8082 = vpop.f32.mrf.mxu0
        %v8083 = vadd.f32 0.0, %v8082
        %v8084 = vpop.f32.mrf.mxu0
        %v8085 = vpop.f32.mrf.mxu0
        %v8086 = vadd.f32 0.0, %v8085
        %v8087 = vpop.f32.mrf.mxu0
        %8088 = vmatprep.mubr.bf16.mxu0 0
        %8089 = vmatmul.mubr.bf16.gmra.mxu0 %v7884
        %v8090 = vpop.f32.mrf.mxu0
        %v8091 = vadd.f32 0.0, %v8090
        %v8092 = vpop.f32.mrf.mxu0
        %v8093 = vpop.f32.mrf.mxu0
        %v8094 = vadd.f32 0.0, %v8093
        %v8095 = vpop.f32.mrf.mxu0
        %8096 = vmatprep.mubr.bf16.mxu0 0
        %8097 = vmatmul.mubr.bf16.gmra.mxu0 %v7885
        %v8098 = vpop.f32.mrf.mxu0
        %v8099 = vadd.f32 0.0, %v8098
        %v8100 = vpop.f32.mrf.mxu0
        %v8101 = vpop.f32.mrf.mxu0
        %v8102 = vadd.f32 0.0, %v8101
        %v8103 = vpop.f32.mrf.mxu0
        %8104 = vmatprep.mubr.bf16.mxu0 0
        %8105 = vmatmul.mubr.bf16.gmra.mxu0 %v7886
        %v8106 = vpop.f32.mrf.mxu0
        %v8107 = vadd.f32 0.0, %v8106
        %v8108 = vpop.f32.mrf.mxu0
        %v8109 = vpop.f32.mrf.mxu0
        %v8110 = vadd.f32 0.0, %v8109
        %v8111 = vpop.f32.mrf.mxu0
        %8112 = vdwg.mxu0
        %v8113 = vadd.f32 %v7807, %v7987
        %v8114 = vadd.f32 %v7808, %v7990
        %v8115 = vadd.f32 %v7809, %v7995
        %v8116 = vadd.f32 %v7810, %v7998
        %v8117 = vadd.f32 %v7811, %v8003
        %v8118 = vadd.f32 %v7812, %v8006
        %v8119 = vadd.f32 %v7813, %v8011
        %v8120 = vadd.f32 %v7814, %v8014
        %v8121 = vadd.f32 %v7815, %v8019
        %v8122 = vadd.f32 %v7816, %v8022
        %v8123 = vadd.f32 %v7817, %v8027
        %v8124 = vadd.f32 %v7818, %v8030
        %v8125 = vadd.f32 %v7819, %v8035
        %v8126 = vadd.f32 %v7820, %v8038
        %v8127 = vadd.f32 %v7821, %v8043
        %v8128 = vadd.f32 %v7822, %v8046
        %v8129 = vadd.f32 %v7823, %v8051
        %v8130 = vadd.f32 %v7824, %v8054
        %v8131 = vadd.f32 %v7825, %v8059
        %v8132 = vadd.f32 %v7826, %v8062
        %v8133 = vadd.f32 %v7827, %v8067
        %v8134 = vadd.f32 %v7828, %v8070
        %v8135 = vadd.f32 %v7829, %v8075
        %v8136 = vadd.f32 %v7830, %v8078
        %v8137 = vadd.f32 %v7831, %v8083
        %v8138 = vadd.f32 %v7832, %v8086
        %v8139 = vadd.f32 %v7833, %v8091
        %v8140 = vadd.f32 %v7834, %v8094
        %v8141 = vadd.f32 %v7835, %v8099
        %v8142 = vadd.f32 %v7836, %v8102
        %v8143 = vadd.f32 %v7837, %v8107
        %v8144 = vadd.f32 %v7838, %v8110
        %v8145 = vld [vmem:[#allocation2 + $0x29] sm:$0xff]
        %v8146 = vld [vmem:[#allocation2 + $0x31] sm:$0xff]
        %v8147 = vld [vmem:[#allocation2 + $0x39] sm:$0xff]
        %v8148 = vld [vmem:[#allocation2 + $0x41] sm:$0xff]
        %v8149 = vld [vmem:[#allocation2 + $0x49] sm:$0xff]
        %v8150 = vld [vmem:[#allocation2 + $0x51] sm:$0xff]
        %v8151 = vld [vmem:[#allocation2 + $0x59] sm:$0xff]
        %v8152 = vld [vmem:[#allocation2 + $0x61] sm:$0xff]
        %v8153 = vld [vmem:[#allocation2 + $0x69] sm:$0xff]
        %v8154 = vld [vmem:[#allocation2 + $0x71] sm:$0xff]
        %v8155 = vld [vmem:[#allocation2 + $0x79] sm:$0xff]
        %v8156 = vld [vmem:[#allocation2 + $0x81] sm:$0xff]
        %v8157 = vld [vmem:[#allocation2 + $0x89] sm:$0xff]
        %v8158 = vld [vmem:[#allocation2 + $0x91] sm:$0xff]
        %v8159 = vld [vmem:[#allocation2 + $0x99] sm:$0xff]
        %v8160 = vld [vmem:[#allocation2 + $0xa1] sm:$0xff]
        %v8161 = vld [vmem:[#allocation2 + $0xa9] sm:$0xff]
        %v8162 = vld [vmem:[#allocation2 + $0xb1] sm:$0xff]
        %v8163 = vld [vmem:[#allocation2 + $0xb9] sm:$0xff]
        %v8164 = vld [vmem:[#allocation2 + $0xc1] sm:$0xff]
        %v8165 = vld [vmem:[#allocation2 + $0xc9] sm:$0xff]
        %v8166 = vld [vmem:[#allocation2 + $0xd1] sm:$0xff]
        %v8167 = vld [vmem:[#allocation2 + $0xd9] sm:$0xff]
        %v8168 = vld [vmem:[#allocation2 + $0xe1] sm:$0xff]
        %v8169 = vld [vmem:[#allocation2 + $0xe9] sm:$0xff]
        %v8170 = vld [vmem:[#allocation2 + $0xf1] sm:$0xff]
        %v8171 = vld [vmem:[#allocation2 + $0xf9] sm:$0xff]
        %v8172 = vld [vmem:[#allocation2 + $0x101] sm:$0xff]
        %v8173 = vld [vmem:[#allocation2 + $0x109] sm:$0xff]
        %v8174 = vld [vmem:[#allocation2 + $0x111] sm:$0xff]
        %v8175 = vld [vmem:[#allocation2 + $0x119] sm:$0xff]
        %v8176 = vld [vmem:[#allocation2 + $0x121] sm:$0xff]
        %8177 = vset.pattern.permute.xlu0 8
        %8178 = vperm.xlu0 %8177, %v4930
        %v8179 = vpop.permute.xlu0 %8178
        %8181 = vset.pattern.permute.xlu0 8
        %8182 = vperm.xlu0 %8181, %v4931
        %v8183 = vpop.permute.xlu0 %8182
        %8185 = vset.pattern.permute.xlu0 8
        %8186 = vperm.xlu0 %8185, %v4932
        %v8187 = vpop.permute.xlu0 %8186
        %8189 = vset.pattern.permute.xlu0 8
        %8190 = vperm.xlu0 %8189, %v4933
        %v8191 = vpop.permute.xlu0 %8190
        %8193 = vset.pattern.permute.xlu0 8
        %8194 = vperm.xlu0 %8193, %v4934
        %v8195 = vpop.permute.xlu0 %8194
        %8197 = vset.pattern.permute.xlu0 8
        %8198 = vperm.xlu0 %8197, %v4935
        %v8199 = vpop.permute.xlu0 %8198
        %8201 = vset.pattern.permute.xlu0 8
        %8202 = vperm.xlu0 %8201, %v4936
        %v8203 = vpop.permute.xlu0 %8202
        %8205 = vset.pattern.permute.xlu0 8
        %8206 = vperm.xlu0 %8205, %v4937
        %v8207 = vpop.permute.xlu0 %8206
        %8209 = vset.pattern.permute.xlu0 8
        %8210 = vperm.xlu0 %8209, %v4938
        %v8211 = vpop.permute.xlu0 %8210
        %8213 = vset.pattern.permute.xlu0 8
        %8214 = vperm.xlu0 %8213, %v4939
        %v8215 = vpop.permute.xlu0 %8214
        %8217 = vset.pattern.permute.xlu0 8
        %8218 = vperm.xlu0 %8217, %v4940
        %v8219 = vpop.permute.xlu0 %8218
        %8221 = vset.pattern.permute.xlu0 8
        %8222 = vperm.xlu0 %8221, %v4941
        %v8223 = vpop.permute.xlu0 %8222
        %8225 = vset.pattern.permute.xlu0 8
        %8226 = vperm.xlu0 %8225, %v4942
        %v8227 = vpop.permute.xlu0 %8226
        %8229 = vset.pattern.permute.xlu0 8
        %8230 = vperm.xlu0 %8229, %v4943
        %v8231 = vpop.permute.xlu0 %8230
        %8233 = vset.pattern.permute.xlu0 8
        %8234 = vperm.xlu0 %8233, %v4944
        %v8235 = vpop.permute.xlu0 %8234
        %8237 = vset.pattern.permute.xlu0 8
        %8238 = vperm.xlu0 %8237, %v4945
        %v8239 = vpop.permute.xlu0 %8238
        %8241 = vset.pattern.permute.xlu0 8
        %8242 = vperm.xlu0 %8241, %v4946
        %v8243 = vpop.permute.xlu0 %8242
        %8245 = vset.pattern.permute.xlu0 8
        %8246 = vperm.xlu0 %8245, %v4947
        %v8247 = vpop.permute.xlu0 %8246
        %8249 = vset.pattern.permute.xlu0 8
        %8250 = vperm.xlu0 %8249, %v4948
        %v8251 = vpop.permute.xlu0 %8250
        %8253 = vset.pattern.permute.xlu0 8
        %8254 = vperm.xlu0 %8253, %v4949
        %v8255 = vpop.permute.xlu0 %8254
        %8257 = vset.pattern.permute.xlu0 8
        %8258 = vperm.xlu0 %8257, %v4950
        %v8259 = vpop.permute.xlu0 %8258
        %8261 = vset.pattern.permute.xlu0 8
        %8262 = vperm.xlu0 %8261, %v4951
        %v8263 = vpop.permute.xlu0 %8262
        %8265 = vset.pattern.permute.xlu0 8
        %8266 = vperm.xlu0 %8265, %v4952
        %v8267 = vpop.permute.xlu0 %8266
        %8269 = vset.pattern.permute.xlu0 8
        %8270 = vperm.xlu0 %8269, %v4953
        %v8271 = vpop.permute.xlu0 %8270
        %8273 = vset.pattern.permute.xlu0 8
        %8274 = vperm.xlu0 %8273, %v4954
        %v8275 = vpop.permute.xlu0 %8274
        %8277 = vset.pattern.permute.xlu0 8
        %8278 = vperm.xlu0 %8277, %v4955
        %v8279 = vpop.permute.xlu0 %8278
        %8281 = vset.pattern.permute.xlu0 8
        %8282 = vperm.xlu0 %8281, %v4956
        %v8283 = vpop.permute.xlu0 %8282
        %8285 = vset.pattern.permute.xlu0 8
        %8286 = vperm.xlu0 %8285, %v4957
        %v8287 = vpop.permute.xlu0 %8286
        %8289 = vset.pattern.permute.xlu0 8
        %8290 = vperm.xlu0 %8289, %v4958
        %v8291 = vpop.permute.xlu0 %8290
        %8293 = vset.pattern.permute.xlu0 8
        %8294 = vperm.xlu0 %8293, %v4959
        %v8295 = vpop.permute.xlu0 %8294
        %8297 = vset.pattern.permute.xlu0 8
        %8298 = vperm.xlu0 %8297, %v4960
        %v8299 = vpop.permute.xlu0 %8298
        %8301 = vset.pattern.permute.xlu0 8
        %8302 = vperm.xlu0 %8301, %v4961
        %v8303 = vpop.permute.xlu0 %8302
        %v8305 = vmul.f32 %v8145, %v8179
        %v8306 = vmul.f32 %v8146, %v8183
        %v8307 = vmul.f32 %v8147, %v8187
        %v8308 = vmul.f32 %v8148, %v8191
        %v8309 = vmul.f32 %v8149, %v8195
        %v8310 = vmul.f32 %v8150, %v8199
        %v8311 = vmul.f32 %v8151, %v8203
        %v8312 = vmul.f32 %v8152, %v8207
        %v8313 = vmul.f32 %v8153, %v8211
        %v8314 = vmul.f32 %v8154, %v8215
        %v8315 = vmul.f32 %v8155, %v8219
        %v8316 = vmul.f32 %v8156, %v8223
        %v8317 = vmul.f32 %v8157, %v8227
        %v8318 = vmul.f32 %v8158, %v8231
        %v8319 = vmul.f32 %v8159, %v8235
        %v8320 = vmul.f32 %v8160, %v8239
        %v8321 = vmul.f32 %v8161, %v8243
        %v8322 = vmul.f32 %v8162, %v8247
        %v8323 = vmul.f32 %v8163, %v8251
        %v8324 = vmul.f32 %v8164, %v8255
        %v8325 = vmul.f32 %v8165, %v8259
        %v8326 = vmul.f32 %v8166, %v8263
        %v8327 = vmul.f32 %v8167, %v8267
        %v8328 = vmul.f32 %v8168, %v8271
        %v8329 = vmul.f32 %v8169, %v8275
        %v8330 = vmul.f32 %v8170, %v8279
        %v8331 = vmul.f32 %v8171, %v8283
        %v8332 = vmul.f32 %v8172, %v8287
        %v8333 = vmul.f32 %v8173, %v8291
        %v8334 = vmul.f32 %v8174, %v8295
        %v8335 = vmul.f32 %v8175, %v8299
        %v8336 = vmul.f32 %v8176, %v8303
        %v8337 = vpack.c.bf16 %v8306, %v8305
        %v8338 = vpack.c.bf16 %v8308, %v8307
        %v8339 = vpack.c.bf16 %v8310, %v8309
        %v8340 = vpack.c.bf16 %v8312, %v8311
        %v8341 = vpack.c.bf16 %v8314, %v8313
        %v8342 = vpack.c.bf16 %v8316, %v8315
        %v8343 = vpack.c.bf16 %v8318, %v8317
        %v8344 = vpack.c.bf16 %v8320, %v8319
        %v8345 = vpack.c.bf16 %v8322, %v8321
        %v8346 = vpack.c.bf16 %v8324, %v8323
        %v8347 = vpack.c.bf16 %v8326, %v8325
        %v8348 = vpack.c.bf16 %v8328, %v8327
        %v8349 = vpack.c.bf16 %v8330, %v8329
        %v8350 = vpack.c.bf16 %v8332, %v8331
        %v8351 = vpack.c.bf16 %v8334, %v8333
        %v8352 = vpack.c.bf16 %v8336, %v8335
        %s8353 = scalar_lea.vmem [#allocation8], 512
        %v8354 = vld [vmem:[%s8353] sm:$0xf]
        %v8355 = vld [vmem:[%s8353 + $0x4] sm:$0xf]
        %v8356 = vld [vmem:[%s8353 + $0x8] sm:$0xf]
        %v8357 = vld [vmem:[%s8353 + $0xc] sm:$0xf]
        %v8358 = vld [vmem:[%s8353 + $0x10] sm:$0xf]
        %v8359 = vld [vmem:[%s8353 + $0x14] sm:$0xf]
        %v8360 = vld [vmem:[%s8353 + $0x18] sm:$0xf]
        %v8361 = vld [vmem:[%s8353 + $0x1c] sm:$0xf]
        %v8362 = vld [vmem:[%s8353 + $0x20] sm:$0xf]
        %v8363 = vld [vmem:[%s8353 + $0x24] sm:$0xf]
        %v8364 = vld [vmem:[%s8353 + $0x28] sm:$0xf]
        %v8365 = vld [vmem:[%s8353 + $0x2c] sm:$0xf]
        %v8366 = vld [vmem:[%s8353 + $0x30] sm:$0xf]
        %v8367 = vld [vmem:[%s8353 + $0x34] sm:$0xf]
        %v8368 = vld [vmem:[%s8353 + $0x38] sm:$0xf]
        %v8369 = vld [vmem:[%s8353 + $0x3c] sm:$0xf]
        %v8386 = vunpack.c.l.b16 %v8354
        %v8387 = vunpack.c.l.b16 %v8355
        %v8388 = vunpack.c.l.b16 %v8356
        %v8389 = vunpack.c.l.b16 %v8357
        %v8390 = vunpack.c.l.b16 %v8358
        %v8391 = vunpack.c.l.b16 %v8359
        %v8392 = vunpack.c.l.b16 %v8360
        %v8393 = vunpack.c.l.b16 %v8361
        %v8394 = vunpack.c.l.b16 %v8362
        %v8395 = vunpack.c.l.b16 %v8363
        %v8396 = vunpack.c.l.b16 %v8364
        %v8397 = vunpack.c.l.b16 %v8365
        %v8398 = vunpack.c.l.b16 %v8366
        %v8399 = vunpack.c.l.b16 %v8367
        %v8400 = vunpack.c.l.b16 %v8368
        %v8401 = vunpack.c.l.b16 %v8369
        %v8402 = vpack.c.b16 %v8387, %v8386
        %v8403 = vpack.c.b16 %v8389, %v8388
        %v8404 = vpack.c.b16 %v8391, %v8390
        %v8405 = vpack.c.b16 %v8393, %v8392
        %v8406 = vpack.c.b16 %v8395, %v8394
        %v8407 = vpack.c.b16 %v8397, %v8396
        %v8408 = vpack.c.b16 %v8399, %v8398
        %v8409 = vpack.c.b16 %v8401, %v8400
        %8418 = vmatprep.subr.bf16.mxu0 0
        %8419 = vmatpush1.bf16.msra.mxu0 %v8409
        %8420 = vmatprep.subr.bf16.mxu0 0
        %8421 = vmatpush1.bf16.msra.mxu0 %v8408
        %8422 = vmatprep.subr.bf16.mxu0 0
        %8423 = vmatpush1.bf16.msra.mxu0 %v8407
        %8424 = vmatprep.subr.bf16.mxu0 0
        %8425 = vmatpush1.bf16.msra.mxu0 %v8406
        %8426 = vmatprep.subr.bf16.mxu0 0
        %8427 = vmatpush1.bf16.msra.mxu0 %v8405
        %8428 = vmatprep.subr.bf16.mxu0 0
        %8429 = vmatpush1.bf16.msra.mxu0 %v8404
        %8430 = vmatprep.subr.bf16.mxu0 0
        %8431 = vmatpush1.bf16.msra.mxu0 %v8403
        %8432 = vmatprep.subr.bf16.mxu0 0
        %8433 = vmatpush1.bf16.msra.mxu0 %v8402
        %8434 = vmatprep.subr.bf16.mxu0 0
        %8435 = vmatpush2.bf16.msra.mxu0 0
        %8436 = vmatprep.subr.bf16.mxu0 0
        %8437 = vmatpush2.bf16.msra.mxu0 0
        %8438 = vmatprep.subr.bf16.mxu0 0
        %8439 = vmatpush2.bf16.msra.mxu0 0
        %8440 = vmatprep.subr.bf16.mxu0 0
        %8441 = vmatpush2.bf16.msra.mxu0 0
        %8442 = vmatprep.subr.bf16.mxu0 0
        %8443 = vmatpush2.bf16.msra.mxu0 0
        %8444 = vmatprep.subr.bf16.mxu0 0
        %8445 = vmatpush2.bf16.msra.mxu0 0
        %8446 = vmatprep.subr.bf16.mxu0 0
        %8447 = vmatpush2.bf16.msra.mxu0 0
        %8448 = vmatprep.subr.bf16.mxu0 0
        %8449 = vmatpush2.bf16.msra.mxu0 0
        %8450 = vmatprep.mubr.bf16.mxu0 0
        %8451 = vmatmul.mubr.bf16.gmra.mxu0 %v8337
        %v8452 = vpop.f32.mrf.mxu0
        %v8453 = vadd.f32 0.0, %v8452
        %v8454 = vpop.f32.mrf.mxu0
        %v8455 = vpop.f32.mrf.mxu0
        %v8456 = vadd.f32 0.0, %v8455
        %v8457 = vpop.f32.mrf.mxu0
        %8458 = vmatprep.mubr.bf16.mxu0 0
        %8459 = vmatmul.mubr.bf16.gmra.mxu0 %v8338
        %v8460 = vpop.f32.mrf.mxu0
        %v8461 = vadd.f32 0.0, %v8460
        %v8462 = vpop.f32.mrf.mxu0
        %v8463 = vpop.f32.mrf.mxu0
        %v8464 = vadd.f32 0.0, %v8463
        %v8465 = vpop.f32.mrf.mxu0
        %8466 = vmatprep.mubr.bf16.mxu0 0
        %8467 = vmatmul.mubr.bf16.gmra.mxu0 %v8339
        %v8468 = vpop.f32.mrf.mxu0
        %v8469 = vadd.f32 0.0, %v8468
        %v8470 = vpop.f32.mrf.mxu0
        %v8471 = vpop.f32.mrf.mxu0
        %v8472 = vadd.f32 0.0, %v8471
        %v8473 = vpop.f32.mrf.mxu0
        %8474 = vmatprep.mubr.bf16.mxu0 0
        %8475 = vmatmul.mubr.bf16.gmra.mxu0 %v8340
        %v8476 = vpop.f32.mrf.mxu0
        %v8477 = vadd.f32 0.0, %v8476
        %v8478 = vpop.f32.mrf.mxu0
        %v8479 = vpop.f32.mrf.mxu0
        %v8480 = vadd.f32 0.0, %v8479
        %v8481 = vpop.f32.mrf.mxu0
        %8482 = vmatprep.mubr.bf16.mxu0 0
        %8483 = vmatmul.mubr.bf16.gmra.mxu0 %v8341
        %v8484 = vpop.f32.mrf.mxu0
        %v8485 = vadd.f32 0.0, %v8484
        %v8486 = vpop.f32.mrf.mxu0
        %v8487 = vpop.f32.mrf.mxu0
        %v8488 = vadd.f32 0.0, %v8487
        %v8489 = vpop.f32.mrf.mxu0
        %8490 = vmatprep.mubr.bf16.mxu0 0
        %8491 = vmatmul.mubr.bf16.gmra.mxu0 %v8342
        %v8492 = vpop.f32.mrf.mxu0
        %v8493 = vadd.f32 0.0, %v8492
        %v8494 = vpop.f32.mrf.mxu0
        %v8495 = vpop.f32.mrf.mxu0
        %v8496 = vadd.f32 0.0, %v8495
        %v8497 = vpop.f32.mrf.mxu0
        %8498 = vmatprep.mubr.bf16.mxu0 0
        %8499 = vmatmul.mubr.bf16.gmra.mxu0 %v8343
        %v8500 = vpop.f32.mrf.mxu0
        %v8501 = vadd.f32 0.0, %v8500
        %v8502 = vpop.f32.mrf.mxu0
        %v8503 = vpop.f32.mrf.mxu0
        %v8504 = vadd.f32 0.0, %v8503
        %v8505 = vpop.f32.mrf.mxu0
        %8506 = vmatprep.mubr.bf16.mxu0 0
        %8507 = vmatmul.mubr.bf16.gmra.mxu0 %v8344
        %v8508 = vpop.f32.mrf.mxu0
        %v8509 = vadd.f32 0.0, %v8508
        %v8510 = vpop.f32.mrf.mxu0
        %v8511 = vpop.f32.mrf.mxu0
        %v8512 = vadd.f32 0.0, %v8511
        %v8513 = vpop.f32.mrf.mxu0
        %8514 = vmatprep.mubr.bf16.mxu0 0
        %8515 = vmatmul.mubr.bf16.gmra.mxu0 %v8345
        %v8516 = vpop.f32.mrf.mxu0
        %v8517 = vadd.f32 0.0, %v8516
        %v8518 = vpop.f32.mrf.mxu0
        %v8519 = vpop.f32.mrf.mxu0
        %v8520 = vadd.f32 0.0, %v8519
        %v8521 = vpop.f32.mrf.mxu0
        %8522 = vmatprep.mubr.bf16.mxu0 0
        %8523 = vmatmul.mubr.bf16.gmra.mxu0 %v8346
        %v8524 = vpop.f32.mrf.mxu0
        %v8525 = vadd.f32 0.0, %v8524
        %v8526 = vpop.f32.mrf.mxu0
        %v8527 = vpop.f32.mrf.mxu0
        %v8528 = vadd.f32 0.0, %v8527
        %v8529 = vpop.f32.mrf.mxu0
        %8530 = vmatprep.mubr.bf16.mxu0 0
        %8531 = vmatmul.mubr.bf16.gmra.mxu0 %v8347
        %v8532 = vpop.f32.mrf.mxu0
        %v8533 = vadd.f32 0.0, %v8532
        %v8534 = vpop.f32.mrf.mxu0
        %v8535 = vpop.f32.mrf.mxu0
        %v8536 = vadd.f32 0.0, %v8535
        %v8537 = vpop.f32.mrf.mxu0
        %8538 = vmatprep.mubr.bf16.mxu0 0
        %8539 = vmatmul.mubr.bf16.gmra.mxu0 %v8348
        %v8540 = vpop.f32.mrf.mxu0
        %v8541 = vadd.f32 0.0, %v8540
        %v8542 = vpop.f32.mrf.mxu0
        %v8543 = vpop.f32.mrf.mxu0
        %v8544 = vadd.f32 0.0, %v8543
        %v8545 = vpop.f32.mrf.mxu0
        %8546 = vmatprep.mubr.bf16.mxu0 0
        %8547 = vmatmul.mubr.bf16.gmra.mxu0 %v8349
        %v8548 = vpop.f32.mrf.mxu0
        %v8549 = vadd.f32 0.0, %v8548
        %v8550 = vpop.f32.mrf.mxu0
        %v8551 = vpop.f32.mrf.mxu0
        %v8552 = vadd.f32 0.0, %v8551
        %v8553 = vpop.f32.mrf.mxu0
        %8554 = vmatprep.mubr.bf16.mxu0 0
        %8555 = vmatmul.mubr.bf16.gmra.mxu0 %v8350
        %v8556 = vpop.f32.mrf.mxu0
        %v8557 = vadd.f32 0.0, %v8556
        %v8558 = vpop.f32.mrf.mxu0
        %v8559 = vpop.f32.mrf.mxu0
        %v8560 = vadd.f32 0.0, %v8559
        %v8561 = vpop.f32.mrf.mxu0
        %8562 = vmatprep.mubr.bf16.mxu0 0
        %8563 = vmatmul.mubr.bf16.gmra.mxu0 %v8351
        %v8564 = vpop.f32.mrf.mxu0
        %v8565 = vadd.f32 0.0, %v8564
        %v8566 = vpop.f32.mrf.mxu0
        %v8567 = vpop.f32.mrf.mxu0
        %v8568 = vadd.f32 0.0, %v8567
        %v8569 = vpop.f32.mrf.mxu0
        %8570 = vmatprep.mubr.bf16.mxu0 0
        %8571 = vmatmul.mubr.bf16.gmra.mxu0 %v8352
        %v8572 = vpop.f32.mrf.mxu0
        %v8573 = vadd.f32 0.0, %v8572
        %v8574 = vpop.f32.mrf.mxu0
        %v8575 = vpop.f32.mrf.mxu0
        %v8576 = vadd.f32 0.0, %v8575
        %v8577 = vpop.f32.mrf.mxu0
        %8578 = vdwg.mxu0
        %v8579 = vadd.f32 %v8113, %v8453
        %v8580 = vadd.f32 %v8114, %v8456
        %v8581 = vadd.f32 %v8115, %v8461
        %v8582 = vadd.f32 %v8116, %v8464
        %v8583 = vadd.f32 %v8117, %v8469
        %v8584 = vadd.f32 %v8118, %v8472
        %v8585 = vadd.f32 %v8119, %v8477
        %v8586 = vadd.f32 %v8120, %v8480
        %v8587 = vadd.f32 %v8121, %v8485
        %v8588 = vadd.f32 %v8122, %v8488
        %v8589 = vadd.f32 %v8123, %v8493
        %v8590 = vadd.f32 %v8124, %v8496
        %v8591 = vadd.f32 %v8125, %v8501
        %v8592 = vadd.f32 %v8126, %v8504
        %v8593 = vadd.f32 %v8127, %v8509
        %v8594 = vadd.f32 %v8128, %v8512
        %v8595 = vadd.f32 %v8129, %v8517
        %v8596 = vadd.f32 %v8130, %v8520
        %v8597 = vadd.f32 %v8131, %v8525
        %v8598 = vadd.f32 %v8132, %v8528
        %v8599 = vadd.f32 %v8133, %v8533
        %v8600 = vadd.f32 %v8134, %v8536
        %v8601 = vadd.f32 %v8135, %v8541
        %v8602 = vadd.f32 %v8136, %v8544
        %v8603 = vadd.f32 %v8137, %v8549
        %v8604 = vadd.f32 %v8138, %v8552
        %v8605 = vadd.f32 %v8139, %v8557
        %v8606 = vadd.f32 %v8140, %v8560
        %v8607 = vadd.f32 %v8141, %v8565
        %v8608 = vadd.f32 %v8142, %v8568
        %v8609 = vadd.f32 %v8143, %v8573
        %v8610 = vadd.f32 %v8144, %v8576
        %v8611 = vld [vmem:[%s6] sm:$0x1]
        %v8613 = vlaneseq
        %v8614 = vshrl.u32 %v8613, 7
        %v8615 = vsub.s32 0, %v8614
        %v8616 = vrot.slane %v8611, %v8615
        %v8618 = vadd.f32 %v8579, %v8616
        %v8619 = vadd.f32 %v8580, %v8616
        %v8620 = vadd.f32 %v8581, %v8616
        %v8621 = vadd.f32 %v8582, %v8616
        %v8622 = vadd.f32 %v8583, %v8616
        %v8623 = vadd.f32 %v8584, %v8616
        %v8624 = vadd.f32 %v8585, %v8616
        %v8625 = vadd.f32 %v8586, %v8616
        %v8626 = vadd.f32 %v8587, %v8616
        %v8627 = vadd.f32 %v8588, %v8616
        %v8628 = vadd.f32 %v8589, %v8616
        %v8629 = vadd.f32 %v8590, %v8616
        %v8630 = vadd.f32 %v8591, %v8616
        %v8631 = vadd.f32 %v8592, %v8616
        %v8632 = vadd.f32 %v8593, %v8616
        %v8633 = vadd.f32 %v8594, %v8616
        %v8634 = vadd.f32 %v8595, %v8616
        %v8635 = vadd.f32 %v8596, %v8616
        %v8636 = vadd.f32 %v8597, %v8616
        %v8637 = vadd.f32 %v8598, %v8616
        %v8638 = vadd.f32 %v8599, %v8616
        %v8639 = vadd.f32 %v8600, %v8616
        %v8640 = vadd.f32 %v8601, %v8616
        %v8641 = vadd.f32 %v8602, %v8616
        %v8642 = vadd.f32 %v8603, %v8616
        %v8643 = vadd.f32 %v8604, %v8616
        %v8644 = vadd.f32 %v8605, %v8616
        %v8645 = vadd.f32 %v8606, %v8616
        %v8646 = vadd.f32 %v8607, %v8616
        %v8647 = vadd.f32 %v8608, %v8616
        %v8648 = vadd.f32 %v8609, %v8616
        %v8649 = vadd.f32 %v8610, %v8616
        %v8650 = vld [vmem:[%s355] sm:$0xff]
        %v8651 = vld [vmem:[%s355 + $0x8] sm:$0xff]
        %v8652 = vld [vmem:[%s355 + $0x10] sm:$0xff]
        %v8653 = vld [vmem:[%s355 + $0x18] sm:$0xff]
        %v8654 = vld [vmem:[%s355 + $0x20] sm:$0xff]
        %v8655 = vld [vmem:[%s355 + $0x28] sm:$0xff]
        %v8656 = vld [vmem:[%s355 + $0x30] sm:$0xff]
        %v8657 = vld [vmem:[%s355 + $0x38] sm:$0xff]
        %v8658 = vld [vmem:[%s355 + $0x40] sm:$0xff]
        %v8659 = vld [vmem:[%s355 + $0x48] sm:$0xff]
        %v8660 = vld [vmem:[%s355 + $0x50] sm:$0xff]
        %v8661 = vld [vmem:[%s355 + $0x58] sm:$0xff]
        %v8662 = vld [vmem:[%s355 + $0x60] sm:$0xff]
        %v8663 = vld [vmem:[%s355 + $0x68] sm:$0xff]
        %v8664 = vld [vmem:[%s355 + $0x70] sm:$0xff]
        %v8665 = vld [vmem:[%s355 + $0x78] sm:$0xff]
        %v8666 = vld [vmem:[%s355 + $0x80] sm:$0xff]
        %v8667 = vld [vmem:[%s355 + $0x88] sm:$0xff]
        %v8668 = vld [vmem:[%s355 + $0x90] sm:$0xff]
        %v8669 = vld [vmem:[%s355 + $0x98] sm:$0xff]
        %v8670 = vld [vmem:[%s355 + $0xa0] sm:$0xff]
        %v8671 = vld [vmem:[%s355 + $0xa8] sm:$0xff]
        %v8672 = vld [vmem:[%s355 + $0xb0] sm:$0xff]
        %v8673 = vld [vmem:[%s355 + $0xb8] sm:$0xff]
        %v8674 = vld [vmem:[%s355 + $0xc0] sm:$0xff]
        %v8675 = vld [vmem:[%s355 + $0xc8] sm:$0xff]
        %v8676 = vld [vmem:[%s355 + $0xd0] sm:$0xff]
        %v8677 = vld [vmem:[%s355 + $0xd8] sm:$0xff]
        %v8678 = vld [vmem:[%s355 + $0xe0] sm:$0xff]
        %v8679 = vld [vmem:[%s355 + $0xe8] sm:$0xff]
        %v8680 = vld [vmem:[%s355 + $0xf0] sm:$0xff]
        %v8681 = vld [vmem:[%s355 + $0xf8] sm:$0xff]
        %v8682 = vpack.c.bf16 %v8651, %v8650
        %v8683 = vpack.c.bf16 %v8653, %v8652
        %v8684 = vpack.c.bf16 %v8655, %v8654
        %v8685 = vpack.c.bf16 %v8657, %v8656
        %v8686 = vpack.c.bf16 %v8659, %v8658
        %v8687 = vpack.c.bf16 %v8661, %v8660
        %v8688 = vpack.c.bf16 %v8663, %v8662
        %v8689 = vpack.c.bf16 %v8665, %v8664
        %v8690 = vpack.c.bf16 %v8667, %v8666
        %v8691 = vpack.c.bf16 %v8669, %v8668
        %v8692 = vpack.c.bf16 %v8671, %v8670
        %v8693 = vpack.c.bf16 %v8673, %v8672
        %v8694 = vpack.c.bf16 %v8675, %v8674
        %v8695 = vpack.c.bf16 %v8677, %v8676
        %v8696 = vpack.c.bf16 %v8679, %v8678
        %v8697 = vpack.c.bf16 %v8681, %v8680
        %v8698 = vld [vmem:[%s8] sm:$0xf]
        %v8699 = vld [vmem:[%s8 + $0x4] sm:$0xf]
        %v8700 = vld [vmem:[%s8 + $0x8] sm:$0xf]
        %v8701 = vld [vmem:[%s8 + $0xc] sm:$0xf]
        %v8702 = vld [vmem:[%s8 + $0x10] sm:$0xf]
        %v8703 = vld [vmem:[%s8 + $0x14] sm:$0xf]
        %v8704 = vld [vmem:[%s8 + $0x18] sm:$0xf]
        %v8705 = vld [vmem:[%s8 + $0x1c] sm:$0xf]
        %v8706 = vld [vmem:[%s8 + $0x20] sm:$0xf]
        %v8707 = vld [vmem:[%s8 + $0x24] sm:$0xf]
        %v8708 = vld [vmem:[%s8 + $0x28] sm:$0xf]
        %v8709 = vld [vmem:[%s8 + $0x2c] sm:$0xf]
        %v8710 = vld [vmem:[%s8 + $0x30] sm:$0xf]
        %v8711 = vld [vmem:[%s8 + $0x34] sm:$0xf]
        %v8712 = vld [vmem:[%s8 + $0x38] sm:$0xf]
        %v8713 = vld [vmem:[%s8 + $0x3c] sm:$0xf]
        %v8730 = vunpack.c.l.b16 %v8698
        %v8731 = vunpack.c.l.b16 %v8699
        %v8732 = vunpack.c.l.b16 %v8700
        %v8733 = vunpack.c.l.b16 %v8701
        %v8734 = vunpack.c.l.b16 %v8702
        %v8735 = vunpack.c.l.b16 %v8703
        %v8736 = vunpack.c.l.b16 %v8704
        %v8737 = vunpack.c.l.b16 %v8705
        %v8738 = vunpack.c.l.b16 %v8706
        %v8739 = vunpack.c.l.b16 %v8707
        %v8740 = vunpack.c.l.b16 %v8708
        %v8741 = vunpack.c.l.b16 %v8709
        %v8742 = vunpack.c.l.b16 %v8710
        %v8743 = vunpack.c.l.b16 %v8711
        %v8744 = vunpack.c.l.b16 %v8712
        %v8745 = vunpack.c.l.b16 %v8713
        %v8746 = vpack.c.b16 %v8731, %v8730
        %v8747 = vpack.c.b16 %v8733, %v8732
        %v8748 = vpack.c.b16 %v8735, %v8734
        %v8749 = vpack.c.b16 %v8737, %v8736
        %v8750 = vpack.c.b16 %v8739, %v8738
        %v8751 = vpack.c.b16 %v8741, %v8740
        %v8752 = vpack.c.b16 %v8743, %v8742
        %v8753 = vpack.c.b16 %v8745, %v8744
        %8762 = vmatprep.subr.bf16.mxu0 0
        %8763 = vmatpush1.bf16.msra.mxu0 %v8753
        %8764 = vmatprep.subr.bf16.mxu0 0
        %8765 = vmatpush1.bf16.msra.mxu0 %v8752
        %8766 = vmatprep.subr.bf16.mxu0 0
        %8767 = vmatpush1.bf16.msra.mxu0 %v8751
        %8768 = vmatprep.subr.bf16.mxu0 0
        %8769 = vmatpush1.bf16.msra.mxu0 %v8750
        %8770 = vmatprep.subr.bf16.mxu0 0
        %8771 = vmatpush1.bf16.msra.mxu0 %v8749
        %8772 = vmatprep.subr.bf16.mxu0 0
        %8773 = vmatpush1.bf16.msra.mxu0 %v8748
        %8774 = vmatprep.subr.bf16.mxu0 0
        %8775 = vmatpush1.bf16.msra.mxu0 %v8747
        %8776 = vmatprep.subr.bf16.mxu0 0
        %8777 = vmatpush1.bf16.msra.mxu0 %v8746
        %8778 = vmatprep.subr.bf16.mxu0 0
        %8779 = vmatpush2.bf16.msra.mxu0 0
        %8780 = vmatprep.subr.bf16.mxu0 0
        %8781 = vmatpush2.bf16.msra.mxu0 0
        %8782 = vmatprep.subr.bf16.mxu0 0
        %8783 = vmatpush2.bf16.msra.mxu0 0
        %8784 = vmatprep.subr.bf16.mxu0 0
        %8785 = vmatpush2.bf16.msra.mxu0 0
        %8786 = vmatprep.subr.bf16.mxu0 0
        %8787 = vmatpush2.bf16.msra.mxu0 0
        %8788 = vmatprep.subr.bf16.mxu0 0
        %8789 = vmatpush2.bf16.msra.mxu0 0
        %8790 = vmatprep.subr.bf16.mxu0 0
        %8791 = vmatpush2.bf16.msra.mxu0 0
        %8792 = vmatprep.subr.bf16.mxu0 0
        %8793 = vmatpush2.bf16.msra.mxu0 0
        %8794 = vmatprep.mubr.bf16.mxu0 0
        %8795 = vmatmul.mubr.bf16.gmra.mxu0 %v8682
        %v8796 = vpop.f32.mrf.mxu0
        %v8797 = vadd.f32 0.0, %v8796
        %v8798 = vpop.f32.mrf.mxu0
        %v8799 = vpop.f32.mrf.mxu0
        %v8800 = vadd.f32 0.0, %v8799
        %v8801 = vpop.f32.mrf.mxu0
        %8802 = vmatprep.mubr.bf16.mxu0 0
        %8803 = vmatmul.mubr.bf16.gmra.mxu0 %v8683
        %v8804 = vpop.f32.mrf.mxu0
        %v8805 = vadd.f32 0.0, %v8804
        %v8806 = vpop.f32.mrf.mxu0
        %v8807 = vpop.f32.mrf.mxu0
        %v8808 = vadd.f32 0.0, %v8807
        %v8809 = vpop.f32.mrf.mxu0
        %8810 = vmatprep.mubr.bf16.mxu0 0
        %8811 = vmatmul.mubr.bf16.gmra.mxu0 %v8684
        %v8812 = vpop.f32.mrf.mxu0
        %v8813 = vadd.f32 0.0, %v8812
        %v8814 = vpop.f32.mrf.mxu0
        %v8815 = vpop.f32.mrf.mxu0
        %v8816 = vadd.f32 0.0, %v8815
        %v8817 = vpop.f32.mrf.mxu0
        %8818 = vmatprep.mubr.bf16.mxu0 0
        %8819 = vmatmul.mubr.bf16.gmra.mxu0 %v8685
        %v8820 = vpop.f32.mrf.mxu0
        %v8821 = vadd.f32 0.0, %v8820
        %v8822 = vpop.f32.mrf.mxu0
        %v8823 = vpop.f32.mrf.mxu0
        %v8824 = vadd.f32 0.0, %v8823
        %v8825 = vpop.f32.mrf.mxu0
        %8826 = vmatprep.mubr.bf16.mxu0 0
        %8827 = vmatmul.mubr.bf16.gmra.mxu0 %v8686
        %v8828 = vpop.f32.mrf.mxu0
        %v8829 = vadd.f32 0.0, %v8828
        %v8830 = vpop.f32.mrf.mxu0
        %v8831 = vpop.f32.mrf.mxu0
        %v8832 = vadd.f32 0.0, %v8831
        %v8833 = vpop.f32.mrf.mxu0
        %8834 = vmatprep.mubr.bf16.mxu0 0
        %8835 = vmatmul.mubr.bf16.gmra.mxu0 %v8687
        %v8836 = vpop.f32.mrf.mxu0
        %v8837 = vadd.f32 0.0, %v8836
        %v8838 = vpop.f32.mrf.mxu0
        %v8839 = vpop.f32.mrf.mxu0
        %v8840 = vadd.f32 0.0, %v8839
        %v8841 = vpop.f32.mrf.mxu0
        %8842 = vmatprep.mubr.bf16.mxu0 0
        %8843 = vmatmul.mubr.bf16.gmra.mxu0 %v8688
        %v8844 = vpop.f32.mrf.mxu0
        %v8845 = vadd.f32 0.0, %v8844
        %v8846 = vpop.f32.mrf.mxu0
        %v8847 = vpop.f32.mrf.mxu0
        %v8848 = vadd.f32 0.0, %v8847
        %v8849 = vpop.f32.mrf.mxu0
        %8850 = vmatprep.mubr.bf16.mxu0 0
        %8851 = vmatmul.mubr.bf16.gmra.mxu0 %v8689
        %v8852 = vpop.f32.mrf.mxu0
        %v8853 = vadd.f32 0.0, %v8852
        %v8854 = vpop.f32.mrf.mxu0
        %v8855 = vpop.f32.mrf.mxu0
        %v8856 = vadd.f32 0.0, %v8855
        %v8857 = vpop.f32.mrf.mxu0
        %8858 = vmatprep.mubr.bf16.mxu0 0
        %8859 = vmatmul.mubr.bf16.gmra.mxu0 %v8690
        %v8860 = vpop.f32.mrf.mxu0
        %v8861 = vadd.f32 0.0, %v8860
        %v8862 = vpop.f32.mrf.mxu0
        %v8863 = vpop.f32.mrf.mxu0
        %v8864 = vadd.f32 0.0, %v8863
        %v8865 = vpop.f32.mrf.mxu0
        %8866 = vmatprep.mubr.bf16.mxu0 0
        %8867 = vmatmul.mubr.bf16.gmra.mxu0 %v8691
        %v8868 = vpop.f32.mrf.mxu0
        %v8869 = vadd.f32 0.0, %v8868
        %v8870 = vpop.f32.mrf.mxu0
        %v8871 = vpop.f32.mrf.mxu0
        %v8872 = vadd.f32 0.0, %v8871
        %v8873 = vpop.f32.mrf.mxu0
        %8874 = vmatprep.mubr.bf16.mxu0 0
        %8875 = vmatmul.mubr.bf16.gmra.mxu0 %v8692
        %v8876 = vpop.f32.mrf.mxu0
        %v8877 = vadd.f32 0.0, %v8876
        %v8878 = vpop.f32.mrf.mxu0
        %v8879 = vpop.f32.mrf.mxu0
        %v8880 = vadd.f32 0.0, %v8879
        %v8881 = vpop.f32.mrf.mxu0
        %8882 = vmatprep.mubr.bf16.mxu0 0
        %8883 = vmatmul.mubr.bf16.gmra.mxu0 %v8693
        %v8884 = vpop.f32.mrf.mxu0
        %v8885 = vadd.f32 0.0, %v8884
        %v8886 = vpop.f32.mrf.mxu0
        %v8887 = vpop.f32.mrf.mxu0
        %v8888 = vadd.f32 0.0, %v8887
        %v8889 = vpop.f32.mrf.mxu0
        %8890 = vmatprep.mubr.bf16.mxu0 0
        %8891 = vmatmul.mubr.bf16.gmra.mxu0 %v8694
        %v8892 = vpop.f32.mrf.mxu0
        %v8893 = vadd.f32 0.0, %v8892
        %v8894 = vpop.f32.mrf.mxu0
        %v8895 = vpop.f32.mrf.mxu0
        %v8896 = vadd.f32 0.0, %v8895
        %v8897 = vpop.f32.mrf.mxu0
        %8898 = vmatprep.mubr.bf16.mxu0 0
        %8899 = vmatmul.mubr.bf16.gmra.mxu0 %v8695
        %v8900 = vpop.f32.mrf.mxu0
        %v8901 = vadd.f32 0.0, %v8900
        %v8902 = vpop.f32.mrf.mxu0
        %v8903 = vpop.f32.mrf.mxu0
        %v8904 = vadd.f32 0.0, %v8903
        %v8905 = vpop.f32.mrf.mxu0
        %8906 = vmatprep.mubr.bf16.mxu0 0
        %8907 = vmatmul.mubr.bf16.gmra.mxu0 %v8696
        %v8908 = vpop.f32.mrf.mxu0
        %v8909 = vadd.f32 0.0, %v8908
        %v8910 = vpop.f32.mrf.mxu0
        %v8911 = vpop.f32.mrf.mxu0
        %v8912 = vadd.f32 0.0, %v8911
        %v8913 = vpop.f32.mrf.mxu0
        %8914 = vmatprep.mubr.bf16.mxu0 0
        %8915 = vmatmul.mubr.bf16.gmra.mxu0 %v8697
        %v8916 = vpop.f32.mrf.mxu0
        %v8917 = vadd.f32 0.0, %v8916
        %v8918 = vpop.f32.mrf.mxu0
        %v8919 = vpop.f32.mrf.mxu0
        %v8920 = vadd.f32 0.0, %v8919
        %v8921 = vpop.f32.mrf.mxu0
        %8922 = vdwg.mxu0
        %v8923 = vadd.f32 %v8618, %v8797
        %v8924 = vadd.f32 %v8619, %v8800
        %v8925 = vadd.f32 %v8620, %v8805
        %v8926 = vadd.f32 %v8621, %v8808
        %v8927 = vadd.f32 %v8622, %v8813
        %v8928 = vadd.f32 %v8623, %v8816
        %v8929 = vadd.f32 %v8624, %v8821
        %v8930 = vadd.f32 %v8625, %v8824
        %v8931 = vadd.f32 %v8626, %v8829
        %v8932 = vadd.f32 %v8627, %v8832
        %v8933 = vadd.f32 %v8628, %v8837
        %v8934 = vadd.f32 %v8629, %v8840
        %v8935 = vadd.f32 %v8630, %v8845
        %v8936 = vadd.f32 %v8631, %v8848
        %v8937 = vadd.f32 %v8632, %v8853
        %v8938 = vadd.f32 %v8633, %v8856
        %v8939 = vadd.f32 %v8634, %v8861
        %v8940 = vadd.f32 %v8635, %v8864
        %v8941 = vadd.f32 %v8636, %v8869
        %v8942 = vadd.f32 %v8637, %v8872
        %v8943 = vadd.f32 %v8638, %v8877
        %v8944 = vadd.f32 %v8639, %v8880
        %v8945 = vadd.f32 %v8640, %v8885
        %v8946 = vadd.f32 %v8641, %v8888
        %v8947 = vadd.f32 %v8642, %v8893
        %v8948 = vadd.f32 %v8643, %v8896
        %v8949 = vadd.f32 %v8644, %v8901
        %v8950 = vadd.f32 %v8645, %v8904
        %v8951 = vadd.f32 %v8646, %v8909
        %v8952 = vadd.f32 %v8647, %v8912
        %v8953 = vadd.f32 %v8648, %v8917
        %v8954 = vadd.f32 %v8649, %v8920
        %v8955 = vmul.f32 %v8923, 0.70710677
        %v8956 = vmul.f32 %v8924, 0.70710677
        %v8957 = vmul.f32 %v8925, 0.70710677
        %v8958 = vmul.f32 %v8926, 0.70710677
        %v8959 = vmul.f32 %v8927, 0.70710677
        %v8960 = vmul.f32 %v8928, 0.70710677
        %v8961 = vmul.f32 %v8929, 0.70710677
        %v8962 = vmul.f32 %v8930, 0.70710677
        %v8963 = vmul.f32 %v8931, 0.70710677
        %v8964 = vmul.f32 %v8932, 0.70710677
        %v8965 = vmul.f32 %v8933, 0.70710677
        %v8966 = vmul.f32 %v8934, 0.70710677
        %v8967 = vmul.f32 %v8935, 0.70710677
        %v8968 = vmul.f32 %v8936, 0.70710677
        %v8969 = vmul.f32 %v8937, 0.70710677
        %v8970 = vmul.f32 %v8938, 0.70710677
        %v8971 = vmul.f32 %v8939, 0.70710677
        %v8972 = vmul.f32 %v8940, 0.70710677
        %v8973 = vmul.f32 %v8941, 0.70710677
        %v8974 = vmul.f32 %v8942, 0.70710677
        %v8975 = vmul.f32 %v8943, 0.70710677
        %v8976 = vmul.f32 %v8944, 0.70710677
        %v8977 = vmul.f32 %v8945, 0.70710677
        %v8978 = vmul.f32 %v8946, 0.70710677
        %v8979 = vmul.f32 %v8947, 0.70710677
        %v8980 = vmul.f32 %v8948, 0.70710677
        %v8981 = vmul.f32 %v8949, 0.70710677
        %v8982 = vmul.f32 %v8950, 0.70710677
        %v8983 = vmul.f32 %v8951, 0.70710677
        %v8984 = vmul.f32 %v8952, 0.70710677
        %v8985 = vmul.f32 %v8953, 0.70710677
        %v8986 = vmul.f32 %v8954, 0.70710677
        %8987 = vst [vmem:[%s405] sm:$0xff] %v8955
        %8988 = vst [vmem:[%s405 + $0x8] sm:$0xff] %v8956
        %8989 = vst [vmem:[%s405 + $0x10] sm:$0xff] %v8957
        %8990 = vst [vmem:[%s405 + $0x18] sm:$0xff] %v8958
        %8991 = vst [vmem:[%s405 + $0x20] sm:$0xff] %v8959
        %8992 = vst [vmem:[%s405 + $0x28] sm:$0xff] %v8960
        %8993 = vst [vmem:[%s405 + $0x30] sm:$0xff] %v8961
        %8994 = vst [vmem:[%s405 + $0x38] sm:$0xff] %v8962
        %8995 = vst [vmem:[%s405 + $0x40] sm:$0xff] %v8963
        %8996 = vst [vmem:[%s405 + $0x48] sm:$0xff] %v8964
        %8997 = vst [vmem:[%s405 + $0x50] sm:$0xff] %v8965
        %8998 = vst [vmem:[%s405 + $0x58] sm:$0xff] %v8966
        %8999 = vst [vmem:[%s405 + $0x60] sm:$0xff] %v8967
        %9000 = vst [vmem:[%s405 + $0x68] sm:$0xff] %v8968
        %9001 = vst [vmem:[%s405 + $0x70] sm:$0xff] %v8969
        %9002 = vst [vmem:[%s405 + $0x78] sm:$0xff] %v8970
        %9003 = vst [vmem:[%s405 + $0x80] sm:$0xff] %v8971
        %9004 = vst [vmem:[%s405 + $0x88] sm:$0xff] %v8972
        %9005 = vst [vmem:[%s405 + $0x90] sm:$0xff] %v8973
        %9006 = vst [vmem:[%s405 + $0x98] sm:$0xff] %v8974
        %9007 = vst [vmem:[%s405 + $0xa0] sm:$0xff] %v8975
        %9008 = vst [vmem:[%s405 + $0xa8] sm:$0xff] %v8976
        %9009 = vst [vmem:[%s405 + $0xb0] sm:$0xff] %v8977
        %9010 = vst [vmem:[%s405 + $0xb8] sm:$0xff] %v8978
        %9011 = vst [vmem:[%s405 + $0xc0] sm:$0xff] %v8979
        %9012 = vst [vmem:[%s405 + $0xc8] sm:$0xff] %v8980
        %9013 = vst [vmem:[%s405 + $0xd0] sm:$0xff] %v8981
        %9014 = vst [vmem:[%s405 + $0xd8] sm:$0xff] %v8982
        %9015 = vst [vmem:[%s405 + $0xe0] sm:$0xff] %v8983
        %9016 = vst [vmem:[%s405 + $0xe8] sm:$0xff] %v8984
        %9017 = vst [vmem:[%s405 + $0xf0] sm:$0xff] %v8985
        %9018 = vst [vmem:[%s405 + $0xf8] sm:$0xff] %v8986
        %s9019 = sand.u32 %s239, 1
        %s9020 = scalar_lea.sflag [#allocation5], %s9019
        %s9021 = sand.u32 %s239, 1
        %s9022 = smul.addr %s9021, 256
        %s9023 = scalar_lea.vmem [#allocation9], %s9022
        // Predicated region
        $region69: #{tpu_custom_call.1} parent=55 // pred_check
          %p9024 = pneg %p249
        $region70: #{tpu_custom_call.1} parent=55 // pred_check_branch
          %9026 = sbr.rel (%p9024) target = $region72
        $region71: #{tpu_custom_call.1} parent=55 // pred_region
          %s9028 = ssub.s32 4096, 4096
          %9029 = vsyncadd %s9020, %s9028
          %s9030 = smul.addr %s27, 32
          %s9031 = smul.addr %s9030, 128
          %s9032 = scalar_lea.hbm %s9, %s9031
          %s9033 = sshll.u32 %s9023, 4
          %s9034 = int_to_ptr.vmem [resolvable:$true] %s9033
          %9039 = dma.vmem_to_hbm [thread:$0]  %s9034, 4096, %s9032, %s9020, 128, 128, 8
        $region72: #{tpu_custom_call.1} parent=55 // pred_fallthru
          _
      $region56: #{tpu_custom_call.1} parent=5 // pred_fallthru
        _
      %p9040 = scmp.le.s32.totalorder 2, %s22
      // Predicated region
      $region73: #{tpu_custom_call.1} parent=5 // pred_check
        %p9041 = pneg %p9040
      $region74: #{tpu_custom_call.1} parent=5 // pred_check_branch
        %9043 = sbr.rel (%p9041) target = $region76
      $region75: #{tpu_custom_call.1} parent=5 // pred_region
        %s9044 = ssub.s32 %s22, 2
        // Predicated region
        $region77: #{tpu_custom_call.1} parent=75 // pred_check
          %p9045 = pneg %p255
        $region78: #{tpu_custom_call.1} parent=75 // pred_check_branch
          %9047 = sbr.rel (%p9045) target = $region80
        $region79: #{tpu_custom_call.1} parent=75 // pred_region
          %s9048 = sand.u32 %s240, 1
          %s9049 = scalar_lea.sflag [#allocation5], %s9048
          %s9050 = sand.u32 %s240, 1
          %s9051 = smul.addr %s9050, 256
          %s9052 = scalar_lea.vmem [#allocation9], %s9051
          %9053 = dma.done %s9049, 4096
        $region80: #{tpu_custom_call.1} parent=75 // pred_fallthru
          _
      $region76: #{tpu_custom_call.1} parent=5 // pred_fallthru
        _
    $region6: #{tpu_custom_call.1} parent=1 // loop_footer
      %s26 = sadd.s32 1, %s22
    $region7: #{tpu_custom_call.1} parent=1 // loop_footer_branch
      %21 = sbr.rel target = $region3
    $region8: #{tpu_custom_call.1} parent=1 // loop_exit
      _
    %9054 = vsyncpa [#allocation4], 1
    %s9055 = scalar_lea.sflag [#allocation4], 1
    %9056 = vsyncpa %s9055, 1
    %9057 = vsyncpa [#allocation7], 1
    %9058 = vsyncpa [#allocation5], 1
    %s9059 = scalar_lea.sflag [#allocation5], 1
    %9060 = vsyncpa %s9059, 1

</llo_original>
